<compile_context>
chip_gen: v5e
topology: v5e:2x2
jax: 0.10.0
libtpu: 0.0.40
codegen_flags: <defaults>
</compile_context>

<pallas_src>
import functools

import jax
import jax.numpy as jnp
import numpy as np
from jax.experimental import pallas as pl
from jax.experimental.pallas import tpu as pltpu


def _window_attn_kernel(x_ref, wqkv_ref, bqkv_ref, bias_ref, wproj_ref, bproj_ref,
                        o_ref, *, num_heads, head_dim, n_tok, win_blk):
    # x_ref:    (M, C) bf16 with M = win_blk * n_tok
    # wqkv_ref: (C, OUT) bf16, columns grouped [Q_all | K_all | V_all] head-major,
    #           scale already folded into the Q columns
    # bqkv_ref: (1, OUT) f32 (same grouping / scale folding)
    # bias_ref: (num_heads, N, N) f32 relative position bias
    # wproj_ref:(C, C) bf16 ; bproj_ref: (1, C) f32 ; o_ref: (M, C)
    M = win_blk * n_tok
    C = num_heads * head_dim
    nh16 = num_heads * 16

    x = x_ref[...]                                            # (M, C) bf16

    # QKV projection on the MXU, f32 accumulation.
    qkv = jnp.dot(x, wqkv_ref[...], preferred_element_type=jnp.float32)
    qkv = qkv + bqkv_ref[...]                                 # (M, OUT) f32

    # Three contiguous slabs (scale already folded into Q).
    q_all = qkv[:, :nh16].astype(jnp.bfloat16)                # (M, nh*16)
    k_all = qkv[:, nh16:2 * nh16].astype(jnp.bfloat16)        # (M, nh*16)
    v_all = qkv[:, 2 * nh16:].astype(jnp.bfloat16)            # (M, C)

    bias = bias_ref[...]                                      # (nh, N, N)
    wp = wproj_ref[...]                                       # (C, C) bf16

    out = jnp.zeros((M, C), jnp.float32)
    for h in range(num_heads):                                # small, unrolled
        q = q_all[:, h * 16:(h + 1) * 16].reshape(win_blk, n_tok, 16)
        k = k_all[:, h * 16:(h + 1) * 16].reshape(win_blk, n_tok, 16)
        v = v_all[:, h * head_dim:(h + 1) * head_dim].reshape(win_blk, n_tok, head_dim)

        # Window-batched scores; contraction on the last dim (no k.T relayout).
        s = jnp.einsum('bnd,bmd->bnm', q, k,
                       preferred_element_type=jnp.float32)    # (B_blk, N, N)
        s = s + bias[h]                                       # broadcast over windows

        # numerically-stable softmax along last axis
        s = s - jnp.max(s, axis=-1, keepdims=True)
        p = jnp.exp(s)
        p = p * pl.reciprocal(jnp.sum(p, axis=-1, keepdims=True), approx=True)

        ctx = jnp.einsum('bnm,bmd->bnd', p.astype(jnp.bfloat16), v,
                         preferred_element_type=jnp.float32)  # (B_blk, N, hd)

        # Fold this head straight into the output projection (avoids lane concat).
        out = out + jnp.dot(ctx.reshape(M, head_dim).astype(jnp.bfloat16),
                            wp[h * head_dim:(h + 1) * head_dim, :],
                            preferred_element_type=jnp.float32)

    out = out + bproj_ref[...]
    o_ref[...] = out.astype(o_ref.dtype)


def window_attention_pallas(x, w_qkv, b_qkv, rel_bias, w_proj, b_proj, num_heads,
                            win_blk=32):
    B_, N, C = x.shape
    head_dim = C // num_heads
    OUT = C + 32 * num_heads
    scale = 16 ** (-0.5)

    # Pick a window-block size that divides B_ (keeps grid length >= 1; with the
    # default 32 and B_ >= 64 the grid stays >= 2 so v7x uses both TensorCores).
    wb = min(win_blk, B_)
    while B_ % wb:
        wb -= 1
    M = wb * N

    # ---- host-side weight prep: column grouping, scale folding, bf16 cast ----
    per = 32 + head_dim
    q_cols = np.concatenate([np.arange(h * per, h * per + 16) for h in range(num_heads)])
    k_cols = np.concatenate([np.arange(h * per + 16, h * per + 32) for h in range(num_heads)])
    v_cols = np.concatenate([np.arange(h * per + 32, h * per + 32 + head_dim)
                             for h in range(num_heads)])

    w_g = jnp.concatenate([w_qkv[:, q_cols] * scale,
                           w_qkv[:, k_cols],
                           w_qkv[:, v_cols]], axis=1).astype(jnp.bfloat16)   # (C, OUT)
    b_g = jnp.concatenate([b_qkv[q_cols] * scale,
                           b_qkv[k_cols],
                           b_qkv[v_cols]]).reshape(1, OUT).astype(jnp.float32)

    x2 = x.reshape(B_ * N, C).astype(jnp.bfloat16)
    wp = w_proj.astype(jnp.bfloat16)
    bp = b_proj.reshape(1, C).astype(jnp.float32)
    bias = rel_bias.astype(jnp.float32)

    kernel = functools.partial(_window_attn_kernel, num_heads=num_heads,
                               head_dim=head_dim, n_tok=N, win_blk=wb)

    out = pl.pallas_call(
        kernel,
        out_shape=jax.ShapeDtypeStruct((B_ * N, C), x.dtype),
        grid=(B_ // wb,),
        in_specs=[
            pl.BlockSpec((M, C), lambda i: (i, 0)),                # x (per-block rows)
            pl.BlockSpec((C, OUT), lambda i: (0, 0)),              # grouped qkv weight
            pl.BlockSpec((1, OUT), lambda i: (0, 0)),              # grouped qkv bias
            pl.BlockSpec((num_heads, N, N), lambda i: (0, 0, 0)),  # rel pos bias
            pl.BlockSpec((C, C), lambda i: (0, 0)),                # proj weight
            pl.BlockSpec((1, C), lambda i: (0, 0)),                # proj bias
        ],
        out_specs=pl.BlockSpec((M, C), lambda i: (i, 0)),
        compiler_params=pltpu.CompilerParams(dimension_semantics=("parallel",)),
    )(x2, w_g, b_g, bias, wp, bp)
    return out.reshape(B_, N, C)


def make_relative_position_index(Wh, Ww):
    coords_h = np.arange(Wh)
    coords_w = np.arange(Ww)
    coords = np.stack(np.meshgrid(coords_h, coords_w, indexing="ij"))   # (2, Wh, Ww)
    coords_flatten = coords.reshape(2, -1)                              # (2, N)
    rel = coords_flatten[:, :, None] - coords_flatten[:, None, :]       # (2, N, N)
    rel = rel.transpose(1, 2, 0).copy()                                 # (N, N, 2)
    rel[:, :, 0] += Wh - 1
    rel[:, :, 1] += Ww - 1
    rel[:, :, 0] *= 2 * Ww - 1
    return rel.sum(-1)                                                  # (N, N)


def ref_forward(x, w_qkv, b_qkv, rel_bias, w_proj, b_proj, num_heads):
    """Pure-JAX f32 reference mirroring the PyTorch forward exactly."""
    B_, N, C = x.shape
    hd = C // num_heads
    qkv = x @ w_qkv + b_qkv                               # (B, N, C + 32*nh)
    qkv = qkv.reshape(B_, N, num_heads, hd + 32)
    q, k, v = qkv[..., :16], qkv[..., 16:32], qkv[..., 32:]
    q = jnp.transpose(q, (0, 2, 1, 3)) * (16 ** -0.5)
    k = jnp.transpose(k, (0, 2, 1, 3))
    v = jnp.transpose(v, (0, 2, 1, 3))
    attn = q @ jnp.swapaxes(k, -2, -1) + rel_bias[None]   # (B, nh, N, N)
    attn = jax.nn.softmax(attn, axis=-1)
    out = jnp.transpose(attn @ v, (0, 2, 1, 3)).reshape(B_, N, C)
    return out @ w_proj + b_proj


if __name__ == "__main__":
    # Small, module-consistent shapes: 4x4 windows (N=16 tokens), dim=32, 4 heads.
    dim = 32
    num_heads = 4
    window_size = (4, 4)
    N = window_size[0] * window_size[1]   # 16 tokens per window
    B_ = 64                               # number of windows * batch (grid of 2 blocks)
    OUT = dim + 16 * num_heads * 2        # qkv output features = 160

    key = jax.random.PRNGKey(0)
    kx, k1, k2, k3, k4, k5 = jax.random.split(key, 6)

    x = jax.random.normal(kx, (B_, N, dim), dtype=jnp.float32)

    # Deterministic parameter init (synthetic; not loaded from a checkpoint).
    w_qkv = jax.random.normal(k1, (dim, OUT), dtype=jnp.float32) * 0.05
    b_qkv = jax.random.normal(k2, (OUT,), dtype=jnp.float32) * 0.05
    w_proj = jax.random.normal(k3, (dim, dim), dtype=jnp.float32) * 0.05
    b_proj = jax.random.normal(k4, (dim,), dtype=jnp.float32) * 0.05
    # relative_position_bias_table: ((2*Wh-1)*(2*Ww-1), num_heads), trunc_normal(std=0.02)
    table = jax.random.normal(
        k5, ((2 * window_size[0] - 1) * (2 * window_size[1] - 1), num_heads),
        dtype=jnp.float32) * 0.02

    # Gather the (nh, N, N) relative position bias in plain JAX (glue, as in module init).
    rel_idx = jnp.asarray(make_relative_position_index(*window_size))       # (N, N)
    rel_bias = table[rel_idx.reshape(-1)].reshape(N, N, num_heads)
    rel_bias = jnp.transpose(rel_bias, (2, 0, 1))                           # (nh, N, N)

    out = window_attention_pallas(x, w_qkv, b_qkv, rel_bias, w_proj, b_proj, num_heads)
    out = jax.block_until_ready(out)

    expected = ref_forward(x, w_qkv, b_qkv, rel_bias, w_proj, b_proj, num_heads)
    # bf16 MXU inputs with f32 accumulation -> loosened tolerance vs f32 reference.
    np.testing.assert_allclose(np.asarray(out), np.asarray(expected),
                               rtol=2e-2, atol=2e-2)
    print("KERNEL_OK")
</pallas_src>

<mosaic_0001>
module attributes {stable_mosaic.version = 11 : i64} {
  func.func @_window_attn_kernel(%arg0: i32, %arg1: memref<512x32xbf16, #tpu.memory_space<vmem>>, %arg2: memref<32x160xbf16, #tpu.memory_space<vmem>>, %arg3: memref<1x160xf32, #tpu.memory_space<vmem>>, %arg4: memref<4x16x16xf32, #tpu.memory_space<vmem>>, %arg5: memref<32x32xbf16, #tpu.memory_space<vmem>>, %arg6: memref<1x32xf32, #tpu.memory_space<vmem>>, %arg7: memref<512x32xf32, #tpu.memory_space<vmem>>) attributes {dimension_semantics = [#tpu.dimension_semantics<parallel>], iteration_bounds = array<i64: 2>, scalar_prefetch = 0 : i64, scratch_operands = 0 : i64, tpu.core_type = #tpu.core_type<tc>, window_params = [{transform_indices = @transform_0, window_bounds = array<i64: 512, 32>}, {pipeline_mode = #tpu.pipeline_mode<synchronous>, transform_indices = @transform_1, window_bounds = array<i64: 32, 160>}, {pipeline_mode = #tpu.pipeline_mode<synchronous>, transform_indices = @transform_2, window_bounds = array<i64: 1, 160>}, {pipeline_mode = #tpu.pipeline_mode<synchronous>, transform_indices = @transform_3, window_bounds = array<i64: 4, 16, 16>}, {pipeline_mode = #tpu.pipeline_mode<synchronous>, transform_indices = @transform_4, window_bounds = array<i64: 32, 32>}, {pipeline_mode = #tpu.pipeline_mode<synchronous>, transform_indices = @transform_5, window_bounds = array<i64: 1, 32>}, {transform_indices = @transform_6, window_bounds = array<i64: 512, 32>}]} {
    %c0 = arith.constant 0 : index
    %c0_0 = arith.constant 0 : index
    %0 = vector.load %arg1[%c0, %c0_0] : memref<512x32xbf16, #tpu.memory_space<vmem>>, vector<512x32xbf16>
    %c0_1 = arith.constant 0 : index
    %c0_2 = arith.constant 0 : index
    %1 = vector.load %arg2[%c0_1, %c0_2] : memref<32x160xbf16, #tpu.memory_space<vmem>>, vector<32x160xbf16>
    %cst = arith.constant dense<0.000000e+00> : vector<512x160xf32>
    %2 = tpu.matmul %0, %1, %cst {dimension_numbers = #tpu.dot_dimension_numbers<[1], [0], [0], [1], [0, 0, 1, 1], [], []>} : vector<512x32xbf16>, vector<32x160xbf16>, vector<512x160xf32> -> vector<512x160xf32>
    %c0_3 = arith.constant 0 : index
    %c0_4 = arith.constant 0 : index
    %3 = vector.load %arg3[%c0_3, %c0_4] : memref<1x160xf32, #tpu.memory_space<vmem>>, vector<1x160xf32>
    %4 = vector.broadcast %3 : vector<1x160xf32> to vector<512x160xf32>
    %5 = arith.addf %2, %4 : vector<512x160xf32>
    %6 = vector.extract_strided_slice %5 {offsets = [0, 0], sizes = [512, 64], strides = [1, 1]} : vector<512x160xf32> to vector<512x64xf32>
    %7 = arith.truncf %6 : vector<512x64xf32> to vector<512x64xbf16>
    %8 = vector.extract_strided_slice %5 {offsets = [0, 64], sizes = [512, 64], strides = [1, 1]} : vector<512x160xf32> to vector<512x64xf32>
    %9 = arith.truncf %8 : vector<512x64xf32> to vector<512x64xbf16>
    %10 = vector.extract_strided_slice %5 {offsets = [0, 128], sizes = [512, 32], strides = [1, 1]} : vector<512x160xf32> to vector<512x32xf32>
    %11 = arith.truncf %10 : vector<512x32xf32> to vector<512x32xbf16>
    %c0_5 = arith.constant 0 : index
    %c0_6 = arith.constant 0 : index
    %c0_7 = arith.constant 0 : index
    %12 = vector.load %arg4[%c0_5, %c0_6, %c0_7] : memref<4x16x16xf32, #tpu.memory_space<vmem>>, vector<4x16x16xf32>
    %c0_8 = arith.constant 0 : index
    %c0_9 = arith.constant 0 : index
    %13 = vector.load %arg5[%c0_8, %c0_9] : memref<32x32xbf16, #tpu.memory_space<vmem>>, vector<32x32xbf16>
    %cst_10 = arith.constant 0.000000e+00 : f32
    %14 = vector.broadcast %cst_10 : f32 to vector<512x32xf32>
    %15 = vector.extract_strided_slice %7 {offsets = [0, 0], sizes = [512, 16], strides = [1, 1]} : vector<512x64xbf16> to vector<512x16xbf16>
    %16 = vector.shape_cast %15 : vector<512x16xbf16> to vector<32x16x16xbf16>
    %17 = vector.extract_strided_slice %9 {offsets = [0, 0], sizes = [512, 16], strides = [1, 1]} : vector<512x64xbf16> to vector<512x16xbf16>
    %18 = vector.shape_cast %17 : vector<512x16xbf16> to vector<32x16x16xbf16>
    %19 = vector.extract_strided_slice %11 {offsets = [0, 0], sizes = [512, 8], strides = [1, 1]} : vector<512x32xbf16> to vector<512x8xbf16>
    %20 = vector.shape_cast %19 : vector<512x8xbf16> to vector<32x16x8xbf16>
    "tpu.trace_start"() <{level = 10 : i32, message = "bnd,bmd->bnm"}> : () -> ()
    %cst_11 = arith.constant dense<0.000000e+00> : vector<32x16x16xf32>
    %21 = tpu.matmul %16, %18, %cst_11 {dimension_numbers = #tpu.dot_dimension_numbers<[2], [2], [1], [1], [0, 0, 0, 1, 1, 1], [0], [0]>} : vector<32x16x16xbf16>, vector<32x16x16xbf16>, vector<32x16x16xf32> -> vector<32x16x16xf32>
    "tpu.trace_stop"() : () -> ()
    %22 = vector.extract_strided_slice %12 {offsets = [0, 0, 0], sizes = [1, 16, 16], strides = [1, 1, 1]} : vector<4x16x16xf32> to vector<1x16x16xf32>
    %23 = vector.shape_cast %22 : vector<1x16x16xf32> to vector<16x16xf32>
    %24 = vector.shape_cast %23 : vector<16x16xf32> to vector<1x16x16xf32>
    %25 = vector.broadcast %24 : vector<1x16x16xf32> to vector<32x16x16xf32>
    %26 = arith.addf %21, %25 : vector<32x16x16xf32>
    %cst_12 = arith.constant dense<0xFF800000> : vector<32x16xf32>
    %27 = vector.multi_reduction <maximumf>, %26, %cst_12 [2] : vector<32x16x16xf32> to vector<32x16xf32>
    %28 = vector.shape_cast %27 : vector<32x16xf32> to vector<32x16x1xf32>
    %29 = vector.broadcast %28 : vector<32x16x1xf32> to vector<32x16x16xf32>
    %30 = arith.subf %26, %29 : vector<32x16x16xf32>
    %31 = math.exp %30 : vector<32x16x16xf32>
    %cst_13 = arith.constant dense<0.000000e+00> : vector<32x16xf32>
    %32 = vector.multi_reduction <add>, %31, %cst_13 [2] : vector<32x16x16xf32> to vector<32x16xf32>
    %33 = vector.shape_cast %32 : vector<32x16xf32> to vector<32x16x1xf32>
    %34 = tpu.reciprocal %33 {approx = true} : vector<32x16x1xf32> -> vector<32x16x1xf32>
    %35 = vector.broadcast %34 : vector<32x16x1xf32> to vector<32x16x16xf32>
    %36 = arith.mulf %31, %35 : vector<32x16x16xf32>
    %37 = arith.truncf %36 : vector<32x16x16xf32> to vector<32x16x16xbf16>
    "tpu.trace_start"() <{level = 10 : i32, message = "bnm,bmd->bnd"}> : () -> ()
    %cst_14 = arith.constant dense<0.000000e+00> : vector<32x16x8xf32>
    %38 = tpu.matmul %37, %20, %cst_14 {dimension_numbers = #tpu.dot_dimension_numbers<[2], [1], [1], [2], [0, 0, 0, 1, 1, 2], [0], [0]>} : vector<32x16x16xbf16>, vector<32x16x8xbf16>, vector<32x16x8xf32> -> vector<32x16x8xf32>
    "tpu.trace_stop"() : () -> ()
    %39 = vector.shape_cast %38 : vector<32x16x8xf32> to vector<512x8xf32>
    %40 = arith.truncf %39 : vector<512x8xf32> to vector<512x8xbf16>
    %41 = vector.extract_strided_slice %13 {offsets = [0, 0], sizes = [8, 32], strides = [1, 1]} : vector<32x32xbf16> to vector<8x32xbf16>
    %cst_15 = arith.constant dense<0.000000e+00> : vector<512x32xf32>
    %42 = tpu.matmul %40, %41, %cst_15 {dimension_numbers = #tpu.dot_dimension_numbers<[1], [0], [0], [1], [0, 0, 1, 1], [], []>} : vector<512x8xbf16>, vector<8x32xbf16>, vector<512x32xf32> -> vector<512x32xf32>
    %43 = arith.addf %14, %42 : vector<512x32xf32>
    %44 = vector.extract_strided_slice %7 {offsets = [0, 16], sizes = [512, 16], strides = [1, 1]} : vector<512x64xbf16> to vector<512x16xbf16>
    %45 = vector.shape_cast %44 : vector<512x16xbf16> to vector<32x16x16xbf16>
    %46 = vector.extract_strided_slice %9 {offsets = [0, 16], sizes = [512, 16], strides = [1, 1]} : vector<512x64xbf16> to vector<512x16xbf16>
    %47 = vector.shape_cast %46 : vector<512x16xbf16> to vector<32x16x16xbf16>
    %48 = vector.extract_strided_slice %11 {offsets = [0, 8], sizes = [512, 8], strides = [1, 1]} : vector<512x32xbf16> to vector<512x8xbf16>
    %49 = vector.shape_cast %48 : vector<512x8xbf16> to vector<32x16x8xbf16>
    "tpu.trace_start"() <{level = 10 : i32, message = "bnd,bmd->bnm"}> : () -> ()
    %cst_16 = arith.constant dense<0.000000e+00> : vector<32x16x16xf32>
    %50 = tpu.matmul %45, %47, %cst_16 {dimension_numbers = #tpu.dot_dimension_numbers<[2], [2], [1], [1], [0, 0, 0, 1, 1, 1], [0], [0]>} : vector<32x16x16xbf16>, vector<32x16x16xbf16>, vector<32x16x16xf32> -> vector<32x16x16xf32>
    "tpu.trace_stop"() : () -> ()
    %51 = vector.extract_strided_slice %12 {offsets = [1, 0, 0], sizes = [1, 16, 16], strides = [1, 1, 1]} : vector<4x16x16xf32> to vector<1x16x16xf32>
    %52 = vector.shape_cast %51 : vector<1x16x16xf32> to vector<16x16xf32>
    %53 = vector.shape_cast %52 : vector<16x16xf32> to vector<1x16x16xf32>
    %54 = vector.broadcast %53 : vector<1x16x16xf32> to vector<32x16x16xf32>
    %55 = arith.addf %50, %54 : vector<32x16x16xf32>
    %cst_17 = arith.constant dense<0xFF800000> : vector<32x16xf32>
    %56 = vector.multi_reduction <maximumf>, %55, %cst_17 [2] : vector<32x16x16xf32> to vector<32x16xf32>
    %57 = vector.shape_cast %56 : vector<32x16xf32> to vector<32x16x1xf32>
    %58 = vector.broadcast %57 : vector<32x16x1xf32> to vector<32x16x16xf32>
    %59 = arith.subf %55, %58 : vector<32x16x16xf32>
    %60 = math.exp %59 : vector<32x16x16xf32>
    %cst_18 = arith.constant dense<0.000000e+00> : vector<32x16xf32>
    %61 = vector.multi_reduction <add>, %60, %cst_18 [2] : vector<32x16x16xf32> to vector<32x16xf32>
    %62 = vector.shape_cast %61 : vector<32x16xf32> to vector<32x16x1xf32>
    %63 = tpu.reciprocal %62 {approx = true} : vector<32x16x1xf32> -> vector<32x16x1xf32>
    %64 = vector.broadcast %63 : vector<32x16x1xf32> to vector<32x16x16xf32>
    %65 = arith.mulf %60, %64 : vector<32x16x16xf32>
    %66 = arith.truncf %65 : vector<32x16x16xf32> to vector<32x16x16xbf16>
    "tpu.trace_start"() <{level = 10 : i32, message = "bnm,bmd->bnd"}> : () -> ()
    %cst_19 = arith.constant dense<0.000000e+00> : vector<32x16x8xf32>
    %67 = tpu.matmul %66, %49, %cst_19 {dimension_numbers = #tpu.dot_dimension_numbers<[2], [1], [1], [2], [0, 0, 0, 1, 1, 2], [0], [0]>} : vector<32x16x16xbf16>, vector<32x16x8xbf16>, vector<32x16x8xf32> -> vector<32x16x8xf32>
    "tpu.trace_stop"() : () -> ()
    %68 = vector.shape_cast %67 : vector<32x16x8xf32> to vector<512x8xf32>
    %69 = arith.truncf %68 : vector<512x8xf32> to vector<512x8xbf16>
    %70 = vector.extract_strided_slice %13 {offsets = [8, 0], sizes = [8, 32], strides = [1, 1]} : vector<32x32xbf16> to vector<8x32xbf16>
    %cst_20 = arith.constant dense<0.000000e+00> : vector<512x32xf32>
    %71 = tpu.matmul %69, %70, %cst_20 {dimension_numbers = #tpu.dot_dimension_numbers<[1], [0], [0], [1], [0, 0, 1, 1], [], []>} : vector<512x8xbf16>, vector<8x32xbf16>, vector<512x32xf32> -> vector<512x32xf32>
    %72 = arith.addf %43, %71 : vector<512x32xf32>
    %73 = vector.extract_strided_slice %7 {offsets = [0, 32], sizes = [512, 16], strides = [1, 1]} : vector<512x64xbf16> to vector<512x16xbf16>
    %74 = vector.shape_cast %73 : vector<512x16xbf16> to vector<32x16x16xbf16>
    %75 = vector.extract_strided_slice %9 {offsets = [0, 32], sizes = [512, 16], strides = [1, 1]} : vector<512x64xbf16> to vector<512x16xbf16>
    %76 = vector.shape_cast %75 : vector<512x16xbf16> to vector<32x16x16xbf16>
    %77 = vector.extract_strided_slice %11 {offsets = [0, 16], sizes = [512, 8], strides = [1, 1]} : vector<512x32xbf16> to vector<512x8xbf16>
    %78 = vector.shape_cast %77 : vector<512x8xbf16> to vector<32x16x8xbf16>
    "tpu.trace_start"() <{level = 10 : i32, message = "bnd,bmd->bnm"}> : () -> ()
    %cst_21 = arith.constant dense<0.000000e+00> : vector<32x16x16xf32>
    %79 = tpu.matmul %74, %76, %cst_21 {dimension_numbers = #tpu.dot_dimension_numbers<[2], [2], [1], [1], [0, 0, 0, 1, 1, 1], [0], [0]>} : vector<32x16x16xbf16>, vector<32x16x16xbf16>, vector<32x16x16xf32> -> vector<32x16x16xf32>
    "tpu.trace_stop"() : () -> ()
    %80 = vector.extract_strided_slice %12 {offsets = [2, 0, 0], sizes = [1, 16, 16], strides = [1, 1, 1]} : vector<4x16x16xf32> to vector<1x16x16xf32>
    %81 = vector.shape_cast %80 : vector<1x16x16xf32> to vector<16x16xf32>
    %82 = vector.shape_cast %81 : vector<16x16xf32> to vector<1x16x16xf32>
    %83 = vector.broadcast %82 : vector<1x16x16xf32> to vector<32x16x16xf32>
    %84 = arith.addf %79, %83 : vector<32x16x16xf32>
    %cst_22 = arith.constant dense<0xFF800000> : vector<32x16xf32>
    %85 = vector.multi_reduction <maximumf>, %84, %cst_22 [2] : vector<32x16x16xf32> to vector<32x16xf32>
    %86 = vector.shape_cast %85 : vector<32x16xf32> to vector<32x16x1xf32>
    %87 = vector.broadcast %86 : vector<32x16x1xf32> to vector<32x16x16xf32>
    %88 = arith.subf %84, %87 : vector<32x16x16xf32>
    %89 = math.exp %88 : vector<32x16x16xf32>
    %cst_23 = arith.constant dense<0.000000e+00> : vector<32x16xf32>
    %90 = vector.multi_reduction <add>, %89, %cst_23 [2] : vector<32x16x16xf32> to vector<32x16xf32>
    %91 = vector.shape_cast %90 : vector<32x16xf32> to vector<32x16x1xf32>
    %92 = tpu.reciprocal %91 {approx = true} : vector<32x16x1xf32> -> vector<32x16x1xf32>
    %93 = vector.broadcast %92 : vector<32x16x1xf32> to vector<32x16x16xf32>
    %94 = arith.mulf %89, %93 : vector<32x16x16xf32>
    %95 = arith.truncf %94 : vector<32x16x16xf32> to vector<32x16x16xbf16>
    "tpu.trace_start"() <{level = 10 : i32, message = "bnm,bmd->bnd"}> : () -> ()
    %cst_24 = arith.constant dense<0.000000e+00> : vector<32x16x8xf32>
    %96 = tpu.matmul %95, %78, %cst_24 {dimension_numbers = #tpu.dot_dimension_numbers<[2], [1], [1], [2], [0, 0, 0, 1, 1, 2], [0], [0]>} : vector<32x16x16xbf16>, vector<32x16x8xbf16>, vector<32x16x8xf32> -> vector<32x16x8xf32>
    "tpu.trace_stop"() : () -> ()
    %97 = vector.shape_cast %96 : vector<32x16x8xf32> to vector<512x8xf32>
    %98 = arith.truncf %97 : vector<512x8xf32> to vector<512x8xbf16>
    %99 = vector.extract_strided_slice %13 {offsets = [16, 0], sizes = [8, 32], strides = [1, 1]} : vector<32x32xbf16> to vector<8x32xbf16>
    %cst_25 = arith.constant dense<0.000000e+00> : vector<512x32xf32>
    %100 = tpu.matmul %98, %99, %cst_25 {dimension_numbers = #tpu.dot_dimension_numbers<[1], [0], [0], [1], [0, 0, 1, 1], [], []>} : vector<512x8xbf16>, vector<8x32xbf16>, vector<512x32xf32> -> vector<512x32xf32>
    %101 = arith.addf %72, %100 : vector<512x32xf32>
    %102 = vector.extract_strided_slice %7 {offsets = [0, 48], sizes = [512, 16], strides = [1, 1]} : vector<512x64xbf16> to vector<512x16xbf16>
    %103 = vector.shape_cast %102 : vector<512x16xbf16> to vector<32x16x16xbf16>
    %104 = vector.extract_strided_slice %9 {offsets = [0, 48], sizes = [512, 16], strides = [1, 1]} : vector<512x64xbf16> to vector<512x16xbf16>
    %105 = vector.shape_cast %104 : vector<512x16xbf16> to vector<32x16x16xbf16>
    %106 = vector.extract_strided_slice %11 {offsets = [0, 24], sizes = [512, 8], strides = [1, 1]} : vector<512x32xbf16> to vector<512x8xbf16>
    %107 = vector.shape_cast %106 : vector<512x8xbf16> to vector<32x16x8xbf16>
    "tpu.trace_start"() <{level = 10 : i32, message = "bnd,bmd->bnm"}> : () -> ()
    %cst_26 = arith.constant dense<0.000000e+00> : vector<32x16x16xf32>
    %108 = tpu.matmul %103, %105, %cst_26 {dimension_numbers = #tpu.dot_dimension_numbers<[2], [2], [1], [1], [0, 0, 0, 1, 1, 1], [0], [0]>} : vector<32x16x16xbf16>, vector<32x16x16xbf16>, vector<32x16x16xf32> -> vector<32x16x16xf32>
    "tpu.trace_stop"() : () -> ()
    %109 = vector.extract_strided_slice %12 {offsets = [3, 0, 0], sizes = [1, 16, 16], strides = [1, 1, 1]} : vector<4x16x16xf32> to vector<1x16x16xf32>
    %110 = vector.shape_cast %109 : vector<1x16x16xf32> to vector<16x16xf32>
    %111 = vector.shape_cast %110 : vector<16x16xf32> to vector<1x16x16xf32>
    %112 = vector.broadcast %111 : vector<1x16x16xf32> to vector<32x16x16xf32>
    %113 = arith.addf %108, %112 : vector<32x16x16xf32>
    %cst_27 = arith.constant dense<0xFF800000> : vector<32x16xf32>
    %114 = vector.multi_reduction <maximumf>, %113, %cst_27 [2] : vector<32x16x16xf32> to vector<32x16xf32>
    %115 = vector.shape_cast %114 : vector<32x16xf32> to vector<32x16x1xf32>
    %116 = vector.broadcast %115 : vector<32x16x1xf32> to vector<32x16x16xf32>
    %117 = arith.subf %113, %116 : vector<32x16x16xf32>
    %118 = math.exp %117 : vector<32x16x16xf32>
    %cst_28 = arith.constant dense<0.000000e+00> : vector<32x16xf32>
    %119 = vector.multi_reduction <add>, %118, %cst_28 [2] : vector<32x16x16xf32> to vector<32x16xf32>
    %120 = vector.shape_cast %119 : vector<32x16xf32> to vector<32x16x1xf32>
    %121 = tpu.reciprocal %120 {approx = true} : vector<32x16x1xf32> -> vector<32x16x1xf32>
    %122 = vector.broadcast %121 : vector<32x16x1xf32> to vector<32x16x16xf32>
    %123 = arith.mulf %118, %122 : vector<32x16x16xf32>
    %124 = arith.truncf %123 : vector<32x16x16xf32> to vector<32x16x16xbf16>
    "tpu.trace_start"() <{level = 10 : i32, message = "bnm,bmd->bnd"}> : () -> ()
    %cst_29 = arith.constant dense<0.000000e+00> : vector<32x16x8xf32>
    %125 = tpu.matmul %124, %107, %cst_29 {dimension_numbers = #tpu.dot_dimension_numbers<[2], [1], [1], [2], [0, 0, 0, 1, 1, 2], [0], [0]>} : vector<32x16x16xbf16>, vector<32x16x8xbf16>, vector<32x16x8xf32> -> vector<32x16x8xf32>
    "tpu.trace_stop"() : () -> ()
    %126 = vector.shape_cast %125 : vector<32x16x8xf32> to vector<512x8xf32>
    %127 = arith.truncf %126 : vector<512x8xf32> to vector<512x8xbf16>
    %128 = vector.extract_strided_slice %13 {offsets = [24, 0], sizes = [8, 32], strides = [1, 1]} : vector<32x32xbf16> to vector<8x32xbf16>
    %cst_30 = arith.constant dense<0.000000e+00> : vector<512x32xf32>
    %129 = tpu.matmul %127, %128, %cst_30 {dimension_numbers = #tpu.dot_dimension_numbers<[1], [0], [0], [1], [0, 0, 1, 1], [], []>} : vector<512x8xbf16>, vector<8x32xbf16>, vector<512x32xf32> -> vector<512x32xf32>
    %130 = arith.addf %101, %129 : vector<512x32xf32>
    %c0_31 = arith.constant 0 : index
    %c0_32 = arith.constant 0 : index
    %131 = vector.load %arg6[%c0_31, %c0_32] : memref<1x32xf32, #tpu.memory_space<vmem>>, vector<1x32xf32>
    %132 = vector.broadcast %131 : vector<1x32xf32> to vector<512x32xf32>
    %133 = arith.addf %130, %132 : vector<512x32xf32>
    %c0_33 = arith.constant 0 : index
    %c0_34 = arith.constant 0 : index
    %134 = vector.load %arg7[%c0_33, %c0_34] : memref<512x32xf32, #tpu.memory_space<vmem>>, vector<512x32xf32>
    tpu.vector_store %arg7[%c0_33, %c0_34], %133 {strides = array<i32>} : memref<512x32xf32, #tpu.memory_space<vmem>>, vector<512x32xf32>,
    return
  }
  func.func @transform_0(%arg0: i32) -> (i32, i32) {
    %c0_i32 = arith.constant 0 : i32
    %c0_i32_0 = arith.constant 0 : i32
    return %arg0, %c0_i32 : i32, i32
  }
  func.func @transform_1(%arg0: i32) -> (i32, i32) {
    %c0_i32 = arith.constant 0 : i32
    %c0_i32_0 = arith.constant 0 : i32
    %c0_i32_1 = arith.constant 0 : i32
    return %c0_i32, %c0_i32_0 : i32, i32
  }
  func.func @transform_2(%arg0: i32) -> (i32, i32) {
    %c0_i32 = arith.constant 0 : i32
    %c0_i32_0 = arith.constant 0 : i32
    %c0_i32_1 = arith.constant 0 : i32
    return %c0_i32, %c0_i32_0 : i32, i32
  }
  func.func @transform_3(%arg0: i32) -> (i32, i32, i32) {
    %c0_i32 = arith.constant 0 : i32
    %c0_i32_0 = arith.constant 0 : i32
    %c0_i32_1 = arith.constant 0 : i32
    %c0_i32_2 = arith.constant 0 : i32
    return %c0_i32, %c0_i32_0, %c0_i32_1 : i32, i32, i32
  }
  func.func @transform_4(%arg0: i32) -> (i32, i32) {
    %c0_i32 = arith.constant 0 : i32
    %c0_i32_0 = arith.constant 0 : i32
    %c0_i32_1 = arith.constant 0 : i32
    return %c0_i32, %c0_i32_0 : i32, i32
  }
  func.func @transform_5(%arg0: i32) -> (i32, i32) {
    %c0_i32 = arith.constant 0 : i32
    %c0_i32_0 = arith.constant 0 : i32
    %c0_i32_1 = arith.constant 0 : i32
    return %c0_i32, %c0_i32_0 : i32, i32
  }
  func.func @transform_6(%arg0: i32) -> (i32, i32) {
    %c0_i32 = arith.constant 0 : i32
    %c0_i32_0 = arith.constant 0 : i32
    return %arg0, %c0_i32 : i32, i32
  }
}

</mosaic_0001>

<llo_original>
// kernel: tpu_custom_call.1
$region0: #{tpu_custom_call.1}
  #allocation0 [shape = 'u32[]', space=smem, size = 0x4, offset = 0x4, fixed_abs, tag = 'smem constant byte address 0x4 - core index']
  #allocation1 [shape = 'u32[72,128]{1,0:T(1,128)}', space=vmem, size = 0x9000, scoped, tag = 'internal scratch']
  %s0 = inlined_call_operand.vmem [shape: bf16[1024,32], index: 0, kind: input, shape index: {}]
  %s1 = inlined_call_operand.vmem [shape: bf16[32,160], index: 1, kind: input, shape index: {}]
  %s2 = inlined_call_operand.vmem [shape: f32[1,160], index: 2, kind: input, shape index: {}]
  %s3 = inlined_call_operand.vmem [shape: f32[4,16,16], index: 3, kind: input, shape index: {}]
  %s4 = inlined_call_operand.vmem [shape: bf16[32,32], index: 4, kind: input, shape index: {}]
  %s5 = inlined_call_operand.vmem [shape: f32[1,32], index: 5, kind: input, shape index: {}]
  %s6 = inlined_call_operand.vmem [shape: f32[1024,32], index: 6, kind: output, shape index: {}]
  %s7 = sld [smem:[#allocation0]]
  $region57: #{tpu_custom_call.1} parent=0
    _
  %s9 = ssub.s32 1, %s7
  %s10 = scalar_select 0, %s9, %s7
  loop: start=0, step=1, limit=4
  $region2: #{tpu_custom_call.1} parent=0 // loop_pre_header
    _
  $region3: #{tpu_custom_call.1} parent=0 // loop_header
    %s12 = sphi 0, %s16
    %p13 = scmp.ge.s32.totalorder %s12, 4
    %s22 = sphi 0, %s24
    %s25 = sphi 0, %s22
    %s26 = sphi 0, %s25
    %s42 = sphi 0, %s26
    %s46 = sphi 0, %s46
    %s48 = sphi 0, %s46
    %s49 = sphi 0, %s48
    %s63 = sphi 0, %s49
    %s67 = sphi 0, %s67
    %s69 = sphi 0, %s67
    %s70 = sphi 0, %s69
    %s84 = sphi 0, %s70
    %s88 = sphi 0, %s88
    %s90 = sphi 0, %s88
    %s91 = sphi 0, %s90
    %s105 = sphi 0, %s91
    %s109 = sphi 0, %s109
    %s111 = sphi 0, %s109
    %s112 = sphi 0, %s111
    %s126 = sphi 0, %s112
    %s130 = sphi 0, %s130
    %s132 = sphi 0, %s130
    %s133 = sphi 0, %s132
    %s147 = sphi 0, %s133
    %s153 = sphi 0, %s155
    %s156 = sphi 0, %s153
    %s157 = sphi 0, %s156
    %s173 = sphi 0, %s157
  $region4: #{tpu_custom_call.1} parent=0 // loop_header_branch
    %15 = sbr.rel (%p13) target = $region8
  $region5: #{tpu_custom_call.1} parent=0 // loop_body
    %s17 = ssub.s32 %s12, 1
    %s18 = ssub.s32 %s12, 2
    %s19 = sadd.s32 %s12, 1
    %s20 = ssub.s32 %s12, %s19
    %p21 = scmp.eq.s32.totalorder %s20, 0
    %s23 = sadd.s32 %s22, 1
    %s24 = scalar_select %p21, %s22, %s23
    %p27 = pneg %p21
    %p28 = scmp.eq.s32.totalorder %s12, 1
    %p29 = por %p27, %p28
    %p30 = scmp.ne.s32.totalorder %s22, %s25
    %p31 = scmp.eq.s32.totalorder %s12, 0
    %p32 = por %p30, %p31
    %p33 = scmp.ne.s32.totalorder %s22, %s25
    %p34 = scmp.eq.s32.totalorder %s17, 1
    %p35 = por %p33, %p34
    %p36 = scmp.ne.s32.totalorder %s25, %s26
    %p37 = scmp.eq.s32.totalorder %s17, 0
    %p38 = por %p36, %p37
    %p39 = scmp.ne.s32.totalorder %s25, %s26
    %p40 = scmp.eq.s32.totalorder %s18, 1
    %p41 = por %p39, %p40
    %p43 = scmp.ne.s32.totalorder %s26, %s42
    %p44 = scmp.eq.s32.totalorder %s18, 0
    %p45 = por %p43, %p44
    %s47 = sadd.s32 %s46, 1
    %p50 = scmp.eq.s32.totalorder %s12, 1
    %p51 = scmp.ne.s32.totalorder %s46, %s48
    %p52 = scmp.eq.s32.totalorder %s12, 0
    %p53 = por %p51, %p52
    %p54 = scmp.ne.s32.totalorder %s46, %s48
    %p55 = scmp.eq.s32.totalorder %s17, 1
    %p56 = por %p54, %p55
    %p57 = scmp.ne.s32.totalorder %s48, %s49
    %p58 = scmp.eq.s32.totalorder %s17, 0
    %p59 = por %p57, %p58
    %p60 = scmp.ne.s32.totalorder %s48, %s49
    %p61 = scmp.eq.s32.totalorder %s18, 1
    %p62 = por %p60, %p61
    %p64 = scmp.ne.s32.totalorder %s49, %s63
    %p65 = scmp.eq.s32.totalorder %s18, 0
    %p66 = por %p64, %p65
    %s68 = sadd.s32 %s67, 1
    %p71 = scmp.eq.s32.totalorder %s12, 1
    %p72 = scmp.ne.s32.totalorder %s67, %s69
    %p73 = scmp.eq.s32.totalorder %s12, 0
    %p74 = por %p72, %p73
    %p75 = scmp.ne.s32.totalorder %s67, %s69
    %p76 = scmp.eq.s32.totalorder %s17, 1
    %p77 = por %p75, %p76
    %p78 = scmp.ne.s32.totalorder %s69, %s70
    %p79 = scmp.eq.s32.totalorder %s17, 0
    %p80 = por %p78, %p79
    %p81 = scmp.ne.s32.totalorder %s69, %s70
    %p82 = scmp.eq.s32.totalorder %s18, 1
    %p83 = por %p81, %p82
    %p85 = scmp.ne.s32.totalorder %s70, %s84
    %p86 = scmp.eq.s32.totalorder %s18, 0
    %p87 = por %p85, %p86
    %s89 = sadd.s32 %s88, 1
    %p92 = scmp.eq.s32.totalorder %s12, 1
    %p93 = scmp.ne.s32.totalorder %s88, %s90
    %p94 = scmp.eq.s32.totalorder %s12, 0
    %p95 = por %p93, %p94
    %p96 = scmp.ne.s32.totalorder %s88, %s90
    %p97 = scmp.eq.s32.totalorder %s17, 1
    %p98 = por %p96, %p97
    %p99 = scmp.ne.s32.totalorder %s90, %s91
    %p100 = scmp.eq.s32.totalorder %s17, 0
    %p101 = por %p99, %p100
    %p102 = scmp.ne.s32.totalorder %s90, %s91
    %p103 = scmp.eq.s32.totalorder %s18, 1
    %p104 = por %p102, %p103
    %p106 = scmp.ne.s32.totalorder %s91, %s105
    %p107 = scmp.eq.s32.totalorder %s18, 0
    %p108 = por %p106, %p107
    %s110 = sadd.s32 %s109, 1
    %p113 = scmp.eq.s32.totalorder %s12, 1
    %p114 = scmp.ne.s32.totalorder %s109, %s111
    %p115 = scmp.eq.s32.totalorder %s12, 0
    %p116 = por %p114, %p115
    %p117 = scmp.ne.s32.totalorder %s109, %s111
    %p118 = scmp.eq.s32.totalorder %s17, 1
    %p119 = por %p117, %p118
    %p120 = scmp.ne.s32.totalorder %s111, %s112
    %p121 = scmp.eq.s32.totalorder %s17, 0
    %p122 = por %p120, %p121
    %p123 = scmp.ne.s32.totalorder %s111, %s112
    %p124 = scmp.eq.s32.totalorder %s18, 1
    %p125 = por %p123, %p124
    %p127 = scmp.ne.s32.totalorder %s112, %s126
    %p128 = scmp.eq.s32.totalorder %s18, 0
    %p129 = por %p127, %p128
    %s131 = sadd.s32 %s130, 1
    %p134 = scmp.eq.s32.totalorder %s12, 1
    %p135 = scmp.ne.s32.totalorder %s130, %s132
    %p136 = scmp.eq.s32.totalorder %s12, 0
    %p137 = por %p135, %p136
    %p138 = scmp.ne.s32.totalorder %s130, %s132
    %p139 = scmp.eq.s32.totalorder %s17, 1
    %p140 = por %p138, %p139
    %p141 = scmp.ne.s32.totalorder %s132, %s133
    %p142 = scmp.eq.s32.totalorder %s17, 0
    %p143 = por %p141, %p142
    %p144 = scmp.ne.s32.totalorder %s132, %s133
    %p145 = scmp.eq.s32.totalorder %s18, 1
    %p146 = por %p144, %p145
    %p148 = scmp.ne.s32.totalorder %s133, %s147
    %p149 = scmp.eq.s32.totalorder %s18, 0
    %p150 = por %p148, %p149
    %s151 = ssub.s32 %s12, %s19
    %p152 = scmp.eq.s32.totalorder %s151, 0
    %s154 = sadd.s32 %s153, 1
    %s155 = scalar_select %p152, %s153, %s154
    %p158 = pneg %p152
    %p159 = scmp.eq.s32.totalorder %s12, 1
    %p160 = por %p158, %p159
    %p161 = scmp.ne.s32.totalorder %s153, %s156
    %p162 = scmp.eq.s32.totalorder %s12, 0
    %p163 = por %p161, %p162
    %p164 = scmp.ne.s32.totalorder %s153, %s156
    %p165 = scmp.eq.s32.totalorder %s17, 1
    %p166 = por %p164, %p165
    %p167 = scmp.ne.s32.totalorder %s156, %s157
    %p168 = scmp.eq.s32.totalorder %s17, 0
    %p169 = por %p167, %p168
    %p170 = scmp.ne.s32.totalorder %s156, %s157
    %p171 = scmp.eq.s32.totalorder %s18, 1
    %p172 = por %p170, %p171
    %p174 = scmp.ne.s32.totalorder %s157, %s173
    %p175 = scmp.eq.s32.totalorder %s18, 0
    %p176 = por %p174, %p175
    %p177 = scmp.le.s32.totalorder 1, %s12
    %p178 = scmp.lt.s32.totalorder %s12, 3
    %p179 = pnand %p177, %p178
    %p180 = pneg %p179
    // Predicated region
    $region9: #{tpu_custom_call.1} parent=5 // pred_check
      _
    $region10: #{tpu_custom_call.1} parent=5 // pred_check_branch
      %182 = sbr.rel (%p179) target = $region12
    $region11: #{tpu_custom_call.1} parent=5 // pred_region
      %s183 = ssub.s32 %s12, 1
      // Predicated region
      $region13: #{tpu_custom_call.1} parent=11 // pred_check
        %p184 = pneg %p59
      $region14: #{tpu_custom_call.1} parent=11 // pred_check_branch
        %186 = sbr.rel (%p184) target = $region16
      $region15: #{tpu_custom_call.1} parent=11 // pred_region
        _
      $region16: #{tpu_custom_call.1} parent=11 // pred_fallthru
        _
      // Predicated region
      $region17: #{tpu_custom_call.1} parent=11 // pred_check
        %p187 = pneg %p80
      $region18: #{tpu_custom_call.1} parent=11 // pred_check_branch
        %189 = sbr.rel (%p187) target = $region20
      $region19: #{tpu_custom_call.1} parent=11 // pred_region
        _
      $region20: #{tpu_custom_call.1} parent=11 // pred_fallthru
        _
      // Predicated region
      $region21: #{tpu_custom_call.1} parent=11 // pred_check
        %p190 = pneg %p101
      $region22: #{tpu_custom_call.1} parent=11 // pred_check_branch
        %192 = sbr.rel (%p190) target = $region24
      $region23: #{tpu_custom_call.1} parent=11 // pred_region
        _
      $region24: #{tpu_custom_call.1} parent=11 // pred_fallthru
        _
      // Predicated region
      $region25: #{tpu_custom_call.1} parent=11 // pred_check
        %p193 = pneg %p122
      $region26: #{tpu_custom_call.1} parent=11 // pred_check_branch
        %195 = sbr.rel (%p193) target = $region28
      $region27: #{tpu_custom_call.1} parent=11 // pred_region
        _
      $region28: #{tpu_custom_call.1} parent=11 // pred_fallthru
        _
      // Predicated region
      $region29: #{tpu_custom_call.1} parent=11 // pred_check
        %p196 = pneg %p143
      $region30: #{tpu_custom_call.1} parent=11 // pred_check_branch
        %198 = sbr.rel (%p196) target = $region32
      $region31: #{tpu_custom_call.1} parent=11 // pred_region
        _
      $region32: #{tpu_custom_call.1} parent=11 // pred_fallthru
        _
    $region12: #{tpu_custom_call.1} parent=5 // pred_fallthru
      _
    %p199 = scmp.lt.s32.totalorder %s12, 2
    // Predicated region
    $region33: #{tpu_custom_call.1} parent=5 // pred_check
      %p200 = pneg %p199
    $region34: #{tpu_custom_call.1} parent=5 // pred_check_branch
      %202 = sbr.rel (%p200) target = $region36
    $region35: #{tpu_custom_call.1} parent=5 // pred_region
      // Predicated region
      $region37: #{tpu_custom_call.1} parent=35 // pred_check
        %p203 = pneg %p32
      $region38: #{tpu_custom_call.1} parent=35 // pred_check_branch
        %205 = sbr.rel (%p203) target = $region40
      $region39: #{tpu_custom_call.1} parent=35 // pred_region
        %s206 = smul.u32 64, %s12
        %p207 = scmp.lt.s32.totalorder %s206, 127
        %s208 = scalar_select %p207, %s206, 127
        %s209 = smul.addr %s208, 4
        %s210 = scalar_lea.vmem %s0, %s209
        %s211 = smul.u32 64, %s12
      $region40: #{tpu_custom_call.1} parent=35 // pred_fallthru
        _
    $region36: #{tpu_custom_call.1} parent=5 // pred_fallthru
      _
    %p212 = scmp.le.s32.totalorder 1, %s12
    %p213 = scmp.lt.s32.totalorder %s12, 3
    %p214 = pnand %p212, %p213
    %p215 = pneg %p214
    // Predicated region
    $region41: #{tpu_custom_call.1} parent=5 // pred_check
      _
    $region42: #{tpu_custom_call.1} parent=5 // pred_check_branch
      %217 = sbr.rel (%p214) target = $region44
    $region43: #{tpu_custom_call.1} parent=5 // pred_region
      %s218 = ssub.s32 %s12, 1
      %s219 = smul.u32 64, %s17
      %p220 = scmp.lt.s32.totalorder %s219, 127
      %s221 = scalar_select %p220, %s219, 127
      %s222 = smul.addr %s221, 4
      %s223 = scalar_lea.vmem %s0, %s222
      %p224 = pneg %p38
      %p225 = pneg %p35
      %p226 = pneg %p59
      %p227 = pneg %p56
      %p228 = pneg %p80
      %p229 = pneg %p77
      %p230 = pneg %p101
      %p231 = pneg %p98
      %p232 = pneg %p122
      %p233 = pneg %p119
      %p234 = pneg %p143
      %p235 = pneg %p140
      %p236 = pneg %p169
      %p237 = pneg %p166
      %s238 = smul.u32 64, %s17
      %p239 = scmp.lt.s32.totalorder %s238, 127
      %s240 = scalar_select %p239, %s238, 127
      %s241 = smul.addr %s240, 8
      %s242 = scalar_lea.vmem %s6, %s241
      %s243 = smul.u32 64, %s17
      %p244 = scmp.lt.s32.totalorder %s243, 127
      %s245 = scalar_select %p244, %s243, 127
      %s246 = smul.addr %s245, 4
      %s247 = scalar_lea.vmem %s0, %s246
      %s248 = smul.u32 64, %s17
      %s249 = smul.u32 64, %s17
      %p250 = scmp.lt.s32.totalorder %s249, 127
      %s251 = scalar_select %p250, %s249, 127
      %s252 = smul.addr %s251, 8
      %s253 = scalar_lea.vmem %s6, %s252
      %s254 = smul.u32 64, %s17
      %v256 = vld [vmem:[%s247] sm:$0xf]
      %v257 = vld [vmem:[%s247 + $0x4] sm:$0xf]
      %v258 = vld [vmem:[%s247 + $0x8] sm:$0xf]
      %v259 = vld [vmem:[%s247 + $0xc] sm:$0xf]
      %v260 = vld [vmem:[%s247 + $0x10] sm:$0xf]
      %v261 = vld [vmem:[%s247 + $0x14] sm:$0xf]
      %v262 = vld [vmem:[%s247 + $0x18] sm:$0xf]
      %v263 = vld [vmem:[%s247 + $0x1c] sm:$0xf]
      %v264 = vld [vmem:[%s247 + $0x20] sm:$0xf]
      %v265 = vld [vmem:[%s247 + $0x24] sm:$0xf]
      %v266 = vld [vmem:[%s247 + $0x28] sm:$0xf]
      %v267 = vld [vmem:[%s247 + $0x2c] sm:$0xf]
      %v268 = vld [vmem:[%s247 + $0x30] sm:$0xf]
      %v269 = vld [vmem:[%s247 + $0x34] sm:$0xf]
      %v270 = vld [vmem:[%s247 + $0x38] sm:$0xf]
      %v271 = vld [vmem:[%s247 + $0x3c] sm:$0xf]
      %v272 = vld [vmem:[%s247 + $0x40] sm:$0xf]
      %v273 = vld [vmem:[%s247 + $0x44] sm:$0xf]
      %v274 = vld [vmem:[%s247 + $0x48] sm:$0xf]
      %v275 = vld [vmem:[%s247 + $0x4c] sm:$0xf]
      %v276 = vld [vmem:[%s247 + $0x50] sm:$0xf]
      %v277 = vld [vmem:[%s247 + $0x54] sm:$0xf]
      %v278 = vld [vmem:[%s247 + $0x58] sm:$0xf]
      %v279 = vld [vmem:[%s247 + $0x5c] sm:$0xf]
      %v280 = vld [vmem:[%s247 + $0x60] sm:$0xf]
      %v281 = vld [vmem:[%s247 + $0x64] sm:$0xf]
      %v282 = vld [vmem:[%s247 + $0x68] sm:$0xf]
      %v283 = vld [vmem:[%s247 + $0x6c] sm:$0xf]
      %v284 = vld [vmem:[%s247 + $0x70] sm:$0xf]
      %v285 = vld [vmem:[%s247 + $0x74] sm:$0xf]
      %v286 = vld [vmem:[%s247 + $0x78] sm:$0xf]
      %v287 = vld [vmem:[%s247 + $0x7c] sm:$0xf]
      %v288 = vld [vmem:[%s247 + $0x80] sm:$0xf]
      %v289 = vld [vmem:[%s247 + $0x84] sm:$0xf]
      %v290 = vld [vmem:[%s247 + $0x88] sm:$0xf]
      %v291 = vld [vmem:[%s247 + $0x8c] sm:$0xf]
      %v292 = vld [vmem:[%s247 + $0x90] sm:$0xf]
      %v293 = vld [vmem:[%s247 + $0x94] sm:$0xf]
      %v294 = vld [vmem:[%s247 + $0x98] sm:$0xf]
      %v295 = vld [vmem:[%s247 + $0x9c] sm:$0xf]
      %v296 = vld [vmem:[%s247 + $0xa0] sm:$0xf]
      %v297 = vld [vmem:[%s247 + $0xa4] sm:$0xf]
      %v298 = vld [vmem:[%s247 + $0xa8] sm:$0xf]
      %v299 = vld [vmem:[%s247 + $0xac] sm:$0xf]
      %v300 = vld [vmem:[%s247 + $0xb0] sm:$0xf]
      %v301 = vld [vmem:[%s247 + $0xb4] sm:$0xf]
      %v302 = vld [vmem:[%s247 + $0xb8] sm:$0xf]
      %v303 = vld [vmem:[%s247 + $0xbc] sm:$0xf]
      %v304 = vld [vmem:[%s247 + $0xc0] sm:$0xf]
      %v305 = vld [vmem:[%s247 + $0xc4] sm:$0xf]
      %v306 = vld [vmem:[%s247 + $0xc8] sm:$0xf]
      %v307 = vld [vmem:[%s247 + $0xcc] sm:$0xf]
      %v308 = vld [vmem:[%s247 + $0xd0] sm:$0xf]
      %v309 = vld [vmem:[%s247 + $0xd4] sm:$0xf]
      %v310 = vld [vmem:[%s247 + $0xd8] sm:$0xf]
      %v311 = vld [vmem:[%s247 + $0xdc] sm:$0xf]
      %v312 = vld [vmem:[%s247 + $0xe0] sm:$0xf]
      %v313 = vld [vmem:[%s247 + $0xe4] sm:$0xf]
      %v314 = vld [vmem:[%s247 + $0xe8] sm:$0xf]
      %v315 = vld [vmem:[%s247 + $0xec] sm:$0xf]
      %v316 = vld [vmem:[%s247 + $0xf0] sm:$0xf]
      %v317 = vld [vmem:[%s247 + $0xf4] sm:$0xf]
      %v318 = vld [vmem:[%s247 + $0xf8] sm:$0xf]
      %v319 = vld [vmem:[%s247 + $0xfc] sm:$0xf]
      %v320 = vld [vmem:[%s1] sm:$0xff]
      %v321 = vld [vmem:[%s1 + $0x8] sm:$0xff]
      %v322 = vld [vmem:[%s1 + $0x10] sm:$0xff]
      %v323 = vld [vmem:[%s1 + $0x18] sm:$0xff]
      %v324 = vld [vmem:[%s2] sm:$0x3]
      %v326 = vperm.slane %v324, 0
      %v327 = vperm.slane %v324, 1
      %v394 = vunpack.c.l.b16 %v256
      %v395 = vunpack.c.l.b16 %v257
      %v396 = vunpack.c.l.b16 %v258
      %v397 = vunpack.c.l.b16 %v259
      %v398 = vunpack.c.l.b16 %v260
      %v399 = vunpack.c.l.b16 %v261
      %v400 = vunpack.c.l.b16 %v262
      %v401 = vunpack.c.l.b16 %v263
      %v402 = vunpack.c.l.b16 %v264
      %v403 = vunpack.c.l.b16 %v265
      %v404 = vunpack.c.l.b16 %v266
      %v405 = vunpack.c.l.b16 %v267
      %v406 = vunpack.c.l.b16 %v268
      %v407 = vunpack.c.l.b16 %v269
      %v408 = vunpack.c.l.b16 %v270
      %v409 = vunpack.c.l.b16 %v271
      %v410 = vunpack.c.l.b16 %v272
      %v411 = vunpack.c.l.b16 %v273
      %v412 = vunpack.c.l.b16 %v274
      %v413 = vunpack.c.l.b16 %v275
      %v414 = vunpack.c.l.b16 %v276
      %v415 = vunpack.c.l.b16 %v277
      %v416 = vunpack.c.l.b16 %v278
      %v417 = vunpack.c.l.b16 %v279
      %v418 = vunpack.c.l.b16 %v280
      %v419 = vunpack.c.l.b16 %v281
      %v420 = vunpack.c.l.b16 %v282
      %v421 = vunpack.c.l.b16 %v283
      %v422 = vunpack.c.l.b16 %v284
      %v423 = vunpack.c.l.b16 %v285
      %v424 = vunpack.c.l.b16 %v286
      %v425 = vunpack.c.l.b16 %v287
      %v426 = vunpack.c.l.b16 %v288
      %v427 = vunpack.c.l.b16 %v289
      %v428 = vunpack.c.l.b16 %v290
      %v429 = vunpack.c.l.b16 %v291
      %v430 = vunpack.c.l.b16 %v292
      %v431 = vunpack.c.l.b16 %v293
      %v432 = vunpack.c.l.b16 %v294
      %v433 = vunpack.c.l.b16 %v295
      %v434 = vunpack.c.l.b16 %v296
      %v435 = vunpack.c.l.b16 %v297
      %v436 = vunpack.c.l.b16 %v298
      %v437 = vunpack.c.l.b16 %v299
      %v438 = vunpack.c.l.b16 %v300
      %v439 = vunpack.c.l.b16 %v301
      %v440 = vunpack.c.l.b16 %v302
      %v441 = vunpack.c.l.b16 %v303
      %v442 = vunpack.c.l.b16 %v304
      %v443 = vunpack.c.l.b16 %v305
      %v444 = vunpack.c.l.b16 %v306
      %v445 = vunpack.c.l.b16 %v307
      %v446 = vunpack.c.l.b16 %v308
      %v447 = vunpack.c.l.b16 %v309
      %v448 = vunpack.c.l.b16 %v310
      %v449 = vunpack.c.l.b16 %v311
      %v450 = vunpack.c.l.b16 %v312
      %v451 = vunpack.c.l.b16 %v313
      %v452 = vunpack.c.l.b16 %v314
      %v453 = vunpack.c.l.b16 %v315
      %v454 = vunpack.c.l.b16 %v316
      %v455 = vunpack.c.l.b16 %v317
      %v456 = vunpack.c.l.b16 %v318
      %v457 = vunpack.c.l.b16 %v319
      %v458 = vpack.c.b16 %v395, %v394
      %v459 = vpack.c.b16 %v397, %v396
      %v460 = vpack.c.b16 %v399, %v398
      %v461 = vpack.c.b16 %v401, %v400
      %v462 = vpack.c.b16 %v403, %v402
      %v463 = vpack.c.b16 %v405, %v404
      %v464 = vpack.c.b16 %v407, %v406
      %v465 = vpack.c.b16 %v409, %v408
      %v466 = vpack.c.b16 %v411, %v410
      %v467 = vpack.c.b16 %v413, %v412
      %v468 = vpack.c.b16 %v415, %v414
      %v469 = vpack.c.b16 %v417, %v416
      %v470 = vpack.c.b16 %v419, %v418
      %v471 = vpack.c.b16 %v421, %v420
      %v472 = vpack.c.b16 %v423, %v422
      %v473 = vpack.c.b16 %v425, %v424
      %v474 = vpack.c.b16 %v427, %v426
      %v475 = vpack.c.b16 %v429, %v428
      %v476 = vpack.c.b16 %v431, %v430
      %v477 = vpack.c.b16 %v433, %v432
      %v478 = vpack.c.b16 %v435, %v434
      %v479 = vpack.c.b16 %v437, %v436
      %v480 = vpack.c.b16 %v439, %v438
      %v481 = vpack.c.b16 %v441, %v440
      %v482 = vpack.c.b16 %v443, %v442
      %v483 = vpack.c.b16 %v445, %v444
      %v484 = vpack.c.b16 %v447, %v446
      %v485 = vpack.c.b16 %v449, %v448
      %v486 = vpack.c.b16 %v451, %v450
      %v487 = vpack.c.b16 %v453, %v452
      %v488 = vpack.c.b16 %v455, %v454
      %v489 = vpack.c.b16 %v457, %v456
      %v494 = vunpack.c.l.b16 %v320
      %v495 = vunpack.c.h.b16 %v320
      %v496 = vunpack.c.l.b16 %v321
      %v497 = vunpack.c.h.b16 %v321
      %v498 = vunpack.c.l.b16 %v322
      %v499 = vunpack.c.h.b16 %v322
      %v500 = vunpack.c.l.b16 %v323
      %v501 = vunpack.c.h.b16 %v323
      %v502 = vpack.c.b16 %v496, %v494
      %v503 = vpack.c.b16 %v497, %v495
      %v504 = vpack.c.b16 %v500, %v498
      %v505 = vpack.c.b16 %v501, %v499
      %vm510 = vcmask 261120
      %v512 = vsel %vm510, %v458, 0
      %v515 = vsel %vm510, %v459, 0
      %v518 = vsel %vm510, %v460, 0
      %v521 = vsel %vm510, %v461, 0
      %v524 = vsel %vm510, %v462, 0
      %v527 = vsel %vm510, %v463, 0
      %v530 = vsel %vm510, %v464, 0
      %v533 = vsel %vm510, %v465, 0
      %v536 = vsel %vm510, %v466, 0
      %v539 = vsel %vm510, %v467, 0
      %v542 = vsel %vm510, %v468, 0
      %v545 = vsel %vm510, %v469, 0
      %v548 = vsel %vm510, %v470, 0
      %v551 = vsel %vm510, %v471, 0
      %v554 = vsel %vm510, %v472, 0
      %v557 = vsel %vm510, %v473, 0
      %v560 = vsel %vm510, %v474, 0
      %v563 = vsel %vm510, %v475, 0
      %v566 = vsel %vm510, %v476, 0
      %v569 = vsel %vm510, %v477, 0
      %v572 = vsel %vm510, %v478, 0
      %v575 = vsel %vm510, %v479, 0
      %v578 = vsel %vm510, %v480, 0
      %v581 = vsel %vm510, %v481, 0
      %v584 = vsel %vm510, %v482, 0
      %v587 = vsel %vm510, %v483, 0
      %v590 = vsel %vm510, %v484, 0
      %v593 = vsel %vm510, %v485, 0
      %v596 = vsel %vm510, %v486, 0
      %v599 = vsel %vm510, %v487, 0
      %v602 = vsel %vm510, %v488, 0
      %v605 = vsel %vm510, %v489, 0
      %607 = vmatpush.bf16.msra.mxu0 0
      %608 = vmatpush.bf16.msra.mxu0 0
      %609 = vmatpush.bf16.msra.mxu0 0
      %610 = vmatpush.bf16.msra.mxu0 0
      %611 = vmatpush.bf16.msra.mxu0 0
      %612 = vmatpush.bf16.msra.mxu0 0
      %613 = vmatpush.bf16.msra.mxu0 %v504
      %614 = vmatpush.bf16.msra.mxu0 %v502
      %615 = vmatmul.bf16.gmra.mxu0 %v512
      %v616 = vpop.f32.mrf.mxu0
      %v617 = vadd.f32 %v326, %v616
      %v618 = vpop.f32.mrf.mxu0
      %v619 = vadd.f32 %v326, %v618
      %620 = vmatmul.bf16.gmra.mxu0 %v515
      %v621 = vpop.f32.mrf.mxu0
      %v622 = vadd.f32 %v326, %v621
      %v623 = vpop.f32.mrf.mxu0
      %v624 = vadd.f32 %v326, %v623
      %625 = vmatmul.bf16.gmra.mxu0 %v518
      %v626 = vpop.f32.mrf.mxu0
      %v627 = vadd.f32 %v326, %v626
      %v628 = vpop.f32.mrf.mxu0
      %v629 = vadd.f32 %v326, %v628
      %630 = vmatmul.bf16.gmra.mxu0 %v521
      %v631 = vpop.f32.mrf.mxu0
      %v632 = vadd.f32 %v326, %v631
      %v633 = vpop.f32.mrf.mxu0
      %v634 = vadd.f32 %v326, %v633
      %635 = vmatmul.bf16.gmra.mxu0 %v524
      %v636 = vpop.f32.mrf.mxu0
      %v637 = vadd.f32 %v326, %v636
      %v638 = vpop.f32.mrf.mxu0
      %v639 = vadd.f32 %v326, %v638
      %640 = vmatmul.bf16.gmra.mxu0 %v527
      %v641 = vpop.f32.mrf.mxu0
      %v642 = vadd.f32 %v326, %v641
      %v643 = vpop.f32.mrf.mxu0
      %v644 = vadd.f32 %v326, %v643
      %645 = vmatmul.bf16.gmra.mxu0 %v530
      %v646 = vpop.f32.mrf.mxu0
      %v647 = vadd.f32 %v326, %v646
      %v648 = vpop.f32.mrf.mxu0
      %v649 = vadd.f32 %v326, %v648
      %650 = vmatmul.bf16.gmra.mxu0 %v533
      %v651 = vpop.f32.mrf.mxu0
      %v652 = vadd.f32 %v326, %v651
      %v653 = vpop.f32.mrf.mxu0
      %v654 = vadd.f32 %v326, %v653
      %655 = vmatmul.bf16.gmra.mxu0 %v536
      %v656 = vpop.f32.mrf.mxu0
      %v657 = vadd.f32 %v326, %v656
      %v658 = vpop.f32.mrf.mxu0
      %v659 = vadd.f32 %v326, %v658
      %660 = vmatmul.bf16.gmra.mxu0 %v539
      %v661 = vpop.f32.mrf.mxu0
      %v662 = vadd.f32 %v326, %v661
      %v663 = vpop.f32.mrf.mxu0
      %v664 = vadd.f32 %v326, %v663
      %665 = vmatmul.bf16.gmra.mxu0 %v542
      %v666 = vpop.f32.mrf.mxu0
      %v667 = vadd.f32 %v326, %v666
      %v668 = vpop.f32.mrf.mxu0
      %v669 = vadd.f32 %v326, %v668
      %670 = vmatmul.bf16.gmra.mxu0 %v545
      %v671 = vpop.f32.mrf.mxu0
      %v672 = vadd.f32 %v326, %v671
      %v673 = vpop.f32.mrf.mxu0
      %v674 = vadd.f32 %v326, %v673
      %675 = vmatmul.bf16.gmra.mxu0 %v548
      %v676 = vpop.f32.mrf.mxu0
      %v677 = vadd.f32 %v326, %v676
      %v678 = vpop.f32.mrf.mxu0
      %v679 = vadd.f32 %v326, %v678
      %680 = vmatmul.bf16.gmra.mxu0 %v551
      %v681 = vpop.f32.mrf.mxu0
      %v682 = vadd.f32 %v326, %v681
      %v683 = vpop.f32.mrf.mxu0
      %v684 = vadd.f32 %v326, %v683
      %685 = vmatmul.bf16.gmra.mxu0 %v554
      %v686 = vpop.f32.mrf.mxu0
      %v687 = vadd.f32 %v326, %v686
      %v688 = vpop.f32.mrf.mxu0
      %v689 = vadd.f32 %v326, %v688
      %690 = vmatmul.bf16.gmra.mxu0 %v557
      %v691 = vpop.f32.mrf.mxu0
      %v692 = vadd.f32 %v326, %v691
      %v693 = vpop.f32.mrf.mxu0
      %v694 = vadd.f32 %v326, %v693
      %695 = vmatmul.bf16.gmra.mxu0 %v560
      %v696 = vpop.f32.mrf.mxu0
      %v697 = vadd.f32 %v326, %v696
      %v698 = vpop.f32.mrf.mxu0
      %v699 = vadd.f32 %v326, %v698
      %700 = vmatmul.bf16.gmra.mxu0 %v563
      %v701 = vpop.f32.mrf.mxu0
      %v702 = vadd.f32 %v326, %v701
      %v703 = vpop.f32.mrf.mxu0
      %v704 = vadd.f32 %v326, %v703
      %705 = vmatmul.bf16.gmra.mxu0 %v566
      %v706 = vpop.f32.mrf.mxu0
      %v707 = vadd.f32 %v326, %v706
      %v708 = vpop.f32.mrf.mxu0
      %v709 = vadd.f32 %v326, %v708
      %710 = vmatmul.bf16.gmra.mxu0 %v569
      %v711 = vpop.f32.mrf.mxu0
      %v712 = vadd.f32 %v326, %v711
      %v713 = vpop.f32.mrf.mxu0
      %v714 = vadd.f32 %v326, %v713
      %715 = vmatmul.bf16.gmra.mxu0 %v572
      %v716 = vpop.f32.mrf.mxu0
      %v717 = vadd.f32 %v326, %v716
      %v718 = vpop.f32.mrf.mxu0
      %v719 = vadd.f32 %v326, %v718
      %720 = vmatmul.bf16.gmra.mxu0 %v575
      %v721 = vpop.f32.mrf.mxu0
      %v722 = vadd.f32 %v326, %v721
      %v723 = vpop.f32.mrf.mxu0
      %v724 = vadd.f32 %v326, %v723
      %725 = vmatmul.bf16.gmra.mxu0 %v578
      %v726 = vpop.f32.mrf.mxu0
      %v727 = vadd.f32 %v326, %v726
      %v728 = vpop.f32.mrf.mxu0
      %v729 = vadd.f32 %v326, %v728
      %730 = vmatmul.bf16.gmra.mxu0 %v581
      %v731 = vpop.f32.mrf.mxu0
      %v732 = vadd.f32 %v326, %v731
      %v733 = vpop.f32.mrf.mxu0
      %v734 = vadd.f32 %v326, %v733
      %735 = vmatmul.bf16.gmra.mxu0 %v584
      %v736 = vpop.f32.mrf.mxu0
      %v737 = vadd.f32 %v326, %v736
      %v738 = vpop.f32.mrf.mxu0
      %v739 = vadd.f32 %v326, %v738
      %740 = vmatmul.bf16.gmra.mxu0 %v587
      %v741 = vpop.f32.mrf.mxu0
      %v742 = vadd.f32 %v326, %v741
      %v743 = vpop.f32.mrf.mxu0
      %v744 = vadd.f32 %v326, %v743
      %745 = vmatmul.bf16.gmra.mxu0 %v590
      %v746 = vpop.f32.mrf.mxu0
      %v747 = vadd.f32 %v326, %v746
      %v748 = vpop.f32.mrf.mxu0
      %v749 = vadd.f32 %v326, %v748
      %750 = vmatmul.bf16.gmra.mxu0 %v593
      %v751 = vpop.f32.mrf.mxu0
      %v752 = vadd.f32 %v326, %v751
      %v753 = vpop.f32.mrf.mxu0
      %v754 = vadd.f32 %v326, %v753
      %755 = vmatmul.bf16.gmra.mxu0 %v596
      %v756 = vpop.f32.mrf.mxu0
      %v757 = vadd.f32 %v326, %v756
      %v758 = vpop.f32.mrf.mxu0
      %v759 = vadd.f32 %v326, %v758
      %760 = vmatmul.bf16.gmra.mxu0 %v599
      %v761 = vpop.f32.mrf.mxu0
      %v762 = vadd.f32 %v326, %v761
      %v763 = vpop.f32.mrf.mxu0
      %v764 = vadd.f32 %v326, %v763
      %765 = vmatmul.bf16.gmra.mxu0 %v602
      %v766 = vpop.f32.mrf.mxu0
      %v767 = vadd.f32 %v326, %v766
      %v768 = vpop.f32.mrf.mxu0
      %v769 = vadd.f32 %v326, %v768
      %770 = vmatmul.bf16.gmra.mxu0 %v605
      %v771 = vpop.f32.mrf.mxu0
      %v772 = vadd.f32 %v326, %v771
      %v773 = vpop.f32.mrf.mxu0
      %v774 = vadd.f32 %v326, %v773
      %775 = vdwg.mxu0
      %776 = vmatpush.bf16.msra.mxu0 0
      %777 = vmatpush.bf16.msra.mxu0 0
      %778 = vmatpush.bf16.msra.mxu0 0
      %779 = vmatpush.bf16.msra.mxu0 0
      %780 = vmatpush.bf16.msra.mxu0 0
      %781 = vmatpush.bf16.msra.mxu0 0
      %782 = vmatpush.bf16.msra.mxu0 %v505
      %783 = vmatpush.bf16.msra.mxu0 %v503
      %784 = vmatmul.bf16.gmra.mxu0 %v512
      %v785 = vpop.f32.mrf.mxu0
      %v786 = vadd.f32 %v327, %v785
      %v787 = vpop.f32.mrf.mxu0
      %v788 = vadd.f32 %v327, %v787
      %789 = vmatmul.bf16.gmra.mxu0 %v515
      %v790 = vpop.f32.mrf.mxu0
      %v791 = vadd.f32 %v327, %v790
      %v792 = vpop.f32.mrf.mxu0
      %v793 = vadd.f32 %v327, %v792
      %794 = vmatmul.bf16.gmra.mxu0 %v518
      %v795 = vpop.f32.mrf.mxu0
      %v796 = vadd.f32 %v327, %v795
      %v797 = vpop.f32.mrf.mxu0
      %v798 = vadd.f32 %v327, %v797
      %799 = vmatmul.bf16.gmra.mxu0 %v521
      %v800 = vpop.f32.mrf.mxu0
      %v801 = vadd.f32 %v327, %v800
      %v802 = vpop.f32.mrf.mxu0
      %v803 = vadd.f32 %v327, %v802
      %804 = vmatmul.bf16.gmra.mxu0 %v524
      %v805 = vpop.f32.mrf.mxu0
      %v806 = vadd.f32 %v327, %v805
      %v807 = vpop.f32.mrf.mxu0
      %v808 = vadd.f32 %v327, %v807
      %809 = vmatmul.bf16.gmra.mxu0 %v527
      %v810 = vpop.f32.mrf.mxu0
      %v811 = vadd.f32 %v327, %v810
      %v812 = vpop.f32.mrf.mxu0
      %v813 = vadd.f32 %v327, %v812
      %814 = vmatmul.bf16.gmra.mxu0 %v530
      %v815 = vpop.f32.mrf.mxu0
      %v816 = vadd.f32 %v327, %v815
      %v817 = vpop.f32.mrf.mxu0
      %v818 = vadd.f32 %v327, %v817
      %819 = vmatmul.bf16.gmra.mxu0 %v533
      %v820 = vpop.f32.mrf.mxu0
      %v821 = vadd.f32 %v327, %v820
      %v822 = vpop.f32.mrf.mxu0
      %v823 = vadd.f32 %v327, %v822
      %824 = vmatmul.bf16.gmra.mxu0 %v536
      %v825 = vpop.f32.mrf.mxu0
      %v826 = vadd.f32 %v327, %v825
      %v827 = vpop.f32.mrf.mxu0
      %v828 = vadd.f32 %v327, %v827
      %829 = vmatmul.bf16.gmra.mxu0 %v539
      %v830 = vpop.f32.mrf.mxu0
      %v831 = vadd.f32 %v327, %v830
      %v832 = vpop.f32.mrf.mxu0
      %v833 = vadd.f32 %v327, %v832
      %834 = vmatmul.bf16.gmra.mxu0 %v542
      %v835 = vpop.f32.mrf.mxu0
      %v836 = vadd.f32 %v327, %v835
      %v837 = vpop.f32.mrf.mxu0
      %v838 = vadd.f32 %v327, %v837
      %839 = vmatmul.bf16.gmra.mxu0 %v545
      %v840 = vpop.f32.mrf.mxu0
      %v841 = vadd.f32 %v327, %v840
      %v842 = vpop.f32.mrf.mxu0
      %v843 = vadd.f32 %v327, %v842
      %844 = vmatmul.bf16.gmra.mxu0 %v548
      %v845 = vpop.f32.mrf.mxu0
      %v846 = vadd.f32 %v327, %v845
      %v847 = vpop.f32.mrf.mxu0
      %v848 = vadd.f32 %v327, %v847
      %849 = vmatmul.bf16.gmra.mxu0 %v551
      %v850 = vpop.f32.mrf.mxu0
      %v851 = vadd.f32 %v327, %v850
      %v852 = vpop.f32.mrf.mxu0
      %v853 = vadd.f32 %v327, %v852
      %854 = vmatmul.bf16.gmra.mxu0 %v554
      %v855 = vpop.f32.mrf.mxu0
      %v856 = vadd.f32 %v327, %v855
      %v857 = vpop.f32.mrf.mxu0
      %v858 = vadd.f32 %v327, %v857
      %859 = vmatmul.bf16.gmra.mxu0 %v557
      %v860 = vpop.f32.mrf.mxu0
      %v861 = vadd.f32 %v327, %v860
      %v862 = vpop.f32.mrf.mxu0
      %v863 = vadd.f32 %v327, %v862
      %864 = vmatmul.bf16.gmra.mxu0 %v560
      %v865 = vpop.f32.mrf.mxu0
      %v866 = vadd.f32 %v327, %v865
      %v867 = vpop.f32.mrf.mxu0
      %v868 = vadd.f32 %v327, %v867
      %869 = vmatmul.bf16.gmra.mxu0 %v563
      %v870 = vpop.f32.mrf.mxu0
      %v871 = vadd.f32 %v327, %v870
      %v872 = vpop.f32.mrf.mxu0
      %v873 = vadd.f32 %v327, %v872
      %874 = vmatmul.bf16.gmra.mxu0 %v566
      %v875 = vpop.f32.mrf.mxu0
      %v876 = vadd.f32 %v327, %v875
      %v877 = vpop.f32.mrf.mxu0
      %v878 = vadd.f32 %v327, %v877
      %879 = vmatmul.bf16.gmra.mxu0 %v569
      %v880 = vpop.f32.mrf.mxu0
      %v881 = vadd.f32 %v327, %v880
      %v882 = vpop.f32.mrf.mxu0
      %v883 = vadd.f32 %v327, %v882
      %884 = vmatmul.bf16.gmra.mxu0 %v572
      %v885 = vpop.f32.mrf.mxu0
      %v886 = vadd.f32 %v327, %v885
      %v887 = vpop.f32.mrf.mxu0
      %v888 = vadd.f32 %v327, %v887
      %889 = vmatmul.bf16.gmra.mxu0 %v575
      %v890 = vpop.f32.mrf.mxu0
      %v891 = vadd.f32 %v327, %v890
      %v892 = vpop.f32.mrf.mxu0
      %v893 = vadd.f32 %v327, %v892
      %894 = vmatmul.bf16.gmra.mxu0 %v578
      %v895 = vpop.f32.mrf.mxu0
      %v896 = vadd.f32 %v327, %v895
      %v897 = vpop.f32.mrf.mxu0
      %v898 = vadd.f32 %v327, %v897
      %899 = vmatmul.bf16.gmra.mxu0 %v581
      %v900 = vpop.f32.mrf.mxu0
      %v901 = vadd.f32 %v327, %v900
      %v902 = vpop.f32.mrf.mxu0
      %v903 = vadd.f32 %v327, %v902
      %904 = vmatmul.bf16.gmra.mxu0 %v584
      %v905 = vpop.f32.mrf.mxu0
      %v906 = vadd.f32 %v327, %v905
      %v907 = vpop.f32.mrf.mxu0
      %v908 = vadd.f32 %v327, %v907
      %909 = vmatmul.bf16.gmra.mxu0 %v587
      %v910 = vpop.f32.mrf.mxu0
      %v911 = vadd.f32 %v327, %v910
      %v912 = vpop.f32.mrf.mxu0
      %v913 = vadd.f32 %v327, %v912
      %914 = vmatmul.bf16.gmra.mxu0 %v590
      %v915 = vpop.f32.mrf.mxu0
      %v916 = vadd.f32 %v327, %v915
      %v917 = vpop.f32.mrf.mxu0
      %v918 = vadd.f32 %v327, %v917
      %919 = vmatmul.bf16.gmra.mxu0 %v593
      %v920 = vpop.f32.mrf.mxu0
      %v921 = vadd.f32 %v327, %v920
      %v922 = vpop.f32.mrf.mxu0
      %v923 = vadd.f32 %v327, %v922
      %924 = vmatmul.bf16.gmra.mxu0 %v596
      %v925 = vpop.f32.mrf.mxu0
      %v926 = vadd.f32 %v327, %v925
      %v927 = vpop.f32.mrf.mxu0
      %v928 = vadd.f32 %v327, %v927
      %929 = vmatmul.bf16.gmra.mxu0 %v599
      %v930 = vpop.f32.mrf.mxu0
      %v931 = vadd.f32 %v327, %v930
      %v932 = vpop.f32.mrf.mxu0
      %v933 = vadd.f32 %v327, %v932
      %934 = vmatmul.bf16.gmra.mxu0 %v602
      %v935 = vpop.f32.mrf.mxu0
      %v936 = vadd.f32 %v327, %v935
      %v937 = vpop.f32.mrf.mxu0
      %v938 = vadd.f32 %v327, %v937
      %939 = vmatmul.bf16.gmra.mxu0 %v605
      %v940 = vpop.f32.mrf.mxu0
      %v941 = vadd.f32 %v327, %v940
      %v942 = vpop.f32.mrf.mxu0
      %v943 = vadd.f32 %v327, %v942
      %944 = vdwg.mxu0
      %v945 = vpack.c.bf16 %v617, %v617
      %v946 = vpack.c.bf16 %v619, %v619
      %v947 = vpack.c.bf16 %v622, %v622
      %v948 = vpack.c.bf16 %v624, %v624
      %v949 = vpack.c.bf16 %v627, %v627
      %v950 = vpack.c.bf16 %v629, %v629
      %v951 = vpack.c.bf16 %v632, %v632
      %v952 = vpack.c.bf16 %v634, %v634
      %v953 = vpack.c.bf16 %v637, %v637
      %v954 = vpack.c.bf16 %v639, %v639
      %v955 = vpack.c.bf16 %v642, %v642
      %v956 = vpack.c.bf16 %v644, %v644
      %v957 = vpack.c.bf16 %v647, %v647
      %v958 = vpack.c.bf16 %v649, %v649
      %v959 = vpack.c.bf16 %v652, %v652
      %v960 = vpack.c.bf16 %v654, %v654
      %v961 = vpack.c.bf16 %v657, %v657
      %v962 = vpack.c.bf16 %v659, %v659
      %v963 = vpack.c.bf16 %v662, %v662
      %v964 = vpack.c.bf16 %v664, %v664
      %v965 = vpack.c.bf16 %v667, %v667
      %v966 = vpack.c.bf16 %v669, %v669
      %v967 = vpack.c.bf16 %v672, %v672
      %v968 = vpack.c.bf16 %v674, %v674
      %v969 = vpack.c.bf16 %v677, %v677
      %v970 = vpack.c.bf16 %v679, %v679
      %v971 = vpack.c.bf16 %v682, %v682
      %v972 = vpack.c.bf16 %v684, %v684
      %v973 = vpack.c.bf16 %v687, %v687
      %v974 = vpack.c.bf16 %v689, %v689
      %v975 = vpack.c.bf16 %v692, %v692
      %v976 = vpack.c.bf16 %v694, %v694
      %v977 = vpack.c.bf16 %v697, %v697
      %v978 = vpack.c.bf16 %v699, %v699
      %v979 = vpack.c.bf16 %v702, %v702
      %v980 = vpack.c.bf16 %v704, %v704
      %v981 = vpack.c.bf16 %v707, %v707
      %v982 = vpack.c.bf16 %v709, %v709
      %v983 = vpack.c.bf16 %v712, %v712
      %v984 = vpack.c.bf16 %v714, %v714
      %v985 = vpack.c.bf16 %v717, %v717
      %v986 = vpack.c.bf16 %v719, %v719
      %v987 = vpack.c.bf16 %v722, %v722
      %v988 = vpack.c.bf16 %v724, %v724
      %v989 = vpack.c.bf16 %v727, %v727
      %v990 = vpack.c.bf16 %v729, %v729
      %v991 = vpack.c.bf16 %v732, %v732
      %v992 = vpack.c.bf16 %v734, %v734
      %v993 = vpack.c.bf16 %v737, %v737
      %v994 = vpack.c.bf16 %v739, %v739
      %v995 = vpack.c.bf16 %v742, %v742
      %v996 = vpack.c.bf16 %v744, %v744
      %v997 = vpack.c.bf16 %v747, %v747
      %v998 = vpack.c.bf16 %v749, %v749
      %v999 = vpack.c.bf16 %v752, %v752
      %v1000 = vpack.c.bf16 %v754, %v754
      %v1001 = vpack.c.bf16 %v757, %v757
      %v1002 = vpack.c.bf16 %v759, %v759
      %v1003 = vpack.c.bf16 %v762, %v762
      %v1004 = vpack.c.bf16 %v764, %v764
      %v1005 = vpack.c.bf16 %v767, %v767
      %v1006 = vpack.c.bf16 %v769, %v769
      %v1007 = vpack.c.bf16 %v772, %v772
      %v1008 = vpack.c.bf16 %v774, %v774
      %v1009 = vpack.c.bf16 %v786, %v786
      %v1010 = vpack.c.bf16 %v788, %v788
      %v1011 = vpack.c.bf16 %v791, %v791
      %v1012 = vpack.c.bf16 %v793, %v793
      %v1013 = vpack.c.bf16 %v796, %v796
      %v1014 = vpack.c.bf16 %v798, %v798
      %v1015 = vpack.c.bf16 %v801, %v801
      %v1016 = vpack.c.bf16 %v803, %v803
      %v1017 = vpack.c.bf16 %v806, %v806
      %v1018 = vpack.c.bf16 %v808, %v808
      %v1019 = vpack.c.bf16 %v811, %v811
      %v1020 = vpack.c.bf16 %v813, %v813
      %v1021 = vpack.c.bf16 %v816, %v816
      %v1022 = vpack.c.bf16 %v818, %v818
      %v1023 = vpack.c.bf16 %v821, %v821
      %v1024 = vpack.c.bf16 %v823, %v823
      %v1025 = vpack.c.bf16 %v826, %v826
      %v1026 = vpack.c.bf16 %v828, %v828
      %v1027 = vpack.c.bf16 %v831, %v831
      %v1028 = vpack.c.bf16 %v833, %v833
      %v1029 = vpack.c.bf16 %v836, %v836
      %v1030 = vpack.c.bf16 %v838, %v838
      %v1031 = vpack.c.bf16 %v841, %v841
      %v1032 = vpack.c.bf16 %v843, %v843
      %v1033 = vpack.c.bf16 %v846, %v846
      %v1034 = vpack.c.bf16 %v848, %v848
      %v1035 = vpack.c.bf16 %v851, %v851
      %v1036 = vpack.c.bf16 %v853, %v853
      %v1037 = vpack.c.bf16 %v856, %v856
      %v1038 = vpack.c.bf16 %v858, %v858
      %v1039 = vpack.c.bf16 %v861, %v861
      %v1040 = vpack.c.bf16 %v863, %v863
      %v1041 = vpack.c.bf16 %v866, %v866
      %v1042 = vpack.c.bf16 %v868, %v868
      %v1043 = vpack.c.bf16 %v871, %v871
      %v1044 = vpack.c.bf16 %v873, %v873
      %v1045 = vpack.c.bf16 %v876, %v876
      %v1046 = vpack.c.bf16 %v878, %v878
      %v1047 = vpack.c.bf16 %v881, %v881
      %v1048 = vpack.c.bf16 %v883, %v883
      %v1049 = vpack.c.bf16 %v886, %v886
      %v1050 = vpack.c.bf16 %v888, %v888
      %v1051 = vpack.c.bf16 %v891, %v891
      %v1052 = vpack.c.bf16 %v893, %v893
      %v1053 = vpack.c.bf16 %v896, %v896
      %v1054 = vpack.c.bf16 %v898, %v898
      %v1055 = vpack.c.bf16 %v901, %v901
      %v1056 = vpack.c.bf16 %v903, %v903
      %v1057 = vpack.c.bf16 %v906, %v906
      %v1058 = vpack.c.bf16 %v908, %v908
      %v1059 = vpack.c.bf16 %v911, %v911
      %v1060 = vpack.c.bf16 %v913, %v913
      %v1061 = vpack.c.bf16 %v916, %v916
      %v1062 = vpack.c.bf16 %v918, %v918
      %v1063 = vpack.c.bf16 %v921, %v921
      %v1064 = vpack.c.bf16 %v923, %v923
      %v1065 = vpack.c.bf16 %v926, %v926
      %v1066 = vpack.c.bf16 %v928, %v928
      %v1067 = vpack.c.bf16 %v931, %v931
      %v1068 = vpack.c.bf16 %v933, %v933
      %v1069 = vpack.c.bf16 %v936, %v936
      %v1070 = vpack.c.bf16 %v938, %v938
      %v1071 = vpack.c.bf16 %v941, %v941
      %v1072 = vpack.c.bf16 %v943, %v943
      %v1073 = vld [vmem:[%s3] sm:$0xff]
      %v1074 = vld [vmem:[%s3 + $0x8] sm:$0xff]
      %v1075 = vld [vmem:[%s3 + $0x10] sm:$0xff]
      %v1076 = vld [vmem:[%s3 + $0x18] sm:$0xff]
      %v1077 = vld [vmem:[%s3 + $0x20] sm:$0xff]
      %v1078 = vld [vmem:[%s3 + $0x28] sm:$0xff]
      %v1079 = vld [vmem:[%s3 + $0x30] sm:$0xff]
      %v1080 = vld [vmem:[%s3 + $0x38] sm:$0xff]
      %v1081 = vld [vmem:[%s4] sm:$0xf]
      %v1082 = vld [vmem:[%s4 + $0x4] sm:$0xf]
      %v1083 = vld [vmem:[%s4 + $0x8] sm:$0xf]
      %v1084 = vld [vmem:[%s4 + $0xc] sm:$0xf]
      %v1087 = vunpack.c.l.b16 %v945
      %v1088 = vunpack.c.l.b16 %v946
      %v1089 = vpack.c.b16 %v1088, %v1087
      %1090 = vrot.lane.b32.xlu0 %v1089, 64
      %v1091 = vpop.permute.xlu0 %1090
      %vm1092 = vcmask 130048
      %v1094 = vsel %vm1092, %v1089, 0
      %v1097 = vsel %vm1092, %v1091, 0
      %1099 = vmatpush.bf16.xpose.msra.mxu0 0
      %1100 = vmatpush.bf16.xpose.msra.mxu0 0
      %1101 = vmatpush.bf16.xpose.msra.mxu0 0
      %1102 = vmatpush.bf16.xpose.msra.mxu0 0
      %1103 = vmatpush.bf16.xpose.msra.mxu0 0
      %1104 = vmatpush.bf16.xpose.msra.mxu0 0
      %1105 = vmatpush.bf16.xpose.msra.mxu0 0
      %1106 = vmatpush.bf16.xpose.msra.mxu0 %v1097
      %1107 = vmatmul.bf16.gmra.mxu0 %v1094
      %v1108 = vpop.f32.mrf.mxu0
      %v1109 = vadd.f32 %v1073, %v1108
      %v1110 = vpop.f32.mrf.mxu0
      %v1111 = vadd.f32 %v1074, %v1110
      %1112 = vdwg.mxu0
      %v1115 = vunpack.c.l.b16 %v947
      %v1116 = vunpack.c.l.b16 %v948
      %v1117 = vpack.c.b16 %v1116, %v1115
      %1118 = vrot.lane.b32.xlu0 %v1117, 64
      %v1119 = vpop.permute.xlu0 %1118
      %v1121 = vsel %vm1092, %v1117, 0
      %v1124 = vsel %vm1092, %v1119, 0
      %1126 = vmatpush.bf16.xpose.msra.mxu0 0
      %1127 = vmatpush.bf16.xpose.msra.mxu0 0
      %1128 = vmatpush.bf16.xpose.msra.mxu0 0
      %1129 = vmatpush.bf16.xpose.msra.mxu0 0
      %1130 = vmatpush.bf16.xpose.msra.mxu0 0
      %1131 = vmatpush.bf16.xpose.msra.mxu0 0
      %1132 = vmatpush.bf16.xpose.msra.mxu0 0
      %1133 = vmatpush.bf16.xpose.msra.mxu0 %v1124
      %1134 = vmatmul.bf16.gmra.mxu0 %v1121
      %v1135 = vpop.f32.mrf.mxu0
      %v1136 = vadd.f32 %v1073, %v1135
      %v1137 = vpop.f32.mrf.mxu0
      %v1138 = vadd.f32 %v1074, %v1137
      %1139 = vdwg.mxu0
      %v1142 = vunpack.c.l.b16 %v949
      %v1143 = vunpack.c.l.b16 %v950
      %v1144 = vpack.c.b16 %v1143, %v1142
      %1145 = vrot.lane.b32.xlu0 %v1144, 64
      %v1146 = vpop.permute.xlu0 %1145
      %v1148 = vsel %vm1092, %v1144, 0
      %v1151 = vsel %vm1092, %v1146, 0
      %1153 = vmatpush.bf16.xpose.msra.mxu0 0
      %1154 = vmatpush.bf16.xpose.msra.mxu0 0
      %1155 = vmatpush.bf16.xpose.msra.mxu0 0
      %1156 = vmatpush.bf16.xpose.msra.mxu0 0
      %1157 = vmatpush.bf16.xpose.msra.mxu0 0
      %1158 = vmatpush.bf16.xpose.msra.mxu0 0
      %1159 = vmatpush.bf16.xpose.msra.mxu0 0
      %1160 = vmatpush.bf16.xpose.msra.mxu0 %v1151
      %1161 = vmatmul.bf16.gmra.mxu0 %v1148
      %v1162 = vpop.f32.mrf.mxu0
      %v1163 = vadd.f32 %v1073, %v1162
      %v1164 = vpop.f32.mrf.mxu0
      %v1165 = vadd.f32 %v1074, %v1164
      %1166 = vdwg.mxu0
      %v1169 = vunpack.c.l.b16 %v951
      %v1170 = vunpack.c.l.b16 %v952
      %v1171 = vpack.c.b16 %v1170, %v1169
      %1172 = vrot.lane.b32.xlu0 %v1171, 64
      %v1173 = vpop.permute.xlu0 %1172
      %v1175 = vsel %vm1092, %v1171, 0
      %v1178 = vsel %vm1092, %v1173, 0
      %1180 = vmatpush.bf16.xpose.msra.mxu0 0
      %1181 = vmatpush.bf16.xpose.msra.mxu0 0
      %1182 = vmatpush.bf16.xpose.msra.mxu0 0
      %1183 = vmatpush.bf16.xpose.msra.mxu0 0
      %1184 = vmatpush.bf16.xpose.msra.mxu0 0
      %1185 = vmatpush.bf16.xpose.msra.mxu0 0
      %1186 = vmatpush.bf16.xpose.msra.mxu0 0
      %1187 = vmatpush.bf16.xpose.msra.mxu0 %v1178
      %1188 = vmatmul.bf16.gmra.mxu0 %v1175
      %v1189 = vpop.f32.mrf.mxu0
      %v1190 = vadd.f32 %v1073, %v1189
      %v1191 = vpop.f32.mrf.mxu0
      %v1192 = vadd.f32 %v1074, %v1191
      %1193 = vdwg.mxu0
      %v1196 = vunpack.c.l.b16 %v953
      %v1197 = vunpack.c.l.b16 %v954
      %v1198 = vpack.c.b16 %v1197, %v1196
      %1199 = vrot.lane.b32.xlu0 %v1198, 64
      %v1200 = vpop.permute.xlu0 %1199
      %v1202 = vsel %vm1092, %v1198, 0
      %v1205 = vsel %vm1092, %v1200, 0
      %1207 = vmatpush.bf16.xpose.msra.mxu0 0
      %1208 = vmatpush.bf16.xpose.msra.mxu0 0
      %1209 = vmatpush.bf16.xpose.msra.mxu0 0
      %1210 = vmatpush.bf16.xpose.msra.mxu0 0
      %1211 = vmatpush.bf16.xpose.msra.mxu0 0
      %1212 = vmatpush.bf16.xpose.msra.mxu0 0
      %1213 = vmatpush.bf16.xpose.msra.mxu0 0
      %1214 = vmatpush.bf16.xpose.msra.mxu0 %v1205
      %1215 = vmatmul.bf16.gmra.mxu0 %v1202
      %v1216 = vpop.f32.mrf.mxu0
      %v1217 = vadd.f32 %v1073, %v1216
      %v1218 = vpop.f32.mrf.mxu0
      %v1219 = vadd.f32 %v1074, %v1218
      %1220 = vdwg.mxu0
      %v1223 = vunpack.c.l.b16 %v955
      %v1224 = vunpack.c.l.b16 %v956
      %v1225 = vpack.c.b16 %v1224, %v1223
      %1226 = vrot.lane.b32.xlu0 %v1225, 64
      %v1227 = vpop.permute.xlu0 %1226
      %v1229 = vsel %vm1092, %v1225, 0
      %v1232 = vsel %vm1092, %v1227, 0
      %1234 = vmatpush.bf16.xpose.msra.mxu0 0
      %1235 = vmatpush.bf16.xpose.msra.mxu0 0
      %1236 = vmatpush.bf16.xpose.msra.mxu0 0
      %1237 = vmatpush.bf16.xpose.msra.mxu0 0
      %1238 = vmatpush.bf16.xpose.msra.mxu0 0
      %1239 = vmatpush.bf16.xpose.msra.mxu0 0
      %1240 = vmatpush.bf16.xpose.msra.mxu0 0
      %1241 = vmatpush.bf16.xpose.msra.mxu0 %v1232
      %1242 = vmatmul.bf16.gmra.mxu0 %v1229
      %v1243 = vpop.f32.mrf.mxu0
      %v1244 = vadd.f32 %v1073, %v1243
      %v1245 = vpop.f32.mrf.mxu0
      %v1246 = vadd.f32 %v1074, %v1245
      %1247 = vdwg.mxu0
      %v1250 = vunpack.c.l.b16 %v957
      %v1251 = vunpack.c.l.b16 %v958
      %v1252 = vpack.c.b16 %v1251, %v1250
      %1253 = vrot.lane.b32.xlu0 %v1252, 64
      %v1254 = vpop.permute.xlu0 %1253
      %v1256 = vsel %vm1092, %v1252, 0
      %v1259 = vsel %vm1092, %v1254, 0
      %1261 = vmatpush.bf16.xpose.msra.mxu0 0
      %1262 = vmatpush.bf16.xpose.msra.mxu0 0
      %1263 = vmatpush.bf16.xpose.msra.mxu0 0
      %1264 = vmatpush.bf16.xpose.msra.mxu0 0
      %1265 = vmatpush.bf16.xpose.msra.mxu0 0
      %1266 = vmatpush.bf16.xpose.msra.mxu0 0
      %1267 = vmatpush.bf16.xpose.msra.mxu0 0
      %1268 = vmatpush.bf16.xpose.msra.mxu0 %v1259
      %1269 = vmatmul.bf16.gmra.mxu0 %v1256
      %v1270 = vpop.f32.mrf.mxu0
      %v1271 = vadd.f32 %v1073, %v1270
      %v1272 = vpop.f32.mrf.mxu0
      %v1273 = vadd.f32 %v1074, %v1272
      %1274 = vdwg.mxu0
      %v1277 = vunpack.c.l.b16 %v959
      %v1278 = vunpack.c.l.b16 %v960
      %v1279 = vpack.c.b16 %v1278, %v1277
      %1280 = vrot.lane.b32.xlu0 %v1279, 64
      %v1281 = vpop.permute.xlu0 %1280
      %v1283 = vsel %vm1092, %v1279, 0
      %v1286 = vsel %vm1092, %v1281, 0
      %1288 = vmatpush.bf16.xpose.msra.mxu0 0
      %1289 = vmatpush.bf16.xpose.msra.mxu0 0
      %1290 = vmatpush.bf16.xpose.msra.mxu0 0
      %1291 = vmatpush.bf16.xpose.msra.mxu0 0
      %1292 = vmatpush.bf16.xpose.msra.mxu0 0
      %1293 = vmatpush.bf16.xpose.msra.mxu0 0
      %1294 = vmatpush.bf16.xpose.msra.mxu0 0
      %1295 = vmatpush.bf16.xpose.msra.mxu0 %v1286
      %1296 = vmatmul.bf16.gmra.mxu0 %v1283
      %v1297 = vpop.f32.mrf.mxu0
      %v1298 = vadd.f32 %v1073, %v1297
      %v1299 = vpop.f32.mrf.mxu0
      %v1300 = vadd.f32 %v1074, %v1299
      %1301 = vdwg.mxu0
      %v1304 = vunpack.c.l.b16 %v961
      %v1305 = vunpack.c.l.b16 %v962
      %v1306 = vpack.c.b16 %v1305, %v1304
      %1307 = vrot.lane.b32.xlu0 %v1306, 64
      %v1308 = vpop.permute.xlu0 %1307
      %v1310 = vsel %vm1092, %v1306, 0
      %v1313 = vsel %vm1092, %v1308, 0
      %1315 = vmatpush.bf16.xpose.msra.mxu0 0
      %1316 = vmatpush.bf16.xpose.msra.mxu0 0
      %1317 = vmatpush.bf16.xpose.msra.mxu0 0
      %1318 = vmatpush.bf16.xpose.msra.mxu0 0
      %1319 = vmatpush.bf16.xpose.msra.mxu0 0
      %1320 = vmatpush.bf16.xpose.msra.mxu0 0
      %1321 = vmatpush.bf16.xpose.msra.mxu0 0
      %1322 = vmatpush.bf16.xpose.msra.mxu0 %v1313
      %1323 = vmatmul.bf16.gmra.mxu0 %v1310
      %v1324 = vpop.f32.mrf.mxu0
      %v1325 = vadd.f32 %v1073, %v1324
      %v1326 = vpop.f32.mrf.mxu0
      %v1327 = vadd.f32 %v1074, %v1326
      %1328 = vdwg.mxu0
      %v1331 = vunpack.c.l.b16 %v963
      %v1332 = vunpack.c.l.b16 %v964
      %v1333 = vpack.c.b16 %v1332, %v1331
      %1334 = vrot.lane.b32.xlu0 %v1333, 64
      %v1335 = vpop.permute.xlu0 %1334
      %v1337 = vsel %vm1092, %v1333, 0
      %v1340 = vsel %vm1092, %v1335, 0
      %1342 = vmatpush.bf16.xpose.msra.mxu0 0
      %1343 = vmatpush.bf16.xpose.msra.mxu0 0
      %1344 = vmatpush.bf16.xpose.msra.mxu0 0
      %1345 = vmatpush.bf16.xpose.msra.mxu0 0
      %1346 = vmatpush.bf16.xpose.msra.mxu0 0
      %1347 = vmatpush.bf16.xpose.msra.mxu0 0
      %1348 = vmatpush.bf16.xpose.msra.mxu0 0
      %1349 = vmatpush.bf16.xpose.msra.mxu0 %v1340
      %1350 = vmatmul.bf16.gmra.mxu0 %v1337
      %v1351 = vpop.f32.mrf.mxu0
      %v1352 = vadd.f32 %v1073, %v1351
      %v1353 = vpop.f32.mrf.mxu0
      %v1354 = vadd.f32 %v1074, %v1353
      %1355 = vdwg.mxu0
      %v1358 = vunpack.c.l.b16 %v965
      %v1359 = vunpack.c.l.b16 %v966
      %v1360 = vpack.c.b16 %v1359, %v1358
      %1361 = vrot.lane.b32.xlu0 %v1360, 64
      %v1362 = vpop.permute.xlu0 %1361
      %v1364 = vsel %vm1092, %v1360, 0
      %v1367 = vsel %vm1092, %v1362, 0
      %1369 = vmatpush.bf16.xpose.msra.mxu0 0
      %1370 = vmatpush.bf16.xpose.msra.mxu0 0
      %1371 = vmatpush.bf16.xpose.msra.mxu0 0
      %1372 = vmatpush.bf16.xpose.msra.mxu0 0
      %1373 = vmatpush.bf16.xpose.msra.mxu0 0
      %1374 = vmatpush.bf16.xpose.msra.mxu0 0
      %1375 = vmatpush.bf16.xpose.msra.mxu0 0
      %1376 = vmatpush.bf16.xpose.msra.mxu0 %v1367
      %1377 = vmatmul.bf16.gmra.mxu0 %v1364
      %v1378 = vpop.f32.mrf.mxu0
      %v1379 = vadd.f32 %v1073, %v1378
      %v1380 = vpop.f32.mrf.mxu0
      %v1381 = vadd.f32 %v1074, %v1380
      %1382 = vdwg.mxu0
      %v1385 = vunpack.c.l.b16 %v967
      %v1386 = vunpack.c.l.b16 %v968
      %v1387 = vpack.c.b16 %v1386, %v1385
      %1388 = vrot.lane.b32.xlu0 %v1387, 64
      %v1389 = vpop.permute.xlu0 %1388
      %v1391 = vsel %vm1092, %v1387, 0
      %v1394 = vsel %vm1092, %v1389, 0
      %1396 = vmatpush.bf16.xpose.msra.mxu0 0
      %1397 = vmatpush.bf16.xpose.msra.mxu0 0
      %1398 = vmatpush.bf16.xpose.msra.mxu0 0
      %1399 = vmatpush.bf16.xpose.msra.mxu0 0
      %1400 = vmatpush.bf16.xpose.msra.mxu0 0
      %1401 = vmatpush.bf16.xpose.msra.mxu0 0
      %1402 = vmatpush.bf16.xpose.msra.mxu0 0
      %1403 = vmatpush.bf16.xpose.msra.mxu0 %v1394
      %1404 = vmatmul.bf16.gmra.mxu0 %v1391
      %v1405 = vpop.f32.mrf.mxu0
      %v1406 = vadd.f32 %v1073, %v1405
      %v1407 = vpop.f32.mrf.mxu0
      %v1408 = vadd.f32 %v1074, %v1407
      %1409 = vdwg.mxu0
      %v1412 = vunpack.c.l.b16 %v969
      %v1413 = vunpack.c.l.b16 %v970
      %v1414 = vpack.c.b16 %v1413, %v1412
      %1415 = vrot.lane.b32.xlu0 %v1414, 64
      %v1416 = vpop.permute.xlu0 %1415
      %v1418 = vsel %vm1092, %v1414, 0
      %v1421 = vsel %vm1092, %v1416, 0
      %1423 = vmatpush.bf16.xpose.msra.mxu0 0
      %1424 = vmatpush.bf16.xpose.msra.mxu0 0
      %1425 = vmatpush.bf16.xpose.msra.mxu0 0
      %1426 = vmatpush.bf16.xpose.msra.mxu0 0
      %1427 = vmatpush.bf16.xpose.msra.mxu0 0
      %1428 = vmatpush.bf16.xpose.msra.mxu0 0
      %1429 = vmatpush.bf16.xpose.msra.mxu0 0
      %1430 = vmatpush.bf16.xpose.msra.mxu0 %v1421
      %1431 = vmatmul.bf16.gmra.mxu0 %v1418
      %v1432 = vpop.f32.mrf.mxu0
      %v1433 = vadd.f32 %v1073, %v1432
      %v1434 = vpop.f32.mrf.mxu0
      %v1435 = vadd.f32 %v1074, %v1434
      %1436 = vdwg.mxu0
      %v1439 = vunpack.c.l.b16 %v971
      %v1440 = vunpack.c.l.b16 %v972
      %v1441 = vpack.c.b16 %v1440, %v1439
      %1442 = vrot.lane.b32.xlu0 %v1441, 64
      %v1443 = vpop.permute.xlu0 %1442
      %v1445 = vsel %vm1092, %v1441, 0
      %v1448 = vsel %vm1092, %v1443, 0
      %1450 = vmatpush.bf16.xpose.msra.mxu0 0
      %1451 = vmatpush.bf16.xpose.msra.mxu0 0
      %1452 = vmatpush.bf16.xpose.msra.mxu0 0
      %1453 = vmatpush.bf16.xpose.msra.mxu0 0
      %1454 = vmatpush.bf16.xpose.msra.mxu0 0
      %1455 = vmatpush.bf16.xpose.msra.mxu0 0
      %1456 = vmatpush.bf16.xpose.msra.mxu0 0
      %1457 = vmatpush.bf16.xpose.msra.mxu0 %v1448
      %1458 = vmatmul.bf16.gmra.mxu0 %v1445
      %v1459 = vpop.f32.mrf.mxu0
      %v1460 = vadd.f32 %v1073, %v1459
      %v1461 = vpop.f32.mrf.mxu0
      %v1462 = vadd.f32 %v1074, %v1461
      %1463 = vdwg.mxu0
      %v1466 = vunpack.c.l.b16 %v973
      %v1467 = vunpack.c.l.b16 %v974
      %v1468 = vpack.c.b16 %v1467, %v1466
      %1469 = vrot.lane.b32.xlu0 %v1468, 64
      %v1470 = vpop.permute.xlu0 %1469
      %v1472 = vsel %vm1092, %v1468, 0
      %v1475 = vsel %vm1092, %v1470, 0
      %1477 = vmatpush.bf16.xpose.msra.mxu0 0
      %1478 = vmatpush.bf16.xpose.msra.mxu0 0
      %1479 = vmatpush.bf16.xpose.msra.mxu0 0
      %1480 = vmatpush.bf16.xpose.msra.mxu0 0
      %1481 = vmatpush.bf16.xpose.msra.mxu0 0
      %1482 = vmatpush.bf16.xpose.msra.mxu0 0
      %1483 = vmatpush.bf16.xpose.msra.mxu0 0
      %1484 = vmatpush.bf16.xpose.msra.mxu0 %v1475
      %1485 = vmatmul.bf16.gmra.mxu0 %v1472
      %v1486 = vpop.f32.mrf.mxu0
      %v1487 = vadd.f32 %v1073, %v1486
      %v1488 = vpop.f32.mrf.mxu0
      %v1489 = vadd.f32 %v1074, %v1488
      %1490 = vdwg.mxu0
      %v1493 = vunpack.c.l.b16 %v975
      %v1494 = vunpack.c.l.b16 %v976
      %v1495 = vpack.c.b16 %v1494, %v1493
      %1496 = vrot.lane.b32.xlu0 %v1495, 64
      %v1497 = vpop.permute.xlu0 %1496
      %v1499 = vsel %vm1092, %v1495, 0
      %v1502 = vsel %vm1092, %v1497, 0
      %1504 = vmatpush.bf16.xpose.msra.mxu0 0
      %1505 = vmatpush.bf16.xpose.msra.mxu0 0
      %1506 = vmatpush.bf16.xpose.msra.mxu0 0
      %1507 = vmatpush.bf16.xpose.msra.mxu0 0
      %1508 = vmatpush.bf16.xpose.msra.mxu0 0
      %1509 = vmatpush.bf16.xpose.msra.mxu0 0
      %1510 = vmatpush.bf16.xpose.msra.mxu0 0
      %1511 = vmatpush.bf16.xpose.msra.mxu0 %v1502
      %1512 = vmatmul.bf16.gmra.mxu0 %v1499
      %v1513 = vpop.f32.mrf.mxu0
      %v1514 = vadd.f32 %v1073, %v1513
      %v1515 = vpop.f32.mrf.mxu0
      %v1516 = vadd.f32 %v1074, %v1515
      %1517 = vdwg.mxu0
      %v1520 = vunpack.c.l.b16 %v977
      %v1521 = vunpack.c.l.b16 %v978
      %v1522 = vpack.c.b16 %v1521, %v1520
      %1523 = vrot.lane.b32.xlu0 %v1522, 64
      %v1524 = vpop.permute.xlu0 %1523
      %v1526 = vsel %vm1092, %v1522, 0
      %v1529 = vsel %vm1092, %v1524, 0
      %1531 = vmatpush.bf16.xpose.msra.mxu0 0
      %1532 = vmatpush.bf16.xpose.msra.mxu0 0
      %1533 = vmatpush.bf16.xpose.msra.mxu0 0
      %1534 = vmatpush.bf16.xpose.msra.mxu0 0
      %1535 = vmatpush.bf16.xpose.msra.mxu0 0
      %1536 = vmatpush.bf16.xpose.msra.mxu0 0
      %1537 = vmatpush.bf16.xpose.msra.mxu0 0
      %1538 = vmatpush.bf16.xpose.msra.mxu0 %v1529
      %1539 = vmatmul.bf16.gmra.mxu0 %v1526
      %v1540 = vpop.f32.mrf.mxu0
      %v1541 = vadd.f32 %v1073, %v1540
      %v1542 = vpop.f32.mrf.mxu0
      %v1543 = vadd.f32 %v1074, %v1542
      %1544 = vdwg.mxu0
      %v1547 = vunpack.c.l.b16 %v979
      %v1548 = vunpack.c.l.b16 %v980
      %v1549 = vpack.c.b16 %v1548, %v1547
      %1550 = vrot.lane.b32.xlu0 %v1549, 64
      %v1551 = vpop.permute.xlu0 %1550
      %v1553 = vsel %vm1092, %v1549, 0
      %v1556 = vsel %vm1092, %v1551, 0
      %1558 = vmatpush.bf16.xpose.msra.mxu0 0
      %1559 = vmatpush.bf16.xpose.msra.mxu0 0
      %1560 = vmatpush.bf16.xpose.msra.mxu0 0
      %1561 = vmatpush.bf16.xpose.msra.mxu0 0
      %1562 = vmatpush.bf16.xpose.msra.mxu0 0
      %1563 = vmatpush.bf16.xpose.msra.mxu0 0
      %1564 = vmatpush.bf16.xpose.msra.mxu0 0
      %1565 = vmatpush.bf16.xpose.msra.mxu0 %v1556
      %1566 = vmatmul.bf16.gmra.mxu0 %v1553
      %v1567 = vpop.f32.mrf.mxu0
      %v1568 = vadd.f32 %v1073, %v1567
      %v1569 = vpop.f32.mrf.mxu0
      %v1570 = vadd.f32 %v1074, %v1569
      %1571 = vdwg.mxu0
      %v1574 = vunpack.c.l.b16 %v981
      %v1575 = vunpack.c.l.b16 %v982
      %v1576 = vpack.c.b16 %v1575, %v1574
      %1577 = vrot.lane.b32.xlu0 %v1576, 64
      %v1578 = vpop.permute.xlu0 %1577
      %v1580 = vsel %vm1092, %v1576, 0
      %v1583 = vsel %vm1092, %v1578, 0
      %1585 = vmatpush.bf16.xpose.msra.mxu0 0
      %1586 = vmatpush.bf16.xpose.msra.mxu0 0
      %1587 = vmatpush.bf16.xpose.msra.mxu0 0
      %1588 = vmatpush.bf16.xpose.msra.mxu0 0
      %1589 = vmatpush.bf16.xpose.msra.mxu0 0
      %1590 = vmatpush.bf16.xpose.msra.mxu0 0
      %1591 = vmatpush.bf16.xpose.msra.mxu0 0
      %1592 = vmatpush.bf16.xpose.msra.mxu0 %v1583
      %1593 = vmatmul.bf16.gmra.mxu0 %v1580
      %v1594 = vpop.f32.mrf.mxu0
      %v1595 = vadd.f32 %v1073, %v1594
      %v1596 = vpop.f32.mrf.mxu0
      %v1597 = vadd.f32 %v1074, %v1596
      %1598 = vdwg.mxu0
      %v1601 = vunpack.c.l.b16 %v983
      %v1602 = vunpack.c.l.b16 %v984
      %v1603 = vpack.c.b16 %v1602, %v1601
      %1604 = vrot.lane.b32.xlu0 %v1603, 64
      %v1605 = vpop.permute.xlu0 %1604
      %v1607 = vsel %vm1092, %v1603, 0
      %v1610 = vsel %vm1092, %v1605, 0
      %1612 = vmatpush.bf16.xpose.msra.mxu0 0
      %1613 = vmatpush.bf16.xpose.msra.mxu0 0
      %1614 = vmatpush.bf16.xpose.msra.mxu0 0
      %1615 = vmatpush.bf16.xpose.msra.mxu0 0
      %1616 = vmatpush.bf16.xpose.msra.mxu0 0
      %1617 = vmatpush.bf16.xpose.msra.mxu0 0
      %1618 = vmatpush.bf16.xpose.msra.mxu0 0
      %1619 = vmatpush.bf16.xpose.msra.mxu0 %v1610
      %1620 = vmatmul.bf16.gmra.mxu0 %v1607
      %v1621 = vpop.f32.mrf.mxu0
      %v1622 = vadd.f32 %v1073, %v1621
      %v1623 = vpop.f32.mrf.mxu0
      %v1624 = vadd.f32 %v1074, %v1623
      %1625 = vdwg.mxu0
      %v1628 = vunpack.c.l.b16 %v985
      %v1629 = vunpack.c.l.b16 %v986
      %v1630 = vpack.c.b16 %v1629, %v1628
      %1631 = vrot.lane.b32.xlu0 %v1630, 64
      %v1632 = vpop.permute.xlu0 %1631
      %v1634 = vsel %vm1092, %v1630, 0
      %v1637 = vsel %vm1092, %v1632, 0
      %1639 = vmatpush.bf16.xpose.msra.mxu0 0
      %1640 = vmatpush.bf16.xpose.msra.mxu0 0
      %1641 = vmatpush.bf16.xpose.msra.mxu0 0
      %1642 = vmatpush.bf16.xpose.msra.mxu0 0
      %1643 = vmatpush.bf16.xpose.msra.mxu0 0
      %1644 = vmatpush.bf16.xpose.msra.mxu0 0
      %1645 = vmatpush.bf16.xpose.msra.mxu0 0
      %1646 = vmatpush.bf16.xpose.msra.mxu0 %v1637
      %1647 = vmatmul.bf16.gmra.mxu0 %v1634
      %v1648 = vpop.f32.mrf.mxu0
      %v1649 = vadd.f32 %v1073, %v1648
      %v1650 = vpop.f32.mrf.mxu0
      %v1651 = vadd.f32 %v1074, %v1650
      %1652 = vdwg.mxu0
      %v1655 = vunpack.c.l.b16 %v987
      %v1656 = vunpack.c.l.b16 %v988
      %v1657 = vpack.c.b16 %v1656, %v1655
      %1658 = vrot.lane.b32.xlu0 %v1657, 64
      %v1659 = vpop.permute.xlu0 %1658
      %v1661 = vsel %vm1092, %v1657, 0
      %v1664 = vsel %vm1092, %v1659, 0
      %1666 = vmatpush.bf16.xpose.msra.mxu0 0
      %1667 = vmatpush.bf16.xpose.msra.mxu0 0
      %1668 = vmatpush.bf16.xpose.msra.mxu0 0
      %1669 = vmatpush.bf16.xpose.msra.mxu0 0
      %1670 = vmatpush.bf16.xpose.msra.mxu0 0
      %1671 = vmatpush.bf16.xpose.msra.mxu0 0
      %1672 = vmatpush.bf16.xpose.msra.mxu0 0
      %1673 = vmatpush.bf16.xpose.msra.mxu0 %v1664
      %1674 = vmatmul.bf16.gmra.mxu0 %v1661
      %v1675 = vpop.f32.mrf.mxu0
      %v1676 = vadd.f32 %v1073, %v1675
      %v1677 = vpop.f32.mrf.mxu0
      %v1678 = vadd.f32 %v1074, %v1677
      %1679 = vdwg.mxu0
      %v1682 = vunpack.c.l.b16 %v989
      %v1683 = vunpack.c.l.b16 %v990
      %v1684 = vpack.c.b16 %v1683, %v1682
      %1685 = vrot.lane.b32.xlu0 %v1684, 64
      %v1686 = vpop.permute.xlu0 %1685
      %v1688 = vsel %vm1092, %v1684, 0
      %v1691 = vsel %vm1092, %v1686, 0
      %1693 = vmatpush.bf16.xpose.msra.mxu0 0
      %1694 = vmatpush.bf16.xpose.msra.mxu0 0
      %1695 = vmatpush.bf16.xpose.msra.mxu0 0
      %1696 = vmatpush.bf16.xpose.msra.mxu0 0
      %1697 = vmatpush.bf16.xpose.msra.mxu0 0
      %1698 = vmatpush.bf16.xpose.msra.mxu0 0
      %1699 = vmatpush.bf16.xpose.msra.mxu0 0
      %1700 = vmatpush.bf16.xpose.msra.mxu0 %v1691
      %1701 = vmatmul.bf16.gmra.mxu0 %v1688
      %v1702 = vpop.f32.mrf.mxu0
      %v1703 = vadd.f32 %v1073, %v1702
      %v1704 = vpop.f32.mrf.mxu0
      %v1705 = vadd.f32 %v1074, %v1704
      %1706 = vdwg.mxu0
      %v1709 = vunpack.c.l.b16 %v991
      %v1710 = vunpack.c.l.b16 %v992
      %v1711 = vpack.c.b16 %v1710, %v1709
      %1712 = vrot.lane.b32.xlu0 %v1711, 64
      %v1713 = vpop.permute.xlu0 %1712
      %v1715 = vsel %vm1092, %v1711, 0
      %v1718 = vsel %vm1092, %v1713, 0
      %1720 = vmatpush.bf16.xpose.msra.mxu0 0
      %1721 = vmatpush.bf16.xpose.msra.mxu0 0
      %1722 = vmatpush.bf16.xpose.msra.mxu0 0
      %1723 = vmatpush.bf16.xpose.msra.mxu0 0
      %1724 = vmatpush.bf16.xpose.msra.mxu0 0
      %1725 = vmatpush.bf16.xpose.msra.mxu0 0
      %1726 = vmatpush.bf16.xpose.msra.mxu0 0
      %1727 = vmatpush.bf16.xpose.msra.mxu0 %v1718
      %1728 = vmatmul.bf16.gmra.mxu0 %v1715
      %v1729 = vpop.f32.mrf.mxu0
      %v1730 = vadd.f32 %v1073, %v1729
      %v1731 = vpop.f32.mrf.mxu0
      %v1732 = vadd.f32 %v1074, %v1731
      %1733 = vdwg.mxu0
      %v1736 = vunpack.c.l.b16 %v993
      %v1737 = vunpack.c.l.b16 %v994
      %v1738 = vpack.c.b16 %v1737, %v1736
      %1739 = vrot.lane.b32.xlu0 %v1738, 64
      %v1740 = vpop.permute.xlu0 %1739
      %v1742 = vsel %vm1092, %v1738, 0
      %v1745 = vsel %vm1092, %v1740, 0
      %1747 = vmatpush.bf16.xpose.msra.mxu0 0
      %1748 = vmatpush.bf16.xpose.msra.mxu0 0
      %1749 = vmatpush.bf16.xpose.msra.mxu0 0
      %1750 = vmatpush.bf16.xpose.msra.mxu0 0
      %1751 = vmatpush.bf16.xpose.msra.mxu0 0
      %1752 = vmatpush.bf16.xpose.msra.mxu0 0
      %1753 = vmatpush.bf16.xpose.msra.mxu0 0
      %1754 = vmatpush.bf16.xpose.msra.mxu0 %v1745
      %1755 = vmatmul.bf16.gmra.mxu0 %v1742
      %v1756 = vpop.f32.mrf.mxu0
      %v1757 = vadd.f32 %v1073, %v1756
      %v1758 = vpop.f32.mrf.mxu0
      %v1759 = vadd.f32 %v1074, %v1758
      %1760 = vdwg.mxu0
      %v1763 = vunpack.c.l.b16 %v995
      %v1764 = vunpack.c.l.b16 %v996
      %v1765 = vpack.c.b16 %v1764, %v1763
      %1766 = vrot.lane.b32.xlu0 %v1765, 64
      %v1767 = vpop.permute.xlu0 %1766
      %v1769 = vsel %vm1092, %v1765, 0
      %v1772 = vsel %vm1092, %v1767, 0
      %1774 = vmatpush.bf16.xpose.msra.mxu0 0
      %1775 = vmatpush.bf16.xpose.msra.mxu0 0
      %1776 = vmatpush.bf16.xpose.msra.mxu0 0
      %1777 = vmatpush.bf16.xpose.msra.mxu0 0
      %1778 = vmatpush.bf16.xpose.msra.mxu0 0
      %1779 = vmatpush.bf16.xpose.msra.mxu0 0
      %1780 = vmatpush.bf16.xpose.msra.mxu0 0
      %1781 = vmatpush.bf16.xpose.msra.mxu0 %v1772
      %1782 = vmatmul.bf16.gmra.mxu0 %v1769
      %v1783 = vpop.f32.mrf.mxu0
      %v1784 = vadd.f32 %v1073, %v1783
      %v1785 = vpop.f32.mrf.mxu0
      %v1786 = vadd.f32 %v1074, %v1785
      %1787 = vdwg.mxu0
      %v1790 = vunpack.c.l.b16 %v997
      %v1791 = vunpack.c.l.b16 %v998
      %v1792 = vpack.c.b16 %v1791, %v1790
      %1793 = vrot.lane.b32.xlu0 %v1792, 64
      %v1794 = vpop.permute.xlu0 %1793
      %v1796 = vsel %vm1092, %v1792, 0
      %v1799 = vsel %vm1092, %v1794, 0
      %1801 = vmatpush.bf16.xpose.msra.mxu0 0
      %1802 = vmatpush.bf16.xpose.msra.mxu0 0
      %1803 = vmatpush.bf16.xpose.msra.mxu0 0
      %1804 = vmatpush.bf16.xpose.msra.mxu0 0
      %1805 = vmatpush.bf16.xpose.msra.mxu0 0
      %1806 = vmatpush.bf16.xpose.msra.mxu0 0
      %1807 = vmatpush.bf16.xpose.msra.mxu0 0
      %1808 = vmatpush.bf16.xpose.msra.mxu0 %v1799
      %1809 = vmatmul.bf16.gmra.mxu0 %v1796
      %v1810 = vpop.f32.mrf.mxu0
      %v1811 = vadd.f32 %v1073, %v1810
      %v1812 = vpop.f32.mrf.mxu0
      %v1813 = vadd.f32 %v1074, %v1812
      %1814 = vdwg.mxu0
      %v1817 = vunpack.c.l.b16 %v999
      %v1818 = vunpack.c.l.b16 %v1000
      %v1819 = vpack.c.b16 %v1818, %v1817
      %1820 = vrot.lane.b32.xlu0 %v1819, 64
      %v1821 = vpop.permute.xlu0 %1820
      %v1823 = vsel %vm1092, %v1819, 0
      %v1826 = vsel %vm1092, %v1821, 0
      %1828 = vmatpush.bf16.xpose.msra.mxu0 0
      %1829 = vmatpush.bf16.xpose.msra.mxu0 0
      %1830 = vmatpush.bf16.xpose.msra.mxu0 0
      %1831 = vmatpush.bf16.xpose.msra.mxu0 0
      %1832 = vmatpush.bf16.xpose.msra.mxu0 0
      %1833 = vmatpush.bf16.xpose.msra.mxu0 0
      %1834 = vmatpush.bf16.xpose.msra.mxu0 0
      %1835 = vmatpush.bf16.xpose.msra.mxu0 %v1826
      %1836 = vmatmul.bf16.gmra.mxu0 %v1823
      %v1837 = vpop.f32.mrf.mxu0
      %v1838 = vadd.f32 %v1073, %v1837
      %v1839 = vpop.f32.mrf.mxu0
      %v1840 = vadd.f32 %v1074, %v1839
      %1841 = vdwg.mxu0
      %v1844 = vunpack.c.l.b16 %v1001
      %v1845 = vunpack.c.l.b16 %v1002
      %v1846 = vpack.c.b16 %v1845, %v1844
      %1847 = vrot.lane.b32.xlu0 %v1846, 64
      %v1848 = vpop.permute.xlu0 %1847
      %v1850 = vsel %vm1092, %v1846, 0
      %v1853 = vsel %vm1092, %v1848, 0
      %1855 = vmatpush.bf16.xpose.msra.mxu0 0
      %1856 = vmatpush.bf16.xpose.msra.mxu0 0
      %1857 = vmatpush.bf16.xpose.msra.mxu0 0
      %1858 = vmatpush.bf16.xpose.msra.mxu0 0
      %1859 = vmatpush.bf16.xpose.msra.mxu0 0
      %1860 = vmatpush.bf16.xpose.msra.mxu0 0
      %1861 = vmatpush.bf16.xpose.msra.mxu0 0
      %1862 = vmatpush.bf16.xpose.msra.mxu0 %v1853
      %1863 = vmatmul.bf16.gmra.mxu0 %v1850
      %v1864 = vpop.f32.mrf.mxu0
      %v1865 = vadd.f32 %v1073, %v1864
      %v1866 = vpop.f32.mrf.mxu0
      %v1867 = vadd.f32 %v1074, %v1866
      %1868 = vdwg.mxu0
      %v1871 = vunpack.c.l.b16 %v1003
      %v1872 = vunpack.c.l.b16 %v1004
      %v1873 = vpack.c.b16 %v1872, %v1871
      %1874 = vrot.lane.b32.xlu0 %v1873, 64
      %v1875 = vpop.permute.xlu0 %1874
      %v1877 = vsel %vm1092, %v1873, 0
      %v1880 = vsel %vm1092, %v1875, 0
      %1882 = vmatpush.bf16.xpose.msra.mxu0 0
      %1883 = vmatpush.bf16.xpose.msra.mxu0 0
      %1884 = vmatpush.bf16.xpose.msra.mxu0 0
      %1885 = vmatpush.bf16.xpose.msra.mxu0 0
      %1886 = vmatpush.bf16.xpose.msra.mxu0 0
      %1887 = vmatpush.bf16.xpose.msra.mxu0 0
      %1888 = vmatpush.bf16.xpose.msra.mxu0 0
      %1889 = vmatpush.bf16.xpose.msra.mxu0 %v1880
      %1890 = vmatmul.bf16.gmra.mxu0 %v1877
      %v1891 = vpop.f32.mrf.mxu0
      %v1892 = vadd.f32 %v1073, %v1891
      %v1893 = vpop.f32.mrf.mxu0
      %v1894 = vadd.f32 %v1074, %v1893
      %1895 = vdwg.mxu0
      %v1898 = vunpack.c.l.b16 %v1005
      %v1899 = vunpack.c.l.b16 %v1006
      %v1900 = vpack.c.b16 %v1899, %v1898
      %1901 = vrot.lane.b32.xlu0 %v1900, 64
      %v1902 = vpop.permute.xlu0 %1901
      %v1904 = vsel %vm1092, %v1900, 0
      %v1907 = vsel %vm1092, %v1902, 0
      %1909 = vmatpush.bf16.xpose.msra.mxu0 0
      %1910 = vmatpush.bf16.xpose.msra.mxu0 0
      %1911 = vmatpush.bf16.xpose.msra.mxu0 0
      %1912 = vmatpush.bf16.xpose.msra.mxu0 0
      %1913 = vmatpush.bf16.xpose.msra.mxu0 0
      %1914 = vmatpush.bf16.xpose.msra.mxu0 0
      %1915 = vmatpush.bf16.xpose.msra.mxu0 0
      %1916 = vmatpush.bf16.xpose.msra.mxu0 %v1907
      %1917 = vmatmul.bf16.gmra.mxu0 %v1904
      %v1918 = vpop.f32.mrf.mxu0
      %v1919 = vadd.f32 %v1073, %v1918
      %v1920 = vpop.f32.mrf.mxu0
      %v1921 = vadd.f32 %v1074, %v1920
      %1922 = vdwg.mxu0
      %v1925 = vunpack.c.l.b16 %v1007
      %v1926 = vunpack.c.l.b16 %v1008
      %v1927 = vpack.c.b16 %v1926, %v1925
      %1928 = vrot.lane.b32.xlu0 %v1927, 64
      %v1929 = vpop.permute.xlu0 %1928
      %v1931 = vsel %vm1092, %v1927, 0
      %v1934 = vsel %vm1092, %v1929, 0
      %1936 = vmatpush.bf16.xpose.msra.mxu0 0
      %1937 = vmatpush.bf16.xpose.msra.mxu0 0
      %1938 = vmatpush.bf16.xpose.msra.mxu0 0
      %1939 = vmatpush.bf16.xpose.msra.mxu0 0
      %1940 = vmatpush.bf16.xpose.msra.mxu0 0
      %1941 = vmatpush.bf16.xpose.msra.mxu0 0
      %1942 = vmatpush.bf16.xpose.msra.mxu0 0
      %1943 = vmatpush.bf16.xpose.msra.mxu0 %v1934
      %1944 = vmatmul.bf16.gmra.mxu0 %v1931
      %v1945 = vpop.f32.mrf.mxu0
      %v1946 = vadd.f32 %v1073, %v1945
      %v1947 = vpop.f32.mrf.mxu0
      %v1948 = vadd.f32 %v1074, %v1947
      %1949 = vdwg.mxu0
      %v1950 = vsel %vm1092, %v1109, -inf
      %1951 = vmax.xlane.f32.xlu0 %v1950
      %v1952 = vpop.xlane.xlu0 %1951
      %v1953 = vsel %vm1092, %v1111, -inf
      %1954 = vmax.xlane.f32.xlu0 %v1953
      %v1955 = vpop.xlane.xlu0 %1954
      %v1956 = vsel %vm1092, %v1136, -inf
      %1957 = vmax.xlane.f32.xlu0 %v1956
      %v1958 = vpop.xlane.xlu0 %1957
      %v1959 = vsel %vm1092, %v1138, -inf
      %1960 = vmax.xlane.f32.xlu0 %v1959
      %v1961 = vpop.xlane.xlu0 %1960
      %v1962 = vsel %vm1092, %v1163, -inf
      %1963 = vmax.xlane.f32.xlu0 %v1962
      %v1964 = vpop.xlane.xlu0 %1963
      %v1965 = vsel %vm1092, %v1165, -inf
      %1966 = vmax.xlane.f32.xlu0 %v1965
      %v1967 = vpop.xlane.xlu0 %1966
      %v1968 = vsel %vm1092, %v1190, -inf
      %1969 = vmax.xlane.f32.xlu0 %v1968
      %v1970 = vpop.xlane.xlu0 %1969
      %v1971 = vsel %vm1092, %v1192, -inf
      %1972 = vmax.xlane.f32.xlu0 %v1971
      %v1973 = vpop.xlane.xlu0 %1972
      %v1974 = vsel %vm1092, %v1217, -inf
      %1975 = vmax.xlane.f32.xlu0 %v1974
      %v1976 = vpop.xlane.xlu0 %1975
      %v1977 = vsel %vm1092, %v1219, -inf
      %1978 = vmax.xlane.f32.xlu0 %v1977
      %v1979 = vpop.xlane.xlu0 %1978
      %v1980 = vsel %vm1092, %v1244, -inf
      %1981 = vmax.xlane.f32.xlu0 %v1980
      %v1982 = vpop.xlane.xlu0 %1981
      %v1983 = vsel %vm1092, %v1246, -inf
      %1984 = vmax.xlane.f32.xlu0 %v1983
      %v1985 = vpop.xlane.xlu0 %1984
      %v1986 = vsel %vm1092, %v1271, -inf
      %1987 = vmax.xlane.f32.xlu0 %v1986
      %v1988 = vpop.xlane.xlu0 %1987
      %v1989 = vsel %vm1092, %v1273, -inf
      %1990 = vmax.xlane.f32.xlu0 %v1989
      %v1991 = vpop.xlane.xlu0 %1990
      %v1992 = vsel %vm1092, %v1298, -inf
      %1993 = vmax.xlane.f32.xlu0 %v1992
      %v1994 = vpop.xlane.xlu0 %1993
      %v1995 = vsel %vm1092, %v1300, -inf
      %1996 = vmax.xlane.f32.xlu0 %v1995
      %v1997 = vpop.xlane.xlu0 %1996
      %v1998 = vsel %vm1092, %v1325, -inf
      %1999 = vmax.xlane.f32.xlu0 %v1998
      %v2000 = vpop.xlane.xlu0 %1999
      %v2001 = vsel %vm1092, %v1327, -inf
      %2002 = vmax.xlane.f32.xlu0 %v2001
      %v2003 = vpop.xlane.xlu0 %2002
      %v2004 = vsel %vm1092, %v1352, -inf
      %2005 = vmax.xlane.f32.xlu0 %v2004
      %v2006 = vpop.xlane.xlu0 %2005
      %v2007 = vsel %vm1092, %v1354, -inf
      %2008 = vmax.xlane.f32.xlu0 %v2007
      %v2009 = vpop.xlane.xlu0 %2008
      %v2010 = vsel %vm1092, %v1379, -inf
      %2011 = vmax.xlane.f32.xlu0 %v2010
      %v2012 = vpop.xlane.xlu0 %2011
      %v2013 = vsel %vm1092, %v1381, -inf
      %2014 = vmax.xlane.f32.xlu0 %v2013
      %v2015 = vpop.xlane.xlu0 %2014
      %v2016 = vsel %vm1092, %v1406, -inf
      %2017 = vmax.xlane.f32.xlu0 %v2016
      %v2018 = vpop.xlane.xlu0 %2017
      %v2019 = vsel %vm1092, %v1408, -inf
      %2020 = vmax.xlane.f32.xlu0 %v2019
      %v2021 = vpop.xlane.xlu0 %2020
      %v2022 = vsel %vm1092, %v1433, -inf
      %2023 = vmax.xlane.f32.xlu0 %v2022
      %v2024 = vpop.xlane.xlu0 %2023
      %v2025 = vsel %vm1092, %v1435, -inf
      %2026 = vmax.xlane.f32.xlu0 %v2025
      %v2027 = vpop.xlane.xlu0 %2026
      %v2028 = vsel %vm1092, %v1460, -inf
      %2029 = vmax.xlane.f32.xlu0 %v2028
      %v2030 = vpop.xlane.xlu0 %2029
      %v2031 = vsel %vm1092, %v1462, -inf
      %2032 = vmax.xlane.f32.xlu0 %v2031
      %v2033 = vpop.xlane.xlu0 %2032
      %v2034 = vsel %vm1092, %v1487, -inf
      %2035 = vmax.xlane.f32.xlu0 %v2034
      %v2036 = vpop.xlane.xlu0 %2035
      %v2037 = vsel %vm1092, %v1489, -inf
      %2038 = vmax.xlane.f32.xlu0 %v2037
      %v2039 = vpop.xlane.xlu0 %2038
      %v2040 = vsel %vm1092, %v1514, -inf
      %2041 = vmax.xlane.f32.xlu0 %v2040
      %v2042 = vpop.xlane.xlu0 %2041
      %v2043 = vsel %vm1092, %v1516, -inf
      %2044 = vmax.xlane.f32.xlu0 %v2043
      %v2045 = vpop.xlane.xlu0 %2044
      %v2046 = vsel %vm1092, %v1541, -inf
      %2047 = vmax.xlane.f32.xlu0 %v2046
      %v2048 = vpop.xlane.xlu0 %2047
      %v2049 = vsel %vm1092, %v1543, -inf
      %2050 = vmax.xlane.f32.xlu0 %v2049
      %v2051 = vpop.xlane.xlu0 %2050
      %v2052 = vsel %vm1092, %v1568, -inf
      %2053 = vmax.xlane.f32.xlu0 %v2052
      %v2054 = vpop.xlane.xlu0 %2053
      %v2055 = vsel %vm1092, %v1570, -inf
      %2056 = vmax.xlane.f32.xlu0 %v2055
      %v2057 = vpop.xlane.xlu0 %2056
      %v2058 = vsel %vm1092, %v1595, -inf
      %2059 = vmax.xlane.f32.xlu0 %v2058
      %v2060 = vpop.xlane.xlu0 %2059
      %v2061 = vsel %vm1092, %v1597, -inf
      %2062 = vmax.xlane.f32.xlu0 %v2061
      %v2063 = vpop.xlane.xlu0 %2062
      %v2064 = vsel %vm1092, %v1622, -inf
      %2065 = vmax.xlane.f32.xlu0 %v2064
      %v2066 = vpop.xlane.xlu0 %2065
      %v2067 = vsel %vm1092, %v1624, -inf
      %2068 = vmax.xlane.f32.xlu0 %v2067
      %v2069 = vpop.xlane.xlu0 %2068
      %v2070 = vsel %vm1092, %v1649, -inf
      %2071 = vmax.xlane.f32.xlu0 %v2070
      %v2072 = vpop.xlane.xlu0 %2071
      %v2073 = vsel %vm1092, %v1651, -inf
      %2074 = vmax.xlane.f32.xlu0 %v2073
      %v2075 = vpop.xlane.xlu0 %2074
      %v2076 = vsel %vm1092, %v1676, -inf
      %2077 = vmax.xlane.f32.xlu0 %v2076
      %v2078 = vpop.xlane.xlu0 %2077
      %v2079 = vsel %vm1092, %v1678, -inf
      %2080 = vmax.xlane.f32.xlu0 %v2079
      %v2081 = vpop.xlane.xlu0 %2080
      %v2082 = vsel %vm1092, %v1703, -inf
      %2083 = vmax.xlane.f32.xlu0 %v2082
      %v2084 = vpop.xlane.xlu0 %2083
      %v2085 = vsel %vm1092, %v1705, -inf
      %2086 = vmax.xlane.f32.xlu0 %v2085
      %v2087 = vpop.xlane.xlu0 %2086
      %v2088 = vsel %vm1092, %v1730, -inf
      %2089 = vmax.xlane.f32.xlu0 %v2088
      %v2090 = vpop.xlane.xlu0 %2089
      %v2091 = vsel %vm1092, %v1732, -inf
      %2092 = vmax.xlane.f32.xlu0 %v2091
      %v2093 = vpop.xlane.xlu0 %2092
      %v2094 = vsel %vm1092, %v1757, -inf
      %2095 = vmax.xlane.f32.xlu0 %v2094
      %v2096 = vpop.xlane.xlu0 %2095
      %v2097 = vsel %vm1092, %v1759, -inf
      %2098 = vmax.xlane.f32.xlu0 %v2097
      %v2099 = vpop.xlane.xlu0 %2098
      %v2100 = vsel %vm1092, %v1784, -inf
      %2101 = vmax.xlane.f32.xlu0 %v2100
      %v2102 = vpop.xlane.xlu0 %2101
      %v2103 = vsel %vm1092, %v1786, -inf
      %2104 = vmax.xlane.f32.xlu0 %v2103
      %v2105 = vpop.xlane.xlu0 %2104
      %v2106 = vsel %vm1092, %v1811, -inf
      %2107 = vmax.xlane.f32.xlu0 %v2106
      %v2108 = vpop.xlane.xlu0 %2107
      %v2109 = vsel %vm1092, %v1813, -inf
      %2110 = vmax.xlane.f32.xlu0 %v2109
      %v2111 = vpop.xlane.xlu0 %2110
      %v2112 = vsel %vm1092, %v1838, -inf
      %2113 = vmax.xlane.f32.xlu0 %v2112
      %v2114 = vpop.xlane.xlu0 %2113
      %v2115 = vsel %vm1092, %v1840, -inf
      %2116 = vmax.xlane.f32.xlu0 %v2115
      %v2117 = vpop.xlane.xlu0 %2116
      %v2118 = vsel %vm1092, %v1865, -inf
      %2119 = vmax.xlane.f32.xlu0 %v2118
      %v2120 = vpop.xlane.xlu0 %2119
      %v2121 = vsel %vm1092, %v1867, -inf
      %2122 = vmax.xlane.f32.xlu0 %v2121
      %v2123 = vpop.xlane.xlu0 %2122
      %v2124 = vsel %vm1092, %v1892, -inf
      %2125 = vmax.xlane.f32.xlu0 %v2124
      %v2126 = vpop.xlane.xlu0 %2125
      %v2127 = vsel %vm1092, %v1894, -inf
      %2128 = vmax.xlane.f32.xlu0 %v2127
      %v2129 = vpop.xlane.xlu0 %2128
      %v2130 = vsel %vm1092, %v1919, -inf
      %2131 = vmax.xlane.f32.xlu0 %v2130
      %v2132 = vpop.xlane.xlu0 %2131
      %v2133 = vsel %vm1092, %v1921, -inf
      %2134 = vmax.xlane.f32.xlu0 %v2133
      %v2135 = vpop.xlane.xlu0 %2134
      %v2136 = vsel %vm1092, %v1946, -inf
      %2137 = vmax.xlane.f32.xlu0 %v2136
      %v2138 = vpop.xlane.xlu0 %2137
      %v2139 = vsel %vm1092, %v1948, -inf
      %2140 = vmax.xlane.f32.xlu0 %v2139
      %v2141 = vpop.xlane.xlu0 %2140
      %v2142 = vsub.f32 %v1109, %v1952
      %v2143 = vsub.f32 %v1111, %v1955
      %v2144 = vsub.f32 %v1136, %v1958
      %v2145 = vsub.f32 %v1138, %v1961
      %v2146 = vsub.f32 %v1163, %v1964
      %v2147 = vsub.f32 %v1165, %v1967
      %v2148 = vsub.f32 %v1190, %v1970
      %v2149 = vsub.f32 %v1192, %v1973
      %v2150 = vsub.f32 %v1217, %v1976
      %v2151 = vsub.f32 %v1219, %v1979
      %v2152 = vsub.f32 %v1244, %v1982
      %v2153 = vsub.f32 %v1246, %v1985
      %v2154 = vsub.f32 %v1271, %v1988
      %v2155 = vsub.f32 %v1273, %v1991
      %v2156 = vsub.f32 %v1298, %v1994
      %v2157 = vsub.f32 %v1300, %v1997
      %v2158 = vsub.f32 %v1325, %v2000
      %v2159 = vsub.f32 %v1327, %v2003
      %v2160 = vsub.f32 %v1352, %v2006
      %v2161 = vsub.f32 %v1354, %v2009
      %v2162 = vsub.f32 %v1379, %v2012
      %v2163 = vsub.f32 %v1381, %v2015
      %v2164 = vsub.f32 %v1406, %v2018
      %v2165 = vsub.f32 %v1408, %v2021
      %v2166 = vsub.f32 %v1433, %v2024
      %v2167 = vsub.f32 %v1435, %v2027
      %v2168 = vsub.f32 %v1460, %v2030
      %v2169 = vsub.f32 %v1462, %v2033
      %v2170 = vsub.f32 %v1487, %v2036
      %v2171 = vsub.f32 %v1489, %v2039
      %v2172 = vsub.f32 %v1514, %v2042
      %v2173 = vsub.f32 %v1516, %v2045
      %v2174 = vsub.f32 %v1541, %v2048
      %v2175 = vsub.f32 %v1543, %v2051
      %v2176 = vsub.f32 %v1568, %v2054
      %v2177 = vsub.f32 %v1570, %v2057
      %v2178 = vsub.f32 %v1595, %v2060
      %v2179 = vsub.f32 %v1597, %v2063
      %v2180 = vsub.f32 %v1622, %v2066
      %v2181 = vsub.f32 %v1624, %v2069
      %v2182 = vsub.f32 %v1649, %v2072
      %v2183 = vsub.f32 %v1651, %v2075
      %v2184 = vsub.f32 %v1676, %v2078
      %v2185 = vsub.f32 %v1678, %v2081
      %v2186 = vsub.f32 %v1703, %v2084
      %v2187 = vsub.f32 %v1705, %v2087
      %v2188 = vsub.f32 %v1730, %v2090
      %v2189 = vsub.f32 %v1732, %v2093
      %v2190 = vsub.f32 %v1757, %v2096
      %v2191 = vsub.f32 %v1759, %v2099
      %v2192 = vsub.f32 %v1784, %v2102
      %v2193 = vsub.f32 %v1786, %v2105
      %v2194 = vsub.f32 %v1811, %v2108
      %v2195 = vsub.f32 %v1813, %v2111
      %v2196 = vsub.f32 %v1838, %v2114
      %v2197 = vsub.f32 %v1840, %v2117
      %v2198 = vsub.f32 %v1865, %v2120
      %v2199 = vsub.f32 %v1867, %v2123
      %v2200 = vsub.f32 %v1892, %v2126
      %v2201 = vsub.f32 %v1894, %v2129
      %v2202 = vsub.f32 %v1919, %v2132
      %v2203 = vsub.f32 %v1921, %v2135
      %v2204 = vsub.f32 %v1946, %v2138
      %v2205 = vsub.f32 %v1948, %v2141
      %v2206 = vmul.f32 %v2142, 1.442695
      %v2207 = vpow.pop %v2206
      %v2208 = vmul.f32 %v2143, 1.442695
      %v2209 = vpow.pop %v2208
      %v2210 = vmul.f32 %v2144, 1.442695
      %v2211 = vpow.pop %v2210
      %v2212 = vmul.f32 %v2145, 1.442695
      %v2213 = vpow.pop %v2212
      %v2214 = vmul.f32 %v2146, 1.442695
      %v2215 = vpow.pop %v2214
      %v2216 = vmul.f32 %v2147, 1.442695
      %v2217 = vpow.pop %v2216
      %v2218 = vmul.f32 %v2148, 1.442695
      %v2219 = vpow.pop %v2218
      %v2220 = vmul.f32 %v2149, 1.442695
      %v2221 = vpow.pop %v2220
      %v2222 = vmul.f32 %v2150, 1.442695
      %v2223 = vpow.pop %v2222
      %v2224 = vmul.f32 %v2151, 1.442695
      %v2225 = vpow.pop %v2224
      %v2226 = vmul.f32 %v2152, 1.442695
      %v2227 = vpow.pop %v2226
      %v2228 = vmul.f32 %v2153, 1.442695
      %v2229 = vpow.pop %v2228
      %v2230 = vmul.f32 %v2154, 1.442695
      %v2231 = vpow.pop %v2230
      %v2232 = vmul.f32 %v2155, 1.442695
      %v2233 = vpow.pop %v2232
      %v2234 = vmul.f32 %v2156, 1.442695
      %v2235 = vpow.pop %v2234
      %v2236 = vmul.f32 %v2157, 1.442695
      %v2237 = vpow.pop %v2236
      %v2238 = vmul.f32 %v2158, 1.442695
      %v2239 = vpow.pop %v2238
      %v2240 = vmul.f32 %v2159, 1.442695
      %v2241 = vpow.pop %v2240
      %v2242 = vmul.f32 %v2160, 1.442695
      %v2243 = vpow.pop %v2242
      %v2244 = vmul.f32 %v2161, 1.442695
      %v2245 = vpow.pop %v2244
      %v2246 = vmul.f32 %v2162, 1.442695
      %v2247 = vpow.pop %v2246
      %v2248 = vmul.f32 %v2163, 1.442695
      %v2249 = vpow.pop %v2248
      %v2250 = vmul.f32 %v2164, 1.442695
      %v2251 = vpow.pop %v2250
      %v2252 = vmul.f32 %v2165, 1.442695
      %v2253 = vpow.pop %v2252
      %v2254 = vmul.f32 %v2166, 1.442695
      %v2255 = vpow.pop %v2254
      %v2256 = vmul.f32 %v2167, 1.442695
      %v2257 = vpow.pop %v2256
      %v2258 = vmul.f32 %v2168, 1.442695
      %v2259 = vpow.pop %v2258
      %v2260 = vmul.f32 %v2169, 1.442695
      %v2261 = vpow.pop %v2260
      %v2262 = vmul.f32 %v2170, 1.442695
      %v2263 = vpow.pop %v2262
      %v2264 = vmul.f32 %v2171, 1.442695
      %v2265 = vpow.pop %v2264
      %v2266 = vmul.f32 %v2172, 1.442695
      %v2267 = vpow.pop %v2266
      %v2268 = vmul.f32 %v2173, 1.442695
      %v2269 = vpow.pop %v2268
      %v2270 = vmul.f32 %v2174, 1.442695
      %v2271 = vpow.pop %v2270
      %v2272 = vmul.f32 %v2175, 1.442695
      %v2273 = vpow.pop %v2272
      %v2274 = vmul.f32 %v2176, 1.442695
      %v2275 = vpow.pop %v2274
      %v2276 = vmul.f32 %v2177, 1.442695
      %v2277 = vpow.pop %v2276
      %v2278 = vmul.f32 %v2178, 1.442695
      %v2279 = vpow.pop %v2278
      %v2280 = vmul.f32 %v2179, 1.442695
      %v2281 = vpow.pop %v2280
      %v2282 = vmul.f32 %v2180, 1.442695
      %v2283 = vpow.pop %v2282
      %v2284 = vmul.f32 %v2181, 1.442695
      %v2285 = vpow.pop %v2284
      %v2286 = vmul.f32 %v2182, 1.442695
      %v2287 = vpow.pop %v2286
      %v2288 = vmul.f32 %v2183, 1.442695
      %v2289 = vpow.pop %v2288
      %v2290 = vmul.f32 %v2184, 1.442695
      %v2291 = vpow.pop %v2290
      %v2292 = vmul.f32 %v2185, 1.442695
      %v2293 = vpow.pop %v2292
      %v2294 = vmul.f32 %v2186, 1.442695
      %v2295 = vpow.pop %v2294
      %v2296 = vmul.f32 %v2187, 1.442695
      %v2297 = vpow.pop %v2296
      %v2298 = vmul.f32 %v2188, 1.442695
      %v2299 = vpow.pop %v2298
      %v2300 = vmul.f32 %v2189, 1.442695
      %v2301 = vpow.pop %v2300
      %v2302 = vmul.f32 %v2190, 1.442695
      %v2303 = vpow.pop %v2302
      %v2304 = vmul.f32 %v2191, 1.442695
      %v2305 = vpow.pop %v2304
      %v2306 = vmul.f32 %v2192, 1.442695
      %v2307 = vpow.pop %v2306
      %v2308 = vmul.f32 %v2193, 1.442695
      %v2309 = vpow.pop %v2308
      %v2310 = vmul.f32 %v2194, 1.442695
      %v2311 = vpow.pop %v2310
      %v2312 = vmul.f32 %v2195, 1.442695
      %v2313 = vpow.pop %v2312
      %v2314 = vmul.f32 %v2196, 1.442695
      %v2315 = vpow.pop %v2314
      %v2316 = vmul.f32 %v2197, 1.442695
      %v2317 = vpow.pop %v2316
      %v2318 = vmul.f32 %v2198, 1.442695
      %v2319 = vpow.pop %v2318
      %v2320 = vmul.f32 %v2199, 1.442695
      %v2321 = vpow.pop %v2320
      %v2322 = vmul.f32 %v2200, 1.442695
      %v2323 = vpow.pop %v2322
      %v2324 = vmul.f32 %v2201, 1.442695
      %v2325 = vpow.pop %v2324
      %v2326 = vmul.f32 %v2202, 1.442695
      %v2327 = vpow.pop %v2326
      %v2328 = vmul.f32 %v2203, 1.442695
      %v2329 = vpow.pop %v2328
      %v2330 = vmul.f32 %v2204, 1.442695
      %v2331 = vpow.pop %v2330
      %v2332 = vmul.f32 %v2205, 1.442695
      %v2333 = vpow.pop %v2332
      %v2334 = vsel %vm1092, %v2207, 0.0
      %2335 = vadd.xlane.f32.xlu0 %v2334
      %v2336 = vpop.xlane.xlu0 %2335
      %v2337 = vsel %vm1092, %v2209, 0.0
      %2338 = vadd.xlane.f32.xlu0 %v2337
      %v2339 = vpop.xlane.xlu0 %2338
      %v2340 = vsel %vm1092, %v2211, 0.0
      %2341 = vadd.xlane.f32.xlu0 %v2340
      %v2342 = vpop.xlane.xlu0 %2341
      %v2343 = vsel %vm1092, %v2213, 0.0
      %2344 = vadd.xlane.f32.xlu0 %v2343
      %v2345 = vpop.xlane.xlu0 %2344
      %v2346 = vsel %vm1092, %v2215, 0.0
      %2347 = vadd.xlane.f32.xlu0 %v2346
      %v2348 = vpop.xlane.xlu0 %2347
      %v2349 = vsel %vm1092, %v2217, 0.0
      %2350 = vadd.xlane.f32.xlu0 %v2349
      %v2351 = vpop.xlane.xlu0 %2350
      %v2352 = vsel %vm1092, %v2219, 0.0
      %2353 = vadd.xlane.f32.xlu0 %v2352
      %v2354 = vpop.xlane.xlu0 %2353
      %v2355 = vsel %vm1092, %v2221, 0.0
      %2356 = vadd.xlane.f32.xlu0 %v2355
      %v2357 = vpop.xlane.xlu0 %2356
      %v2358 = vsel %vm1092, %v2223, 0.0
      %2359 = vadd.xlane.f32.xlu0 %v2358
      %v2360 = vpop.xlane.xlu0 %2359
      %v2361 = vsel %vm1092, %v2225, 0.0
      %2362 = vadd.xlane.f32.xlu0 %v2361
      %v2363 = vpop.xlane.xlu0 %2362
      %v2364 = vsel %vm1092, %v2227, 0.0
      %2365 = vadd.xlane.f32.xlu0 %v2364
      %v2366 = vpop.xlane.xlu0 %2365
      %v2367 = vsel %vm1092, %v2229, 0.0
      %2368 = vadd.xlane.f32.xlu0 %v2367
      %v2369 = vpop.xlane.xlu0 %2368
      %v2370 = vsel %vm1092, %v2231, 0.0
      %2371 = vadd.xlane.f32.xlu0 %v2370
      %v2372 = vpop.xlane.xlu0 %2371
      %v2373 = vsel %vm1092, %v2233, 0.0
      %2374 = vadd.xlane.f32.xlu0 %v2373
      %v2375 = vpop.xlane.xlu0 %2374
      %v2376 = vsel %vm1092, %v2235, 0.0
      %2377 = vadd.xlane.f32.xlu0 %v2376
      %v2378 = vpop.xlane.xlu0 %2377
      %v2379 = vsel %vm1092, %v2237, 0.0
      %2380 = vadd.xlane.f32.xlu0 %v2379
      %v2381 = vpop.xlane.xlu0 %2380
      %v2382 = vsel %vm1092, %v2239, 0.0
      %2383 = vadd.xlane.f32.xlu0 %v2382
      %v2384 = vpop.xlane.xlu0 %2383
      %v2385 = vsel %vm1092, %v2241, 0.0
      %2386 = vadd.xlane.f32.xlu0 %v2385
      %v2387 = vpop.xlane.xlu0 %2386
      %v2388 = vsel %vm1092, %v2243, 0.0
      %2389 = vadd.xlane.f32.xlu0 %v2388
      %v2390 = vpop.xlane.xlu0 %2389
      %v2391 = vsel %vm1092, %v2245, 0.0
      %2392 = vadd.xlane.f32.xlu0 %v2391
      %v2393 = vpop.xlane.xlu0 %2392
      %v2394 = vsel %vm1092, %v2247, 0.0
      %2395 = vadd.xlane.f32.xlu0 %v2394
      %v2396 = vpop.xlane.xlu0 %2395
      %v2397 = vsel %vm1092, %v2249, 0.0
      %2398 = vadd.xlane.f32.xlu0 %v2397
      %v2399 = vpop.xlane.xlu0 %2398
      %v2400 = vsel %vm1092, %v2251, 0.0
      %2401 = vadd.xlane.f32.xlu0 %v2400
      %v2402 = vpop.xlane.xlu0 %2401
      %v2403 = vsel %vm1092, %v2253, 0.0
      %2404 = vadd.xlane.f32.xlu0 %v2403
      %v2405 = vpop.xlane.xlu0 %2404
      %v2406 = vsel %vm1092, %v2255, 0.0
      %2407 = vadd.xlane.f32.xlu0 %v2406
      %v2408 = vpop.xlane.xlu0 %2407
      %v2409 = vsel %vm1092, %v2257, 0.0
      %2410 = vadd.xlane.f32.xlu0 %v2409
      %v2411 = vpop.xlane.xlu0 %2410
      %v2412 = vsel %vm1092, %v2259, 0.0
      %2413 = vadd.xlane.f32.xlu0 %v2412
      %v2414 = vpop.xlane.xlu0 %2413
      %v2415 = vsel %vm1092, %v2261, 0.0
      %2416 = vadd.xlane.f32.xlu0 %v2415
      %v2417 = vpop.xlane.xlu0 %2416
      %v2418 = vsel %vm1092, %v2263, 0.0
      %2419 = vadd.xlane.f32.xlu0 %v2418
      %v2420 = vpop.xlane.xlu0 %2419
      %v2421 = vsel %vm1092, %v2265, 0.0
      %2422 = vadd.xlane.f32.xlu0 %v2421
      %v2423 = vpop.xlane.xlu0 %2422
      %v2424 = vsel %vm1092, %v2267, 0.0
      %2425 = vadd.xlane.f32.xlu0 %v2424
      %v2426 = vpop.xlane.xlu0 %2425
      %v2427 = vsel %vm1092, %v2269, 0.0
      %2428 = vadd.xlane.f32.xlu0 %v2427
      %v2429 = vpop.xlane.xlu0 %2428
      %v2430 = vsel %vm1092, %v2271, 0.0
      %2431 = vadd.xlane.f32.xlu0 %v2430
      %v2432 = vpop.xlane.xlu0 %2431
      %v2433 = vsel %vm1092, %v2273, 0.0
      %2434 = vadd.xlane.f32.xlu0 %v2433
      %v2435 = vpop.xlane.xlu0 %2434
      %v2436 = vsel %vm1092, %v2275, 0.0
      %2437 = vadd.xlane.f32.xlu0 %v2436
      %v2438 = vpop.xlane.xlu0 %2437
      %v2439 = vsel %vm1092, %v2277, 0.0
      %2440 = vadd.xlane.f32.xlu0 %v2439
      %v2441 = vpop.xlane.xlu0 %2440
      %v2442 = vsel %vm1092, %v2279, 0.0
      %2443 = vadd.xlane.f32.xlu0 %v2442
      %v2444 = vpop.xlane.xlu0 %2443
      %v2445 = vsel %vm1092, %v2281, 0.0
      %2446 = vadd.xlane.f32.xlu0 %v2445
      %v2447 = vpop.xlane.xlu0 %2446
      %v2448 = vsel %vm1092, %v2283, 0.0
      %2449 = vadd.xlane.f32.xlu0 %v2448
      %v2450 = vpop.xlane.xlu0 %2449
      %v2451 = vsel %vm1092, %v2285, 0.0
      %2452 = vadd.xlane.f32.xlu0 %v2451
      %v2453 = vpop.xlane.xlu0 %2452
      %v2454 = vsel %vm1092, %v2287, 0.0
      %2455 = vadd.xlane.f32.xlu0 %v2454
      %v2456 = vpop.xlane.xlu0 %2455
      %v2457 = vsel %vm1092, %v2289, 0.0
      %2458 = vadd.xlane.f32.xlu0 %v2457
      %v2459 = vpop.xlane.xlu0 %2458
      %v2460 = vsel %vm1092, %v2291, 0.0
      %2461 = vadd.xlane.f32.xlu0 %v2460
      %v2462 = vpop.xlane.xlu0 %2461
      %v2463 = vsel %vm1092, %v2293, 0.0
      %2464 = vadd.xlane.f32.xlu0 %v2463
      %v2465 = vpop.xlane.xlu0 %2464
      %v2466 = vsel %vm1092, %v2295, 0.0
      %2467 = vadd.xlane.f32.xlu0 %v2466
      %v2468 = vpop.xlane.xlu0 %2467
      %v2469 = vsel %vm1092, %v2297, 0.0
      %2470 = vadd.xlane.f32.xlu0 %v2469
      %v2471 = vpop.xlane.xlu0 %2470
      %v2472 = vsel %vm1092, %v2299, 0.0
      %2473 = vadd.xlane.f32.xlu0 %v2472
      %v2474 = vpop.xlane.xlu0 %2473
      %v2475 = vsel %vm1092, %v2301, 0.0
      %2476 = vadd.xlane.f32.xlu0 %v2475
      %v2477 = vpop.xlane.xlu0 %2476
      %v2478 = vsel %vm1092, %v2303, 0.0
      %2479 = vadd.xlane.f32.xlu0 %v2478
      %v2480 = vpop.xlane.xlu0 %2479
      %v2481 = vsel %vm1092, %v2305, 0.0
      %2482 = vadd.xlane.f32.xlu0 %v2481
      %v2483 = vpop.xlane.xlu0 %2482
      %v2484 = vsel %vm1092, %v2307, 0.0
      %2485 = vadd.xlane.f32.xlu0 %v2484
      %v2486 = vpop.xlane.xlu0 %2485
      %v2487 = vsel %vm1092, %v2309, 0.0
      %2488 = vadd.xlane.f32.xlu0 %v2487
      %v2489 = vpop.xlane.xlu0 %2488
      %v2490 = vsel %vm1092, %v2311, 0.0
      %2491 = vadd.xlane.f32.xlu0 %v2490
      %v2492 = vpop.xlane.xlu0 %2491
      %v2493 = vsel %vm1092, %v2313, 0.0
      %2494 = vadd.xlane.f32.xlu0 %v2493
      %v2495 = vpop.xlane.xlu0 %2494
      %v2496 = vsel %vm1092, %v2315, 0.0
      %2497 = vadd.xlane.f32.xlu0 %v2496
      %v2498 = vpop.xlane.xlu0 %2497
      %v2499 = vsel %vm1092, %v2317, 0.0
      %2500 = vadd.xlane.f32.xlu0 %v2499
      %v2501 = vpop.xlane.xlu0 %2500
      %v2502 = vsel %vm1092, %v2319, 0.0
      %2503 = vadd.xlane.f32.xlu0 %v2502
      %v2504 = vpop.xlane.xlu0 %2503
      %v2505 = vsel %vm1092, %v2321, 0.0
      %2506 = vadd.xlane.f32.xlu0 %v2505
      %v2507 = vpop.xlane.xlu0 %2506
      %v2508 = vsel %vm1092, %v2323, 0.0
      %2509 = vadd.xlane.f32.xlu0 %v2508
      %v2510 = vpop.xlane.xlu0 %2509
      %v2511 = vsel %vm1092, %v2325, 0.0
      %2512 = vadd.xlane.f32.xlu0 %v2511
      %v2513 = vpop.xlane.xlu0 %2512
      %v2514 = vsel %vm1092, %v2327, 0.0
      %2515 = vadd.xlane.f32.xlu0 %v2514
      %v2516 = vpop.xlane.xlu0 %2515
      %v2517 = vsel %vm1092, %v2329, 0.0
      %2518 = vadd.xlane.f32.xlu0 %v2517
      %v2519 = vpop.xlane.xlu0 %2518
      %v2520 = vsel %vm1092, %v2331, 0.0
      %2521 = vadd.xlane.f32.xlu0 %v2520
      %v2522 = vpop.xlane.xlu0 %2521
      %v2523 = vsel %vm1092, %v2333, 0.0
      %2524 = vadd.xlane.f32.xlu0 %v2523
      %v2525 = vpop.xlane.xlu0 %2524
      %v2526 = vrcp.pop %v2336
      %v2527 = vrcp.pop %v2339
      %v2528 = vrcp.pop %v2342
      %v2529 = vrcp.pop %v2345
      %v2530 = vrcp.pop %v2348
      %v2531 = vrcp.pop %v2351
      %v2532 = vrcp.pop %v2354
      %v2533 = vrcp.pop %v2357
      %v2534 = vrcp.pop %v2360
      %v2535 = vrcp.pop %v2363
      %v2536 = vrcp.pop %v2366
      %v2537 = vrcp.pop %v2369
      %v2538 = vrcp.pop %v2372
      %v2539 = vrcp.pop %v2375
      %v2540 = vrcp.pop %v2378
      %v2541 = vrcp.pop %v2381
      %v2542 = vrcp.pop %v2384
      %v2543 = vrcp.pop %v2387
      %v2544 = vrcp.pop %v2390
      %v2545 = vrcp.pop %v2393
      %v2546 = vrcp.pop %v2396
      %v2547 = vrcp.pop %v2399
      %v2548 = vrcp.pop %v2402
      %v2549 = vrcp.pop %v2405
      %v2550 = vrcp.pop %v2408
      %v2551 = vrcp.pop %v2411
      %v2552 = vrcp.pop %v2414
      %v2553 = vrcp.pop %v2417
      %v2554 = vrcp.pop %v2420
      %v2555 = vrcp.pop %v2423
      %v2556 = vrcp.pop %v2426
      %v2557 = vrcp.pop %v2429
      %v2558 = vrcp.pop %v2432
      %v2559 = vrcp.pop %v2435
      %v2560 = vrcp.pop %v2438
      %v2561 = vrcp.pop %v2441
      %v2562 = vrcp.pop %v2444
      %v2563 = vrcp.pop %v2447
      %v2564 = vrcp.pop %v2450
      %v2565 = vrcp.pop %v2453
      %v2566 = vrcp.pop %v2456
      %v2567 = vrcp.pop %v2459
      %v2568 = vrcp.pop %v2462
      %v2569 = vrcp.pop %v2465
      %v2570 = vrcp.pop %v2468
      %v2571 = vrcp.pop %v2471
      %v2572 = vrcp.pop %v2474
      %v2573 = vrcp.pop %v2477
      %v2574 = vrcp.pop %v2480
      %v2575 = vrcp.pop %v2483
      %v2576 = vrcp.pop %v2486
      %v2577 = vrcp.pop %v2489
      %v2578 = vrcp.pop %v2492
      %v2579 = vrcp.pop %v2495
      %v2580 = vrcp.pop %v2498
      %v2581 = vrcp.pop %v2501
      %v2582 = vrcp.pop %v2504
      %v2583 = vrcp.pop %v2507
      %v2584 = vrcp.pop %v2510
      %v2585 = vrcp.pop %v2513
      %v2586 = vrcp.pop %v2516
      %v2587 = vrcp.pop %v2519
      %v2588 = vrcp.pop %v2522
      %v2589 = vrcp.pop %v2525
      %v2590 = vmul.f32 %v2207, %v2526
      %v2591 = vmul.f32 %v2209, %v2527
      %v2592 = vmul.f32 %v2211, %v2528
      %v2593 = vmul.f32 %v2213, %v2529
      %v2594 = vmul.f32 %v2215, %v2530
      %v2595 = vmul.f32 %v2217, %v2531
      %v2596 = vmul.f32 %v2219, %v2532
      %v2597 = vmul.f32 %v2221, %v2533
      %v2598 = vmul.f32 %v2223, %v2534
      %v2599 = vmul.f32 %v2225, %v2535
      %v2600 = vmul.f32 %v2227, %v2536
      %v2601 = vmul.f32 %v2229, %v2537
      %v2602 = vmul.f32 %v2231, %v2538
      %v2603 = vmul.f32 %v2233, %v2539
      %v2604 = vmul.f32 %v2235, %v2540
      %v2605 = vmul.f32 %v2237, %v2541
      %v2606 = vmul.f32 %v2239, %v2542
      %v2607 = vmul.f32 %v2241, %v2543
      %v2608 = vmul.f32 %v2243, %v2544
      %v2609 = vmul.f32 %v2245, %v2545
      %v2610 = vmul.f32 %v2247, %v2546
      %v2611 = vmul.f32 %v2249, %v2547
      %v2612 = vmul.f32 %v2251, %v2548
      %v2613 = vmul.f32 %v2253, %v2549
      %v2614 = vmul.f32 %v2255, %v2550
      %v2615 = vmul.f32 %v2257, %v2551
      %v2616 = vmul.f32 %v2259, %v2552
      %v2617 = vmul.f32 %v2261, %v2553
      %v2618 = vmul.f32 %v2263, %v2554
      %v2619 = vmul.f32 %v2265, %v2555
      %v2620 = vmul.f32 %v2267, %v2556
      %v2621 = vmul.f32 %v2269, %v2557
      %v2622 = vmul.f32 %v2271, %v2558
      %v2623 = vmul.f32 %v2273, %v2559
      %v2624 = vmul.f32 %v2275, %v2560
      %v2625 = vmul.f32 %v2277, %v2561
      %v2626 = vmul.f32 %v2279, %v2562
      %v2627 = vmul.f32 %v2281, %v2563
      %v2628 = vmul.f32 %v2283, %v2564
      %v2629 = vmul.f32 %v2285, %v2565
      %v2630 = vmul.f32 %v2287, %v2566
      %v2631 = vmul.f32 %v2289, %v2567
      %v2632 = vmul.f32 %v2291, %v2568
      %v2633 = vmul.f32 %v2293, %v2569
      %v2634 = vmul.f32 %v2295, %v2570
      %v2635 = vmul.f32 %v2297, %v2571
      %v2636 = vmul.f32 %v2299, %v2572
      %v2637 = vmul.f32 %v2301, %v2573
      %v2638 = vmul.f32 %v2303, %v2574
      %v2639 = vmul.f32 %v2305, %v2575
      %v2640 = vmul.f32 %v2307, %v2576
      %v2641 = vmul.f32 %v2309, %v2577
      %v2642 = vmul.f32 %v2311, %v2578
      %v2643 = vmul.f32 %v2313, %v2579
      %v2644 = vmul.f32 %v2315, %v2580
      %v2645 = vmul.f32 %v2317, %v2581
      %v2646 = vmul.f32 %v2319, %v2582
      %v2647 = vmul.f32 %v2321, %v2583
      %v2648 = vmul.f32 %v2323, %v2584
      %v2649 = vmul.f32 %v2325, %v2585
      %v2650 = vmul.f32 %v2327, %v2586
      %v2651 = vmul.f32 %v2329, %v2587
      %v2652 = vmul.f32 %v2331, %v2588
      %v2653 = vmul.f32 %v2333, %v2589
      %v2654 = vpack.c.bf16 %v2590, %v2590
      %v2655 = vpack.c.bf16 %v2591, %v2591
      %v2656 = vpack.c.bf16 %v2592, %v2592
      %v2657 = vpack.c.bf16 %v2593, %v2593
      %v2658 = vpack.c.bf16 %v2594, %v2594
      %v2659 = vpack.c.bf16 %v2595, %v2595
      %v2660 = vpack.c.bf16 %v2596, %v2596
      %v2661 = vpack.c.bf16 %v2597, %v2597
      %v2662 = vpack.c.bf16 %v2598, %v2598
      %v2663 = vpack.c.bf16 %v2599, %v2599
      %v2664 = vpack.c.bf16 %v2600, %v2600
      %v2665 = vpack.c.bf16 %v2601, %v2601
      %v2666 = vpack.c.bf16 %v2602, %v2602
      %v2667 = vpack.c.bf16 %v2603, %v2603
      %v2668 = vpack.c.bf16 %v2604, %v2604
      %v2669 = vpack.c.bf16 %v2605, %v2605
      %v2670 = vpack.c.bf16 %v2606, %v2606
      %v2671 = vpack.c.bf16 %v2607, %v2607
      %v2672 = vpack.c.bf16 %v2608, %v2608
      %v2673 = vpack.c.bf16 %v2609, %v2609
      %v2674 = vpack.c.bf16 %v2610, %v2610
      %v2675 = vpack.c.bf16 %v2611, %v2611
      %v2676 = vpack.c.bf16 %v2612, %v2612
      %v2677 = vpack.c.bf16 %v2613, %v2613
      %v2678 = vpack.c.bf16 %v2614, %v2614
      %v2679 = vpack.c.bf16 %v2615, %v2615
      %v2680 = vpack.c.bf16 %v2616, %v2616
      %v2681 = vpack.c.bf16 %v2617, %v2617
      %v2682 = vpack.c.bf16 %v2618, %v2618
      %v2683 = vpack.c.bf16 %v2619, %v2619
      %v2684 = vpack.c.bf16 %v2620, %v2620
      %v2685 = vpack.c.bf16 %v2621, %v2621
      %v2686 = vpack.c.bf16 %v2622, %v2622
      %v2687 = vpack.c.bf16 %v2623, %v2623
      %v2688 = vpack.c.bf16 %v2624, %v2624
      %v2689 = vpack.c.bf16 %v2625, %v2625
      %v2690 = vpack.c.bf16 %v2626, %v2626
      %v2691 = vpack.c.bf16 %v2627, %v2627
      %v2692 = vpack.c.bf16 %v2628, %v2628
      %v2693 = vpack.c.bf16 %v2629, %v2629
      %v2694 = vpack.c.bf16 %v2630, %v2630
      %v2695 = vpack.c.bf16 %v2631, %v2631
      %v2696 = vpack.c.bf16 %v2632, %v2632
      %v2697 = vpack.c.bf16 %v2633, %v2633
      %v2698 = vpack.c.bf16 %v2634, %v2634
      %v2699 = vpack.c.bf16 %v2635, %v2635
      %v2700 = vpack.c.bf16 %v2636, %v2636
      %v2701 = vpack.c.bf16 %v2637, %v2637
      %v2702 = vpack.c.bf16 %v2638, %v2638
      %v2703 = vpack.c.bf16 %v2639, %v2639
      %v2704 = vpack.c.bf16 %v2640, %v2640
      %v2705 = vpack.c.bf16 %v2641, %v2641
      %v2706 = vpack.c.bf16 %v2642, %v2642
      %v2707 = vpack.c.bf16 %v2643, %v2643
      %v2708 = vpack.c.bf16 %v2644, %v2644
      %v2709 = vpack.c.bf16 %v2645, %v2645
      %v2710 = vpack.c.bf16 %v2646, %v2646
      %v2711 = vpack.c.bf16 %v2647, %v2647
      %v2712 = vpack.c.bf16 %v2648, %v2648
      %v2713 = vpack.c.bf16 %v2649, %v2649
      %v2714 = vpack.c.bf16 %v2650, %v2650
      %v2715 = vpack.c.bf16 %v2651, %v2651
      %v2716 = vpack.c.bf16 %v2652, %v2652
      %v2717 = vpack.c.bf16 %v2653, %v2653
      %v2720 = vunpack.c.l.b16 %v2654
      %v2721 = vunpack.c.l.b16 %v2655
      %v2722 = vpack.c.b16 %v2721, %v2720
      %v2725 = vunpack.c.l.b16 %v1009
      %v2726 = vunpack.c.l.b16 %v1010
      %v2727 = vpack.c.b16 %v2726, %v2725
      %v2730 = vsel %vm1092, %v2722, 0
      %2732 = vmatpush.bf16.msra.mxu0 0
      %2733 = vmatpush.bf16.msra.mxu0 0
      %2734 = vmatpush.bf16.msra.mxu0 0
      %2735 = vmatpush.bf16.msra.mxu0 0
      %2736 = vmatpush.bf16.msra.mxu0 0
      %2737 = vmatpush.bf16.msra.mxu0 0
      %2738 = vmatpush.bf16.msra.mxu0 0
      %2739 = vmatpush.bf16.msra.mxu0 %v2727
      %2740 = vmatmul.bf16.gmra.mxu0 %v2730
      %v2741 = vpop.f32.mrf.mxu0
      %v2742 = vadd.f32 0.0, %v2741
      %v2743 = vpop.f32.mrf.mxu0
      %v2744 = vadd.f32 0.0, %v2743
      %2745 = vdwg.mxu0
      %v2748 = vunpack.c.l.b16 %v2656
      %v2749 = vunpack.c.l.b16 %v2657
      %v2750 = vpack.c.b16 %v2749, %v2748
      %v2753 = vunpack.c.l.b16 %v1011
      %v2754 = vunpack.c.l.b16 %v1012
      %v2755 = vpack.c.b16 %v2754, %v2753
      %v2758 = vsel %vm1092, %v2750, 0
      %2760 = vmatpush.bf16.msra.mxu0 0
      %2761 = vmatpush.bf16.msra.mxu0 0
      %2762 = vmatpush.bf16.msra.mxu0 0
      %2763 = vmatpush.bf16.msra.mxu0 0
      %2764 = vmatpush.bf16.msra.mxu0 0
      %2765 = vmatpush.bf16.msra.mxu0 0
      %2766 = vmatpush.bf16.msra.mxu0 0
      %2767 = vmatpush.bf16.msra.mxu0 %v2755
      %2768 = vmatmul.bf16.gmra.mxu0 %v2758
      %v2769 = vpop.f32.mrf.mxu0
      %v2770 = vadd.f32 0.0, %v2769
      %v2771 = vpop.f32.mrf.mxu0
      %v2772 = vadd.f32 0.0, %v2771
      %2773 = vdwg.mxu0
      %v2776 = vunpack.c.l.b16 %v2658
      %v2777 = vunpack.c.l.b16 %v2659
      %v2778 = vpack.c.b16 %v2777, %v2776
      %v2781 = vunpack.c.l.b16 %v1013
      %v2782 = vunpack.c.l.b16 %v1014
      %v2783 = vpack.c.b16 %v2782, %v2781
      %v2786 = vsel %vm1092, %v2778, 0
      %2788 = vmatpush.bf16.msra.mxu0 0
      %2789 = vmatpush.bf16.msra.mxu0 0
      %2790 = vmatpush.bf16.msra.mxu0 0
      %2791 = vmatpush.bf16.msra.mxu0 0
      %2792 = vmatpush.bf16.msra.mxu0 0
      %2793 = vmatpush.bf16.msra.mxu0 0
      %2794 = vmatpush.bf16.msra.mxu0 0
      %2795 = vmatpush.bf16.msra.mxu0 %v2783
      %2796 = vmatmul.bf16.gmra.mxu0 %v2786
      %v2797 = vpop.f32.mrf.mxu0
      %v2798 = vadd.f32 0.0, %v2797
      %v2799 = vpop.f32.mrf.mxu0
      %v2800 = vadd.f32 0.0, %v2799
      %2801 = vdwg.mxu0
      %v2804 = vunpack.c.l.b16 %v2660
      %v2805 = vunpack.c.l.b16 %v2661
      %v2806 = vpack.c.b16 %v2805, %v2804
      %v2809 = vunpack.c.l.b16 %v1015
      %v2810 = vunpack.c.l.b16 %v1016
      %v2811 = vpack.c.b16 %v2810, %v2809
      %v2814 = vsel %vm1092, %v2806, 0
      %2816 = vmatpush.bf16.msra.mxu0 0
      %2817 = vmatpush.bf16.msra.mxu0 0
      %2818 = vmatpush.bf16.msra.mxu0 0
      %2819 = vmatpush.bf16.msra.mxu0 0
      %2820 = vmatpush.bf16.msra.mxu0 0
      %2821 = vmatpush.bf16.msra.mxu0 0
      %2822 = vmatpush.bf16.msra.mxu0 0
      %2823 = vmatpush.bf16.msra.mxu0 %v2811
      %2824 = vmatmul.bf16.gmra.mxu0 %v2814
      %v2825 = vpop.f32.mrf.mxu0
      %v2826 = vadd.f32 0.0, %v2825
      %v2827 = vpop.f32.mrf.mxu0
      %v2828 = vadd.f32 0.0, %v2827
      %2829 = vdwg.mxu0
      %v2832 = vunpack.c.l.b16 %v2662
      %v2833 = vunpack.c.l.b16 %v2663
      %v2834 = vpack.c.b16 %v2833, %v2832
      %v2837 = vunpack.c.l.b16 %v1017
      %v2838 = vunpack.c.l.b16 %v1018
      %v2839 = vpack.c.b16 %v2838, %v2837
      %v2842 = vsel %vm1092, %v2834, 0
      %2844 = vmatpush.bf16.msra.mxu0 0
      %2845 = vmatpush.bf16.msra.mxu0 0
      %2846 = vmatpush.bf16.msra.mxu0 0
      %2847 = vmatpush.bf16.msra.mxu0 0
      %2848 = vmatpush.bf16.msra.mxu0 0
      %2849 = vmatpush.bf16.msra.mxu0 0
      %2850 = vmatpush.bf16.msra.mxu0 0
      %2851 = vmatpush.bf16.msra.mxu0 %v2839
      %2852 = vmatmul.bf16.gmra.mxu0 %v2842
      %v2853 = vpop.f32.mrf.mxu0
      %v2854 = vadd.f32 0.0, %v2853
      %v2855 = vpop.f32.mrf.mxu0
      %v2856 = vadd.f32 0.0, %v2855
      %2857 = vdwg.mxu0
      %v2860 = vunpack.c.l.b16 %v2664
      %v2861 = vunpack.c.l.b16 %v2665
      %v2862 = vpack.c.b16 %v2861, %v2860
      %v2865 = vunpack.c.l.b16 %v1019
      %v2866 = vunpack.c.l.b16 %v1020
      %v2867 = vpack.c.b16 %v2866, %v2865
      %v2870 = vsel %vm1092, %v2862, 0
      %2872 = vmatpush.bf16.msra.mxu0 0
      %2873 = vmatpush.bf16.msra.mxu0 0
      %2874 = vmatpush.bf16.msra.mxu0 0
      %2875 = vmatpush.bf16.msra.mxu0 0
      %2876 = vmatpush.bf16.msra.mxu0 0
      %2877 = vmatpush.bf16.msra.mxu0 0
      %2878 = vmatpush.bf16.msra.mxu0 0
      %2879 = vmatpush.bf16.msra.mxu0 %v2867
      %2880 = vmatmul.bf16.gmra.mxu0 %v2870
      %v2881 = vpop.f32.mrf.mxu0
      %v2882 = vadd.f32 0.0, %v2881
      %v2883 = vpop.f32.mrf.mxu0
      %v2884 = vadd.f32 0.0, %v2883
      %2885 = vdwg.mxu0
      %v2888 = vunpack.c.l.b16 %v2666
      %v2889 = vunpack.c.l.b16 %v2667
      %v2890 = vpack.c.b16 %v2889, %v2888
      %v2893 = vunpack.c.l.b16 %v1021
      %v2894 = vunpack.c.l.b16 %v1022
      %v2895 = vpack.c.b16 %v2894, %v2893
      %v2898 = vsel %vm1092, %v2890, 0
      %2900 = vmatpush.bf16.msra.mxu0 0
      %2901 = vmatpush.bf16.msra.mxu0 0
      %2902 = vmatpush.bf16.msra.mxu0 0
      %2903 = vmatpush.bf16.msra.mxu0 0
      %2904 = vmatpush.bf16.msra.mxu0 0
      %2905 = vmatpush.bf16.msra.mxu0 0
      %2906 = vmatpush.bf16.msra.mxu0 0
      %2907 = vmatpush.bf16.msra.mxu0 %v2895
      %2908 = vmatmul.bf16.gmra.mxu0 %v2898
      %v2909 = vpop.f32.mrf.mxu0
      %v2910 = vadd.f32 0.0, %v2909
      %v2911 = vpop.f32.mrf.mxu0
      %v2912 = vadd.f32 0.0, %v2911
      %2913 = vdwg.mxu0
      %v2916 = vunpack.c.l.b16 %v2668
      %v2917 = vunpack.c.l.b16 %v2669
      %v2918 = vpack.c.b16 %v2917, %v2916
      %v2921 = vunpack.c.l.b16 %v1023
      %v2922 = vunpack.c.l.b16 %v1024
      %v2923 = vpack.c.b16 %v2922, %v2921
      %v2926 = vsel %vm1092, %v2918, 0
      %2928 = vmatpush.bf16.msra.mxu0 0
      %2929 = vmatpush.bf16.msra.mxu0 0
      %2930 = vmatpush.bf16.msra.mxu0 0
      %2931 = vmatpush.bf16.msra.mxu0 0
      %2932 = vmatpush.bf16.msra.mxu0 0
      %2933 = vmatpush.bf16.msra.mxu0 0
      %2934 = vmatpush.bf16.msra.mxu0 0
      %2935 = vmatpush.bf16.msra.mxu0 %v2923
      %2936 = vmatmul.bf16.gmra.mxu0 %v2926
      %v2937 = vpop.f32.mrf.mxu0
      %v2938 = vadd.f32 0.0, %v2937
      %v2939 = vpop.f32.mrf.mxu0
      %v2940 = vadd.f32 0.0, %v2939
      %2941 = vdwg.mxu0
      %v2944 = vunpack.c.l.b16 %v2670
      %v2945 = vunpack.c.l.b16 %v2671
      %v2946 = vpack.c.b16 %v2945, %v2944
      %v2949 = vunpack.c.l.b16 %v1025
      %v2950 = vunpack.c.l.b16 %v1026
      %v2951 = vpack.c.b16 %v2950, %v2949
      %v2954 = vsel %vm1092, %v2946, 0
      %2956 = vmatpush.bf16.msra.mxu0 0
      %2957 = vmatpush.bf16.msra.mxu0 0
      %2958 = vmatpush.bf16.msra.mxu0 0
      %2959 = vmatpush.bf16.msra.mxu0 0
      %2960 = vmatpush.bf16.msra.mxu0 0
      %2961 = vmatpush.bf16.msra.mxu0 0
      %2962 = vmatpush.bf16.msra.mxu0 0
      %2963 = vmatpush.bf16.msra.mxu0 %v2951
      %2964 = vmatmul.bf16.gmra.mxu0 %v2954
      %v2965 = vpop.f32.mrf.mxu0
      %v2966 = vadd.f32 0.0, %v2965
      %v2967 = vpop.f32.mrf.mxu0
      %v2968 = vadd.f32 0.0, %v2967
      %2969 = vdwg.mxu0
      %v2972 = vunpack.c.l.b16 %v2672
      %v2973 = vunpack.c.l.b16 %v2673
      %v2974 = vpack.c.b16 %v2973, %v2972
      %v2977 = vunpack.c.l.b16 %v1027
      %v2978 = vunpack.c.l.b16 %v1028
      %v2979 = vpack.c.b16 %v2978, %v2977
      %v2982 = vsel %vm1092, %v2974, 0
      %2984 = vmatpush.bf16.msra.mxu0 0
      %2985 = vmatpush.bf16.msra.mxu0 0
      %2986 = vmatpush.bf16.msra.mxu0 0
      %2987 = vmatpush.bf16.msra.mxu0 0
      %2988 = vmatpush.bf16.msra.mxu0 0
      %2989 = vmatpush.bf16.msra.mxu0 0
      %2990 = vmatpush.bf16.msra.mxu0 0
      %2991 = vmatpush.bf16.msra.mxu0 %v2979
      %2992 = vmatmul.bf16.gmra.mxu0 %v2982
      %v2993 = vpop.f32.mrf.mxu0
      %v2994 = vadd.f32 0.0, %v2993
      %v2995 = vpop.f32.mrf.mxu0
      %v2996 = vadd.f32 0.0, %v2995
      %2997 = vdwg.mxu0
      %v3000 = vunpack.c.l.b16 %v2674
      %v3001 = vunpack.c.l.b16 %v2675
      %v3002 = vpack.c.b16 %v3001, %v3000
      %v3005 = vunpack.c.l.b16 %v1029
      %v3006 = vunpack.c.l.b16 %v1030
      %v3007 = vpack.c.b16 %v3006, %v3005
      %v3010 = vsel %vm1092, %v3002, 0
      %3012 = vmatpush.bf16.msra.mxu0 0
      %3013 = vmatpush.bf16.msra.mxu0 0
      %3014 = vmatpush.bf16.msra.mxu0 0
      %3015 = vmatpush.bf16.msra.mxu0 0
      %3016 = vmatpush.bf16.msra.mxu0 0
      %3017 = vmatpush.bf16.msra.mxu0 0
      %3018 = vmatpush.bf16.msra.mxu0 0
      %3019 = vmatpush.bf16.msra.mxu0 %v3007
      %3020 = vmatmul.bf16.gmra.mxu0 %v3010
      %v3021 = vpop.f32.mrf.mxu0
      %v3022 = vadd.f32 0.0, %v3021
      %v3023 = vpop.f32.mrf.mxu0
      %v3024 = vadd.f32 0.0, %v3023
      %3025 = vdwg.mxu0
      %v3028 = vunpack.c.l.b16 %v2676
      %v3029 = vunpack.c.l.b16 %v2677
      %v3030 = vpack.c.b16 %v3029, %v3028
      %v3033 = vunpack.c.l.b16 %v1031
      %v3034 = vunpack.c.l.b16 %v1032
      %v3035 = vpack.c.b16 %v3034, %v3033
      %v3038 = vsel %vm1092, %v3030, 0
      %3040 = vmatpush.bf16.msra.mxu0 0
      %3041 = vmatpush.bf16.msra.mxu0 0
      %3042 = vmatpush.bf16.msra.mxu0 0
      %3043 = vmatpush.bf16.msra.mxu0 0
      %3044 = vmatpush.bf16.msra.mxu0 0
      %3045 = vmatpush.bf16.msra.mxu0 0
      %3046 = vmatpush.bf16.msra.mxu0 0
      %3047 = vmatpush.bf16.msra.mxu0 %v3035
      %3048 = vmatmul.bf16.gmra.mxu0 %v3038
      %v3049 = vpop.f32.mrf.mxu0
      %v3050 = vadd.f32 0.0, %v3049
      %v3051 = vpop.f32.mrf.mxu0
      %v3052 = vadd.f32 0.0, %v3051
      %3053 = vdwg.mxu0
      %v3056 = vunpack.c.l.b16 %v2678
      %v3057 = vunpack.c.l.b16 %v2679
      %v3058 = vpack.c.b16 %v3057, %v3056
      %v3061 = vunpack.c.l.b16 %v1033
      %v3062 = vunpack.c.l.b16 %v1034
      %v3063 = vpack.c.b16 %v3062, %v3061
      %v3066 = vsel %vm1092, %v3058, 0
      %3068 = vmatpush.bf16.msra.mxu0 0
      %3069 = vmatpush.bf16.msra.mxu0 0
      %3070 = vmatpush.bf16.msra.mxu0 0
      %3071 = vmatpush.bf16.msra.mxu0 0
      %3072 = vmatpush.bf16.msra.mxu0 0
      %3073 = vmatpush.bf16.msra.mxu0 0
      %3074 = vmatpush.bf16.msra.mxu0 0
      %3075 = vmatpush.bf16.msra.mxu0 %v3063
      %3076 = vmatmul.bf16.gmra.mxu0 %v3066
      %v3077 = vpop.f32.mrf.mxu0
      %v3078 = vadd.f32 0.0, %v3077
      %v3079 = vpop.f32.mrf.mxu0
      %v3080 = vadd.f32 0.0, %v3079
      %3081 = vdwg.mxu0
      %v3084 = vunpack.c.l.b16 %v2680
      %v3085 = vunpack.c.l.b16 %v2681
      %v3086 = vpack.c.b16 %v3085, %v3084
      %v3089 = vunpack.c.l.b16 %v1035
      %v3090 = vunpack.c.l.b16 %v1036
      %v3091 = vpack.c.b16 %v3090, %v3089
      %v3094 = vsel %vm1092, %v3086, 0
      %3096 = vmatpush.bf16.msra.mxu0 0
      %3097 = vmatpush.bf16.msra.mxu0 0
      %3098 = vmatpush.bf16.msra.mxu0 0
      %3099 = vmatpush.bf16.msra.mxu0 0
      %3100 = vmatpush.bf16.msra.mxu0 0
      %3101 = vmatpush.bf16.msra.mxu0 0
      %3102 = vmatpush.bf16.msra.mxu0 0
      %3103 = vmatpush.bf16.msra.mxu0 %v3091
      %3104 = vmatmul.bf16.gmra.mxu0 %v3094
      %v3105 = vpop.f32.mrf.mxu0
      %v3106 = vadd.f32 0.0, %v3105
      %v3107 = vpop.f32.mrf.mxu0
      %v3108 = vadd.f32 0.0, %v3107
      %3109 = vdwg.mxu0
      %v3112 = vunpack.c.l.b16 %v2682
      %v3113 = vunpack.c.l.b16 %v2683
      %v3114 = vpack.c.b16 %v3113, %v3112
      %v3117 = vunpack.c.l.b16 %v1037
      %v3118 = vunpack.c.l.b16 %v1038
      %v3119 = vpack.c.b16 %v3118, %v3117
      %v3122 = vsel %vm1092, %v3114, 0
      %3124 = vmatpush.bf16.msra.mxu0 0
      %3125 = vmatpush.bf16.msra.mxu0 0
      %3126 = vmatpush.bf16.msra.mxu0 0
      %3127 = vmatpush.bf16.msra.mxu0 0
      %3128 = vmatpush.bf16.msra.mxu0 0
      %3129 = vmatpush.bf16.msra.mxu0 0
      %3130 = vmatpush.bf16.msra.mxu0 0
      %3131 = vmatpush.bf16.msra.mxu0 %v3119
      %3132 = vmatmul.bf16.gmra.mxu0 %v3122
      %v3133 = vpop.f32.mrf.mxu0
      %v3134 = vadd.f32 0.0, %v3133
      %v3135 = vpop.f32.mrf.mxu0
      %v3136 = vadd.f32 0.0, %v3135
      %3137 = vdwg.mxu0
      %v3140 = vunpack.c.l.b16 %v2684
      %v3141 = vunpack.c.l.b16 %v2685
      %v3142 = vpack.c.b16 %v3141, %v3140
      %v3145 = vunpack.c.l.b16 %v1039
      %v3146 = vunpack.c.l.b16 %v1040
      %v3147 = vpack.c.b16 %v3146, %v3145
      %v3150 = vsel %vm1092, %v3142, 0
      %3152 = vmatpush.bf16.msra.mxu0 0
      %3153 = vmatpush.bf16.msra.mxu0 0
      %3154 = vmatpush.bf16.msra.mxu0 0
      %3155 = vmatpush.bf16.msra.mxu0 0
      %3156 = vmatpush.bf16.msra.mxu0 0
      %3157 = vmatpush.bf16.msra.mxu0 0
      %3158 = vmatpush.bf16.msra.mxu0 0
      %3159 = vmatpush.bf16.msra.mxu0 %v3147
      %3160 = vmatmul.bf16.gmra.mxu0 %v3150
      %v3161 = vpop.f32.mrf.mxu0
      %v3162 = vadd.f32 0.0, %v3161
      %v3163 = vpop.f32.mrf.mxu0
      %v3164 = vadd.f32 0.0, %v3163
      %3165 = vdwg.mxu0
      %v3168 = vunpack.c.l.b16 %v2686
      %v3169 = vunpack.c.l.b16 %v2687
      %v3170 = vpack.c.b16 %v3169, %v3168
      %v3173 = vunpack.c.l.b16 %v1041
      %v3174 = vunpack.c.l.b16 %v1042
      %v3175 = vpack.c.b16 %v3174, %v3173
      %v3178 = vsel %vm1092, %v3170, 0
      %3180 = vmatpush.bf16.msra.mxu0 0
      %3181 = vmatpush.bf16.msra.mxu0 0
      %3182 = vmatpush.bf16.msra.mxu0 0
      %3183 = vmatpush.bf16.msra.mxu0 0
      %3184 = vmatpush.bf16.msra.mxu0 0
      %3185 = vmatpush.bf16.msra.mxu0 0
      %3186 = vmatpush.bf16.msra.mxu0 0
      %3187 = vmatpush.bf16.msra.mxu0 %v3175
      %3188 = vmatmul.bf16.gmra.mxu0 %v3178
      %v3189 = vpop.f32.mrf.mxu0
      %v3190 = vadd.f32 0.0, %v3189
      %v3191 = vpop.f32.mrf.mxu0
      %v3192 = vadd.f32 0.0, %v3191
      %3193 = vdwg.mxu0
      %v3196 = vunpack.c.l.b16 %v2688
      %v3197 = vunpack.c.l.b16 %v2689
      %v3198 = vpack.c.b16 %v3197, %v3196
      %v3201 = vunpack.c.l.b16 %v1043
      %v3202 = vunpack.c.l.b16 %v1044
      %v3203 = vpack.c.b16 %v3202, %v3201
      %v3206 = vsel %vm1092, %v3198, 0
      %3208 = vmatpush.bf16.msra.mxu0 0
      %3209 = vmatpush.bf16.msra.mxu0 0
      %3210 = vmatpush.bf16.msra.mxu0 0
      %3211 = vmatpush.bf16.msra.mxu0 0
      %3212 = vmatpush.bf16.msra.mxu0 0
      %3213 = vmatpush.bf16.msra.mxu0 0
      %3214 = vmatpush.bf16.msra.mxu0 0
      %3215 = vmatpush.bf16.msra.mxu0 %v3203
      %3216 = vmatmul.bf16.gmra.mxu0 %v3206
      %v3217 = vpop.f32.mrf.mxu0
      %v3218 = vadd.f32 0.0, %v3217
      %v3219 = vpop.f32.mrf.mxu0
      %v3220 = vadd.f32 0.0, %v3219
      %3221 = vdwg.mxu0
      %v3224 = vunpack.c.l.b16 %v2690
      %v3225 = vunpack.c.l.b16 %v2691
      %v3226 = vpack.c.b16 %v3225, %v3224
      %v3229 = vunpack.c.l.b16 %v1045
      %v3230 = vunpack.c.l.b16 %v1046
      %v3231 = vpack.c.b16 %v3230, %v3229
      %v3234 = vsel %vm1092, %v3226, 0
      %3236 = vmatpush.bf16.msra.mxu0 0
      %3237 = vmatpush.bf16.msra.mxu0 0
      %3238 = vmatpush.bf16.msra.mxu0 0
      %3239 = vmatpush.bf16.msra.mxu0 0
      %3240 = vmatpush.bf16.msra.mxu0 0
      %3241 = vmatpush.bf16.msra.mxu0 0
      %3242 = vmatpush.bf16.msra.mxu0 0
      %3243 = vmatpush.bf16.msra.mxu0 %v3231
      %3244 = vmatmul.bf16.gmra.mxu0 %v3234
      %v3245 = vpop.f32.mrf.mxu0
      %v3246 = vadd.f32 0.0, %v3245
      %v3247 = vpop.f32.mrf.mxu0
      %v3248 = vadd.f32 0.0, %v3247
      %3249 = vdwg.mxu0
      %v3252 = vunpack.c.l.b16 %v2692
      %v3253 = vunpack.c.l.b16 %v2693
      %v3254 = vpack.c.b16 %v3253, %v3252
      %v3257 = vunpack.c.l.b16 %v1047
      %v3258 = vunpack.c.l.b16 %v1048
      %v3259 = vpack.c.b16 %v3258, %v3257
      %v3262 = vsel %vm1092, %v3254, 0
      %3264 = vmatpush.bf16.msra.mxu0 0
      %3265 = vmatpush.bf16.msra.mxu0 0
      %3266 = vmatpush.bf16.msra.mxu0 0
      %3267 = vmatpush.bf16.msra.mxu0 0
      %3268 = vmatpush.bf16.msra.mxu0 0
      %3269 = vmatpush.bf16.msra.mxu0 0
      %3270 = vmatpush.bf16.msra.mxu0 0
      %3271 = vmatpush.bf16.msra.mxu0 %v3259
      %3272 = vmatmul.bf16.gmra.mxu0 %v3262
      %v3273 = vpop.f32.mrf.mxu0
      %v3274 = vadd.f32 0.0, %v3273
      %v3275 = vpop.f32.mrf.mxu0
      %v3276 = vadd.f32 0.0, %v3275
      %3277 = vdwg.mxu0
      %v3280 = vunpack.c.l.b16 %v2694
      %v3281 = vunpack.c.l.b16 %v2695
      %v3282 = vpack.c.b16 %v3281, %v3280
      %v3285 = vunpack.c.l.b16 %v1049
      %v3286 = vunpack.c.l.b16 %v1050
      %v3287 = vpack.c.b16 %v3286, %v3285
      %v3290 = vsel %vm1092, %v3282, 0
      %3292 = vmatpush.bf16.msra.mxu0 0
      %3293 = vmatpush.bf16.msra.mxu0 0
      %3294 = vmatpush.bf16.msra.mxu0 0
      %3295 = vmatpush.bf16.msra.mxu0 0
      %3296 = vmatpush.bf16.msra.mxu0 0
      %3297 = vmatpush.bf16.msra.mxu0 0
      %3298 = vmatpush.bf16.msra.mxu0 0
      %3299 = vmatpush.bf16.msra.mxu0 %v3287
      %3300 = vmatmul.bf16.gmra.mxu0 %v3290
      %v3301 = vpop.f32.mrf.mxu0
      %v3302 = vadd.f32 0.0, %v3301
      %v3303 = vpop.f32.mrf.mxu0
      %v3304 = vadd.f32 0.0, %v3303
      %3305 = vdwg.mxu0
      %v3308 = vunpack.c.l.b16 %v2696
      %v3309 = vunpack.c.l.b16 %v2697
      %v3310 = vpack.c.b16 %v3309, %v3308
      %v3313 = vunpack.c.l.b16 %v1051
      %v3314 = vunpack.c.l.b16 %v1052
      %v3315 = vpack.c.b16 %v3314, %v3313
      %v3318 = vsel %vm1092, %v3310, 0
      %3320 = vmatpush.bf16.msra.mxu0 0
      %3321 = vmatpush.bf16.msra.mxu0 0
      %3322 = vmatpush.bf16.msra.mxu0 0
      %3323 = vmatpush.bf16.msra.mxu0 0
      %3324 = vmatpush.bf16.msra.mxu0 0
      %3325 = vmatpush.bf16.msra.mxu0 0
      %3326 = vmatpush.bf16.msra.mxu0 0
      %3327 = vmatpush.bf16.msra.mxu0 %v3315
      %3328 = vmatmul.bf16.gmra.mxu0 %v3318
      %v3329 = vpop.f32.mrf.mxu0
      %v3330 = vadd.f32 0.0, %v3329
      %v3331 = vpop.f32.mrf.mxu0
      %v3332 = vadd.f32 0.0, %v3331
      %3333 = vdwg.mxu0
      %v3336 = vunpack.c.l.b16 %v2698
      %v3337 = vunpack.c.l.b16 %v2699
      %v3338 = vpack.c.b16 %v3337, %v3336
      %v3341 = vunpack.c.l.b16 %v1053
      %v3342 = vunpack.c.l.b16 %v1054
      %v3343 = vpack.c.b16 %v3342, %v3341
      %v3346 = vsel %vm1092, %v3338, 0
      %3348 = vmatpush.bf16.msra.mxu0 0
      %3349 = vmatpush.bf16.msra.mxu0 0
      %3350 = vmatpush.bf16.msra.mxu0 0
      %3351 = vmatpush.bf16.msra.mxu0 0
      %3352 = vmatpush.bf16.msra.mxu0 0
      %3353 = vmatpush.bf16.msra.mxu0 0
      %3354 = vmatpush.bf16.msra.mxu0 0
      %3355 = vmatpush.bf16.msra.mxu0 %v3343
      %3356 = vmatmul.bf16.gmra.mxu0 %v3346
      %v3357 = vpop.f32.mrf.mxu0
      %v3358 = vadd.f32 0.0, %v3357
      %v3359 = vpop.f32.mrf.mxu0
      %v3360 = vadd.f32 0.0, %v3359
      %3361 = vdwg.mxu0
      %v3364 = vunpack.c.l.b16 %v2700
      %v3365 = vunpack.c.l.b16 %v2701
      %v3366 = vpack.c.b16 %v3365, %v3364
      %v3369 = vunpack.c.l.b16 %v1055
      %v3370 = vunpack.c.l.b16 %v1056
      %v3371 = vpack.c.b16 %v3370, %v3369
      %v3374 = vsel %vm1092, %v3366, 0
      %3376 = vmatpush.bf16.msra.mxu0 0
      %3377 = vmatpush.bf16.msra.mxu0 0
      %3378 = vmatpush.bf16.msra.mxu0 0
      %3379 = vmatpush.bf16.msra.mxu0 0
      %3380 = vmatpush.bf16.msra.mxu0 0
      %3381 = vmatpush.bf16.msra.mxu0 0
      %3382 = vmatpush.bf16.msra.mxu0 0
      %3383 = vmatpush.bf16.msra.mxu0 %v3371
      %3384 = vmatmul.bf16.gmra.mxu0 %v3374
      %v3385 = vpop.f32.mrf.mxu0
      %v3386 = vadd.f32 0.0, %v3385
      %v3387 = vpop.f32.mrf.mxu0
      %v3388 = vadd.f32 0.0, %v3387
      %3389 = vdwg.mxu0
      %v3392 = vunpack.c.l.b16 %v2702
      %v3393 = vunpack.c.l.b16 %v2703
      %v3394 = vpack.c.b16 %v3393, %v3392
      %v3397 = vunpack.c.l.b16 %v1057
      %v3398 = vunpack.c.l.b16 %v1058
      %v3399 = vpack.c.b16 %v3398, %v3397
      %v3402 = vsel %vm1092, %v3394, 0
      %3404 = vmatpush.bf16.msra.mxu0 0
      %3405 = vmatpush.bf16.msra.mxu0 0
      %3406 = vmatpush.bf16.msra.mxu0 0
      %3407 = vmatpush.bf16.msra.mxu0 0
      %3408 = vmatpush.bf16.msra.mxu0 0
      %3409 = vmatpush.bf16.msra.mxu0 0
      %3410 = vmatpush.bf16.msra.mxu0 0
      %3411 = vmatpush.bf16.msra.mxu0 %v3399
      %3412 = vmatmul.bf16.gmra.mxu0 %v3402
      %v3413 = vpop.f32.mrf.mxu0
      %v3414 = vadd.f32 0.0, %v3413
      %v3415 = vpop.f32.mrf.mxu0
      %v3416 = vadd.f32 0.0, %v3415
      %3417 = vdwg.mxu0
      %v3420 = vunpack.c.l.b16 %v2704
      %v3421 = vunpack.c.l.b16 %v2705
      %v3422 = vpack.c.b16 %v3421, %v3420
      %v3425 = vunpack.c.l.b16 %v1059
      %v3426 = vunpack.c.l.b16 %v1060
      %v3427 = vpack.c.b16 %v3426, %v3425
      %v3430 = vsel %vm1092, %v3422, 0
      %3432 = vmatpush.bf16.msra.mxu0 0
      %3433 = vmatpush.bf16.msra.mxu0 0
      %3434 = vmatpush.bf16.msra.mxu0 0
      %3435 = vmatpush.bf16.msra.mxu0 0
      %3436 = vmatpush.bf16.msra.mxu0 0
      %3437 = vmatpush.bf16.msra.mxu0 0
      %3438 = vmatpush.bf16.msra.mxu0 0
      %3439 = vmatpush.bf16.msra.mxu0 %v3427
      %3440 = vmatmul.bf16.gmra.mxu0 %v3430
      %v3441 = vpop.f32.mrf.mxu0
      %v3442 = vadd.f32 0.0, %v3441
      %v3443 = vpop.f32.mrf.mxu0
      %v3444 = vadd.f32 0.0, %v3443
      %3445 = vdwg.mxu0
      %v3448 = vunpack.c.l.b16 %v2706
      %v3449 = vunpack.c.l.b16 %v2707
      %v3450 = vpack.c.b16 %v3449, %v3448
      %v3453 = vunpack.c.l.b16 %v1061
      %v3454 = vunpack.c.l.b16 %v1062
      %v3455 = vpack.c.b16 %v3454, %v3453
      %v3458 = vsel %vm1092, %v3450, 0
      %3460 = vmatpush.bf16.msra.mxu0 0
      %3461 = vmatpush.bf16.msra.mxu0 0
      %3462 = vmatpush.bf16.msra.mxu0 0
      %3463 = vmatpush.bf16.msra.mxu0 0
      %3464 = vmatpush.bf16.msra.mxu0 0
      %3465 = vmatpush.bf16.msra.mxu0 0
      %3466 = vmatpush.bf16.msra.mxu0 0
      %3467 = vmatpush.bf16.msra.mxu0 %v3455
      %3468 = vmatmul.bf16.gmra.mxu0 %v3458
      %v3469 = vpop.f32.mrf.mxu0
      %v3470 = vadd.f32 0.0, %v3469
      %v3471 = vpop.f32.mrf.mxu0
      %v3472 = vadd.f32 0.0, %v3471
      %3473 = vdwg.mxu0
      %v3476 = vunpack.c.l.b16 %v2708
      %v3477 = vunpack.c.l.b16 %v2709
      %v3478 = vpack.c.b16 %v3477, %v3476
      %v3481 = vunpack.c.l.b16 %v1063
      %v3482 = vunpack.c.l.b16 %v1064
      %v3483 = vpack.c.b16 %v3482, %v3481
      %v3486 = vsel %vm1092, %v3478, 0
      %3488 = vmatpush.bf16.msra.mxu0 0
      %3489 = vmatpush.bf16.msra.mxu0 0
      %3490 = vmatpush.bf16.msra.mxu0 0
      %3491 = vmatpush.bf16.msra.mxu0 0
      %3492 = vmatpush.bf16.msra.mxu0 0
      %3493 = vmatpush.bf16.msra.mxu0 0
      %3494 = vmatpush.bf16.msra.mxu0 0
      %3495 = vmatpush.bf16.msra.mxu0 %v3483
      %3496 = vmatmul.bf16.gmra.mxu0 %v3486
      %v3497 = vpop.f32.mrf.mxu0
      %v3498 = vadd.f32 0.0, %v3497
      %v3499 = vpop.f32.mrf.mxu0
      %v3500 = vadd.f32 0.0, %v3499
      %3501 = vdwg.mxu0
      %v3504 = vunpack.c.l.b16 %v2710
      %v3505 = vunpack.c.l.b16 %v2711
      %v3506 = vpack.c.b16 %v3505, %v3504
      %v3509 = vunpack.c.l.b16 %v1065
      %v3510 = vunpack.c.l.b16 %v1066
      %v3511 = vpack.c.b16 %v3510, %v3509
      %v3514 = vsel %vm1092, %v3506, 0
      %3516 = vmatpush.bf16.msra.mxu0 0
      %3517 = vmatpush.bf16.msra.mxu0 0
      %3518 = vmatpush.bf16.msra.mxu0 0
      %3519 = vmatpush.bf16.msra.mxu0 0
      %3520 = vmatpush.bf16.msra.mxu0 0
      %3521 = vmatpush.bf16.msra.mxu0 0
      %3522 = vmatpush.bf16.msra.mxu0 0
      %3523 = vmatpush.bf16.msra.mxu0 %v3511
      %3524 = vmatmul.bf16.gmra.mxu0 %v3514
      %v3525 = vpop.f32.mrf.mxu0
      %v3526 = vadd.f32 0.0, %v3525
      %v3527 = vpop.f32.mrf.mxu0
      %v3528 = vadd.f32 0.0, %v3527
      %3529 = vdwg.mxu0
      %v3532 = vunpack.c.l.b16 %v2712
      %v3533 = vunpack.c.l.b16 %v2713
      %v3534 = vpack.c.b16 %v3533, %v3532
      %v3537 = vunpack.c.l.b16 %v1067
      %v3538 = vunpack.c.l.b16 %v1068
      %v3539 = vpack.c.b16 %v3538, %v3537
      %v3542 = vsel %vm1092, %v3534, 0
      %3544 = vmatpush.bf16.msra.mxu0 0
      %3545 = vmatpush.bf16.msra.mxu0 0
      %3546 = vmatpush.bf16.msra.mxu0 0
      %3547 = vmatpush.bf16.msra.mxu0 0
      %3548 = vmatpush.bf16.msra.mxu0 0
      %3549 = vmatpush.bf16.msra.mxu0 0
      %3550 = vmatpush.bf16.msra.mxu0 0
      %3551 = vmatpush.bf16.msra.mxu0 %v3539
      %3552 = vmatmul.bf16.gmra.mxu0 %v3542
      %v3553 = vpop.f32.mrf.mxu0
      %v3554 = vadd.f32 0.0, %v3553
      %v3555 = vpop.f32.mrf.mxu0
      %v3556 = vadd.f32 0.0, %v3555
      %3557 = vdwg.mxu0
      %v3560 = vunpack.c.l.b16 %v2714
      %v3561 = vunpack.c.l.b16 %v2715
      %v3562 = vpack.c.b16 %v3561, %v3560
      %v3565 = vunpack.c.l.b16 %v1069
      %v3566 = vunpack.c.l.b16 %v1070
      %v3567 = vpack.c.b16 %v3566, %v3565
      %v3570 = vsel %vm1092, %v3562, 0
      %3572 = vmatpush.bf16.msra.mxu0 0
      %3573 = vmatpush.bf16.msra.mxu0 0
      %3574 = vmatpush.bf16.msra.mxu0 0
      %3575 = vmatpush.bf16.msra.mxu0 0
      %3576 = vmatpush.bf16.msra.mxu0 0
      %3577 = vmatpush.bf16.msra.mxu0 0
      %3578 = vmatpush.bf16.msra.mxu0 0
      %3579 = vmatpush.bf16.msra.mxu0 %v3567
      %3580 = vmatmul.bf16.gmra.mxu0 %v3570
      %v3581 = vpop.f32.mrf.mxu0
      %v3582 = vadd.f32 0.0, %v3581
      %v3583 = vpop.f32.mrf.mxu0
      %v3584 = vadd.f32 0.0, %v3583
      %3585 = vdwg.mxu0
      %v3588 = vunpack.c.l.b16 %v2716
      %v3589 = vunpack.c.l.b16 %v2717
      %v3590 = vpack.c.b16 %v3589, %v3588
      %v3593 = vunpack.c.l.b16 %v1071
      %v3594 = vunpack.c.l.b16 %v1072
      %v3595 = vpack.c.b16 %v3594, %v3593
      %v3598 = vsel %vm1092, %v3590, 0
      %3600 = vmatpush.bf16.msra.mxu0 0
      %3601 = vmatpush.bf16.msra.mxu0 0
      %3602 = vmatpush.bf16.msra.mxu0 0
      %3603 = vmatpush.bf16.msra.mxu0 0
      %3604 = vmatpush.bf16.msra.mxu0 0
      %3605 = vmatpush.bf16.msra.mxu0 0
      %3606 = vmatpush.bf16.msra.mxu0 0
      %3607 = vmatpush.bf16.msra.mxu0 %v3595
      %3608 = vmatmul.bf16.gmra.mxu0 %v3598
      %v3609 = vpop.f32.mrf.mxu0
      %v3610 = vadd.f32 0.0, %v3609
      %v3611 = vpop.f32.mrf.mxu0
      %v3612 = vadd.f32 0.0, %v3611
      %3613 = vdwg.mxu0
      %v3614 = vpack.c.bf16 %v2744, %v2742
      %v3615 = vpack.c.bf16 %v2772, %v2770
      %v3616 = vpack.c.bf16 %v2800, %v2798
      %v3617 = vpack.c.bf16 %v2828, %v2826
      %v3618 = vpack.c.bf16 %v2856, %v2854
      %v3619 = vpack.c.bf16 %v2884, %v2882
      %v3620 = vpack.c.bf16 %v2912, %v2910
      %v3621 = vpack.c.bf16 %v2940, %v2938
      %v3622 = vpack.c.bf16 %v2968, %v2966
      %v3623 = vpack.c.bf16 %v2996, %v2994
      %v3624 = vpack.c.bf16 %v3024, %v3022
      %v3625 = vpack.c.bf16 %v3052, %v3050
      %v3626 = vpack.c.bf16 %v3080, %v3078
      %v3627 = vpack.c.bf16 %v3108, %v3106
      %v3628 = vpack.c.bf16 %v3136, %v3134
      %v3629 = vpack.c.bf16 %v3164, %v3162
      %v3630 = vpack.c.bf16 %v3192, %v3190
      %v3631 = vpack.c.bf16 %v3220, %v3218
      %v3632 = vpack.c.bf16 %v3248, %v3246
      %v3633 = vpack.c.bf16 %v3276, %v3274
      %v3634 = vpack.c.bf16 %v3304, %v3302
      %v3635 = vpack.c.bf16 %v3332, %v3330
      %v3636 = vpack.c.bf16 %v3360, %v3358
      %v3637 = vpack.c.bf16 %v3388, %v3386
      %v3638 = vpack.c.bf16 %v3416, %v3414
      %v3639 = vpack.c.bf16 %v3444, %v3442
      %v3640 = vpack.c.bf16 %v3472, %v3470
      %v3641 = vpack.c.bf16 %v3500, %v3498
      %v3642 = vpack.c.bf16 %v3528, %v3526
      %v3643 = vpack.c.bf16 %v3556, %v3554
      %v3644 = vpack.c.bf16 %v3584, %v3582
      %v3645 = vpack.c.bf16 %v3612, %v3610
      %3646 = vrot.lane.b32.xlu0 %v1089, 112
      %v3647 = vpop.permute.xlu0 %3646
      %3648 = vrot.lane.b32.xlu0 %v1089, 48
      %v3649 = vpop.permute.xlu0 %3648
      %v3651 = vsel %vm1092, %v3647, 0
      %v3654 = vsel %vm1092, %v3649, 0
      %3656 = vmatpush.bf16.xpose.msra.mxu0 0
      %3657 = vmatpush.bf16.xpose.msra.mxu0 0
      %3658 = vmatpush.bf16.xpose.msra.mxu0 0
      %3659 = vmatpush.bf16.xpose.msra.mxu0 0
      %3660 = vmatpush.bf16.xpose.msra.mxu0 0
      %3661 = vmatpush.bf16.xpose.msra.mxu0 0
      %3662 = vmatpush.bf16.xpose.msra.mxu0 0
      %3663 = vmatpush.bf16.xpose.msra.mxu0 %v3654
      %3664 = vmatmul.bf16.gmra.mxu0 %v3651
      %v3665 = vpop.f32.mrf.mxu0
      %v3666 = vadd.f32 %v1075, %v3665
      %v3667 = vpop.f32.mrf.mxu0
      %v3668 = vadd.f32 %v1076, %v3667
      %3669 = vdwg.mxu0
      %3670 = vrot.lane.b32.xlu0 %v1117, 112
      %v3671 = vpop.permute.xlu0 %3670
      %3672 = vrot.lane.b32.xlu0 %v1117, 48
      %v3673 = vpop.permute.xlu0 %3672
      %v3675 = vsel %vm1092, %v3671, 0
      %v3678 = vsel %vm1092, %v3673, 0
      %3680 = vmatpush.bf16.xpose.msra.mxu0 0
      %3681 = vmatpush.bf16.xpose.msra.mxu0 0
      %3682 = vmatpush.bf16.xpose.msra.mxu0 0
      %3683 = vmatpush.bf16.xpose.msra.mxu0 0
      %3684 = vmatpush.bf16.xpose.msra.mxu0 0
      %3685 = vmatpush.bf16.xpose.msra.mxu0 0
      %3686 = vmatpush.bf16.xpose.msra.mxu0 0
      %3687 = vmatpush.bf16.xpose.msra.mxu0 %v3678
      %3688 = vmatmul.bf16.gmra.mxu0 %v3675
      %v3689 = vpop.f32.mrf.mxu0
      %v3690 = vadd.f32 %v1075, %v3689
      %v3691 = vpop.f32.mrf.mxu0
      %v3692 = vadd.f32 %v1076, %v3691
      %3693 = vdwg.mxu0
      %3694 = vrot.lane.b32.xlu0 %v1144, 112
      %v3695 = vpop.permute.xlu0 %3694
      %3696 = vrot.lane.b32.xlu0 %v1144, 48
      %v3697 = vpop.permute.xlu0 %3696
      %v3699 = vsel %vm1092, %v3695, 0
      %v3702 = vsel %vm1092, %v3697, 0
      %3704 = vmatpush.bf16.xpose.msra.mxu0 0
      %3705 = vmatpush.bf16.xpose.msra.mxu0 0
      %3706 = vmatpush.bf16.xpose.msra.mxu0 0
      %3707 = vmatpush.bf16.xpose.msra.mxu0 0
      %3708 = vmatpush.bf16.xpose.msra.mxu0 0
      %3709 = vmatpush.bf16.xpose.msra.mxu0 0
      %3710 = vmatpush.bf16.xpose.msra.mxu0 0
      %3711 = vmatpush.bf16.xpose.msra.mxu0 %v3702
      %3712 = vmatmul.bf16.gmra.mxu0 %v3699
      %v3713 = vpop.f32.mrf.mxu0
      %v3714 = vadd.f32 %v1075, %v3713
      %v3715 = vpop.f32.mrf.mxu0
      %v3716 = vadd.f32 %v1076, %v3715
      %3717 = vdwg.mxu0
      %3718 = vrot.lane.b32.xlu0 %v1171, 112
      %v3719 = vpop.permute.xlu0 %3718
      %3720 = vrot.lane.b32.xlu0 %v1171, 48
      %v3721 = vpop.permute.xlu0 %3720
      %v3723 = vsel %vm1092, %v3719, 0
      %v3726 = vsel %vm1092, %v3721, 0
      %3728 = vmatpush.bf16.xpose.msra.mxu0 0
      %3729 = vmatpush.bf16.xpose.msra.mxu0 0
      %3730 = vmatpush.bf16.xpose.msra.mxu0 0
      %3731 = vmatpush.bf16.xpose.msra.mxu0 0
      %3732 = vmatpush.bf16.xpose.msra.mxu0 0
      %3733 = vmatpush.bf16.xpose.msra.mxu0 0
      %3734 = vmatpush.bf16.xpose.msra.mxu0 0
      %3735 = vmatpush.bf16.xpose.msra.mxu0 %v3726
      %3736 = vmatmul.bf16.gmra.mxu0 %v3723
      %v3737 = vpop.f32.mrf.mxu0
      %v3738 = vadd.f32 %v1075, %v3737
      %v3739 = vpop.f32.mrf.mxu0
      %v3740 = vadd.f32 %v1076, %v3739
      %3741 = vdwg.mxu0
      %3742 = vrot.lane.b32.xlu0 %v1198, 112
      %v3743 = vpop.permute.xlu0 %3742
      %3744 = vrot.lane.b32.xlu0 %v1198, 48
      %v3745 = vpop.permute.xlu0 %3744
      %v3747 = vsel %vm1092, %v3743, 0
      %v3750 = vsel %vm1092, %v3745, 0
      %3752 = vmatpush.bf16.xpose.msra.mxu0 0
      %3753 = vmatpush.bf16.xpose.msra.mxu0 0
      %3754 = vmatpush.bf16.xpose.msra.mxu0 0
      %3755 = vmatpush.bf16.xpose.msra.mxu0 0
      %3756 = vmatpush.bf16.xpose.msra.mxu0 0
      %3757 = vmatpush.bf16.xpose.msra.mxu0 0
      %3758 = vmatpush.bf16.xpose.msra.mxu0 0
      %3759 = vmatpush.bf16.xpose.msra.mxu0 %v3750
      %3760 = vmatmul.bf16.gmra.mxu0 %v3747
      %v3761 = vpop.f32.mrf.mxu0
      %v3762 = vadd.f32 %v1075, %v3761
      %v3763 = vpop.f32.mrf.mxu0
      %v3764 = vadd.f32 %v1076, %v3763
      %3765 = vdwg.mxu0
      %3766 = vrot.lane.b32.xlu0 %v1225, 112
      %v3767 = vpop.permute.xlu0 %3766
      %3768 = vrot.lane.b32.xlu0 %v1225, 48
      %v3769 = vpop.permute.xlu0 %3768
      %v3771 = vsel %vm1092, %v3767, 0
      %v3774 = vsel %vm1092, %v3769, 0
      %3776 = vmatpush.bf16.xpose.msra.mxu0 0
      %3777 = vmatpush.bf16.xpose.msra.mxu0 0
      %3778 = vmatpush.bf16.xpose.msra.mxu0 0
      %3779 = vmatpush.bf16.xpose.msra.mxu0 0
      %3780 = vmatpush.bf16.xpose.msra.mxu0 0
      %3781 = vmatpush.bf16.xpose.msra.mxu0 0
      %3782 = vmatpush.bf16.xpose.msra.mxu0 0
      %3783 = vmatpush.bf16.xpose.msra.mxu0 %v3774
      %3784 = vmatmul.bf16.gmra.mxu0 %v3771
      %v3785 = vpop.f32.mrf.mxu0
      %v3786 = vadd.f32 %v1075, %v3785
      %v3787 = vpop.f32.mrf.mxu0
      %v3788 = vadd.f32 %v1076, %v3787
      %3789 = vdwg.mxu0
      %3790 = vrot.lane.b32.xlu0 %v1252, 112
      %v3791 = vpop.permute.xlu0 %3790
      %3792 = vrot.lane.b32.xlu0 %v1252, 48
      %v3793 = vpop.permute.xlu0 %3792
      %v3795 = vsel %vm1092, %v3791, 0
      %v3798 = vsel %vm1092, %v3793, 0
      %3800 = vmatpush.bf16.xpose.msra.mxu0 0
      %3801 = vmatpush.bf16.xpose.msra.mxu0 0
      %3802 = vmatpush.bf16.xpose.msra.mxu0 0
      %3803 = vmatpush.bf16.xpose.msra.mxu0 0
      %3804 = vmatpush.bf16.xpose.msra.mxu0 0
      %3805 = vmatpush.bf16.xpose.msra.mxu0 0
      %3806 = vmatpush.bf16.xpose.msra.mxu0 0
      %3807 = vmatpush.bf16.xpose.msra.mxu0 %v3798
      %3808 = vmatmul.bf16.gmra.mxu0 %v3795
      %v3809 = vpop.f32.mrf.mxu0
      %v3810 = vadd.f32 %v1075, %v3809
      %v3811 = vpop.f32.mrf.mxu0
      %v3812 = vadd.f32 %v1076, %v3811
      %3813 = vdwg.mxu0
      %3814 = vrot.lane.b32.xlu0 %v1279, 112
      %v3815 = vpop.permute.xlu0 %3814
      %3816 = vrot.lane.b32.xlu0 %v1279, 48
      %v3817 = vpop.permute.xlu0 %3816
      %v3819 = vsel %vm1092, %v3815, 0
      %v3822 = vsel %vm1092, %v3817, 0
      %3824 = vmatpush.bf16.xpose.msra.mxu0 0
      %3825 = vmatpush.bf16.xpose.msra.mxu0 0
      %3826 = vmatpush.bf16.xpose.msra.mxu0 0
      %3827 = vmatpush.bf16.xpose.msra.mxu0 0
      %3828 = vmatpush.bf16.xpose.msra.mxu0 0
      %3829 = vmatpush.bf16.xpose.msra.mxu0 0
      %3830 = vmatpush.bf16.xpose.msra.mxu0 0
      %3831 = vmatpush.bf16.xpose.msra.mxu0 %v3822
      %3832 = vmatmul.bf16.gmra.mxu0 %v3819
      %v3833 = vpop.f32.mrf.mxu0
      %v3834 = vadd.f32 %v1075, %v3833
      %v3835 = vpop.f32.mrf.mxu0
      %v3836 = vadd.f32 %v1076, %v3835
      %3837 = vdwg.mxu0
      %3838 = vrot.lane.b32.xlu0 %v1306, 112
      %v3839 = vpop.permute.xlu0 %3838
      %3840 = vrot.lane.b32.xlu0 %v1306, 48
      %v3841 = vpop.permute.xlu0 %3840
      %v3843 = vsel %vm1092, %v3839, 0
      %v3846 = vsel %vm1092, %v3841, 0
      %3848 = vmatpush.bf16.xpose.msra.mxu0 0
      %3849 = vmatpush.bf16.xpose.msra.mxu0 0
      %3850 = vmatpush.bf16.xpose.msra.mxu0 0
      %3851 = vmatpush.bf16.xpose.msra.mxu0 0
      %3852 = vmatpush.bf16.xpose.msra.mxu0 0
      %3853 = vmatpush.bf16.xpose.msra.mxu0 0
      %3854 = vmatpush.bf16.xpose.msra.mxu0 0
      %3855 = vmatpush.bf16.xpose.msra.mxu0 %v3846
      %3856 = vmatmul.bf16.gmra.mxu0 %v3843
      %v3857 = vpop.f32.mrf.mxu0
      %v3858 = vadd.f32 %v1075, %v3857
      %v3859 = vpop.f32.mrf.mxu0
      %v3860 = vadd.f32 %v1076, %v3859
      %3861 = vdwg.mxu0
      %3862 = vrot.lane.b32.xlu0 %v1333, 112
      %v3863 = vpop.permute.xlu0 %3862
      %3864 = vrot.lane.b32.xlu0 %v1333, 48
      %v3865 = vpop.permute.xlu0 %3864
      %v3867 = vsel %vm1092, %v3863, 0
      %v3870 = vsel %vm1092, %v3865, 0
      %3872 = vmatpush.bf16.xpose.msra.mxu0 0
      %3873 = vmatpush.bf16.xpose.msra.mxu0 0
      %3874 = vmatpush.bf16.xpose.msra.mxu0 0
      %3875 = vmatpush.bf16.xpose.msra.mxu0 0
      %3876 = vmatpush.bf16.xpose.msra.mxu0 0
      %3877 = vmatpush.bf16.xpose.msra.mxu0 0
      %3878 = vmatpush.bf16.xpose.msra.mxu0 0
      %3879 = vmatpush.bf16.xpose.msra.mxu0 %v3870
      %3880 = vmatmul.bf16.gmra.mxu0 %v3867
      %v3881 = vpop.f32.mrf.mxu0
      %v3882 = vadd.f32 %v1075, %v3881
      %v3883 = vpop.f32.mrf.mxu0
      %v3884 = vadd.f32 %v1076, %v3883
      %3885 = vdwg.mxu0
      %3886 = vrot.lane.b32.xlu0 %v1360, 112
      %v3887 = vpop.permute.xlu0 %3886
      %3888 = vrot.lane.b32.xlu0 %v1360, 48
      %v3889 = vpop.permute.xlu0 %3888
      %v3891 = vsel %vm1092, %v3887, 0
      %v3894 = vsel %vm1092, %v3889, 0
      %3896 = vmatpush.bf16.xpose.msra.mxu0 0
      %3897 = vmatpush.bf16.xpose.msra.mxu0 0
      %3898 = vmatpush.bf16.xpose.msra.mxu0 0
      %3899 = vmatpush.bf16.xpose.msra.mxu0 0
      %3900 = vmatpush.bf16.xpose.msra.mxu0 0
      %3901 = vmatpush.bf16.xpose.msra.mxu0 0
      %3902 = vmatpush.bf16.xpose.msra.mxu0 0
      %3903 = vmatpush.bf16.xpose.msra.mxu0 %v3894
      %3904 = vmatmul.bf16.gmra.mxu0 %v3891
      %v3905 = vpop.f32.mrf.mxu0
      %v3906 = vadd.f32 %v1075, %v3905
      %v3907 = vpop.f32.mrf.mxu0
      %v3908 = vadd.f32 %v1076, %v3907
      %3909 = vdwg.mxu0
      %3910 = vrot.lane.b32.xlu0 %v1387, 112
      %v3911 = vpop.permute.xlu0 %3910
      %3912 = vrot.lane.b32.xlu0 %v1387, 48
      %v3913 = vpop.permute.xlu0 %3912
      %v3915 = vsel %vm1092, %v3911, 0
      %v3918 = vsel %vm1092, %v3913, 0
      %3920 = vmatpush.bf16.xpose.msra.mxu0 0
      %3921 = vmatpush.bf16.xpose.msra.mxu0 0
      %3922 = vmatpush.bf16.xpose.msra.mxu0 0
      %3923 = vmatpush.bf16.xpose.msra.mxu0 0
      %3924 = vmatpush.bf16.xpose.msra.mxu0 0
      %3925 = vmatpush.bf16.xpose.msra.mxu0 0
      %3926 = vmatpush.bf16.xpose.msra.mxu0 0
      %3927 = vmatpush.bf16.xpose.msra.mxu0 %v3918
      %3928 = vmatmul.bf16.gmra.mxu0 %v3915
      %v3929 = vpop.f32.mrf.mxu0
      %v3930 = vadd.f32 %v1075, %v3929
      %v3931 = vpop.f32.mrf.mxu0
      %v3932 = vadd.f32 %v1076, %v3931
      %3933 = vdwg.mxu0
      %3934 = vrot.lane.b32.xlu0 %v1414, 112
      %v3935 = vpop.permute.xlu0 %3934
      %3936 = vrot.lane.b32.xlu0 %v1414, 48
      %v3937 = vpop.permute.xlu0 %3936
      %v3939 = vsel %vm1092, %v3935, 0
      %v3942 = vsel %vm1092, %v3937, 0
      %3944 = vmatpush.bf16.xpose.msra.mxu0 0
      %3945 = vmatpush.bf16.xpose.msra.mxu0 0
      %3946 = vmatpush.bf16.xpose.msra.mxu0 0
      %3947 = vmatpush.bf16.xpose.msra.mxu0 0
      %3948 = vmatpush.bf16.xpose.msra.mxu0 0
      %3949 = vmatpush.bf16.xpose.msra.mxu0 0
      %3950 = vmatpush.bf16.xpose.msra.mxu0 0
      %3951 = vmatpush.bf16.xpose.msra.mxu0 %v3942
      %3952 = vmatmul.bf16.gmra.mxu0 %v3939
      %v3953 = vpop.f32.mrf.mxu0
      %v3954 = vadd.f32 %v1075, %v3953
      %v3955 = vpop.f32.mrf.mxu0
      %v3956 = vadd.f32 %v1076, %v3955
      %3957 = vdwg.mxu0
      %3958 = vrot.lane.b32.xlu0 %v1441, 112
      %v3959 = vpop.permute.xlu0 %3958
      %3960 = vrot.lane.b32.xlu0 %v1441, 48
      %v3961 = vpop.permute.xlu0 %3960
      %v3963 = vsel %vm1092, %v3959, 0
      %v3966 = vsel %vm1092, %v3961, 0
      %3968 = vmatpush.bf16.xpose.msra.mxu0 0
      %3969 = vmatpush.bf16.xpose.msra.mxu0 0
      %3970 = vmatpush.bf16.xpose.msra.mxu0 0
      %3971 = vmatpush.bf16.xpose.msra.mxu0 0
      %3972 = vmatpush.bf16.xpose.msra.mxu0 0
      %3973 = vmatpush.bf16.xpose.msra.mxu0 0
      %3974 = vmatpush.bf16.xpose.msra.mxu0 0
      %3975 = vmatpush.bf16.xpose.msra.mxu0 %v3966
      %3976 = vmatmul.bf16.gmra.mxu0 %v3963
      %v3977 = vpop.f32.mrf.mxu0
      %v3978 = vadd.f32 %v1075, %v3977
      %v3979 = vpop.f32.mrf.mxu0
      %v3980 = vadd.f32 %v1076, %v3979
      %3981 = vdwg.mxu0
      %3982 = vrot.lane.b32.xlu0 %v1468, 112
      %v3983 = vpop.permute.xlu0 %3982
      %3984 = vrot.lane.b32.xlu0 %v1468, 48
      %v3985 = vpop.permute.xlu0 %3984
      %v3987 = vsel %vm1092, %v3983, 0
      %v3990 = vsel %vm1092, %v3985, 0
      %3992 = vmatpush.bf16.xpose.msra.mxu0 0
      %3993 = vmatpush.bf16.xpose.msra.mxu0 0
      %3994 = vmatpush.bf16.xpose.msra.mxu0 0
      %3995 = vmatpush.bf16.xpose.msra.mxu0 0
      %3996 = vmatpush.bf16.xpose.msra.mxu0 0
      %3997 = vmatpush.bf16.xpose.msra.mxu0 0
      %3998 = vmatpush.bf16.xpose.msra.mxu0 0
      %3999 = vmatpush.bf16.xpose.msra.mxu0 %v3990
      %4000 = vmatmul.bf16.gmra.mxu0 %v3987
      %v4001 = vpop.f32.mrf.mxu0
      %v4002 = vadd.f32 %v1075, %v4001
      %v4003 = vpop.f32.mrf.mxu0
      %v4004 = vadd.f32 %v1076, %v4003
      %4005 = vdwg.mxu0
      %4006 = vrot.lane.b32.xlu0 %v1495, 112
      %v4007 = vpop.permute.xlu0 %4006
      %4008 = vrot.lane.b32.xlu0 %v1495, 48
      %v4009 = vpop.permute.xlu0 %4008
      %v4011 = vsel %vm1092, %v4007, 0
      %v4014 = vsel %vm1092, %v4009, 0
      %4016 = vmatpush.bf16.xpose.msra.mxu0 0
      %4017 = vmatpush.bf16.xpose.msra.mxu0 0
      %4018 = vmatpush.bf16.xpose.msra.mxu0 0
      %4019 = vmatpush.bf16.xpose.msra.mxu0 0
      %4020 = vmatpush.bf16.xpose.msra.mxu0 0
      %4021 = vmatpush.bf16.xpose.msra.mxu0 0
      %4022 = vmatpush.bf16.xpose.msra.mxu0 0
      %4023 = vmatpush.bf16.xpose.msra.mxu0 %v4014
      %4024 = vmatmul.bf16.gmra.mxu0 %v4011
      %v4025 = vpop.f32.mrf.mxu0
      %v4026 = vadd.f32 %v1075, %v4025
      %v4027 = vpop.f32.mrf.mxu0
      %v4028 = vadd.f32 %v1076, %v4027
      %4029 = vdwg.mxu0
      %4030 = vrot.lane.b32.xlu0 %v1522, 112
      %v4031 = vpop.permute.xlu0 %4030
      %4032 = vrot.lane.b32.xlu0 %v1522, 48
      %v4033 = vpop.permute.xlu0 %4032
      %v4035 = vsel %vm1092, %v4031, 0
      %v4038 = vsel %vm1092, %v4033, 0
      %4040 = vmatpush.bf16.xpose.msra.mxu0 0
      %4041 = vmatpush.bf16.xpose.msra.mxu0 0
      %4042 = vmatpush.bf16.xpose.msra.mxu0 0
      %4043 = vmatpush.bf16.xpose.msra.mxu0 0
      %4044 = vmatpush.bf16.xpose.msra.mxu0 0
      %4045 = vmatpush.bf16.xpose.msra.mxu0 0
      %4046 = vmatpush.bf16.xpose.msra.mxu0 0
      %4047 = vmatpush.bf16.xpose.msra.mxu0 %v4038
      %4048 = vmatmul.bf16.gmra.mxu0 %v4035
      %v4049 = vpop.f32.mrf.mxu0
      %v4050 = vadd.f32 %v1075, %v4049
      %v4051 = vpop.f32.mrf.mxu0
      %v4052 = vadd.f32 %v1076, %v4051
      %4053 = vdwg.mxu0
      %4054 = vrot.lane.b32.xlu0 %v1549, 112
      %v4055 = vpop.permute.xlu0 %4054
      %4056 = vrot.lane.b32.xlu0 %v1549, 48
      %v4057 = vpop.permute.xlu0 %4056
      %v4059 = vsel %vm1092, %v4055, 0
      %v4062 = vsel %vm1092, %v4057, 0
      %4064 = vmatpush.bf16.xpose.msra.mxu0 0
      %4065 = vmatpush.bf16.xpose.msra.mxu0 0
      %4066 = vmatpush.bf16.xpose.msra.mxu0 0
      %4067 = vmatpush.bf16.xpose.msra.mxu0 0
      %4068 = vmatpush.bf16.xpose.msra.mxu0 0
      %4069 = vmatpush.bf16.xpose.msra.mxu0 0
      %4070 = vmatpush.bf16.xpose.msra.mxu0 0
      %4071 = vmatpush.bf16.xpose.msra.mxu0 %v4062
      %4072 = vmatmul.bf16.gmra.mxu0 %v4059
      %v4073 = vpop.f32.mrf.mxu0
      %v4074 = vadd.f32 %v1075, %v4073
      %v4075 = vpop.f32.mrf.mxu0
      %v4076 = vadd.f32 %v1076, %v4075
      %4077 = vdwg.mxu0
      %4078 = vrot.lane.b32.xlu0 %v1576, 112
      %v4079 = vpop.permute.xlu0 %4078
      %4080 = vrot.lane.b32.xlu0 %v1576, 48
      %v4081 = vpop.permute.xlu0 %4080
      %v4083 = vsel %vm1092, %v4079, 0
      %v4086 = vsel %vm1092, %v4081, 0
      %4088 = vmatpush.bf16.xpose.msra.mxu0 0
      %4089 = vmatpush.bf16.xpose.msra.mxu0 0
      %4090 = vmatpush.bf16.xpose.msra.mxu0 0
      %4091 = vmatpush.bf16.xpose.msra.mxu0 0
      %4092 = vmatpush.bf16.xpose.msra.mxu0 0
      %4093 = vmatpush.bf16.xpose.msra.mxu0 0
      %4094 = vmatpush.bf16.xpose.msra.mxu0 0
      %4095 = vmatpush.bf16.xpose.msra.mxu0 %v4086
      %4096 = vmatmul.bf16.gmra.mxu0 %v4083
      %v4097 = vpop.f32.mrf.mxu0
      %v4098 = vadd.f32 %v1075, %v4097
      %v4099 = vpop.f32.mrf.mxu0
      %v4100 = vadd.f32 %v1076, %v4099
      %4101 = vdwg.mxu0
      %4102 = vrot.lane.b32.xlu0 %v1603, 112
      %v4103 = vpop.permute.xlu0 %4102
      %4104 = vrot.lane.b32.xlu0 %v1603, 48
      %v4105 = vpop.permute.xlu0 %4104
      %v4107 = vsel %vm1092, %v4103, 0
      %v4110 = vsel %vm1092, %v4105, 0
      %4112 = vmatpush.bf16.xpose.msra.mxu0 0
      %4113 = vmatpush.bf16.xpose.msra.mxu0 0
      %4114 = vmatpush.bf16.xpose.msra.mxu0 0
      %4115 = vmatpush.bf16.xpose.msra.mxu0 0
      %4116 = vmatpush.bf16.xpose.msra.mxu0 0
      %4117 = vmatpush.bf16.xpose.msra.mxu0 0
      %4118 = vmatpush.bf16.xpose.msra.mxu0 0
      %4119 = vmatpush.bf16.xpose.msra.mxu0 %v4110
      %4120 = vmatmul.bf16.gmra.mxu0 %v4107
      %v4121 = vpop.f32.mrf.mxu0
      %v4122 = vadd.f32 %v1075, %v4121
      %v4123 = vpop.f32.mrf.mxu0
      %v4124 = vadd.f32 %v1076, %v4123
      %4125 = vdwg.mxu0
      %4126 = vrot.lane.b32.xlu0 %v1630, 112
      %v4127 = vpop.permute.xlu0 %4126
      %4128 = vrot.lane.b32.xlu0 %v1630, 48
      %v4129 = vpop.permute.xlu0 %4128
      %v4131 = vsel %vm1092, %v4127, 0
      %v4134 = vsel %vm1092, %v4129, 0
      %4136 = vmatpush.bf16.xpose.msra.mxu0 0
      %4137 = vmatpush.bf16.xpose.msra.mxu0 0
      %4138 = vmatpush.bf16.xpose.msra.mxu0 0
      %4139 = vmatpush.bf16.xpose.msra.mxu0 0
      %4140 = vmatpush.bf16.xpose.msra.mxu0 0
      %4141 = vmatpush.bf16.xpose.msra.mxu0 0
      %4142 = vmatpush.bf16.xpose.msra.mxu0 0
      %4143 = vmatpush.bf16.xpose.msra.mxu0 %v4134
      %4144 = vmatmul.bf16.gmra.mxu0 %v4131
      %v4145 = vpop.f32.mrf.mxu0
      %v4146 = vadd.f32 %v1075, %v4145
      %v4147 = vpop.f32.mrf.mxu0
      %v4148 = vadd.f32 %v1076, %v4147
      %4149 = vdwg.mxu0
      %4150 = vrot.lane.b32.xlu0 %v1657, 112
      %v4151 = vpop.permute.xlu0 %4150
      %4152 = vrot.lane.b32.xlu0 %v1657, 48
      %v4153 = vpop.permute.xlu0 %4152
      %v4155 = vsel %vm1092, %v4151, 0
      %v4158 = vsel %vm1092, %v4153, 0
      %4160 = vmatpush.bf16.xpose.msra.mxu0 0
      %4161 = vmatpush.bf16.xpose.msra.mxu0 0
      %4162 = vmatpush.bf16.xpose.msra.mxu0 0
      %4163 = vmatpush.bf16.xpose.msra.mxu0 0
      %4164 = vmatpush.bf16.xpose.msra.mxu0 0
      %4165 = vmatpush.bf16.xpose.msra.mxu0 0
      %4166 = vmatpush.bf16.xpose.msra.mxu0 0
      %4167 = vmatpush.bf16.xpose.msra.mxu0 %v4158
      %4168 = vmatmul.bf16.gmra.mxu0 %v4155
      %v4169 = vpop.f32.mrf.mxu0
      %v4170 = vadd.f32 %v1075, %v4169
      %v4171 = vpop.f32.mrf.mxu0
      %v4172 = vadd.f32 %v1076, %v4171
      %4173 = vdwg.mxu0
      %4174 = vrot.lane.b32.xlu0 %v1684, 112
      %v4175 = vpop.permute.xlu0 %4174
      %4176 = vrot.lane.b32.xlu0 %v1684, 48
      %v4177 = vpop.permute.xlu0 %4176
      %v4179 = vsel %vm1092, %v4175, 0
      %v4182 = vsel %vm1092, %v4177, 0
      %4184 = vmatpush.bf16.xpose.msra.mxu0 0
      %4185 = vmatpush.bf16.xpose.msra.mxu0 0
      %4186 = vmatpush.bf16.xpose.msra.mxu0 0
      %4187 = vmatpush.bf16.xpose.msra.mxu0 0
      %4188 = vmatpush.bf16.xpose.msra.mxu0 0
      %4189 = vmatpush.bf16.xpose.msra.mxu0 0
      %4190 = vmatpush.bf16.xpose.msra.mxu0 0
      %4191 = vmatpush.bf16.xpose.msra.mxu0 %v4182
      %4192 = vmatmul.bf16.gmra.mxu0 %v4179
      %v4193 = vpop.f32.mrf.mxu0
      %v4194 = vadd.f32 %v1075, %v4193
      %v4195 = vpop.f32.mrf.mxu0
      %v4196 = vadd.f32 %v1076, %v4195
      %4197 = vdwg.mxu0
      %4198 = vrot.lane.b32.xlu0 %v1711, 112
      %v4199 = vpop.permute.xlu0 %4198
      %4200 = vrot.lane.b32.xlu0 %v1711, 48
      %v4201 = vpop.permute.xlu0 %4200
      %v4203 = vsel %vm1092, %v4199, 0
      %v4206 = vsel %vm1092, %v4201, 0
      %4208 = vmatpush.bf16.xpose.msra.mxu0 0
      %4209 = vmatpush.bf16.xpose.msra.mxu0 0
      %4210 = vmatpush.bf16.xpose.msra.mxu0 0
      %4211 = vmatpush.bf16.xpose.msra.mxu0 0
      %4212 = vmatpush.bf16.xpose.msra.mxu0 0
      %4213 = vmatpush.bf16.xpose.msra.mxu0 0
      %4214 = vmatpush.bf16.xpose.msra.mxu0 0
      %4215 = vmatpush.bf16.xpose.msra.mxu0 %v4206
      %4216 = vmatmul.bf16.gmra.mxu0 %v4203
      %v4217 = vpop.f32.mrf.mxu0
      %v4218 = vadd.f32 %v1075, %v4217
      %v4219 = vpop.f32.mrf.mxu0
      %v4220 = vadd.f32 %v1076, %v4219
      %4221 = vdwg.mxu0
      %4222 = vrot.lane.b32.xlu0 %v1738, 112
      %v4223 = vpop.permute.xlu0 %4222
      %4224 = vrot.lane.b32.xlu0 %v1738, 48
      %v4225 = vpop.permute.xlu0 %4224
      %v4227 = vsel %vm1092, %v4223, 0
      %v4230 = vsel %vm1092, %v4225, 0
      %4232 = vmatpush.bf16.xpose.msra.mxu0 0
      %4233 = vmatpush.bf16.xpose.msra.mxu0 0
      %4234 = vmatpush.bf16.xpose.msra.mxu0 0
      %4235 = vmatpush.bf16.xpose.msra.mxu0 0
      %4236 = vmatpush.bf16.xpose.msra.mxu0 0
      %4237 = vmatpush.bf16.xpose.msra.mxu0 0
      %4238 = vmatpush.bf16.xpose.msra.mxu0 0
      %4239 = vmatpush.bf16.xpose.msra.mxu0 %v4230
      %4240 = vmatmul.bf16.gmra.mxu0 %v4227
      %v4241 = vpop.f32.mrf.mxu0
      %v4242 = vadd.f32 %v1075, %v4241
      %v4243 = vpop.f32.mrf.mxu0
      %v4244 = vadd.f32 %v1076, %v4243
      %4245 = vdwg.mxu0
      %4246 = vrot.lane.b32.xlu0 %v1765, 112
      %v4247 = vpop.permute.xlu0 %4246
      %4248 = vrot.lane.b32.xlu0 %v1765, 48
      %v4249 = vpop.permute.xlu0 %4248
      %v4251 = vsel %vm1092, %v4247, 0
      %v4254 = vsel %vm1092, %v4249, 0
      %4256 = vmatpush.bf16.xpose.msra.mxu0 0
      %4257 = vmatpush.bf16.xpose.msra.mxu0 0
      %4258 = vmatpush.bf16.xpose.msra.mxu0 0
      %4259 = vmatpush.bf16.xpose.msra.mxu0 0
      %4260 = vmatpush.bf16.xpose.msra.mxu0 0
      %4261 = vmatpush.bf16.xpose.msra.mxu0 0
      %4262 = vmatpush.bf16.xpose.msra.mxu0 0
      %4263 = vmatpush.bf16.xpose.msra.mxu0 %v4254
      %4264 = vmatmul.bf16.gmra.mxu0 %v4251
      %v4265 = vpop.f32.mrf.mxu0
      %v4266 = vadd.f32 %v1075, %v4265
      %v4267 = vpop.f32.mrf.mxu0
      %v4268 = vadd.f32 %v1076, %v4267
      %4269 = vdwg.mxu0
      %4270 = vrot.lane.b32.xlu0 %v1792, 112
      %v4271 = vpop.permute.xlu0 %4270
      %4272 = vrot.lane.b32.xlu0 %v1792, 48
      %v4273 = vpop.permute.xlu0 %4272
      %v4275 = vsel %vm1092, %v4271, 0
      %v4278 = vsel %vm1092, %v4273, 0
      %4280 = vmatpush.bf16.xpose.msra.mxu0 0
      %4281 = vmatpush.bf16.xpose.msra.mxu0 0
      %4282 = vmatpush.bf16.xpose.msra.mxu0 0
      %4283 = vmatpush.bf16.xpose.msra.mxu0 0
      %4284 = vmatpush.bf16.xpose.msra.mxu0 0
      %4285 = vmatpush.bf16.xpose.msra.mxu0 0
      %4286 = vmatpush.bf16.xpose.msra.mxu0 0
      %4287 = vmatpush.bf16.xpose.msra.mxu0 %v4278
      %4288 = vmatmul.bf16.gmra.mxu0 %v4275
      %v4289 = vpop.f32.mrf.mxu0
      %v4290 = vadd.f32 %v1075, %v4289
      %v4291 = vpop.f32.mrf.mxu0
      %v4292 = vadd.f32 %v1076, %v4291
      %4293 = vdwg.mxu0
      %4294 = vrot.lane.b32.xlu0 %v1819, 112
      %v4295 = vpop.permute.xlu0 %4294
      %4296 = vrot.lane.b32.xlu0 %v1819, 48
      %v4297 = vpop.permute.xlu0 %4296
      %v4299 = vsel %vm1092, %v4295, 0
      %v4302 = vsel %vm1092, %v4297, 0
      %4304 = vmatpush.bf16.xpose.msra.mxu0 0
      %4305 = vmatpush.bf16.xpose.msra.mxu0 0
      %4306 = vmatpush.bf16.xpose.msra.mxu0 0
      %4307 = vmatpush.bf16.xpose.msra.mxu0 0
      %4308 = vmatpush.bf16.xpose.msra.mxu0 0
      %4309 = vmatpush.bf16.xpose.msra.mxu0 0
      %4310 = vmatpush.bf16.xpose.msra.mxu0 0
      %4311 = vmatpush.bf16.xpose.msra.mxu0 %v4302
      %4312 = vmatmul.bf16.gmra.mxu0 %v4299
      %v4313 = vpop.f32.mrf.mxu0
      %v4314 = vadd.f32 %v1075, %v4313
      %v4315 = vpop.f32.mrf.mxu0
      %v4316 = vadd.f32 %v1076, %v4315
      %4317 = vdwg.mxu0
      %4318 = vrot.lane.b32.xlu0 %v1846, 112
      %v4319 = vpop.permute.xlu0 %4318
      %4320 = vrot.lane.b32.xlu0 %v1846, 48
      %v4321 = vpop.permute.xlu0 %4320
      %v4323 = vsel %vm1092, %v4319, 0
      %v4326 = vsel %vm1092, %v4321, 0
      %4328 = vmatpush.bf16.xpose.msra.mxu0 0
      %4329 = vmatpush.bf16.xpose.msra.mxu0 0
      %4330 = vmatpush.bf16.xpose.msra.mxu0 0
      %4331 = vmatpush.bf16.xpose.msra.mxu0 0
      %4332 = vmatpush.bf16.xpose.msra.mxu0 0
      %4333 = vmatpush.bf16.xpose.msra.mxu0 0
      %4334 = vmatpush.bf16.xpose.msra.mxu0 0
      %4335 = vmatpush.bf16.xpose.msra.mxu0 %v4326
      %4336 = vmatmul.bf16.gmra.mxu0 %v4323
      %v4337 = vpop.f32.mrf.mxu0
      %v4338 = vadd.f32 %v1075, %v4337
      %v4339 = vpop.f32.mrf.mxu0
      %v4340 = vadd.f32 %v1076, %v4339
      %4341 = vdwg.mxu0
      %4342 = vrot.lane.b32.xlu0 %v1873, 112
      %v4343 = vpop.permute.xlu0 %4342
      %4344 = vrot.lane.b32.xlu0 %v1873, 48
      %v4345 = vpop.permute.xlu0 %4344
      %v4347 = vsel %vm1092, %v4343, 0
      %v4350 = vsel %vm1092, %v4345, 0
      %4352 = vmatpush.bf16.xpose.msra.mxu0 0
      %4353 = vmatpush.bf16.xpose.msra.mxu0 0
      %4354 = vmatpush.bf16.xpose.msra.mxu0 0
      %4355 = vmatpush.bf16.xpose.msra.mxu0 0
      %4356 = vmatpush.bf16.xpose.msra.mxu0 0
      %4357 = vmatpush.bf16.xpose.msra.mxu0 0
      %4358 = vmatpush.bf16.xpose.msra.mxu0 0
      %4359 = vmatpush.bf16.xpose.msra.mxu0 %v4350
      %4360 = vmatmul.bf16.gmra.mxu0 %v4347
      %v4361 = vpop.f32.mrf.mxu0
      %v4362 = vadd.f32 %v1075, %v4361
      %v4363 = vpop.f32.mrf.mxu0
      %v4364 = vadd.f32 %v1076, %v4363
      %4365 = vdwg.mxu0
      %4366 = vrot.lane.b32.xlu0 %v1900, 112
      %v4367 = vpop.permute.xlu0 %4366
      %4368 = vrot.lane.b32.xlu0 %v1900, 48
      %v4369 = vpop.permute.xlu0 %4368
      %v4371 = vsel %vm1092, %v4367, 0
      %v4374 = vsel %vm1092, %v4369, 0
      %4376 = vmatpush.bf16.xpose.msra.mxu0 0
      %4377 = vmatpush.bf16.xpose.msra.mxu0 0
      %4378 = vmatpush.bf16.xpose.msra.mxu0 0
      %4379 = vmatpush.bf16.xpose.msra.mxu0 0
      %4380 = vmatpush.bf16.xpose.msra.mxu0 0
      %4381 = vmatpush.bf16.xpose.msra.mxu0 0
      %4382 = vmatpush.bf16.xpose.msra.mxu0 0
      %4383 = vmatpush.bf16.xpose.msra.mxu0 %v4374
      %4384 = vmatmul.bf16.gmra.mxu0 %v4371
      %v4385 = vpop.f32.mrf.mxu0
      %v4386 = vadd.f32 %v1075, %v4385
      %v4387 = vpop.f32.mrf.mxu0
      %v4388 = vadd.f32 %v1076, %v4387
      %4389 = vdwg.mxu0
      %4390 = vrot.lane.b32.xlu0 %v1927, 112
      %v4391 = vpop.permute.xlu0 %4390
      %4392 = vrot.lane.b32.xlu0 %v1927, 48
      %v4393 = vpop.permute.xlu0 %4392
      %v4395 = vsel %vm1092, %v4391, 0
      %v4398 = vsel %vm1092, %v4393, 0
      %4400 = vmatpush.bf16.xpose.msra.mxu0 0
      %4401 = vmatpush.bf16.xpose.msra.mxu0 0
      %4402 = vmatpush.bf16.xpose.msra.mxu0 0
      %4403 = vmatpush.bf16.xpose.msra.mxu0 0
      %4404 = vmatpush.bf16.xpose.msra.mxu0 0
      %4405 = vmatpush.bf16.xpose.msra.mxu0 0
      %4406 = vmatpush.bf16.xpose.msra.mxu0 0
      %4407 = vmatpush.bf16.xpose.msra.mxu0 %v4398
      %4408 = vmatmul.bf16.gmra.mxu0 %v4395
      %v4409 = vpop.f32.mrf.mxu0
      %v4410 = vadd.f32 %v1075, %v4409
      %v4411 = vpop.f32.mrf.mxu0
      %v4412 = vadd.f32 %v1076, %v4411
      %4413 = vdwg.mxu0
      %v4414 = vsel %vm1092, %v3666, -inf
      %4415 = vmax.xlane.f32.xlu0 %v4414
      %v4416 = vpop.xlane.xlu0 %4415
      %v4417 = vsel %vm1092, %v3668, -inf
      %4418 = vmax.xlane.f32.xlu0 %v4417
      %v4419 = vpop.xlane.xlu0 %4418
      %v4420 = vsel %vm1092, %v3690, -inf
      %4421 = vmax.xlane.f32.xlu0 %v4420
      %v4422 = vpop.xlane.xlu0 %4421
      %v4423 = vsel %vm1092, %v3692, -inf
      %4424 = vmax.xlane.f32.xlu0 %v4423
      %v4425 = vpop.xlane.xlu0 %4424
      %v4426 = vsel %vm1092, %v3714, -inf
      %4427 = vmax.xlane.f32.xlu0 %v4426
      %v4428 = vpop.xlane.xlu0 %4427
      %v4429 = vsel %vm1092, %v3716, -inf
      %4430 = vmax.xlane.f32.xlu0 %v4429
      %v4431 = vpop.xlane.xlu0 %4430
      %v4432 = vsel %vm1092, %v3738, -inf
      %4433 = vmax.xlane.f32.xlu0 %v4432
      %v4434 = vpop.xlane.xlu0 %4433
      %v4435 = vsel %vm1092, %v3740, -inf
      %4436 = vmax.xlane.f32.xlu0 %v4435
      %v4437 = vpop.xlane.xlu0 %4436
      %v4438 = vsel %vm1092, %v3762, -inf
      %4439 = vmax.xlane.f32.xlu0 %v4438
      %v4440 = vpop.xlane.xlu0 %4439
      %v4441 = vsel %vm1092, %v3764, -inf
      %4442 = vmax.xlane.f32.xlu0 %v4441
      %v4443 = vpop.xlane.xlu0 %4442
      %v4444 = vsel %vm1092, %v3786, -inf
      %4445 = vmax.xlane.f32.xlu0 %v4444
      %v4446 = vpop.xlane.xlu0 %4445
      %v4447 = vsel %vm1092, %v3788, -inf
      %4448 = vmax.xlane.f32.xlu0 %v4447
      %v4449 = vpop.xlane.xlu0 %4448
      %v4450 = vsel %vm1092, %v3810, -inf
      %4451 = vmax.xlane.f32.xlu0 %v4450
      %v4452 = vpop.xlane.xlu0 %4451
      %v4453 = vsel %vm1092, %v3812, -inf
      %4454 = vmax.xlane.f32.xlu0 %v4453
      %v4455 = vpop.xlane.xlu0 %4454
      %v4456 = vsel %vm1092, %v3834, -inf
      %4457 = vmax.xlane.f32.xlu0 %v4456
      %v4458 = vpop.xlane.xlu0 %4457
      %v4459 = vsel %vm1092, %v3836, -inf
      %4460 = vmax.xlane.f32.xlu0 %v4459
      %v4461 = vpop.xlane.xlu0 %4460
      %v4462 = vsel %vm1092, %v3858, -inf
      %4463 = vmax.xlane.f32.xlu0 %v4462
      %v4464 = vpop.xlane.xlu0 %4463
      %v4465 = vsel %vm1092, %v3860, -inf
      %4466 = vmax.xlane.f32.xlu0 %v4465
      %v4467 = vpop.xlane.xlu0 %4466
      %v4468 = vsel %vm1092, %v3882, -inf
      %4469 = vmax.xlane.f32.xlu0 %v4468
      %v4470 = vpop.xlane.xlu0 %4469
      %v4471 = vsel %vm1092, %v3884, -inf
      %4472 = vmax.xlane.f32.xlu0 %v4471
      %v4473 = vpop.xlane.xlu0 %4472
      %v4474 = vsel %vm1092, %v3906, -inf
      %4475 = vmax.xlane.f32.xlu0 %v4474
      %v4476 = vpop.xlane.xlu0 %4475
      %v4477 = vsel %vm1092, %v3908, -inf
      %4478 = vmax.xlane.f32.xlu0 %v4477
      %v4479 = vpop.xlane.xlu0 %4478
      %v4480 = vsel %vm1092, %v3930, -inf
      %4481 = vmax.xlane.f32.xlu0 %v4480
      %v4482 = vpop.xlane.xlu0 %4481
      %v4483 = vsel %vm1092, %v3932, -inf
      %4484 = vmax.xlane.f32.xlu0 %v4483
      %v4485 = vpop.xlane.xlu0 %4484
      %v4486 = vsel %vm1092, %v3954, -inf
      %4487 = vmax.xlane.f32.xlu0 %v4486
      %v4488 = vpop.xlane.xlu0 %4487
      %v4489 = vsel %vm1092, %v3956, -inf
      %4490 = vmax.xlane.f32.xlu0 %v4489
      %v4491 = vpop.xlane.xlu0 %4490
      %v4492 = vsel %vm1092, %v3978, -inf
      %4493 = vmax.xlane.f32.xlu0 %v4492
      %v4494 = vpop.xlane.xlu0 %4493
      %v4495 = vsel %vm1092, %v3980, -inf
      %4496 = vmax.xlane.f32.xlu0 %v4495
      %v4497 = vpop.xlane.xlu0 %4496
      %v4498 = vsel %vm1092, %v4002, -inf
      %4499 = vmax.xlane.f32.xlu0 %v4498
      %v4500 = vpop.xlane.xlu0 %4499
      %v4501 = vsel %vm1092, %v4004, -inf
      %4502 = vmax.xlane.f32.xlu0 %v4501
      %v4503 = vpop.xlane.xlu0 %4502
      %v4504 = vsel %vm1092, %v4026, -inf
      %4505 = vmax.xlane.f32.xlu0 %v4504
      %v4506 = vpop.xlane.xlu0 %4505
      %v4507 = vsel %vm1092, %v4028, -inf
      %4508 = vmax.xlane.f32.xlu0 %v4507
      %v4509 = vpop.xlane.xlu0 %4508
      %v4510 = vsel %vm1092, %v4050, -inf
      %4511 = vmax.xlane.f32.xlu0 %v4510
      %v4512 = vpop.xlane.xlu0 %4511
      %v4513 = vsel %vm1092, %v4052, -inf
      %4514 = vmax.xlane.f32.xlu0 %v4513
      %v4515 = vpop.xlane.xlu0 %4514
      %v4516 = vsel %vm1092, %v4074, -inf
      %4517 = vmax.xlane.f32.xlu0 %v4516
      %v4518 = vpop.xlane.xlu0 %4517
      %v4519 = vsel %vm1092, %v4076, -inf
      %4520 = vmax.xlane.f32.xlu0 %v4519
      %v4521 = vpop.xlane.xlu0 %4520
      %v4522 = vsel %vm1092, %v4098, -inf
      %4523 = vmax.xlane.f32.xlu0 %v4522
      %v4524 = vpop.xlane.xlu0 %4523
      %v4525 = vsel %vm1092, %v4100, -inf
      %4526 = vmax.xlane.f32.xlu0 %v4525
      %v4527 = vpop.xlane.xlu0 %4526
      %v4528 = vsel %vm1092, %v4122, -inf
      %4529 = vmax.xlane.f32.xlu0 %v4528
      %v4530 = vpop.xlane.xlu0 %4529
      %v4531 = vsel %vm1092, %v4124, -inf
      %4532 = vmax.xlane.f32.xlu0 %v4531
      %v4533 = vpop.xlane.xlu0 %4532
      %v4534 = vsel %vm1092, %v4146, -inf
      %4535 = vmax.xlane.f32.xlu0 %v4534
      %v4536 = vpop.xlane.xlu0 %4535
      %v4537 = vsel %vm1092, %v4148, -inf
      %4538 = vmax.xlane.f32.xlu0 %v4537
      %v4539 = vpop.xlane.xlu0 %4538
      %v4540 = vsel %vm1092, %v4170, -inf
      %4541 = vmax.xlane.f32.xlu0 %v4540
      %v4542 = vpop.xlane.xlu0 %4541
      %v4543 = vsel %vm1092, %v4172, -inf
      %4544 = vmax.xlane.f32.xlu0 %v4543
      %v4545 = vpop.xlane.xlu0 %4544
      %v4546 = vsel %vm1092, %v4194, -inf
      %4547 = vmax.xlane.f32.xlu0 %v4546
      %v4548 = vpop.xlane.xlu0 %4547
      %v4549 = vsel %vm1092, %v4196, -inf
      %4550 = vmax.xlane.f32.xlu0 %v4549
      %v4551 = vpop.xlane.xlu0 %4550
      %v4552 = vsel %vm1092, %v4218, -inf
      %4553 = vmax.xlane.f32.xlu0 %v4552
      %v4554 = vpop.xlane.xlu0 %4553
      %v4555 = vsel %vm1092, %v4220, -inf
      %4556 = vmax.xlane.f32.xlu0 %v4555
      %v4557 = vpop.xlane.xlu0 %4556
      %v4558 = vsel %vm1092, %v4242, -inf
      %4559 = vmax.xlane.f32.xlu0 %v4558
      %v4560 = vpop.xlane.xlu0 %4559
      %v4561 = vsel %vm1092, %v4244, -inf
      %4562 = vmax.xlane.f32.xlu0 %v4561
      %v4563 = vpop.xlane.xlu0 %4562
      %v4564 = vsel %vm1092, %v4266, -inf
      %4565 = vmax.xlane.f32.xlu0 %v4564
      %v4566 = vpop.xlane.xlu0 %4565
      %v4567 = vsel %vm1092, %v4268, -inf
      %4568 = vmax.xlane.f32.xlu0 %v4567
      %v4569 = vpop.xlane.xlu0 %4568
      %v4570 = vsel %vm1092, %v4290, -inf
      %4571 = vmax.xlane.f32.xlu0 %v4570
      %v4572 = vpop.xlane.xlu0 %4571
      %v4573 = vsel %vm1092, %v4292, -inf
      %4574 = vmax.xlane.f32.xlu0 %v4573
      %v4575 = vpop.xlane.xlu0 %4574
      %v4576 = vsel %vm1092, %v4314, -inf
      %4577 = vmax.xlane.f32.xlu0 %v4576
      %v4578 = vpop.xlane.xlu0 %4577
      %v4579 = vsel %vm1092, %v4316, -inf
      %4580 = vmax.xlane.f32.xlu0 %v4579
      %v4581 = vpop.xlane.xlu0 %4580
      %v4582 = vsel %vm1092, %v4338, -inf
      %4583 = vmax.xlane.f32.xlu0 %v4582
      %v4584 = vpop.xlane.xlu0 %4583
      %v4585 = vsel %vm1092, %v4340, -inf
      %4586 = vmax.xlane.f32.xlu0 %v4585
      %v4587 = vpop.xlane.xlu0 %4586
      %v4588 = vsel %vm1092, %v4362, -inf
      %4589 = vmax.xlane.f32.xlu0 %v4588
      %v4590 = vpop.xlane.xlu0 %4589
      %v4591 = vsel %vm1092, %v4364, -inf
      %4592 = vmax.xlane.f32.xlu0 %v4591
      %v4593 = vpop.xlane.xlu0 %4592
      %v4594 = vsel %vm1092, %v4386, -inf
      %4595 = vmax.xlane.f32.xlu0 %v4594
      %v4596 = vpop.xlane.xlu0 %4595
      %v4597 = vsel %vm1092, %v4388, -inf
      %4598 = vmax.xlane.f32.xlu0 %v4597
      %v4599 = vpop.xlane.xlu0 %4598
      %v4600 = vsel %vm1092, %v4410, -inf
      %4601 = vmax.xlane.f32.xlu0 %v4600
      %v4602 = vpop.xlane.xlu0 %4601
      %v4603 = vsel %vm1092, %v4412, -inf
      %4604 = vmax.xlane.f32.xlu0 %v4603
      %v4605 = vpop.xlane.xlu0 %4604
      %v4606 = vsub.f32 %v3666, %v4416
      %v4607 = vsub.f32 %v3668, %v4419
      %v4608 = vsub.f32 %v3690, %v4422
      %v4609 = vsub.f32 %v3692, %v4425
      %v4610 = vsub.f32 %v3714, %v4428
      %v4611 = vsub.f32 %v3716, %v4431
      %v4612 = vsub.f32 %v3738, %v4434
      %v4613 = vsub.f32 %v3740, %v4437
      %v4614 = vsub.f32 %v3762, %v4440
      %v4615 = vsub.f32 %v3764, %v4443
      %v4616 = vsub.f32 %v3786, %v4446
      %v4617 = vsub.f32 %v3788, %v4449
      %v4618 = vsub.f32 %v3810, %v4452
      %v4619 = vsub.f32 %v3812, %v4455
      %v4620 = vsub.f32 %v3834, %v4458
      %v4621 = vsub.f32 %v3836, %v4461
      %v4622 = vsub.f32 %v3858, %v4464
      %v4623 = vsub.f32 %v3860, %v4467
      %v4624 = vsub.f32 %v3882, %v4470
      %v4625 = vsub.f32 %v3884, %v4473
      %v4626 = vsub.f32 %v3906, %v4476
      %v4627 = vsub.f32 %v3908, %v4479
      %v4628 = vsub.f32 %v3930, %v4482
      %v4629 = vsub.f32 %v3932, %v4485
      %v4630 = vsub.f32 %v3954, %v4488
      %v4631 = vsub.f32 %v3956, %v4491
      %v4632 = vsub.f32 %v3978, %v4494
      %v4633 = vsub.f32 %v3980, %v4497
      %v4634 = vsub.f32 %v4002, %v4500
      %v4635 = vsub.f32 %v4004, %v4503
      %v4636 = vsub.f32 %v4026, %v4506
      %v4637 = vsub.f32 %v4028, %v4509
      %v4638 = vsub.f32 %v4050, %v4512
      %v4639 = vsub.f32 %v4052, %v4515
      %v4640 = vsub.f32 %v4074, %v4518
      %v4641 = vsub.f32 %v4076, %v4521
      %v4642 = vsub.f32 %v4098, %v4524
      %v4643 = vsub.f32 %v4100, %v4527
      %v4644 = vsub.f32 %v4122, %v4530
      %v4645 = vsub.f32 %v4124, %v4533
      %v4646 = vsub.f32 %v4146, %v4536
      %v4647 = vsub.f32 %v4148, %v4539
      %v4648 = vsub.f32 %v4170, %v4542
      %v4649 = vsub.f32 %v4172, %v4545
      %v4650 = vsub.f32 %v4194, %v4548
      %v4651 = vsub.f32 %v4196, %v4551
      %v4652 = vsub.f32 %v4218, %v4554
      %v4653 = vsub.f32 %v4220, %v4557
      %v4654 = vsub.f32 %v4242, %v4560
      %v4655 = vsub.f32 %v4244, %v4563
      %v4656 = vsub.f32 %v4266, %v4566
      %v4657 = vsub.f32 %v4268, %v4569
      %v4658 = vsub.f32 %v4290, %v4572
      %v4659 = vsub.f32 %v4292, %v4575
      %v4660 = vsub.f32 %v4314, %v4578
      %v4661 = vsub.f32 %v4316, %v4581
      %v4662 = vsub.f32 %v4338, %v4584
      %v4663 = vsub.f32 %v4340, %v4587
      %v4664 = vsub.f32 %v4362, %v4590
      %v4665 = vsub.f32 %v4364, %v4593
      %v4666 = vsub.f32 %v4386, %v4596
      %v4667 = vsub.f32 %v4388, %v4599
      %v4668 = vsub.f32 %v4410, %v4602
      %v4669 = vsub.f32 %v4412, %v4605
      %v4670 = vmul.f32 %v4606, 1.442695
      %v4671 = vpow.pop %v4670
      %v4672 = vmul.f32 %v4607, 1.442695
      %v4673 = vpow.pop %v4672
      %v4674 = vmul.f32 %v4608, 1.442695
      %v4675 = vpow.pop %v4674
      %v4676 = vmul.f32 %v4609, 1.442695
      %v4677 = vpow.pop %v4676
      %v4678 = vmul.f32 %v4610, 1.442695
      %v4679 = vpow.pop %v4678
      %v4680 = vmul.f32 %v4611, 1.442695
      %v4681 = vpow.pop %v4680
      %v4682 = vmul.f32 %v4612, 1.442695
      %v4683 = vpow.pop %v4682
      %v4684 = vmul.f32 %v4613, 1.442695
      %v4685 = vpow.pop %v4684
      %v4686 = vmul.f32 %v4614, 1.442695
      %v4687 = vpow.pop %v4686
      %v4688 = vmul.f32 %v4615, 1.442695
      %v4689 = vpow.pop %v4688
      %v4690 = vmul.f32 %v4616, 1.442695
      %v4691 = vpow.pop %v4690
      %v4692 = vmul.f32 %v4617, 1.442695
      %v4693 = vpow.pop %v4692
      %v4694 = vmul.f32 %v4618, 1.442695
      %v4695 = vpow.pop %v4694
      %v4696 = vmul.f32 %v4619, 1.442695
      %v4697 = vpow.pop %v4696
      %v4698 = vmul.f32 %v4620, 1.442695
      %v4699 = vpow.pop %v4698
      %v4700 = vmul.f32 %v4621, 1.442695
      %v4701 = vpow.pop %v4700
      %v4702 = vmul.f32 %v4622, 1.442695
      %v4703 = vpow.pop %v4702
      %v4704 = vmul.f32 %v4623, 1.442695
      %v4705 = vpow.pop %v4704
      %v4706 = vmul.f32 %v4624, 1.442695
      %v4707 = vpow.pop %v4706
      %v4708 = vmul.f32 %v4625, 1.442695
      %v4709 = vpow.pop %v4708
      %v4710 = vmul.f32 %v4626, 1.442695
      %v4711 = vpow.pop %v4710
      %v4712 = vmul.f32 %v4627, 1.442695
      %v4713 = vpow.pop %v4712
      %v4714 = vmul.f32 %v4628, 1.442695
      %v4715 = vpow.pop %v4714
      %v4716 = vmul.f32 %v4629, 1.442695
      %v4717 = vpow.pop %v4716
      %v4718 = vmul.f32 %v4630, 1.442695
      %v4719 = vpow.pop %v4718
      %v4720 = vmul.f32 %v4631, 1.442695
      %v4721 = vpow.pop %v4720
      %v4722 = vmul.f32 %v4632, 1.442695
      %v4723 = vpow.pop %v4722
      %v4724 = vmul.f32 %v4633, 1.442695
      %v4725 = vpow.pop %v4724
      %v4726 = vmul.f32 %v4634, 1.442695
      %v4727 = vpow.pop %v4726
      %v4728 = vmul.f32 %v4635, 1.442695
      %v4729 = vpow.pop %v4728
      %v4730 = vmul.f32 %v4636, 1.442695
      %v4731 = vpow.pop %v4730
      %v4732 = vmul.f32 %v4637, 1.442695
      %v4733 = vpow.pop %v4732
      %v4734 = vmul.f32 %v4638, 1.442695
      %v4735 = vpow.pop %v4734
      %v4736 = vmul.f32 %v4639, 1.442695
      %v4737 = vpow.pop %v4736
      %v4738 = vmul.f32 %v4640, 1.442695
      %v4739 = vpow.pop %v4738
      %v4740 = vmul.f32 %v4641, 1.442695
      %v4741 = vpow.pop %v4740
      %v4742 = vmul.f32 %v4642, 1.442695
      %v4743 = vpow.pop %v4742
      %v4744 = vmul.f32 %v4643, 1.442695
      %v4745 = vpow.pop %v4744
      %v4746 = vmul.f32 %v4644, 1.442695
      %v4747 = vpow.pop %v4746
      %v4748 = vmul.f32 %v4645, 1.442695
      %v4749 = vpow.pop %v4748
      %v4750 = vmul.f32 %v4646, 1.442695
      %v4751 = vpow.pop %v4750
      %v4752 = vmul.f32 %v4647, 1.442695
      %v4753 = vpow.pop %v4752
      %v4754 = vmul.f32 %v4648, 1.442695
      %v4755 = vpow.pop %v4754
      %v4756 = vmul.f32 %v4649, 1.442695
      %v4757 = vpow.pop %v4756
      %v4758 = vmul.f32 %v4650, 1.442695
      %v4759 = vpow.pop %v4758
      %v4760 = vmul.f32 %v4651, 1.442695
      %v4761 = vpow.pop %v4760
      %v4762 = vmul.f32 %v4652, 1.442695
      %v4763 = vpow.pop %v4762
      %v4764 = vmul.f32 %v4653, 1.442695
      %v4765 = vpow.pop %v4764
      %v4766 = vmul.f32 %v4654, 1.442695
      %v4767 = vpow.pop %v4766
      %v4768 = vmul.f32 %v4655, 1.442695
      %v4769 = vpow.pop %v4768
      %v4770 = vmul.f32 %v4656, 1.442695
      %v4771 = vpow.pop %v4770
      %v4772 = vmul.f32 %v4657, 1.442695
      %v4773 = vpow.pop %v4772
      %v4774 = vmul.f32 %v4658, 1.442695
      %v4775 = vpow.pop %v4774
      %v4776 = vmul.f32 %v4659, 1.442695
      %v4777 = vpow.pop %v4776
      %v4778 = vmul.f32 %v4660, 1.442695
      %v4779 = vpow.pop %v4778
      %v4780 = vmul.f32 %v4661, 1.442695
      %v4781 = vpow.pop %v4780
      %v4782 = vmul.f32 %v4662, 1.442695
      %v4783 = vpow.pop %v4782
      %v4784 = vmul.f32 %v4663, 1.442695
      %v4785 = vpow.pop %v4784
      %v4786 = vmul.f32 %v4664, 1.442695
      %v4787 = vpow.pop %v4786
      %v4788 = vmul.f32 %v4665, 1.442695
      %v4789 = vpow.pop %v4788
      %v4790 = vmul.f32 %v4666, 1.442695
      %v4791 = vpow.pop %v4790
      %v4792 = vmul.f32 %v4667, 1.442695
      %v4793 = vpow.pop %v4792
      %v4794 = vmul.f32 %v4668, 1.442695
      %v4795 = vpow.pop %v4794
      %v4796 = vmul.f32 %v4669, 1.442695
      %v4797 = vpow.pop %v4796
      %v4798 = vsel %vm1092, %v4671, 0.0
      %4799 = vadd.xlane.f32.xlu0 %v4798
      %v4800 = vpop.xlane.xlu0 %4799
      %v4801 = vsel %vm1092, %v4673, 0.0
      %4802 = vadd.xlane.f32.xlu0 %v4801
      %v4803 = vpop.xlane.xlu0 %4802
      %v4804 = vsel %vm1092, %v4675, 0.0
      %4805 = vadd.xlane.f32.xlu0 %v4804
      %v4806 = vpop.xlane.xlu0 %4805
      %v4807 = vsel %vm1092, %v4677, 0.0
      %4808 = vadd.xlane.f32.xlu0 %v4807
      %v4809 = vpop.xlane.xlu0 %4808
      %v4810 = vsel %vm1092, %v4679, 0.0
      %4811 = vadd.xlane.f32.xlu0 %v4810
      %v4812 = vpop.xlane.xlu0 %4811
      %v4813 = vsel %vm1092, %v4681, 0.0
      %4814 = vadd.xlane.f32.xlu0 %v4813
      %v4815 = vpop.xlane.xlu0 %4814
      %v4816 = vsel %vm1092, %v4683, 0.0
      %4817 = vadd.xlane.f32.xlu0 %v4816
      %v4818 = vpop.xlane.xlu0 %4817
      %v4819 = vsel %vm1092, %v4685, 0.0
      %4820 = vadd.xlane.f32.xlu0 %v4819
      %v4821 = vpop.xlane.xlu0 %4820
      %v4822 = vsel %vm1092, %v4687, 0.0
      %4823 = vadd.xlane.f32.xlu0 %v4822
      %v4824 = vpop.xlane.xlu0 %4823
      %v4825 = vsel %vm1092, %v4689, 0.0
      %4826 = vadd.xlane.f32.xlu0 %v4825
      %v4827 = vpop.xlane.xlu0 %4826
      %v4828 = vsel %vm1092, %v4691, 0.0
      %4829 = vadd.xlane.f32.xlu0 %v4828
      %v4830 = vpop.xlane.xlu0 %4829
      %v4831 = vsel %vm1092, %v4693, 0.0
      %4832 = vadd.xlane.f32.xlu0 %v4831
      %v4833 = vpop.xlane.xlu0 %4832
      %v4834 = vsel %vm1092, %v4695, 0.0
      %4835 = vadd.xlane.f32.xlu0 %v4834
      %v4836 = vpop.xlane.xlu0 %4835
      %v4837 = vsel %vm1092, %v4697, 0.0
      %4838 = vadd.xlane.f32.xlu0 %v4837
      %v4839 = vpop.xlane.xlu0 %4838
      %v4840 = vsel %vm1092, %v4699, 0.0
      %4841 = vadd.xlane.f32.xlu0 %v4840
      %v4842 = vpop.xlane.xlu0 %4841
      %v4843 = vsel %vm1092, %v4701, 0.0
      %4844 = vadd.xlane.f32.xlu0 %v4843
      %v4845 = vpop.xlane.xlu0 %4844
      %v4846 = vsel %vm1092, %v4703, 0.0
      %4847 = vadd.xlane.f32.xlu0 %v4846
      %v4848 = vpop.xlane.xlu0 %4847
      %v4849 = vsel %vm1092, %v4705, 0.0
      %4850 = vadd.xlane.f32.xlu0 %v4849
      %v4851 = vpop.xlane.xlu0 %4850
      %v4852 = vsel %vm1092, %v4707, 0.0
      %4853 = vadd.xlane.f32.xlu0 %v4852
      %v4854 = vpop.xlane.xlu0 %4853
      %v4855 = vsel %vm1092, %v4709, 0.0
      %4856 = vadd.xlane.f32.xlu0 %v4855
      %v4857 = vpop.xlane.xlu0 %4856
      %v4858 = vsel %vm1092, %v4711, 0.0
      %4859 = vadd.xlane.f32.xlu0 %v4858
      %v4860 = vpop.xlane.xlu0 %4859
      %v4861 = vsel %vm1092, %v4713, 0.0
      %4862 = vadd.xlane.f32.xlu0 %v4861
      %v4863 = vpop.xlane.xlu0 %4862
      %v4864 = vsel %vm1092, %v4715, 0.0
      %4865 = vadd.xlane.f32.xlu0 %v4864
      %v4866 = vpop.xlane.xlu0 %4865
      %v4867 = vsel %vm1092, %v4717, 0.0
      %4868 = vadd.xlane.f32.xlu0 %v4867
      %v4869 = vpop.xlane.xlu0 %4868
      %v4870 = vsel %vm1092, %v4719, 0.0
      %4871 = vadd.xlane.f32.xlu0 %v4870
      %v4872 = vpop.xlane.xlu0 %4871
      %v4873 = vsel %vm1092, %v4721, 0.0
      %4874 = vadd.xlane.f32.xlu0 %v4873
      %v4875 = vpop.xlane.xlu0 %4874
      %v4876 = vsel %vm1092, %v4723, 0.0
      %4877 = vadd.xlane.f32.xlu0 %v4876
      %v4878 = vpop.xlane.xlu0 %4877
      %v4879 = vsel %vm1092, %v4725, 0.0
      %4880 = vadd.xlane.f32.xlu0 %v4879
      %v4881 = vpop.xlane.xlu0 %4880
      %v4882 = vsel %vm1092, %v4727, 0.0
      %4883 = vadd.xlane.f32.xlu0 %v4882
      %v4884 = vpop.xlane.xlu0 %4883
      %v4885 = vsel %vm1092, %v4729, 0.0
      %4886 = vadd.xlane.f32.xlu0 %v4885
      %v4887 = vpop.xlane.xlu0 %4886
      %v4888 = vsel %vm1092, %v4731, 0.0
      %4889 = vadd.xlane.f32.xlu0 %v4888
      %v4890 = vpop.xlane.xlu0 %4889
      %v4891 = vsel %vm1092, %v4733, 0.0
      %4892 = vadd.xlane.f32.xlu0 %v4891
      %v4893 = vpop.xlane.xlu0 %4892
      %v4894 = vsel %vm1092, %v4735, 0.0
      %4895 = vadd.xlane.f32.xlu0 %v4894
      %v4896 = vpop.xlane.xlu0 %4895
      %v4897 = vsel %vm1092, %v4737, 0.0
      %4898 = vadd.xlane.f32.xlu0 %v4897
      %v4899 = vpop.xlane.xlu0 %4898
      %v4900 = vsel %vm1092, %v4739, 0.0
      %4901 = vadd.xlane.f32.xlu0 %v4900
      %v4902 = vpop.xlane.xlu0 %4901
      %v4903 = vsel %vm1092, %v4741, 0.0
      %4904 = vadd.xlane.f32.xlu0 %v4903
      %v4905 = vpop.xlane.xlu0 %4904
      %v4906 = vsel %vm1092, %v4743, 0.0
      %4907 = vadd.xlane.f32.xlu0 %v4906
      %v4908 = vpop.xlane.xlu0 %4907
      %v4909 = vsel %vm1092, %v4745, 0.0
      %4910 = vadd.xlane.f32.xlu0 %v4909
      %v4911 = vpop.xlane.xlu0 %4910
      %v4912 = vsel %vm1092, %v4747, 0.0
      %4913 = vadd.xlane.f32.xlu0 %v4912
      %v4914 = vpop.xlane.xlu0 %4913
      %v4915 = vsel %vm1092, %v4749, 0.0
      %4916 = vadd.xlane.f32.xlu0 %v4915
      %v4917 = vpop.xlane.xlu0 %4916
      %v4918 = vsel %vm1092, %v4751, 0.0
      %4919 = vadd.xlane.f32.xlu0 %v4918
      %v4920 = vpop.xlane.xlu0 %4919
      %v4921 = vsel %vm1092, %v4753, 0.0
      %4922 = vadd.xlane.f32.xlu0 %v4921
      %v4923 = vpop.xlane.xlu0 %4922
      %v4924 = vsel %vm1092, %v4755, 0.0
      %4925 = vadd.xlane.f32.xlu0 %v4924
      %v4926 = vpop.xlane.xlu0 %4925
      %v4927 = vsel %vm1092, %v4757, 0.0
      %4928 = vadd.xlane.f32.xlu0 %v4927
      %v4929 = vpop.xlane.xlu0 %4928
      %v4930 = vsel %vm1092, %v4759, 0.0
      %4931 = vadd.xlane.f32.xlu0 %v4930
      %v4932 = vpop.xlane.xlu0 %4931
      %v4933 = vsel %vm1092, %v4761, 0.0
      %4934 = vadd.xlane.f32.xlu0 %v4933
      %v4935 = vpop.xlane.xlu0 %4934
      %v4936 = vsel %vm1092, %v4763, 0.0
      %4937 = vadd.xlane.f32.xlu0 %v4936
      %v4938 = vpop.xlane.xlu0 %4937
      %v4939 = vsel %vm1092, %v4765, 0.0
      %4940 = vadd.xlane.f32.xlu0 %v4939
      %v4941 = vpop.xlane.xlu0 %4940
      %v4942 = vsel %vm1092, %v4767, 0.0
      %4943 = vadd.xlane.f32.xlu0 %v4942
      %v4944 = vpop.xlane.xlu0 %4943
      %v4945 = vsel %vm1092, %v4769, 0.0
      %4946 = vadd.xlane.f32.xlu0 %v4945
      %v4947 = vpop.xlane.xlu0 %4946
      %v4948 = vsel %vm1092, %v4771, 0.0
      %4949 = vadd.xlane.f32.xlu0 %v4948
      %v4950 = vpop.xlane.xlu0 %4949
      %v4951 = vsel %vm1092, %v4773, 0.0
      %4952 = vadd.xlane.f32.xlu0 %v4951
      %v4953 = vpop.xlane.xlu0 %4952
      %v4954 = vsel %vm1092, %v4775, 0.0
      %4955 = vadd.xlane.f32.xlu0 %v4954
      %v4956 = vpop.xlane.xlu0 %4955
      %v4957 = vsel %vm1092, %v4777, 0.0
      %4958 = vadd.xlane.f32.xlu0 %v4957
      %v4959 = vpop.xlane.xlu0 %4958
      %v4960 = vsel %vm1092, %v4779, 0.0
      %4961 = vadd.xlane.f32.xlu0 %v4960
      %v4962 = vpop.xlane.xlu0 %4961
      %v4963 = vsel %vm1092, %v4781, 0.0
      %4964 = vadd.xlane.f32.xlu0 %v4963
      %v4965 = vpop.xlane.xlu0 %4964
      %v4966 = vsel %vm1092, %v4783, 0.0
      %4967 = vadd.xlane.f32.xlu0 %v4966
      %v4968 = vpop.xlane.xlu0 %4967
      %v4969 = vsel %vm1092, %v4785, 0.0
      %4970 = vadd.xlane.f32.xlu0 %v4969
      %v4971 = vpop.xlane.xlu0 %4970
      %v4972 = vsel %vm1092, %v4787, 0.0
      %4973 = vadd.xlane.f32.xlu0 %v4972
      %v4974 = vpop.xlane.xlu0 %4973
      %v4975 = vsel %vm1092, %v4789, 0.0
      %4976 = vadd.xlane.f32.xlu0 %v4975
      %v4977 = vpop.xlane.xlu0 %4976
      %v4978 = vsel %vm1092, %v4791, 0.0
      %4979 = vadd.xlane.f32.xlu0 %v4978
      %v4980 = vpop.xlane.xlu0 %4979
      %v4981 = vsel %vm1092, %v4793, 0.0
      %4982 = vadd.xlane.f32.xlu0 %v4981
      %v4983 = vpop.xlane.xlu0 %4982
      %v4984 = vsel %vm1092, %v4795, 0.0
      %4985 = vadd.xlane.f32.xlu0 %v4984
      %v4986 = vpop.xlane.xlu0 %4985
      %v4987 = vsel %vm1092, %v4797, 0.0
      %4988 = vadd.xlane.f32.xlu0 %v4987
      %v4989 = vpop.xlane.xlu0 %4988
      %v4990 = vrcp.pop %v4800
      %v4991 = vrcp.pop %v4803
      %v4992 = vrcp.pop %v4806
      %v4993 = vrcp.pop %v4809
      %v4994 = vrcp.pop %v4812
      %v4995 = vrcp.pop %v4815
      %v4996 = vrcp.pop %v4818
      %v4997 = vrcp.pop %v4821
      %v4998 = vrcp.pop %v4824
      %v4999 = vrcp.pop %v4827
      %v5000 = vrcp.pop %v4830
      %v5001 = vrcp.pop %v4833
      %v5002 = vrcp.pop %v4836
      %v5003 = vrcp.pop %v4839
      %v5004 = vrcp.pop %v4842
      %v5005 = vrcp.pop %v4845
      %v5006 = vrcp.pop %v4848
      %v5007 = vrcp.pop %v4851
      %v5008 = vrcp.pop %v4854
      %v5009 = vrcp.pop %v4857
      %v5010 = vrcp.pop %v4860
      %v5011 = vrcp.pop %v4863
      %v5012 = vrcp.pop %v4866
      %v5013 = vrcp.pop %v4869
      %v5014 = vrcp.pop %v4872
      %v5015 = vrcp.pop %v4875
      %v5016 = vrcp.pop %v4878
      %v5017 = vrcp.pop %v4881
      %v5018 = vrcp.pop %v4884
      %v5019 = vrcp.pop %v4887
      %v5020 = vrcp.pop %v4890
      %v5021 = vrcp.pop %v4893
      %v5022 = vrcp.pop %v4896
      %v5023 = vrcp.pop %v4899
      %v5024 = vrcp.pop %v4902
      %v5025 = vrcp.pop %v4905
      %v5026 = vrcp.pop %v4908
      %v5027 = vrcp.pop %v4911
      %v5028 = vrcp.pop %v4914
      %v5029 = vrcp.pop %v4917
      %v5030 = vrcp.pop %v4920
      %v5031 = vrcp.pop %v4923
      %v5032 = vrcp.pop %v4926
      %v5033 = vrcp.pop %v4929
      %v5034 = vrcp.pop %v4932
      %v5035 = vrcp.pop %v4935
      %v5036 = vrcp.pop %v4938
      %v5037 = vrcp.pop %v4941
      %v5038 = vrcp.pop %v4944
      %v5039 = vrcp.pop %v4947
      %v5040 = vrcp.pop %v4950
      %v5041 = vrcp.pop %v4953
      %v5042 = vrcp.pop %v4956
      %v5043 = vrcp.pop %v4959
      %v5044 = vrcp.pop %v4962
      %v5045 = vrcp.pop %v4965
      %v5046 = vrcp.pop %v4968
      %v5047 = vrcp.pop %v4971
      %v5048 = vrcp.pop %v4974
      %v5049 = vrcp.pop %v4977
      %v5050 = vrcp.pop %v4980
      %v5051 = vrcp.pop %v4983
      %v5052 = vrcp.pop %v4986
      %v5053 = vrcp.pop %v4989
      %v5054 = vmul.f32 %v4671, %v4990
      %v5055 = vmul.f32 %v4673, %v4991
      %v5056 = vmul.f32 %v4675, %v4992
      %v5057 = vmul.f32 %v4677, %v4993
      %v5058 = vmul.f32 %v4679, %v4994
      %v5059 = vmul.f32 %v4681, %v4995
      %v5060 = vmul.f32 %v4683, %v4996
      %v5061 = vmul.f32 %v4685, %v4997
      %v5062 = vmul.f32 %v4687, %v4998
      %v5063 = vmul.f32 %v4689, %v4999
      %v5064 = vmul.f32 %v4691, %v5000
      %v5065 = vmul.f32 %v4693, %v5001
      %v5066 = vmul.f32 %v4695, %v5002
      %v5067 = vmul.f32 %v4697, %v5003
      %v5068 = vmul.f32 %v4699, %v5004
      %v5069 = vmul.f32 %v4701, %v5005
      %v5070 = vmul.f32 %v4703, %v5006
      %v5071 = vmul.f32 %v4705, %v5007
      %v5072 = vmul.f32 %v4707, %v5008
      %v5073 = vmul.f32 %v4709, %v5009
      %v5074 = vmul.f32 %v4711, %v5010
      %v5075 = vmul.f32 %v4713, %v5011
      %v5076 = vmul.f32 %v4715, %v5012
      %v5077 = vmul.f32 %v4717, %v5013
      %v5078 = vmul.f32 %v4719, %v5014
      %v5079 = vmul.f32 %v4721, %v5015
      %v5080 = vmul.f32 %v4723, %v5016
      %v5081 = vmul.f32 %v4725, %v5017
      %v5082 = vmul.f32 %v4727, %v5018
      %v5083 = vmul.f32 %v4729, %v5019
      %v5084 = vmul.f32 %v4731, %v5020
      %v5085 = vmul.f32 %v4733, %v5021
      %v5086 = vmul.f32 %v4735, %v5022
      %v5087 = vmul.f32 %v4737, %v5023
      %v5088 = vmul.f32 %v4739, %v5024
      %v5089 = vmul.f32 %v4741, %v5025
      %v5090 = vmul.f32 %v4743, %v5026
      %v5091 = vmul.f32 %v4745, %v5027
      %v5092 = vmul.f32 %v4747, %v5028
      %v5093 = vmul.f32 %v4749, %v5029
      %v5094 = vmul.f32 %v4751, %v5030
      %v5095 = vmul.f32 %v4753, %v5031
      %v5096 = vmul.f32 %v4755, %v5032
      %v5097 = vmul.f32 %v4757, %v5033
      %v5098 = vmul.f32 %v4759, %v5034
      %v5099 = vmul.f32 %v4761, %v5035
      %v5100 = vmul.f32 %v4763, %v5036
      %v5101 = vmul.f32 %v4765, %v5037
      %v5102 = vmul.f32 %v4767, %v5038
      %v5103 = vmul.f32 %v4769, %v5039
      %v5104 = vmul.f32 %v4771, %v5040
      %v5105 = vmul.f32 %v4773, %v5041
      %v5106 = vmul.f32 %v4775, %v5042
      %v5107 = vmul.f32 %v4777, %v5043
      %v5108 = vmul.f32 %v4779, %v5044
      %v5109 = vmul.f32 %v4781, %v5045
      %v5110 = vmul.f32 %v4783, %v5046
      %v5111 = vmul.f32 %v4785, %v5047
      %v5112 = vmul.f32 %v4787, %v5048
      %v5113 = vmul.f32 %v4789, %v5049
      %v5114 = vmul.f32 %v4791, %v5050
      %v5115 = vmul.f32 %v4793, %v5051
      %v5116 = vmul.f32 %v4795, %v5052
      %v5117 = vmul.f32 %v4797, %v5053
      %v5118 = vpack.c.bf16 %v5054, %v5054
      %v5119 = vpack.c.bf16 %v5055, %v5055
      %v5120 = vpack.c.bf16 %v5056, %v5056
      %v5121 = vpack.c.bf16 %v5057, %v5057
      %v5122 = vpack.c.bf16 %v5058, %v5058
      %v5123 = vpack.c.bf16 %v5059, %v5059
      %v5124 = vpack.c.bf16 %v5060, %v5060
      %v5125 = vpack.c.bf16 %v5061, %v5061
      %v5126 = vpack.c.bf16 %v5062, %v5062
      %v5127 = vpack.c.bf16 %v5063, %v5063
      %v5128 = vpack.c.bf16 %v5064, %v5064
      %v5129 = vpack.c.bf16 %v5065, %v5065
      %v5130 = vpack.c.bf16 %v5066, %v5066
      %v5131 = vpack.c.bf16 %v5067, %v5067
      %v5132 = vpack.c.bf16 %v5068, %v5068
      %v5133 = vpack.c.bf16 %v5069, %v5069
      %v5134 = vpack.c.bf16 %v5070, %v5070
      %v5135 = vpack.c.bf16 %v5071, %v5071
      %v5136 = vpack.c.bf16 %v5072, %v5072
      %v5137 = vpack.c.bf16 %v5073, %v5073
      %v5138 = vpack.c.bf16 %v5074, %v5074
      %v5139 = vpack.c.bf16 %v5075, %v5075
      %v5140 = vpack.c.bf16 %v5076, %v5076
      %v5141 = vpack.c.bf16 %v5077, %v5077
      %v5142 = vpack.c.bf16 %v5078, %v5078
      %v5143 = vpack.c.bf16 %v5079, %v5079
      %v5144 = vpack.c.bf16 %v5080, %v5080
      %v5145 = vpack.c.bf16 %v5081, %v5081
      %v5146 = vpack.c.bf16 %v5082, %v5082
      %v5147 = vpack.c.bf16 %v5083, %v5083
      %v5148 = vpack.c.bf16 %v5084, %v5084
      %v5149 = vpack.c.bf16 %v5085, %v5085
      %v5150 = vpack.c.bf16 %v5086, %v5086
      %v5151 = vpack.c.bf16 %v5087, %v5087
      %v5152 = vpack.c.bf16 %v5088, %v5088
      %v5153 = vpack.c.bf16 %v5089, %v5089
      %v5154 = vpack.c.bf16 %v5090, %v5090
      %v5155 = vpack.c.bf16 %v5091, %v5091
      %v5156 = vpack.c.bf16 %v5092, %v5092
      %v5157 = vpack.c.bf16 %v5093, %v5093
      %v5158 = vpack.c.bf16 %v5094, %v5094
      %v5159 = vpack.c.bf16 %v5095, %v5095
      %v5160 = vpack.c.bf16 %v5096, %v5096
      %v5161 = vpack.c.bf16 %v5097, %v5097
      %v5162 = vpack.c.bf16 %v5098, %v5098
      %v5163 = vpack.c.bf16 %v5099, %v5099
      %v5164 = vpack.c.bf16 %v5100, %v5100
      %v5165 = vpack.c.bf16 %v5101, %v5101
      %v5166 = vpack.c.bf16 %v5102, %v5102
      %v5167 = vpack.c.bf16 %v5103, %v5103
      %v5168 = vpack.c.bf16 %v5104, %v5104
      %v5169 = vpack.c.bf16 %v5105, %v5105
      %v5170 = vpack.c.bf16 %v5106, %v5106
      %v5171 = vpack.c.bf16 %v5107, %v5107
      %v5172 = vpack.c.bf16 %v5108, %v5108
      %v5173 = vpack.c.bf16 %v5109, %v5109
      %v5174 = vpack.c.bf16 %v5110, %v5110
      %v5175 = vpack.c.bf16 %v5111, %v5111
      %v5176 = vpack.c.bf16 %v5112, %v5112
      %v5177 = vpack.c.bf16 %v5113, %v5113
      %v5178 = vpack.c.bf16 %v5114, %v5114
      %v5179 = vpack.c.bf16 %v5115, %v5115
      %v5180 = vpack.c.bf16 %v5116, %v5116
      %v5181 = vpack.c.bf16 %v5117, %v5117
      %v5184 = vunpack.c.l.b16 %v5118
      %v5185 = vunpack.c.l.b16 %v5119
      %v5186 = vpack.c.b16 %v5185, %v5184
      %5187 = vrot.lane.b32.xlu0 %v2727, 120
      %v5188 = vpop.permute.xlu0 %5187
      %v5191 = vsel %vm1092, %v5186, 0
      %5193 = vmatpush.bf16.msra.mxu0 0
      %5194 = vmatpush.bf16.msra.mxu0 0
      %5195 = vmatpush.bf16.msra.mxu0 0
      %5196 = vmatpush.bf16.msra.mxu0 0
      %5197 = vmatpush.bf16.msra.mxu0 0
      %5198 = vmatpush.bf16.msra.mxu0 0
      %5199 = vmatpush.bf16.msra.mxu0 0
      %5200 = vmatpush.bf16.msra.mxu0 %v5188
      %5201 = vmatmul.bf16.gmra.mxu0 %v5191
      %v5202 = vpop.f32.mrf.mxu0
      %v5203 = vadd.f32 0.0, %v5202
      %v5204 = vpop.f32.mrf.mxu0
      %v5205 = vadd.f32 0.0, %v5204
      %5206 = vdwg.mxu0
      %v5209 = vunpack.c.l.b16 %v5120
      %v5210 = vunpack.c.l.b16 %v5121
      %v5211 = vpack.c.b16 %v5210, %v5209
      %5212 = vrot.lane.b32.xlu0 %v2755, 120
      %v5213 = vpop.permute.xlu0 %5212
      %v5216 = vsel %vm1092, %v5211, 0
      %5218 = vmatpush.bf16.msra.mxu0 0
      %5219 = vmatpush.bf16.msra.mxu0 0
      %5220 = vmatpush.bf16.msra.mxu0 0
      %5221 = vmatpush.bf16.msra.mxu0 0
      %5222 = vmatpush.bf16.msra.mxu0 0
      %5223 = vmatpush.bf16.msra.mxu0 0
      %5224 = vmatpush.bf16.msra.mxu0 0
      %5225 = vmatpush.bf16.msra.mxu0 %v5213
      %5226 = vmatmul.bf16.gmra.mxu0 %v5216
      %v5227 = vpop.f32.mrf.mxu0
      %v5228 = vadd.f32 0.0, %v5227
      %v5229 = vpop.f32.mrf.mxu0
      %v5230 = vadd.f32 0.0, %v5229
      %5231 = vdwg.mxu0
      %v5234 = vunpack.c.l.b16 %v5122
      %v5235 = vunpack.c.l.b16 %v5123
      %v5236 = vpack.c.b16 %v5235, %v5234
      %5237 = vrot.lane.b32.xlu0 %v2783, 120
      %v5238 = vpop.permute.xlu0 %5237
      %v5241 = vsel %vm1092, %v5236, 0
      %5243 = vmatpush.bf16.msra.mxu0 0
      %5244 = vmatpush.bf16.msra.mxu0 0
      %5245 = vmatpush.bf16.msra.mxu0 0
      %5246 = vmatpush.bf16.msra.mxu0 0
      %5247 = vmatpush.bf16.msra.mxu0 0
      %5248 = vmatpush.bf16.msra.mxu0 0
      %5249 = vmatpush.bf16.msra.mxu0 0
      %5250 = vmatpush.bf16.msra.mxu0 %v5238
      %5251 = vmatmul.bf16.gmra.mxu0 %v5241
      %v5252 = vpop.f32.mrf.mxu0
      %v5253 = vadd.f32 0.0, %v5252
      %v5254 = vpop.f32.mrf.mxu0
      %v5255 = vadd.f32 0.0, %v5254
      %5256 = vdwg.mxu0
      %v5259 = vunpack.c.l.b16 %v5124
      %v5260 = vunpack.c.l.b16 %v5125
      %v5261 = vpack.c.b16 %v5260, %v5259
      %5262 = vrot.lane.b32.xlu0 %v2811, 120
      %v5263 = vpop.permute.xlu0 %5262
      %v5266 = vsel %vm1092, %v5261, 0
      %5268 = vmatpush.bf16.msra.mxu0 0
      %5269 = vmatpush.bf16.msra.mxu0 0
      %5270 = vmatpush.bf16.msra.mxu0 0
      %5271 = vmatpush.bf16.msra.mxu0 0
      %5272 = vmatpush.bf16.msra.mxu0 0
      %5273 = vmatpush.bf16.msra.mxu0 0
      %5274 = vmatpush.bf16.msra.mxu0 0
      %5275 = vmatpush.bf16.msra.mxu0 %v5263
      %5276 = vmatmul.bf16.gmra.mxu0 %v5266
      %v5277 = vpop.f32.mrf.mxu0
      %v5278 = vadd.f32 0.0, %v5277
      %v5279 = vpop.f32.mrf.mxu0
      %v5280 = vadd.f32 0.0, %v5279
      %5281 = vdwg.mxu0
      %v5284 = vunpack.c.l.b16 %v5126
      %v5285 = vunpack.c.l.b16 %v5127
      %v5286 = vpack.c.b16 %v5285, %v5284
      %5287 = vrot.lane.b32.xlu0 %v2839, 120
      %v5288 = vpop.permute.xlu0 %5287
      %v5291 = vsel %vm1092, %v5286, 0
      %5293 = vmatpush.bf16.msra.mxu0 0
      %5294 = vmatpush.bf16.msra.mxu0 0
      %5295 = vmatpush.bf16.msra.mxu0 0
      %5296 = vmatpush.bf16.msra.mxu0 0
      %5297 = vmatpush.bf16.msra.mxu0 0
      %5298 = vmatpush.bf16.msra.mxu0 0
      %5299 = vmatpush.bf16.msra.mxu0 0
      %5300 = vmatpush.bf16.msra.mxu0 %v5288
      %5301 = vmatmul.bf16.gmra.mxu0 %v5291
      %v5302 = vpop.f32.mrf.mxu0
      %v5303 = vadd.f32 0.0, %v5302
      %v5304 = vpop.f32.mrf.mxu0
      %v5305 = vadd.f32 0.0, %v5304
      %5306 = vdwg.mxu0
      %v5309 = vunpack.c.l.b16 %v5128
      %v5310 = vunpack.c.l.b16 %v5129
      %v5311 = vpack.c.b16 %v5310, %v5309
      %5312 = vrot.lane.b32.xlu0 %v2867, 120
      %v5313 = vpop.permute.xlu0 %5312
      %v5316 = vsel %vm1092, %v5311, 0
      %5318 = vmatpush.bf16.msra.mxu0 0
      %5319 = vmatpush.bf16.msra.mxu0 0
      %5320 = vmatpush.bf16.msra.mxu0 0
      %5321 = vmatpush.bf16.msra.mxu0 0
      %5322 = vmatpush.bf16.msra.mxu0 0
      %5323 = vmatpush.bf16.msra.mxu0 0
      %5324 = vmatpush.bf16.msra.mxu0 0
      %5325 = vmatpush.bf16.msra.mxu0 %v5313
      %5326 = vmatmul.bf16.gmra.mxu0 %v5316
      %v5327 = vpop.f32.mrf.mxu0
      %v5328 = vadd.f32 0.0, %v5327
      %v5329 = vpop.f32.mrf.mxu0
      %v5330 = vadd.f32 0.0, %v5329
      %5331 = vdwg.mxu0
      %v5334 = vunpack.c.l.b16 %v5130
      %v5335 = vunpack.c.l.b16 %v5131
      %v5336 = vpack.c.b16 %v5335, %v5334
      %5337 = vrot.lane.b32.xlu0 %v2895, 120
      %v5338 = vpop.permute.xlu0 %5337
      %v5341 = vsel %vm1092, %v5336, 0
      %5343 = vmatpush.bf16.msra.mxu0 0
      %5344 = vmatpush.bf16.msra.mxu0 0
      %5345 = vmatpush.bf16.msra.mxu0 0
      %5346 = vmatpush.bf16.msra.mxu0 0
      %5347 = vmatpush.bf16.msra.mxu0 0
      %5348 = vmatpush.bf16.msra.mxu0 0
      %5349 = vmatpush.bf16.msra.mxu0 0
      %5350 = vmatpush.bf16.msra.mxu0 %v5338
      %5351 = vmatmul.bf16.gmra.mxu0 %v5341
      %v5352 = vpop.f32.mrf.mxu0
      %v5353 = vadd.f32 0.0, %v5352
      %v5354 = vpop.f32.mrf.mxu0
      %v5355 = vadd.f32 0.0, %v5354
      %5356 = vdwg.mxu0
      %v5359 = vunpack.c.l.b16 %v5132
      %v5360 = vunpack.c.l.b16 %v5133
      %v5361 = vpack.c.b16 %v5360, %v5359
      %5362 = vrot.lane.b32.xlu0 %v2923, 120
      %v5363 = vpop.permute.xlu0 %5362
      %v5366 = vsel %vm1092, %v5361, 0
      %5368 = vmatpush.bf16.msra.mxu0 0
      %5369 = vmatpush.bf16.msra.mxu0 0
      %5370 = vmatpush.bf16.msra.mxu0 0
      %5371 = vmatpush.bf16.msra.mxu0 0
      %5372 = vmatpush.bf16.msra.mxu0 0
      %5373 = vmatpush.bf16.msra.mxu0 0
      %5374 = vmatpush.bf16.msra.mxu0 0
      %5375 = vmatpush.bf16.msra.mxu0 %v5363
      %5376 = vmatmul.bf16.gmra.mxu0 %v5366
      %v5377 = vpop.f32.mrf.mxu0
      %v5378 = vadd.f32 0.0, %v5377
      %v5379 = vpop.f32.mrf.mxu0
      %v5380 = vadd.f32 0.0, %v5379
      %5381 = vdwg.mxu0
      %v5384 = vunpack.c.l.b16 %v5134
      %v5385 = vunpack.c.l.b16 %v5135
      %v5386 = vpack.c.b16 %v5385, %v5384
      %5387 = vrot.lane.b32.xlu0 %v2951, 120
      %v5388 = vpop.permute.xlu0 %5387
      %v5391 = vsel %vm1092, %v5386, 0
      %5393 = vmatpush.bf16.msra.mxu0 0
      %5394 = vmatpush.bf16.msra.mxu0 0
      %5395 = vmatpush.bf16.msra.mxu0 0
      %5396 = vmatpush.bf16.msra.mxu0 0
      %5397 = vmatpush.bf16.msra.mxu0 0
      %5398 = vmatpush.bf16.msra.mxu0 0
      %5399 = vmatpush.bf16.msra.mxu0 0
      %5400 = vmatpush.bf16.msra.mxu0 %v5388
      %5401 = vmatmul.bf16.gmra.mxu0 %v5391
      %v5402 = vpop.f32.mrf.mxu0
      %v5403 = vadd.f32 0.0, %v5402
      %v5404 = vpop.f32.mrf.mxu0
      %v5405 = vadd.f32 0.0, %v5404
      %5406 = vdwg.mxu0
      %v5409 = vunpack.c.l.b16 %v5136
      %v5410 = vunpack.c.l.b16 %v5137
      %v5411 = vpack.c.b16 %v5410, %v5409
      %5412 = vrot.lane.b32.xlu0 %v2979, 120
      %v5413 = vpop.permute.xlu0 %5412
      %v5416 = vsel %vm1092, %v5411, 0
      %5418 = vmatpush.bf16.msra.mxu0 0
      %5419 = vmatpush.bf16.msra.mxu0 0
      %5420 = vmatpush.bf16.msra.mxu0 0
      %5421 = vmatpush.bf16.msra.mxu0 0
      %5422 = vmatpush.bf16.msra.mxu0 0
      %5423 = vmatpush.bf16.msra.mxu0 0
      %5424 = vmatpush.bf16.msra.mxu0 0
      %5425 = vmatpush.bf16.msra.mxu0 %v5413
      %5426 = vmatmul.bf16.gmra.mxu0 %v5416
      %v5427 = vpop.f32.mrf.mxu0
      %v5428 = vadd.f32 0.0, %v5427
      %v5429 = vpop.f32.mrf.mxu0
      %v5430 = vadd.f32 0.0, %v5429
      %5431 = vdwg.mxu0
      %v5434 = vunpack.c.l.b16 %v5138
      %v5435 = vunpack.c.l.b16 %v5139
      %v5436 = vpack.c.b16 %v5435, %v5434
      %5437 = vrot.lane.b32.xlu0 %v3007, 120
      %v5438 = vpop.permute.xlu0 %5437
      %v5441 = vsel %vm1092, %v5436, 0
      %5443 = vmatpush.bf16.msra.mxu0 0
      %5444 = vmatpush.bf16.msra.mxu0 0
      %5445 = vmatpush.bf16.msra.mxu0 0
      %5446 = vmatpush.bf16.msra.mxu0 0
      %5447 = vmatpush.bf16.msra.mxu0 0
      %5448 = vmatpush.bf16.msra.mxu0 0
      %5449 = vmatpush.bf16.msra.mxu0 0
      %5450 = vmatpush.bf16.msra.mxu0 %v5438
      %5451 = vmatmul.bf16.gmra.mxu0 %v5441
      %v5452 = vpop.f32.mrf.mxu0
      %v5453 = vadd.f32 0.0, %v5452
      %v5454 = vpop.f32.mrf.mxu0
      %v5455 = vadd.f32 0.0, %v5454
      %5456 = vdwg.mxu0
      %v5459 = vunpack.c.l.b16 %v5140
      %v5460 = vunpack.c.l.b16 %v5141
      %v5461 = vpack.c.b16 %v5460, %v5459
      %5462 = vrot.lane.b32.xlu0 %v3035, 120
      %v5463 = vpop.permute.xlu0 %5462
      %v5466 = vsel %vm1092, %v5461, 0
      %5468 = vmatpush.bf16.msra.mxu0 0
      %5469 = vmatpush.bf16.msra.mxu0 0
      %5470 = vmatpush.bf16.msra.mxu0 0
      %5471 = vmatpush.bf16.msra.mxu0 0
      %5472 = vmatpush.bf16.msra.mxu0 0
      %5473 = vmatpush.bf16.msra.mxu0 0
      %5474 = vmatpush.bf16.msra.mxu0 0
      %5475 = vmatpush.bf16.msra.mxu0 %v5463
      %5476 = vmatmul.bf16.gmra.mxu0 %v5466
      %v5477 = vpop.f32.mrf.mxu0
      %v5478 = vadd.f32 0.0, %v5477
      %v5479 = vpop.f32.mrf.mxu0
      %v5480 = vadd.f32 0.0, %v5479
      %5481 = vdwg.mxu0
      %v5484 = vunpack.c.l.b16 %v5142
      %v5485 = vunpack.c.l.b16 %v5143
      %v5486 = vpack.c.b16 %v5485, %v5484
      %5487 = vrot.lane.b32.xlu0 %v3063, 120
      %v5488 = vpop.permute.xlu0 %5487
      %v5491 = vsel %vm1092, %v5486, 0
      %5493 = vmatpush.bf16.msra.mxu0 0
      %5494 = vmatpush.bf16.msra.mxu0 0
      %5495 = vmatpush.bf16.msra.mxu0 0
      %5496 = vmatpush.bf16.msra.mxu0 0
      %5497 = vmatpush.bf16.msra.mxu0 0
      %5498 = vmatpush.bf16.msra.mxu0 0
      %5499 = vmatpush.bf16.msra.mxu0 0
      %5500 = vmatpush.bf16.msra.mxu0 %v5488
      %5501 = vmatmul.bf16.gmra.mxu0 %v5491
      %v5502 = vpop.f32.mrf.mxu0
      %v5503 = vadd.f32 0.0, %v5502
      %v5504 = vpop.f32.mrf.mxu0
      %v5505 = vadd.f32 0.0, %v5504
      %5506 = vdwg.mxu0
      %v5509 = vunpack.c.l.b16 %v5144
      %v5510 = vunpack.c.l.b16 %v5145
      %v5511 = vpack.c.b16 %v5510, %v5509
      %5512 = vrot.lane.b32.xlu0 %v3091, 120
      %v5513 = vpop.permute.xlu0 %5512
      %v5516 = vsel %vm1092, %v5511, 0
      %5518 = vmatpush.bf16.msra.mxu0 0
      %5519 = vmatpush.bf16.msra.mxu0 0
      %5520 = vmatpush.bf16.msra.mxu0 0
      %5521 = vmatpush.bf16.msra.mxu0 0
      %5522 = vmatpush.bf16.msra.mxu0 0
      %5523 = vmatpush.bf16.msra.mxu0 0
      %5524 = vmatpush.bf16.msra.mxu0 0
      %5525 = vmatpush.bf16.msra.mxu0 %v5513
      %5526 = vmatmul.bf16.gmra.mxu0 %v5516
      %v5527 = vpop.f32.mrf.mxu0
      %v5528 = vadd.f32 0.0, %v5527
      %v5529 = vpop.f32.mrf.mxu0
      %v5530 = vadd.f32 0.0, %v5529
      %5531 = vdwg.mxu0
      %v5534 = vunpack.c.l.b16 %v5146
      %v5535 = vunpack.c.l.b16 %v5147
      %v5536 = vpack.c.b16 %v5535, %v5534
      %5537 = vrot.lane.b32.xlu0 %v3119, 120
      %v5538 = vpop.permute.xlu0 %5537
      %v5541 = vsel %vm1092, %v5536, 0
      %5543 = vmatpush.bf16.msra.mxu0 0
      %5544 = vmatpush.bf16.msra.mxu0 0
      %5545 = vmatpush.bf16.msra.mxu0 0
      %5546 = vmatpush.bf16.msra.mxu0 0
      %5547 = vmatpush.bf16.msra.mxu0 0
      %5548 = vmatpush.bf16.msra.mxu0 0
      %5549 = vmatpush.bf16.msra.mxu0 0
      %5550 = vmatpush.bf16.msra.mxu0 %v5538
      %5551 = vmatmul.bf16.gmra.mxu0 %v5541
      %v5552 = vpop.f32.mrf.mxu0
      %v5553 = vadd.f32 0.0, %v5552
      %v5554 = vpop.f32.mrf.mxu0
      %v5555 = vadd.f32 0.0, %v5554
      %5556 = vdwg.mxu0
      %v5559 = vunpack.c.l.b16 %v5148
      %v5560 = vunpack.c.l.b16 %v5149
      %v5561 = vpack.c.b16 %v5560, %v5559
      %5562 = vrot.lane.b32.xlu0 %v3147, 120
      %v5563 = vpop.permute.xlu0 %5562
      %v5566 = vsel %vm1092, %v5561, 0
      %5568 = vmatpush.bf16.msra.mxu0 0
      %5569 = vmatpush.bf16.msra.mxu0 0
      %5570 = vmatpush.bf16.msra.mxu0 0
      %5571 = vmatpush.bf16.msra.mxu0 0
      %5572 = vmatpush.bf16.msra.mxu0 0
      %5573 = vmatpush.bf16.msra.mxu0 0
      %5574 = vmatpush.bf16.msra.mxu0 0
      %5575 = vmatpush.bf16.msra.mxu0 %v5563
      %5576 = vmatmul.bf16.gmra.mxu0 %v5566
      %v5577 = vpop.f32.mrf.mxu0
      %v5578 = vadd.f32 0.0, %v5577
      %v5579 = vpop.f32.mrf.mxu0
      %v5580 = vadd.f32 0.0, %v5579
      %5581 = vdwg.mxu0
      %v5584 = vunpack.c.l.b16 %v5150
      %v5585 = vunpack.c.l.b16 %v5151
      %v5586 = vpack.c.b16 %v5585, %v5584
      %5587 = vrot.lane.b32.xlu0 %v3175, 120
      %v5588 = vpop.permute.xlu0 %5587
      %v5591 = vsel %vm1092, %v5586, 0
      %5593 = vmatpush.bf16.msra.mxu0 0
      %5594 = vmatpush.bf16.msra.mxu0 0
      %5595 = vmatpush.bf16.msra.mxu0 0
      %5596 = vmatpush.bf16.msra.mxu0 0
      %5597 = vmatpush.bf16.msra.mxu0 0
      %5598 = vmatpush.bf16.msra.mxu0 0
      %5599 = vmatpush.bf16.msra.mxu0 0
      %5600 = vmatpush.bf16.msra.mxu0 %v5588
      %5601 = vmatmul.bf16.gmra.mxu0 %v5591
      %v5602 = vpop.f32.mrf.mxu0
      %v5603 = vadd.f32 0.0, %v5602
      %v5604 = vpop.f32.mrf.mxu0
      %v5605 = vadd.f32 0.0, %v5604
      %5606 = vdwg.mxu0
      %v5609 = vunpack.c.l.b16 %v5152
      %v5610 = vunpack.c.l.b16 %v5153
      %v5611 = vpack.c.b16 %v5610, %v5609
      %5612 = vrot.lane.b32.xlu0 %v3203, 120
      %v5613 = vpop.permute.xlu0 %5612
      %v5616 = vsel %vm1092, %v5611, 0
      %5618 = vmatpush.bf16.msra.mxu0 0
      %5619 = vmatpush.bf16.msra.mxu0 0
      %5620 = vmatpush.bf16.msra.mxu0 0
      %5621 = vmatpush.bf16.msra.mxu0 0
      %5622 = vmatpush.bf16.msra.mxu0 0
      %5623 = vmatpush.bf16.msra.mxu0 0
      %5624 = vmatpush.bf16.msra.mxu0 0
      %5625 = vmatpush.bf16.msra.mxu0 %v5613
      %5626 = vmatmul.bf16.gmra.mxu0 %v5616
      %v5627 = vpop.f32.mrf.mxu0
      %v5628 = vadd.f32 0.0, %v5627
      %v5629 = vpop.f32.mrf.mxu0
      %v5630 = vadd.f32 0.0, %v5629
      %5631 = vdwg.mxu0
      %v5634 = vunpack.c.l.b16 %v5154
      %v5635 = vunpack.c.l.b16 %v5155
      %v5636 = vpack.c.b16 %v5635, %v5634
      %5637 = vrot.lane.b32.xlu0 %v3231, 120
      %v5638 = vpop.permute.xlu0 %5637
      %v5641 = vsel %vm1092, %v5636, 0
      %5643 = vmatpush.bf16.msra.mxu0 0
      %5644 = vmatpush.bf16.msra.mxu0 0
      %5645 = vmatpush.bf16.msra.mxu0 0
      %5646 = vmatpush.bf16.msra.mxu0 0
      %5647 = vmatpush.bf16.msra.mxu0 0
      %5648 = vmatpush.bf16.msra.mxu0 0
      %5649 = vmatpush.bf16.msra.mxu0 0
      %5650 = vmatpush.bf16.msra.mxu0 %v5638
      %5651 = vmatmul.bf16.gmra.mxu0 %v5641
      %v5652 = vpop.f32.mrf.mxu0
      %v5653 = vadd.f32 0.0, %v5652
      %v5654 = vpop.f32.mrf.mxu0
      %v5655 = vadd.f32 0.0, %v5654
      %5656 = vdwg.mxu0
      %v5659 = vunpack.c.l.b16 %v5156
      %v5660 = vunpack.c.l.b16 %v5157
      %v5661 = vpack.c.b16 %v5660, %v5659
      %5662 = vrot.lane.b32.xlu0 %v3259, 120
      %v5663 = vpop.permute.xlu0 %5662
      %v5666 = vsel %vm1092, %v5661, 0
      %5668 = vmatpush.bf16.msra.mxu0 0
      %5669 = vmatpush.bf16.msra.mxu0 0
      %5670 = vmatpush.bf16.msra.mxu0 0
      %5671 = vmatpush.bf16.msra.mxu0 0
      %5672 = vmatpush.bf16.msra.mxu0 0
      %5673 = vmatpush.bf16.msra.mxu0 0
      %5674 = vmatpush.bf16.msra.mxu0 0
      %5675 = vmatpush.bf16.msra.mxu0 %v5663
      %5676 = vmatmul.bf16.gmra.mxu0 %v5666
      %v5677 = vpop.f32.mrf.mxu0
      %v5678 = vadd.f32 0.0, %v5677
      %v5679 = vpop.f32.mrf.mxu0
      %v5680 = vadd.f32 0.0, %v5679
      %5681 = vdwg.mxu0
      %v5684 = vunpack.c.l.b16 %v5158
      %v5685 = vunpack.c.l.b16 %v5159
      %v5686 = vpack.c.b16 %v5685, %v5684
      %5687 = vrot.lane.b32.xlu0 %v3287, 120
      %v5688 = vpop.permute.xlu0 %5687
      %v5691 = vsel %vm1092, %v5686, 0
      %5693 = vmatpush.bf16.msra.mxu0 0
      %5694 = vmatpush.bf16.msra.mxu0 0
      %5695 = vmatpush.bf16.msra.mxu0 0
      %5696 = vmatpush.bf16.msra.mxu0 0
      %5697 = vmatpush.bf16.msra.mxu0 0
      %5698 = vmatpush.bf16.msra.mxu0 0
      %5699 = vmatpush.bf16.msra.mxu0 0
      %5700 = vmatpush.bf16.msra.mxu0 %v5688
      %5701 = vmatmul.bf16.gmra.mxu0 %v5691
      %v5702 = vpop.f32.mrf.mxu0
      %v5703 = vadd.f32 0.0, %v5702
      %v5704 = vpop.f32.mrf.mxu0
      %v5705 = vadd.f32 0.0, %v5704
      %5706 = vdwg.mxu0
      %v5709 = vunpack.c.l.b16 %v5160
      %v5710 = vunpack.c.l.b16 %v5161
      %v5711 = vpack.c.b16 %v5710, %v5709
      %5712 = vrot.lane.b32.xlu0 %v3315, 120
      %v5713 = vpop.permute.xlu0 %5712
      %v5716 = vsel %vm1092, %v5711, 0
      %5718 = vmatpush.bf16.msra.mxu0 0
      %5719 = vmatpush.bf16.msra.mxu0 0
      %5720 = vmatpush.bf16.msra.mxu0 0
      %5721 = vmatpush.bf16.msra.mxu0 0
      %5722 = vmatpush.bf16.msra.mxu0 0
      %5723 = vmatpush.bf16.msra.mxu0 0
      %5724 = vmatpush.bf16.msra.mxu0 0
      %5725 = vmatpush.bf16.msra.mxu0 %v5713
      %5726 = vmatmul.bf16.gmra.mxu0 %v5716
      %v5727 = vpop.f32.mrf.mxu0
      %v5728 = vadd.f32 0.0, %v5727
      %v5729 = vpop.f32.mrf.mxu0
      %v5730 = vadd.f32 0.0, %v5729
      %5731 = vdwg.mxu0
      %v5734 = vunpack.c.l.b16 %v5162
      %v5735 = vunpack.c.l.b16 %v5163
      %v5736 = vpack.c.b16 %v5735, %v5734
      %5737 = vrot.lane.b32.xlu0 %v3343, 120
      %v5738 = vpop.permute.xlu0 %5737
      %v5741 = vsel %vm1092, %v5736, 0
      %5743 = vmatpush.bf16.msra.mxu0 0
      %5744 = vmatpush.bf16.msra.mxu0 0
      %5745 = vmatpush.bf16.msra.mxu0 0
      %5746 = vmatpush.bf16.msra.mxu0 0
      %5747 = vmatpush.bf16.msra.mxu0 0
      %5748 = vmatpush.bf16.msra.mxu0 0
      %5749 = vmatpush.bf16.msra.mxu0 0
      %5750 = vmatpush.bf16.msra.mxu0 %v5738
      %5751 = vmatmul.bf16.gmra.mxu0 %v5741
      %v5752 = vpop.f32.mrf.mxu0
      %v5753 = vadd.f32 0.0, %v5752
      %v5754 = vpop.f32.mrf.mxu0
      %v5755 = vadd.f32 0.0, %v5754
      %5756 = vdwg.mxu0
      %v5759 = vunpack.c.l.b16 %v5164
      %v5760 = vunpack.c.l.b16 %v5165
      %v5761 = vpack.c.b16 %v5760, %v5759
      %5762 = vrot.lane.b32.xlu0 %v3371, 120
      %v5763 = vpop.permute.xlu0 %5762
      %v5766 = vsel %vm1092, %v5761, 0
      %5768 = vmatpush.bf16.msra.mxu0 0
      %5769 = vmatpush.bf16.msra.mxu0 0
      %5770 = vmatpush.bf16.msra.mxu0 0
      %5771 = vmatpush.bf16.msra.mxu0 0
      %5772 = vmatpush.bf16.msra.mxu0 0
      %5773 = vmatpush.bf16.msra.mxu0 0
      %5774 = vmatpush.bf16.msra.mxu0 0
      %5775 = vmatpush.bf16.msra.mxu0 %v5763
      %5776 = vmatmul.bf16.gmra.mxu0 %v5766
      %v5777 = vpop.f32.mrf.mxu0
      %v5778 = vadd.f32 0.0, %v5777
      %v5779 = vpop.f32.mrf.mxu0
      %v5780 = vadd.f32 0.0, %v5779
      %5781 = vdwg.mxu0
      %v5784 = vunpack.c.l.b16 %v5166
      %v5785 = vunpack.c.l.b16 %v5167
      %v5786 = vpack.c.b16 %v5785, %v5784
      %5787 = vrot.lane.b32.xlu0 %v3399, 120
      %v5788 = vpop.permute.xlu0 %5787
      %v5791 = vsel %vm1092, %v5786, 0
      %5793 = vmatpush.bf16.msra.mxu0 0
      %5794 = vmatpush.bf16.msra.mxu0 0
      %5795 = vmatpush.bf16.msra.mxu0 0
      %5796 = vmatpush.bf16.msra.mxu0 0
      %5797 = vmatpush.bf16.msra.mxu0 0
      %5798 = vmatpush.bf16.msra.mxu0 0
      %5799 = vmatpush.bf16.msra.mxu0 0
      %5800 = vmatpush.bf16.msra.mxu0 %v5788
      %5801 = vmatmul.bf16.gmra.mxu0 %v5791
      %v5802 = vpop.f32.mrf.mxu0
      %v5803 = vadd.f32 0.0, %v5802
      %v5804 = vpop.f32.mrf.mxu0
      %v5805 = vadd.f32 0.0, %v5804
      %5806 = vdwg.mxu0
      %v5809 = vunpack.c.l.b16 %v5168
      %v5810 = vunpack.c.l.b16 %v5169
      %v5811 = vpack.c.b16 %v5810, %v5809
      %5812 = vrot.lane.b32.xlu0 %v3427, 120
      %v5813 = vpop.permute.xlu0 %5812
      %v5816 = vsel %vm1092, %v5811, 0
      %5818 = vmatpush.bf16.msra.mxu0 0
      %5819 = vmatpush.bf16.msra.mxu0 0
      %5820 = vmatpush.bf16.msra.mxu0 0
      %5821 = vmatpush.bf16.msra.mxu0 0
      %5822 = vmatpush.bf16.msra.mxu0 0
      %5823 = vmatpush.bf16.msra.mxu0 0
      %5824 = vmatpush.bf16.msra.mxu0 0
      %5825 = vmatpush.bf16.msra.mxu0 %v5813
      %5826 = vmatmul.bf16.gmra.mxu0 %v5816
      %v5827 = vpop.f32.mrf.mxu0
      %v5828 = vadd.f32 0.0, %v5827
      %v5829 = vpop.f32.mrf.mxu0
      %v5830 = vadd.f32 0.0, %v5829
      %5831 = vdwg.mxu0
      %v5834 = vunpack.c.l.b16 %v5170
      %v5835 = vunpack.c.l.b16 %v5171
      %v5836 = vpack.c.b16 %v5835, %v5834
      %5837 = vrot.lane.b32.xlu0 %v3455, 120
      %v5838 = vpop.permute.xlu0 %5837
      %v5841 = vsel %vm1092, %v5836, 0
      %5843 = vmatpush.bf16.msra.mxu0 0
      %5844 = vmatpush.bf16.msra.mxu0 0
      %5845 = vmatpush.bf16.msra.mxu0 0
      %5846 = vmatpush.bf16.msra.mxu0 0
      %5847 = vmatpush.bf16.msra.mxu0 0
      %5848 = vmatpush.bf16.msra.mxu0 0
      %5849 = vmatpush.bf16.msra.mxu0 0
      %5850 = vmatpush.bf16.msra.mxu0 %v5838
      %5851 = vmatmul.bf16.gmra.mxu0 %v5841
      %v5852 = vpop.f32.mrf.mxu0
      %v5853 = vadd.f32 0.0, %v5852
      %v5854 = vpop.f32.mrf.mxu0
      %v5855 = vadd.f32 0.0, %v5854
      %5856 = vdwg.mxu0
      %v5859 = vunpack.c.l.b16 %v5172
      %v5860 = vunpack.c.l.b16 %v5173
      %v5861 = vpack.c.b16 %v5860, %v5859
      %5862 = vrot.lane.b32.xlu0 %v3483, 120
      %v5863 = vpop.permute.xlu0 %5862
      %v5866 = vsel %vm1092, %v5861, 0
      %5868 = vmatpush.bf16.msra.mxu0 0
      %5869 = vmatpush.bf16.msra.mxu0 0
      %5870 = vmatpush.bf16.msra.mxu0 0
      %5871 = vmatpush.bf16.msra.mxu0 0
      %5872 = vmatpush.bf16.msra.mxu0 0
      %5873 = vmatpush.bf16.msra.mxu0 0
      %5874 = vmatpush.bf16.msra.mxu0 0
      %5875 = vmatpush.bf16.msra.mxu0 %v5863
      %5876 = vmatmul.bf16.gmra.mxu0 %v5866
      %v5877 = vpop.f32.mrf.mxu0
      %v5878 = vadd.f32 0.0, %v5877
      %v5879 = vpop.f32.mrf.mxu0
      %v5880 = vadd.f32 0.0, %v5879
      %5881 = vdwg.mxu0
      %v5884 = vunpack.c.l.b16 %v5174
      %v5885 = vunpack.c.l.b16 %v5175
      %v5886 = vpack.c.b16 %v5885, %v5884
      %5887 = vrot.lane.b32.xlu0 %v3511, 120
      %v5888 = vpop.permute.xlu0 %5887
      %v5891 = vsel %vm1092, %v5886, 0
      %5893 = vmatpush.bf16.msra.mxu0 0
      %5894 = vmatpush.bf16.msra.mxu0 0
      %5895 = vmatpush.bf16.msra.mxu0 0
      %5896 = vmatpush.bf16.msra.mxu0 0
      %5897 = vmatpush.bf16.msra.mxu0 0
      %5898 = vmatpush.bf16.msra.mxu0 0
      %5899 = vmatpush.bf16.msra.mxu0 0
      %5900 = vmatpush.bf16.msra.mxu0 %v5888
      %5901 = vmatmul.bf16.gmra.mxu0 %v5891
      %v5902 = vpop.f32.mrf.mxu0
      %v5903 = vadd.f32 0.0, %v5902
      %v5904 = vpop.f32.mrf.mxu0
      %v5905 = vadd.f32 0.0, %v5904
      %5906 = vdwg.mxu0
      %v5909 = vunpack.c.l.b16 %v5176
      %v5910 = vunpack.c.l.b16 %v5177
      %v5911 = vpack.c.b16 %v5910, %v5909
      %5912 = vrot.lane.b32.xlu0 %v3539, 120
      %v5913 = vpop.permute.xlu0 %5912
      %v5916 = vsel %vm1092, %v5911, 0
      %5918 = vmatpush.bf16.msra.mxu0 0
      %5919 = vmatpush.bf16.msra.mxu0 0
      %5920 = vmatpush.bf16.msra.mxu0 0
      %5921 = vmatpush.bf16.msra.mxu0 0
      %5922 = vmatpush.bf16.msra.mxu0 0
      %5923 = vmatpush.bf16.msra.mxu0 0
      %5924 = vmatpush.bf16.msra.mxu0 0
      %5925 = vmatpush.bf16.msra.mxu0 %v5913
      %5926 = vmatmul.bf16.gmra.mxu0 %v5916
      %v5927 = vpop.f32.mrf.mxu0
      %v5928 = vadd.f32 0.0, %v5927
      %v5929 = vpop.f32.mrf.mxu0
      %v5930 = vadd.f32 0.0, %v5929
      %5931 = vdwg.mxu0
      %v5934 = vunpack.c.l.b16 %v5178
      %v5935 = vunpack.c.l.b16 %v5179
      %v5936 = vpack.c.b16 %v5935, %v5934
      %5937 = vrot.lane.b32.xlu0 %v3567, 120
      %v5938 = vpop.permute.xlu0 %5937
      %v5941 = vsel %vm1092, %v5936, 0
      %5943 = vmatpush.bf16.msra.mxu0 0
      %5944 = vmatpush.bf16.msra.mxu0 0
      %5945 = vmatpush.bf16.msra.mxu0 0
      %5946 = vmatpush.bf16.msra.mxu0 0
      %5947 = vmatpush.bf16.msra.mxu0 0
      %5948 = vmatpush.bf16.msra.mxu0 0
      %5949 = vmatpush.bf16.msra.mxu0 0
      %5950 = vmatpush.bf16.msra.mxu0 %v5938
      %5951 = vmatmul.bf16.gmra.mxu0 %v5941
      %v5952 = vpop.f32.mrf.mxu0
      %v5953 = vadd.f32 0.0, %v5952
      %v5954 = vpop.f32.mrf.mxu0
      %v5955 = vadd.f32 0.0, %v5954
      %5956 = vdwg.mxu0
      %v5959 = vunpack.c.l.b16 %v5180
      %v5960 = vunpack.c.l.b16 %v5181
      %v5961 = vpack.c.b16 %v5960, %v5959
      %5962 = vrot.lane.b32.xlu0 %v3595, 120
      %v5963 = vpop.permute.xlu0 %5962
      %v5966 = vsel %vm1092, %v5961, 0
      %5968 = vmatpush.bf16.msra.mxu0 0
      %5969 = vmatpush.bf16.msra.mxu0 0
      %5970 = vmatpush.bf16.msra.mxu0 0
      %5971 = vmatpush.bf16.msra.mxu0 0
      %5972 = vmatpush.bf16.msra.mxu0 0
      %5973 = vmatpush.bf16.msra.mxu0 0
      %5974 = vmatpush.bf16.msra.mxu0 0
      %5975 = vmatpush.bf16.msra.mxu0 %v5963
      %5976 = vmatmul.bf16.gmra.mxu0 %v5966
      %v5977 = vpop.f32.mrf.mxu0
      %v5978 = vadd.f32 0.0, %v5977
      %v5979 = vpop.f32.mrf.mxu0
      %v5980 = vadd.f32 0.0, %v5979
      %5981 = vdwg.mxu0
      %v5982 = vpack.c.bf16 %v5205, %v5203
      %v5983 = vpack.c.bf16 %v5230, %v5228
      %v5984 = vpack.c.bf16 %v5255, %v5253
      %v5985 = vpack.c.bf16 %v5280, %v5278
      %v5986 = vpack.c.bf16 %v5305, %v5303
      %v5987 = vpack.c.bf16 %v5330, %v5328
      %v5988 = vpack.c.bf16 %v5355, %v5353
      %v5989 = vpack.c.bf16 %v5380, %v5378
      %v5990 = vpack.c.bf16 %v5405, %v5403
      %v5991 = vpack.c.bf16 %v5430, %v5428
      %v5992 = vpack.c.bf16 %v5455, %v5453
      %v5993 = vpack.c.bf16 %v5480, %v5478
      %v5994 = vpack.c.bf16 %v5505, %v5503
      %v5995 = vpack.c.bf16 %v5530, %v5528
      %v5996 = vpack.c.bf16 %v5555, %v5553
      %v5997 = vpack.c.bf16 %v5580, %v5578
      %v5998 = vpack.c.bf16 %v5605, %v5603
      %v5999 = vpack.c.bf16 %v5630, %v5628
      %v6000 = vpack.c.bf16 %v5655, %v5653
      %v6001 = vpack.c.bf16 %v5680, %v5678
      %v6002 = vpack.c.bf16 %v5705, %v5703
      %v6003 = vpack.c.bf16 %v5730, %v5728
      %v6004 = vpack.c.bf16 %v5755, %v5753
      %v6005 = vpack.c.bf16 %v5780, %v5778
      %v6006 = vpack.c.bf16 %v5805, %v5803
      %v6007 = vpack.c.bf16 %v5830, %v5828
      %v6008 = vpack.c.bf16 %v5855, %v5853
      %v6009 = vpack.c.bf16 %v5880, %v5878
      %v6010 = vpack.c.bf16 %v5905, %v5903
      %v6011 = vpack.c.bf16 %v5930, %v5928
      %v6012 = vpack.c.bf16 %v5955, %v5953
      %v6013 = vpack.c.bf16 %v5980, %v5978
      %vm6014 = vcmask 64512
      %v6016 = vsel %vm6014, %v5982, 0
      %v6019 = vsel %vm6014, %v5983, 0
      %v6022 = vsel %vm6014, %v5984, 0
      %v6025 = vsel %vm6014, %v5985, 0
      %v6028 = vsel %vm6014, %v5986, 0
      %v6031 = vsel %vm6014, %v5987, 0
      %v6034 = vsel %vm6014, %v5988, 0
      %v6037 = vsel %vm6014, %v5989, 0
      %v6040 = vsel %vm6014, %v5990, 0
      %v6043 = vsel %vm6014, %v5991, 0
      %v6046 = vsel %vm6014, %v5992, 0
      %v6049 = vsel %vm6014, %v5993, 0
      %v6052 = vsel %vm6014, %v5994, 0
      %v6055 = vsel %vm6014, %v5995, 0
      %v6058 = vsel %vm6014, %v5996, 0
      %v6061 = vsel %vm6014, %v5997, 0
      %v6064 = vsel %vm6014, %v5998, 0
      %v6067 = vsel %vm6014, %v5999, 0
      %v6070 = vsel %vm6014, %v6000, 0
      %v6073 = vsel %vm6014, %v6001, 0
      %v6076 = vsel %vm6014, %v6002, 0
      %v6079 = vsel %vm6014, %v6003, 0
      %v6082 = vsel %vm6014, %v6004, 0
      %v6085 = vsel %vm6014, %v6005, 0
      %v6088 = vsel %vm6014, %v6006, 0
      %v6091 = vsel %vm6014, %v6007, 0
      %v6094 = vsel %vm6014, %v6008, 0
      %v6097 = vsel %vm6014, %v6009, 0
      %v6100 = vsel %vm6014, %v6010, 0
      %v6103 = vsel %vm6014, %v6011, 0
      %v6106 = vsel %vm6014, %v6012, 0
      %v6109 = vsel %vm6014, %v6013, 0
      %vm6111 = vcmask 1043456
      %v6113 = vsel %vm6111, %v1082, 0
      %6115 = vmatpush.bf16.msra.mxu0 0
      %6116 = vmatpush.bf16.msra.mxu0 0
      %6117 = vmatpush.bf16.msra.mxu0 0
      %6118 = vmatpush.bf16.msra.mxu0 0
      %6119 = vmatpush.bf16.msra.mxu0 0
      %6120 = vmatpush.bf16.msra.mxu0 0
      %6121 = vmatpush.bf16.msra.mxu0 0
      %6122 = vmatpush.bf16.msra.mxu0 %v6113
      %6123 = vmatmul.bf16.gmra.mxu0 %v6016
      %v6124 = vpop.f32.mrf.mxu0
      %v6125 = vadd.f32 0.0, %v6124
      %v6126 = vpop.f32.mrf.mxu0
      %v6127 = vadd.f32 0.0, %v6126
      %6128 = vmatmul.bf16.gmra.mxu0 %v6019
      %v6129 = vpop.f32.mrf.mxu0
      %v6130 = vadd.f32 0.0, %v6129
      %v6131 = vpop.f32.mrf.mxu0
      %v6132 = vadd.f32 0.0, %v6131
      %6133 = vmatmul.bf16.gmra.mxu0 %v6022
      %v6134 = vpop.f32.mrf.mxu0
      %v6135 = vadd.f32 0.0, %v6134
      %v6136 = vpop.f32.mrf.mxu0
      %v6137 = vadd.f32 0.0, %v6136
      %6138 = vmatmul.bf16.gmra.mxu0 %v6025
      %v6139 = vpop.f32.mrf.mxu0
      %v6140 = vadd.f32 0.0, %v6139
      %v6141 = vpop.f32.mrf.mxu0
      %v6142 = vadd.f32 0.0, %v6141
      %6143 = vmatmul.bf16.gmra.mxu0 %v6028
      %v6144 = vpop.f32.mrf.mxu0
      %v6145 = vadd.f32 0.0, %v6144
      %v6146 = vpop.f32.mrf.mxu0
      %v6147 = vadd.f32 0.0, %v6146
      %6148 = vmatmul.bf16.gmra.mxu0 %v6031
      %v6149 = vpop.f32.mrf.mxu0
      %v6150 = vadd.f32 0.0, %v6149
      %v6151 = vpop.f32.mrf.mxu0
      %v6152 = vadd.f32 0.0, %v6151
      %6153 = vmatmul.bf16.gmra.mxu0 %v6034
      %v6154 = vpop.f32.mrf.mxu0
      %v6155 = vadd.f32 0.0, %v6154
      %v6156 = vpop.f32.mrf.mxu0
      %v6157 = vadd.f32 0.0, %v6156
      %6158 = vmatmul.bf16.gmra.mxu0 %v6037
      %v6159 = vpop.f32.mrf.mxu0
      %v6160 = vadd.f32 0.0, %v6159
      %v6161 = vpop.f32.mrf.mxu0
      %v6162 = vadd.f32 0.0, %v6161
      %6163 = vmatmul.bf16.gmra.mxu0 %v6040
      %v6164 = vpop.f32.mrf.mxu0
      %v6165 = vadd.f32 0.0, %v6164
      %v6166 = vpop.f32.mrf.mxu0
      %v6167 = vadd.f32 0.0, %v6166
      %6168 = vmatmul.bf16.gmra.mxu0 %v6043
      %v6169 = vpop.f32.mrf.mxu0
      %v6170 = vadd.f32 0.0, %v6169
      %v6171 = vpop.f32.mrf.mxu0
      %v6172 = vadd.f32 0.0, %v6171
      %6173 = vmatmul.bf16.gmra.mxu0 %v6046
      %v6174 = vpop.f32.mrf.mxu0
      %v6175 = vadd.f32 0.0, %v6174
      %v6176 = vpop.f32.mrf.mxu0
      %v6177 = vadd.f32 0.0, %v6176
      %6178 = vmatmul.bf16.gmra.mxu0 %v6049
      %v6179 = vpop.f32.mrf.mxu0
      %v6180 = vadd.f32 0.0, %v6179
      %v6181 = vpop.f32.mrf.mxu0
      %v6182 = vadd.f32 0.0, %v6181
      %6183 = vmatmul.bf16.gmra.mxu0 %v6052
      %v6184 = vpop.f32.mrf.mxu0
      %v6185 = vadd.f32 0.0, %v6184
      %v6186 = vpop.f32.mrf.mxu0
      %v6187 = vadd.f32 0.0, %v6186
      %6188 = vmatmul.bf16.gmra.mxu0 %v6055
      %v6189 = vpop.f32.mrf.mxu0
      %v6190 = vadd.f32 0.0, %v6189
      %v6191 = vpop.f32.mrf.mxu0
      %v6192 = vadd.f32 0.0, %v6191
      %6193 = vmatmul.bf16.gmra.mxu0 %v6058
      %v6194 = vpop.f32.mrf.mxu0
      %v6195 = vadd.f32 0.0, %v6194
      %v6196 = vpop.f32.mrf.mxu0
      %v6197 = vadd.f32 0.0, %v6196
      %6198 = vmatmul.bf16.gmra.mxu0 %v6061
      %v6199 = vpop.f32.mrf.mxu0
      %v6200 = vadd.f32 0.0, %v6199
      %v6201 = vpop.f32.mrf.mxu0
      %v6202 = vadd.f32 0.0, %v6201
      %6203 = vmatmul.bf16.gmra.mxu0 %v6064
      %v6204 = vpop.f32.mrf.mxu0
      %v6205 = vadd.f32 0.0, %v6204
      %v6206 = vpop.f32.mrf.mxu0
      %v6207 = vadd.f32 0.0, %v6206
      %6208 = vmatmul.bf16.gmra.mxu0 %v6067
      %v6209 = vpop.f32.mrf.mxu0
      %v6210 = vadd.f32 0.0, %v6209
      %v6211 = vpop.f32.mrf.mxu0
      %v6212 = vadd.f32 0.0, %v6211
      %6213 = vmatmul.bf16.gmra.mxu0 %v6070
      %v6214 = vpop.f32.mrf.mxu0
      %v6215 = vadd.f32 0.0, %v6214
      %v6216 = vpop.f32.mrf.mxu0
      %v6217 = vadd.f32 0.0, %v6216
      %6218 = vmatmul.bf16.gmra.mxu0 %v6073
      %v6219 = vpop.f32.mrf.mxu0
      %v6220 = vadd.f32 0.0, %v6219
      %v6221 = vpop.f32.mrf.mxu0
      %v6222 = vadd.f32 0.0, %v6221
      %6223 = vmatmul.bf16.gmra.mxu0 %v6076
      %v6224 = vpop.f32.mrf.mxu0
      %v6225 = vadd.f32 0.0, %v6224
      %v6226 = vpop.f32.mrf.mxu0
      %v6227 = vadd.f32 0.0, %v6226
      %6228 = vmatmul.bf16.gmra.mxu0 %v6079
      %v6229 = vpop.f32.mrf.mxu0
      %v6230 = vadd.f32 0.0, %v6229
      %v6231 = vpop.f32.mrf.mxu0
      %v6232 = vadd.f32 0.0, %v6231
      %6233 = vmatmul.bf16.gmra.mxu0 %v6082
      %v6234 = vpop.f32.mrf.mxu0
      %v6235 = vadd.f32 0.0, %v6234
      %v6236 = vpop.f32.mrf.mxu0
      %v6237 = vadd.f32 0.0, %v6236
      %6238 = vmatmul.bf16.gmra.mxu0 %v6085
      %v6239 = vpop.f32.mrf.mxu0
      %v6240 = vadd.f32 0.0, %v6239
      %v6241 = vpop.f32.mrf.mxu0
      %v6242 = vadd.f32 0.0, %v6241
      %6243 = vmatmul.bf16.gmra.mxu0 %v6088
      %v6244 = vpop.f32.mrf.mxu0
      %v6245 = vadd.f32 0.0, %v6244
      %v6246 = vpop.f32.mrf.mxu0
      %v6247 = vadd.f32 0.0, %v6246
      %6248 = vmatmul.bf16.gmra.mxu0 %v6091
      %v6249 = vpop.f32.mrf.mxu0
      %v6250 = vadd.f32 0.0, %v6249
      %v6251 = vpop.f32.mrf.mxu0
      %v6252 = vadd.f32 0.0, %v6251
      %6253 = vmatmul.bf16.gmra.mxu0 %v6094
      %v6254 = vpop.f32.mrf.mxu0
      %v6255 = vadd.f32 0.0, %v6254
      %v6256 = vpop.f32.mrf.mxu0
      %v6257 = vadd.f32 0.0, %v6256
      %6258 = vmatmul.bf16.gmra.mxu0 %v6097
      %v6259 = vpop.f32.mrf.mxu0
      %v6260 = vadd.f32 0.0, %v6259
      %v6261 = vpop.f32.mrf.mxu0
      %v6262 = vadd.f32 0.0, %v6261
      %6263 = vmatmul.bf16.gmra.mxu0 %v6100
      %v6264 = vpop.f32.mrf.mxu0
      %v6265 = vadd.f32 0.0, %v6264
      %v6266 = vpop.f32.mrf.mxu0
      %v6267 = vadd.f32 0.0, %v6266
      %6268 = vmatmul.bf16.gmra.mxu0 %v6103
      %v6269 = vpop.f32.mrf.mxu0
      %v6270 = vadd.f32 0.0, %v6269
      %v6271 = vpop.f32.mrf.mxu0
      %v6272 = vadd.f32 0.0, %v6271
      %6273 = vmatmul.bf16.gmra.mxu0 %v6106
      %v6274 = vpop.f32.mrf.mxu0
      %v6275 = vadd.f32 0.0, %v6274
      %v6276 = vpop.f32.mrf.mxu0
      %v6277 = vadd.f32 0.0, %v6276
      %6278 = vmatmul.bf16.gmra.mxu0 %v6109
      %v6279 = vpop.f32.mrf.mxu0
      %v6280 = vadd.f32 0.0, %v6279
      %v6281 = vpop.f32.mrf.mxu0
      %v6282 = vadd.f32 0.0, %v6281
      %6283 = vdwg.mxu0
      %v6285 = vsel %vm6014, %v3614, 0
      %v6288 = vsel %vm6014, %v3615, 0
      %v6291 = vsel %vm6014, %v3616, 0
      %v6294 = vsel %vm6014, %v3617, 0
      %v6297 = vsel %vm6014, %v3618, 0
      %v6300 = vsel %vm6014, %v3619, 0
      %v6303 = vsel %vm6014, %v3620, 0
      %v6306 = vsel %vm6014, %v3621, 0
      %v6309 = vsel %vm6014, %v3622, 0
      %v6312 = vsel %vm6014, %v3623, 0
      %v6315 = vsel %vm6014, %v3624, 0
      %v6318 = vsel %vm6014, %v3625, 0
      %v6321 = vsel %vm6014, %v3626, 0
      %v6324 = vsel %vm6014, %v3627, 0
      %v6327 = vsel %vm6014, %v3628, 0
      %v6330 = vsel %vm6014, %v3629, 0
      %v6333 = vsel %vm6014, %v3630, 0
      %v6336 = vsel %vm6014, %v3631, 0
      %v6339 = vsel %vm6014, %v3632, 0
      %v6342 = vsel %vm6014, %v3633, 0
      %v6345 = vsel %vm6014, %v3634, 0
      %v6348 = vsel %vm6014, %v3635, 0
      %v6351 = vsel %vm6014, %v3636, 0
      %v6354 = vsel %vm6014, %v3637, 0
      %v6357 = vsel %vm6014, %v3638, 0
      %v6360 = vsel %vm6014, %v3639, 0
      %v6363 = vsel %vm6014, %v3640, 0
      %v6366 = vsel %vm6014, %v3641, 0
      %v6369 = vsel %vm6014, %v3642, 0
      %v6372 = vsel %vm6014, %v3643, 0
      %v6375 = vsel %vm6014, %v3644, 0
      %v6378 = vsel %vm6014, %v3645, 0
      %v6381 = vsel %vm6111, %v1081, 0
      %6383 = vmatpush.bf16.msra.mxu0 0
      %6384 = vmatpush.bf16.msra.mxu0 0
      %6385 = vmatpush.bf16.msra.mxu0 0
      %6386 = vmatpush.bf16.msra.mxu0 0
      %6387 = vmatpush.bf16.msra.mxu0 0
      %6388 = vmatpush.bf16.msra.mxu0 0
      %6389 = vmatpush.bf16.msra.mxu0 0
      %6390 = vmatpush.bf16.msra.mxu0 %v6381
      %6391 = vmatmul.bf16.gmra.mxu0 %v6285
      %v6392 = vpop.f32.mrf.mxu0
      %v6393 = vadd.f32 %v6125, %v6392
      %v6394 = vpop.f32.mrf.mxu0
      %v6395 = vadd.f32 %v6127, %v6394
      %6396 = vmatmul.bf16.gmra.mxu0 %v6288
      %v6397 = vpop.f32.mrf.mxu0
      %v6398 = vadd.f32 %v6130, %v6397
      %v6399 = vpop.f32.mrf.mxu0
      %v6400 = vadd.f32 %v6132, %v6399
      %6401 = vmatmul.bf16.gmra.mxu0 %v6291
      %v6402 = vpop.f32.mrf.mxu0
      %v6403 = vadd.f32 %v6135, %v6402
      %v6404 = vpop.f32.mrf.mxu0
      %v6405 = vadd.f32 %v6137, %v6404
      %6406 = vmatmul.bf16.gmra.mxu0 %v6294
      %v6407 = vpop.f32.mrf.mxu0
      %v6408 = vadd.f32 %v6140, %v6407
      %v6409 = vpop.f32.mrf.mxu0
      %v6410 = vadd.f32 %v6142, %v6409
      %6411 = vmatmul.bf16.gmra.mxu0 %v6297
      %v6412 = vpop.f32.mrf.mxu0
      %v6413 = vadd.f32 %v6145, %v6412
      %v6414 = vpop.f32.mrf.mxu0
      %v6415 = vadd.f32 %v6147, %v6414
      %6416 = vmatmul.bf16.gmra.mxu0 %v6300
      %v6417 = vpop.f32.mrf.mxu0
      %v6418 = vadd.f32 %v6150, %v6417
      %v6419 = vpop.f32.mrf.mxu0
      %v6420 = vadd.f32 %v6152, %v6419
      %6421 = vmatmul.bf16.gmra.mxu0 %v6303
      %v6422 = vpop.f32.mrf.mxu0
      %v6423 = vadd.f32 %v6155, %v6422
      %v6424 = vpop.f32.mrf.mxu0
      %v6425 = vadd.f32 %v6157, %v6424
      %6426 = vmatmul.bf16.gmra.mxu0 %v6306
      %v6427 = vpop.f32.mrf.mxu0
      %v6428 = vadd.f32 %v6160, %v6427
      %v6429 = vpop.f32.mrf.mxu0
      %v6430 = vadd.f32 %v6162, %v6429
      %6431 = vmatmul.bf16.gmra.mxu0 %v6309
      %v6432 = vpop.f32.mrf.mxu0
      %v6433 = vadd.f32 %v6165, %v6432
      %v6434 = vpop.f32.mrf.mxu0
      %v6435 = vadd.f32 %v6167, %v6434
      %6436 = vmatmul.bf16.gmra.mxu0 %v6312
      %v6437 = vpop.f32.mrf.mxu0
      %v6438 = vadd.f32 %v6170, %v6437
      %v6439 = vpop.f32.mrf.mxu0
      %v6440 = vadd.f32 %v6172, %v6439
      %6441 = vmatmul.bf16.gmra.mxu0 %v6315
      %v6442 = vpop.f32.mrf.mxu0
      %v6443 = vadd.f32 %v6175, %v6442
      %v6444 = vpop.f32.mrf.mxu0
      %v6445 = vadd.f32 %v6177, %v6444
      %6446 = vmatmul.bf16.gmra.mxu0 %v6318
      %v6447 = vpop.f32.mrf.mxu0
      %v6448 = vadd.f32 %v6180, %v6447
      %v6449 = vpop.f32.mrf.mxu0
      %v6450 = vadd.f32 %v6182, %v6449
      %6451 = vmatmul.bf16.gmra.mxu0 %v6321
      %v6452 = vpop.f32.mrf.mxu0
      %v6453 = vadd.f32 %v6185, %v6452
      %v6454 = vpop.f32.mrf.mxu0
      %v6455 = vadd.f32 %v6187, %v6454
      %6456 = vmatmul.bf16.gmra.mxu0 %v6324
      %v6457 = vpop.f32.mrf.mxu0
      %v6458 = vadd.f32 %v6190, %v6457
      %v6459 = vpop.f32.mrf.mxu0
      %v6460 = vadd.f32 %v6192, %v6459
      %6461 = vmatmul.bf16.gmra.mxu0 %v6327
      %v6462 = vpop.f32.mrf.mxu0
      %v6463 = vadd.f32 %v6195, %v6462
      %v6464 = vpop.f32.mrf.mxu0
      %v6465 = vadd.f32 %v6197, %v6464
      %6466 = vmatmul.bf16.gmra.mxu0 %v6330
      %v6467 = vpop.f32.mrf.mxu0
      %v6468 = vadd.f32 %v6200, %v6467
      %v6469 = vpop.f32.mrf.mxu0
      %v6470 = vadd.f32 %v6202, %v6469
      %6471 = vmatmul.bf16.gmra.mxu0 %v6333
      %v6472 = vpop.f32.mrf.mxu0
      %v6473 = vadd.f32 %v6205, %v6472
      %v6474 = vpop.f32.mrf.mxu0
      %v6475 = vadd.f32 %v6207, %v6474
      %6476 = vmatmul.bf16.gmra.mxu0 %v6336
      %v6477 = vpop.f32.mrf.mxu0
      %v6478 = vadd.f32 %v6210, %v6477
      %v6479 = vpop.f32.mrf.mxu0
      %v6480 = vadd.f32 %v6212, %v6479
      %6481 = vmatmul.bf16.gmra.mxu0 %v6339
      %v6482 = vpop.f32.mrf.mxu0
      %v6483 = vadd.f32 %v6215, %v6482
      %v6484 = vpop.f32.mrf.mxu0
      %v6485 = vadd.f32 %v6217, %v6484
      %6486 = vmatmul.bf16.gmra.mxu0 %v6342
      %v6487 = vpop.f32.mrf.mxu0
      %v6488 = vadd.f32 %v6220, %v6487
      %v6489 = vpop.f32.mrf.mxu0
      %v6490 = vadd.f32 %v6222, %v6489
      %6491 = vmatmul.bf16.gmra.mxu0 %v6345
      %v6492 = vpop.f32.mrf.mxu0
      %v6493 = vadd.f32 %v6225, %v6492
      %v6494 = vpop.f32.mrf.mxu0
      %v6495 = vadd.f32 %v6227, %v6494
      %6496 = vmatmul.bf16.gmra.mxu0 %v6348
      %v6497 = vpop.f32.mrf.mxu0
      %v6498 = vadd.f32 %v6230, %v6497
      %v6499 = vpop.f32.mrf.mxu0
      %v6500 = vadd.f32 %v6232, %v6499
      %6501 = vmatmul.bf16.gmra.mxu0 %v6351
      %v6502 = vpop.f32.mrf.mxu0
      %v6503 = vadd.f32 %v6235, %v6502
      %v6504 = vpop.f32.mrf.mxu0
      %v6505 = vadd.f32 %v6237, %v6504
      %6506 = vmatmul.bf16.gmra.mxu0 %v6354
      %v6507 = vpop.f32.mrf.mxu0
      %v6508 = vadd.f32 %v6240, %v6507
      %v6509 = vpop.f32.mrf.mxu0
      %v6510 = vadd.f32 %v6242, %v6509
      %6511 = vmatmul.bf16.gmra.mxu0 %v6357
      %v6512 = vpop.f32.mrf.mxu0
      %v6513 = vadd.f32 %v6245, %v6512
      %v6514 = vpop.f32.mrf.mxu0
      %v6515 = vadd.f32 %v6247, %v6514
      %6516 = vmatmul.bf16.gmra.mxu0 %v6360
      %v6517 = vpop.f32.mrf.mxu0
      %v6518 = vadd.f32 %v6250, %v6517
      %v6519 = vpop.f32.mrf.mxu0
      %v6520 = vadd.f32 %v6252, %v6519
      %6521 = vmatmul.bf16.gmra.mxu0 %v6363
      %v6522 = vpop.f32.mrf.mxu0
      %v6523 = vadd.f32 %v6255, %v6522
      %v6524 = vpop.f32.mrf.mxu0
      %v6525 = vadd.f32 %v6257, %v6524
      %6526 = vmatmul.bf16.gmra.mxu0 %v6366
      %v6527 = vpop.f32.mrf.mxu0
      %v6528 = vadd.f32 %v6260, %v6527
      %v6529 = vpop.f32.mrf.mxu0
      %v6530 = vadd.f32 %v6262, %v6529
      %6531 = vmatmul.bf16.gmra.mxu0 %v6369
      %v6532 = vpop.f32.mrf.mxu0
      %v6533 = vadd.f32 %v6265, %v6532
      %v6534 = vpop.f32.mrf.mxu0
      %v6535 = vadd.f32 %v6267, %v6534
      %6536 = vmatmul.bf16.gmra.mxu0 %v6372
      %v6537 = vpop.f32.mrf.mxu0
      %v6538 = vadd.f32 %v6270, %v6537
      %v6539 = vpop.f32.mrf.mxu0
      %v6540 = vadd.f32 %v6272, %v6539
      %6541 = vmatmul.bf16.gmra.mxu0 %v6375
      %v6542 = vpop.f32.mrf.mxu0
      %v6543 = vadd.f32 %v6275, %v6542
      %v6544 = vpop.f32.mrf.mxu0
      %v6545 = vadd.f32 %v6277, %v6544
      %6546 = vmatmul.bf16.gmra.mxu0 %v6378
      %v6547 = vpop.f32.mrf.mxu0
      %v6548 = vadd.f32 %v6280, %v6547
      %v6549 = vpop.f32.mrf.mxu0
      %v6550 = vadd.f32 %v6282, %v6549
      %6551 = vdwg.mxu0
      %6552 = vrot.lane.b32.xlu0 %v1089, 96
      %v6553 = vpop.permute.xlu0 %6552
      %6554 = vrot.lane.b32.xlu0 %v1089, 32
      %v6555 = vpop.permute.xlu0 %6554
      %v6557 = vsel %vm1092, %v6553, 0
      %v6560 = vsel %vm1092, %v6555, 0
      %6562 = vmatpush.bf16.xpose.msra.mxu0 0
      %6563 = vmatpush.bf16.xpose.msra.mxu0 0
      %6564 = vmatpush.bf16.xpose.msra.mxu0 0
      %6565 = vmatpush.bf16.xpose.msra.mxu0 0
      %6566 = vmatpush.bf16.xpose.msra.mxu0 0
      %6567 = vmatpush.bf16.xpose.msra.mxu0 0
      %6568 = vmatpush.bf16.xpose.msra.mxu0 0
      %6569 = vmatpush.bf16.xpose.msra.mxu0 %v6560
      %6570 = vmatmul.bf16.gmra.mxu0 %v6557
      %v6571 = vpop.f32.mrf.mxu0
      %v6572 = vadd.f32 %v1077, %v6571
      %v6573 = vpop.f32.mrf.mxu0
      %v6574 = vadd.f32 %v1078, %v6573
      %6575 = vdwg.mxu0
      %6576 = vrot.lane.b32.xlu0 %v1117, 96
      %v6577 = vpop.permute.xlu0 %6576
      %6578 = vrot.lane.b32.xlu0 %v1117, 32
      %v6579 = vpop.permute.xlu0 %6578
      %v6581 = vsel %vm1092, %v6577, 0
      %v6584 = vsel %vm1092, %v6579, 0
      %6586 = vmatpush.bf16.xpose.msra.mxu0 0
      %6587 = vmatpush.bf16.xpose.msra.mxu0 0
      %6588 = vmatpush.bf16.xpose.msra.mxu0 0
      %6589 = vmatpush.bf16.xpose.msra.mxu0 0
      %6590 = vmatpush.bf16.xpose.msra.mxu0 0
      %6591 = vmatpush.bf16.xpose.msra.mxu0 0
      %6592 = vmatpush.bf16.xpose.msra.mxu0 0
      %6593 = vmatpush.bf16.xpose.msra.mxu0 %v6584
      %6594 = vmatmul.bf16.gmra.mxu0 %v6581
      %v6595 = vpop.f32.mrf.mxu0
      %v6596 = vadd.f32 %v1077, %v6595
      %v6597 = vpop.f32.mrf.mxu0
      %v6598 = vadd.f32 %v1078, %v6597
      %6599 = vdwg.mxu0
      %6600 = vrot.lane.b32.xlu0 %v1144, 96
      %v6601 = vpop.permute.xlu0 %6600
      %6602 = vrot.lane.b32.xlu0 %v1144, 32
      %v6603 = vpop.permute.xlu0 %6602
      %v6605 = vsel %vm1092, %v6601, 0
      %v6608 = vsel %vm1092, %v6603, 0
      %6610 = vmatpush.bf16.xpose.msra.mxu0 0
      %6611 = vmatpush.bf16.xpose.msra.mxu0 0
      %6612 = vmatpush.bf16.xpose.msra.mxu0 0
      %6613 = vmatpush.bf16.xpose.msra.mxu0 0
      %6614 = vmatpush.bf16.xpose.msra.mxu0 0
      %6615 = vmatpush.bf16.xpose.msra.mxu0 0
      %6616 = vmatpush.bf16.xpose.msra.mxu0 0
      %6617 = vmatpush.bf16.xpose.msra.mxu0 %v6608
      %6618 = vmatmul.bf16.gmra.mxu0 %v6605
      %v6619 = vpop.f32.mrf.mxu0
      %v6620 = vadd.f32 %v1077, %v6619
      %v6621 = vpop.f32.mrf.mxu0
      %v6622 = vadd.f32 %v1078, %v6621
      %6623 = vdwg.mxu0
      %6624 = vrot.lane.b32.xlu0 %v1171, 96
      %v6625 = vpop.permute.xlu0 %6624
      %6626 = vrot.lane.b32.xlu0 %v1171, 32
      %v6627 = vpop.permute.xlu0 %6626
      %v6629 = vsel %vm1092, %v6625, 0
      %v6632 = vsel %vm1092, %v6627, 0
      %6634 = vmatpush.bf16.xpose.msra.mxu0 0
      %6635 = vmatpush.bf16.xpose.msra.mxu0 0
      %6636 = vmatpush.bf16.xpose.msra.mxu0 0
      %6637 = vmatpush.bf16.xpose.msra.mxu0 0
      %6638 = vmatpush.bf16.xpose.msra.mxu0 0
      %6639 = vmatpush.bf16.xpose.msra.mxu0 0
      %6640 = vmatpush.bf16.xpose.msra.mxu0 0
      %6641 = vmatpush.bf16.xpose.msra.mxu0 %v6632
      %6642 = vmatmul.bf16.gmra.mxu0 %v6629
      %v6643 = vpop.f32.mrf.mxu0
      %v6644 = vadd.f32 %v1077, %v6643
      %v6645 = vpop.f32.mrf.mxu0
      %v6646 = vadd.f32 %v1078, %v6645
      %6647 = vdwg.mxu0
      %6648 = vrot.lane.b32.xlu0 %v1198, 96
      %v6649 = vpop.permute.xlu0 %6648
      %6650 = vrot.lane.b32.xlu0 %v1198, 32
      %v6651 = vpop.permute.xlu0 %6650
      %v6653 = vsel %vm1092, %v6649, 0
      %v6656 = vsel %vm1092, %v6651, 0
      %6658 = vmatpush.bf16.xpose.msra.mxu0 0
      %6659 = vmatpush.bf16.xpose.msra.mxu0 0
      %6660 = vmatpush.bf16.xpose.msra.mxu0 0
      %6661 = vmatpush.bf16.xpose.msra.mxu0 0
      %6662 = vmatpush.bf16.xpose.msra.mxu0 0
      %6663 = vmatpush.bf16.xpose.msra.mxu0 0
      %6664 = vmatpush.bf16.xpose.msra.mxu0 0
      %6665 = vmatpush.bf16.xpose.msra.mxu0 %v6656
      %6666 = vmatmul.bf16.gmra.mxu0 %v6653
      %v6667 = vpop.f32.mrf.mxu0
      %v6668 = vadd.f32 %v1077, %v6667
      %v6669 = vpop.f32.mrf.mxu0
      %v6670 = vadd.f32 %v1078, %v6669
      %6671 = vdwg.mxu0
      %6672 = vrot.lane.b32.xlu0 %v1225, 96
      %v6673 = vpop.permute.xlu0 %6672
      %6674 = vrot.lane.b32.xlu0 %v1225, 32
      %v6675 = vpop.permute.xlu0 %6674
      %v6677 = vsel %vm1092, %v6673, 0
      %v6680 = vsel %vm1092, %v6675, 0
      %6682 = vmatpush.bf16.xpose.msra.mxu0 0
      %6683 = vmatpush.bf16.xpose.msra.mxu0 0
      %6684 = vmatpush.bf16.xpose.msra.mxu0 0
      %6685 = vmatpush.bf16.xpose.msra.mxu0 0
      %6686 = vmatpush.bf16.xpose.msra.mxu0 0
      %6687 = vmatpush.bf16.xpose.msra.mxu0 0
      %6688 = vmatpush.bf16.xpose.msra.mxu0 0
      %6689 = vmatpush.bf16.xpose.msra.mxu0 %v6680
      %6690 = vmatmul.bf16.gmra.mxu0 %v6677
      %v6691 = vpop.f32.mrf.mxu0
      %v6692 = vadd.f32 %v1077, %v6691
      %v6693 = vpop.f32.mrf.mxu0
      %v6694 = vadd.f32 %v1078, %v6693
      %6695 = vdwg.mxu0
      %6696 = vrot.lane.b32.xlu0 %v1252, 96
      %v6697 = vpop.permute.xlu0 %6696
      %6698 = vrot.lane.b32.xlu0 %v1252, 32
      %v6699 = vpop.permute.xlu0 %6698
      %v6701 = vsel %vm1092, %v6697, 0
      %v6704 = vsel %vm1092, %v6699, 0
      %6706 = vmatpush.bf16.xpose.msra.mxu0 0
      %6707 = vmatpush.bf16.xpose.msra.mxu0 0
      %6708 = vmatpush.bf16.xpose.msra.mxu0 0
      %6709 = vmatpush.bf16.xpose.msra.mxu0 0
      %6710 = vmatpush.bf16.xpose.msra.mxu0 0
      %6711 = vmatpush.bf16.xpose.msra.mxu0 0
      %6712 = vmatpush.bf16.xpose.msra.mxu0 0
      %6713 = vmatpush.bf16.xpose.msra.mxu0 %v6704
      %6714 = vmatmul.bf16.gmra.mxu0 %v6701
      %v6715 = vpop.f32.mrf.mxu0
      %v6716 = vadd.f32 %v1077, %v6715
      %v6717 = vpop.f32.mrf.mxu0
      %v6718 = vadd.f32 %v1078, %v6717
      %6719 = vdwg.mxu0
      %6720 = vrot.lane.b32.xlu0 %v1279, 96
      %v6721 = vpop.permute.xlu0 %6720
      %6722 = vrot.lane.b32.xlu0 %v1279, 32
      %v6723 = vpop.permute.xlu0 %6722
      %v6725 = vsel %vm1092, %v6721, 0
      %v6728 = vsel %vm1092, %v6723, 0
      %6730 = vmatpush.bf16.xpose.msra.mxu0 0
      %6731 = vmatpush.bf16.xpose.msra.mxu0 0
      %6732 = vmatpush.bf16.xpose.msra.mxu0 0
      %6733 = vmatpush.bf16.xpose.msra.mxu0 0
      %6734 = vmatpush.bf16.xpose.msra.mxu0 0
      %6735 = vmatpush.bf16.xpose.msra.mxu0 0
      %6736 = vmatpush.bf16.xpose.msra.mxu0 0
      %6737 = vmatpush.bf16.xpose.msra.mxu0 %v6728
      %6738 = vmatmul.bf16.gmra.mxu0 %v6725
      %v6739 = vpop.f32.mrf.mxu0
      %v6740 = vadd.f32 %v1077, %v6739
      %v6741 = vpop.f32.mrf.mxu0
      %v6742 = vadd.f32 %v1078, %v6741
      %6743 = vdwg.mxu0
      %6744 = vrot.lane.b32.xlu0 %v1306, 96
      %v6745 = vpop.permute.xlu0 %6744
      %6746 = vrot.lane.b32.xlu0 %v1306, 32
      %v6747 = vpop.permute.xlu0 %6746
      %v6749 = vsel %vm1092, %v6745, 0
      %v6752 = vsel %vm1092, %v6747, 0
      %6754 = vmatpush.bf16.xpose.msra.mxu0 0
      %6755 = vmatpush.bf16.xpose.msra.mxu0 0
      %6756 = vmatpush.bf16.xpose.msra.mxu0 0
      %6757 = vmatpush.bf16.xpose.msra.mxu0 0
      %6758 = vmatpush.bf16.xpose.msra.mxu0 0
      %6759 = vmatpush.bf16.xpose.msra.mxu0 0
      %6760 = vmatpush.bf16.xpose.msra.mxu0 0
      %6761 = vmatpush.bf16.xpose.msra.mxu0 %v6752
      %6762 = vmatmul.bf16.gmra.mxu0 %v6749
      %v6763 = vpop.f32.mrf.mxu0
      %v6764 = vadd.f32 %v1077, %v6763
      %v6765 = vpop.f32.mrf.mxu0
      %v6766 = vadd.f32 %v1078, %v6765
      %6767 = vdwg.mxu0
      %6768 = vrot.lane.b32.xlu0 %v1333, 96
      %v6769 = vpop.permute.xlu0 %6768
      %6770 = vrot.lane.b32.xlu0 %v1333, 32
      %v6771 = vpop.permute.xlu0 %6770
      %v6773 = vsel %vm1092, %v6769, 0
      %v6776 = vsel %vm1092, %v6771, 0
      %6778 = vmatpush.bf16.xpose.msra.mxu0 0
      %6779 = vmatpush.bf16.xpose.msra.mxu0 0
      %6780 = vmatpush.bf16.xpose.msra.mxu0 0
      %6781 = vmatpush.bf16.xpose.msra.mxu0 0
      %6782 = vmatpush.bf16.xpose.msra.mxu0 0
      %6783 = vmatpush.bf16.xpose.msra.mxu0 0
      %6784 = vmatpush.bf16.xpose.msra.mxu0 0
      %6785 = vmatpush.bf16.xpose.msra.mxu0 %v6776
      %6786 = vmatmul.bf16.gmra.mxu0 %v6773
      %v6787 = vpop.f32.mrf.mxu0
      %v6788 = vadd.f32 %v1077, %v6787
      %v6789 = vpop.f32.mrf.mxu0
      %v6790 = vadd.f32 %v1078, %v6789
      %6791 = vdwg.mxu0
      %6792 = vrot.lane.b32.xlu0 %v1360, 96
      %v6793 = vpop.permute.xlu0 %6792
      %6794 = vrot.lane.b32.xlu0 %v1360, 32
      %v6795 = vpop.permute.xlu0 %6794
      %v6797 = vsel %vm1092, %v6793, 0
      %v6800 = vsel %vm1092, %v6795, 0
      %6802 = vmatpush.bf16.xpose.msra.mxu0 0
      %6803 = vmatpush.bf16.xpose.msra.mxu0 0
      %6804 = vmatpush.bf16.xpose.msra.mxu0 0
      %6805 = vmatpush.bf16.xpose.msra.mxu0 0
      %6806 = vmatpush.bf16.xpose.msra.mxu0 0
      %6807 = vmatpush.bf16.xpose.msra.mxu0 0
      %6808 = vmatpush.bf16.xpose.msra.mxu0 0
      %6809 = vmatpush.bf16.xpose.msra.mxu0 %v6800
      %6810 = vmatmul.bf16.gmra.mxu0 %v6797
      %v6811 = vpop.f32.mrf.mxu0
      %v6812 = vadd.f32 %v1077, %v6811
      %v6813 = vpop.f32.mrf.mxu0
      %v6814 = vadd.f32 %v1078, %v6813
      %6815 = vdwg.mxu0
      %6816 = vrot.lane.b32.xlu0 %v1387, 96
      %v6817 = vpop.permute.xlu0 %6816
      %6818 = vrot.lane.b32.xlu0 %v1387, 32
      %v6819 = vpop.permute.xlu0 %6818
      %v6821 = vsel %vm1092, %v6817, 0
      %v6824 = vsel %vm1092, %v6819, 0
      %6826 = vmatpush.bf16.xpose.msra.mxu0 0
      %6827 = vmatpush.bf16.xpose.msra.mxu0 0
      %6828 = vmatpush.bf16.xpose.msra.mxu0 0
      %6829 = vmatpush.bf16.xpose.msra.mxu0 0
      %6830 = vmatpush.bf16.xpose.msra.mxu0 0
      %6831 = vmatpush.bf16.xpose.msra.mxu0 0
      %6832 = vmatpush.bf16.xpose.msra.mxu0 0
      %6833 = vmatpush.bf16.xpose.msra.mxu0 %v6824
      %6834 = vmatmul.bf16.gmra.mxu0 %v6821
      %v6835 = vpop.f32.mrf.mxu0
      %v6836 = vadd.f32 %v1077, %v6835
      %v6837 = vpop.f32.mrf.mxu0
      %v6838 = vadd.f32 %v1078, %v6837
      %6839 = vdwg.mxu0
      %6840 = vrot.lane.b32.xlu0 %v1414, 96
      %v6841 = vpop.permute.xlu0 %6840
      %6842 = vrot.lane.b32.xlu0 %v1414, 32
      %v6843 = vpop.permute.xlu0 %6842
      %v6845 = vsel %vm1092, %v6841, 0
      %v6848 = vsel %vm1092, %v6843, 0
      %6850 = vmatpush.bf16.xpose.msra.mxu0 0
      %6851 = vmatpush.bf16.xpose.msra.mxu0 0
      %6852 = vmatpush.bf16.xpose.msra.mxu0 0
      %6853 = vmatpush.bf16.xpose.msra.mxu0 0
      %6854 = vmatpush.bf16.xpose.msra.mxu0 0
      %6855 = vmatpush.bf16.xpose.msra.mxu0 0
      %6856 = vmatpush.bf16.xpose.msra.mxu0 0
      %6857 = vmatpush.bf16.xpose.msra.mxu0 %v6848
      %6858 = vmatmul.bf16.gmra.mxu0 %v6845
      %v6859 = vpop.f32.mrf.mxu0
      %v6860 = vadd.f32 %v1077, %v6859
      %v6861 = vpop.f32.mrf.mxu0
      %v6862 = vadd.f32 %v1078, %v6861
      %6863 = vdwg.mxu0
      %6864 = vrot.lane.b32.xlu0 %v1441, 96
      %v6865 = vpop.permute.xlu0 %6864
      %6866 = vrot.lane.b32.xlu0 %v1441, 32
      %v6867 = vpop.permute.xlu0 %6866
      %v6869 = vsel %vm1092, %v6865, 0
      %v6872 = vsel %vm1092, %v6867, 0
      %6874 = vmatpush.bf16.xpose.msra.mxu0 0
      %6875 = vmatpush.bf16.xpose.msra.mxu0 0
      %6876 = vmatpush.bf16.xpose.msra.mxu0 0
      %6877 = vmatpush.bf16.xpose.msra.mxu0 0
      %6878 = vmatpush.bf16.xpose.msra.mxu0 0
      %6879 = vmatpush.bf16.xpose.msra.mxu0 0
      %6880 = vmatpush.bf16.xpose.msra.mxu0 0
      %6881 = vmatpush.bf16.xpose.msra.mxu0 %v6872
      %6882 = vmatmul.bf16.gmra.mxu0 %v6869
      %v6883 = vpop.f32.mrf.mxu0
      %v6884 = vadd.f32 %v1077, %v6883
      %v6885 = vpop.f32.mrf.mxu0
      %v6886 = vadd.f32 %v1078, %v6885
      %6887 = vdwg.mxu0
      %6888 = vrot.lane.b32.xlu0 %v1468, 96
      %v6889 = vpop.permute.xlu0 %6888
      %6890 = vrot.lane.b32.xlu0 %v1468, 32
      %v6891 = vpop.permute.xlu0 %6890
      %v6893 = vsel %vm1092, %v6889, 0
      %v6896 = vsel %vm1092, %v6891, 0
      %6898 = vmatpush.bf16.xpose.msra.mxu0 0
      %6899 = vmatpush.bf16.xpose.msra.mxu0 0
      %6900 = vmatpush.bf16.xpose.msra.mxu0 0
      %6901 = vmatpush.bf16.xpose.msra.mxu0 0
      %6902 = vmatpush.bf16.xpose.msra.mxu0 0
      %6903 = vmatpush.bf16.xpose.msra.mxu0 0
      %6904 = vmatpush.bf16.xpose.msra.mxu0 0
      %6905 = vmatpush.bf16.xpose.msra.mxu0 %v6896
      %6906 = vmatmul.bf16.gmra.mxu0 %v6893
      %v6907 = vpop.f32.mrf.mxu0
      %v6908 = vadd.f32 %v1077, %v6907
      %v6909 = vpop.f32.mrf.mxu0
      %v6910 = vadd.f32 %v1078, %v6909
      %6911 = vdwg.mxu0
      %6912 = vrot.lane.b32.xlu0 %v1495, 96
      %v6913 = vpop.permute.xlu0 %6912
      %6914 = vrot.lane.b32.xlu0 %v1495, 32
      %v6915 = vpop.permute.xlu0 %6914
      %v6917 = vsel %vm1092, %v6913, 0
      %v6920 = vsel %vm1092, %v6915, 0
      %6922 = vmatpush.bf16.xpose.msra.mxu0 0
      %6923 = vmatpush.bf16.xpose.msra.mxu0 0
      %6924 = vmatpush.bf16.xpose.msra.mxu0 0
      %6925 = vmatpush.bf16.xpose.msra.mxu0 0
      %6926 = vmatpush.bf16.xpose.msra.mxu0 0
      %6927 = vmatpush.bf16.xpose.msra.mxu0 0
      %6928 = vmatpush.bf16.xpose.msra.mxu0 0
      %6929 = vmatpush.bf16.xpose.msra.mxu0 %v6920
      %6930 = vmatmul.bf16.gmra.mxu0 %v6917
      %v6931 = vpop.f32.mrf.mxu0
      %v6932 = vadd.f32 %v1077, %v6931
      %v6933 = vpop.f32.mrf.mxu0
      %v6934 = vadd.f32 %v1078, %v6933
      %6935 = vdwg.mxu0
      %6936 = vrot.lane.b32.xlu0 %v1522, 96
      %v6937 = vpop.permute.xlu0 %6936
      %6938 = vrot.lane.b32.xlu0 %v1522, 32
      %v6939 = vpop.permute.xlu0 %6938
      %v6941 = vsel %vm1092, %v6937, 0
      %v6944 = vsel %vm1092, %v6939, 0
      %6946 = vmatpush.bf16.xpose.msra.mxu0 0
      %6947 = vmatpush.bf16.xpose.msra.mxu0 0
      %6948 = vmatpush.bf16.xpose.msra.mxu0 0
      %6949 = vmatpush.bf16.xpose.msra.mxu0 0
      %6950 = vmatpush.bf16.xpose.msra.mxu0 0
      %6951 = vmatpush.bf16.xpose.msra.mxu0 0
      %6952 = vmatpush.bf16.xpose.msra.mxu0 0
      %6953 = vmatpush.bf16.xpose.msra.mxu0 %v6944
      %6954 = vmatmul.bf16.gmra.mxu0 %v6941
      %v6955 = vpop.f32.mrf.mxu0
      %v6956 = vadd.f32 %v1077, %v6955
      %v6957 = vpop.f32.mrf.mxu0
      %v6958 = vadd.f32 %v1078, %v6957
      %6959 = vdwg.mxu0
      %6960 = vrot.lane.b32.xlu0 %v1549, 96
      %v6961 = vpop.permute.xlu0 %6960
      %6962 = vrot.lane.b32.xlu0 %v1549, 32
      %v6963 = vpop.permute.xlu0 %6962
      %v6965 = vsel %vm1092, %v6961, 0
      %v6968 = vsel %vm1092, %v6963, 0
      %6970 = vmatpush.bf16.xpose.msra.mxu0 0
      %6971 = vmatpush.bf16.xpose.msra.mxu0 0
      %6972 = vmatpush.bf16.xpose.msra.mxu0 0
      %6973 = vmatpush.bf16.xpose.msra.mxu0 0
      %6974 = vmatpush.bf16.xpose.msra.mxu0 0
      %6975 = vmatpush.bf16.xpose.msra.mxu0 0
      %6976 = vmatpush.bf16.xpose.msra.mxu0 0
      %6977 = vmatpush.bf16.xpose.msra.mxu0 %v6968
      %6978 = vmatmul.bf16.gmra.mxu0 %v6965
      %v6979 = vpop.f32.mrf.mxu0
      %v6980 = vadd.f32 %v1077, %v6979
      %v6981 = vpop.f32.mrf.mxu0
      %v6982 = vadd.f32 %v1078, %v6981
      %6983 = vdwg.mxu0
      %6984 = vrot.lane.b32.xlu0 %v1576, 96
      %v6985 = vpop.permute.xlu0 %6984
      %6986 = vrot.lane.b32.xlu0 %v1576, 32
      %v6987 = vpop.permute.xlu0 %6986
      %v6989 = vsel %vm1092, %v6985, 0
      %v6992 = vsel %vm1092, %v6987, 0
      %6994 = vmatpush.bf16.xpose.msra.mxu0 0
      %6995 = vmatpush.bf16.xpose.msra.mxu0 0
      %6996 = vmatpush.bf16.xpose.msra.mxu0 0
      %6997 = vmatpush.bf16.xpose.msra.mxu0 0
      %6998 = vmatpush.bf16.xpose.msra.mxu0 0
      %6999 = vmatpush.bf16.xpose.msra.mxu0 0
      %7000 = vmatpush.bf16.xpose.msra.mxu0 0
      %7001 = vmatpush.bf16.xpose.msra.mxu0 %v6992
      %7002 = vmatmul.bf16.gmra.mxu0 %v6989
      %v7003 = vpop.f32.mrf.mxu0
      %v7004 = vadd.f32 %v1077, %v7003
      %v7005 = vpop.f32.mrf.mxu0
      %v7006 = vadd.f32 %v1078, %v7005
      %7007 = vdwg.mxu0
      %7008 = vrot.lane.b32.xlu0 %v1603, 96
      %v7009 = vpop.permute.xlu0 %7008
      %7010 = vrot.lane.b32.xlu0 %v1603, 32
      %v7011 = vpop.permute.xlu0 %7010
      %v7013 = vsel %vm1092, %v7009, 0
      %v7016 = vsel %vm1092, %v7011, 0
      %7018 = vmatpush.bf16.xpose.msra.mxu0 0
      %7019 = vmatpush.bf16.xpose.msra.mxu0 0
      %7020 = vmatpush.bf16.xpose.msra.mxu0 0
      %7021 = vmatpush.bf16.xpose.msra.mxu0 0
      %7022 = vmatpush.bf16.xpose.msra.mxu0 0
      %7023 = vmatpush.bf16.xpose.msra.mxu0 0
      %7024 = vmatpush.bf16.xpose.msra.mxu0 0
      %7025 = vmatpush.bf16.xpose.msra.mxu0 %v7016
      %7026 = vmatmul.bf16.gmra.mxu0 %v7013
      %v7027 = vpop.f32.mrf.mxu0
      %v7028 = vadd.f32 %v1077, %v7027
      %v7029 = vpop.f32.mrf.mxu0
      %v7030 = vadd.f32 %v1078, %v7029
      %7031 = vdwg.mxu0
      %7032 = vrot.lane.b32.xlu0 %v1630, 96
      %v7033 = vpop.permute.xlu0 %7032
      %7034 = vrot.lane.b32.xlu0 %v1630, 32
      %v7035 = vpop.permute.xlu0 %7034
      %v7037 = vsel %vm1092, %v7033, 0
      %v7040 = vsel %vm1092, %v7035, 0
      %7042 = vmatpush.bf16.xpose.msra.mxu0 0
      %7043 = vmatpush.bf16.xpose.msra.mxu0 0
      %7044 = vmatpush.bf16.xpose.msra.mxu0 0
      %7045 = vmatpush.bf16.xpose.msra.mxu0 0
      %7046 = vmatpush.bf16.xpose.msra.mxu0 0
      %7047 = vmatpush.bf16.xpose.msra.mxu0 0
      %7048 = vmatpush.bf16.xpose.msra.mxu0 0
      %7049 = vmatpush.bf16.xpose.msra.mxu0 %v7040
      %7050 = vmatmul.bf16.gmra.mxu0 %v7037
      %v7051 = vpop.f32.mrf.mxu0
      %v7052 = vadd.f32 %v1077, %v7051
      %v7053 = vpop.f32.mrf.mxu0
      %v7054 = vadd.f32 %v1078, %v7053
      %7055 = vdwg.mxu0
      %7056 = vrot.lane.b32.xlu0 %v1657, 96
      %v7057 = vpop.permute.xlu0 %7056
      %7058 = vrot.lane.b32.xlu0 %v1657, 32
      %v7059 = vpop.permute.xlu0 %7058
      %v7061 = vsel %vm1092, %v7057, 0
      %v7064 = vsel %vm1092, %v7059, 0
      %7066 = vmatpush.bf16.xpose.msra.mxu0 0
      %7067 = vmatpush.bf16.xpose.msra.mxu0 0
      %7068 = vmatpush.bf16.xpose.msra.mxu0 0
      %7069 = vmatpush.bf16.xpose.msra.mxu0 0
      %7070 = vmatpush.bf16.xpose.msra.mxu0 0
      %7071 = vmatpush.bf16.xpose.msra.mxu0 0
      %7072 = vmatpush.bf16.xpose.msra.mxu0 0
      %7073 = vmatpush.bf16.xpose.msra.mxu0 %v7064
      %7074 = vmatmul.bf16.gmra.mxu0 %v7061
      %v7075 = vpop.f32.mrf.mxu0
      %v7076 = vadd.f32 %v1077, %v7075
      %v7077 = vpop.f32.mrf.mxu0
      %v7078 = vadd.f32 %v1078, %v7077
      %7079 = vdwg.mxu0
      %7080 = vrot.lane.b32.xlu0 %v1684, 96
      %v7081 = vpop.permute.xlu0 %7080
      %7082 = vrot.lane.b32.xlu0 %v1684, 32
      %v7083 = vpop.permute.xlu0 %7082
      %v7085 = vsel %vm1092, %v7081, 0
      %v7088 = vsel %vm1092, %v7083, 0
      %7090 = vmatpush.bf16.xpose.msra.mxu0 0
      %7091 = vmatpush.bf16.xpose.msra.mxu0 0
      %7092 = vmatpush.bf16.xpose.msra.mxu0 0
      %7093 = vmatpush.bf16.xpose.msra.mxu0 0
      %7094 = vmatpush.bf16.xpose.msra.mxu0 0
      %7095 = vmatpush.bf16.xpose.msra.mxu0 0
      %7096 = vmatpush.bf16.xpose.msra.mxu0 0
      %7097 = vmatpush.bf16.xpose.msra.mxu0 %v7088
      %7098 = vmatmul.bf16.gmra.mxu0 %v7085
      %v7099 = vpop.f32.mrf.mxu0
      %v7100 = vadd.f32 %v1077, %v7099
      %v7101 = vpop.f32.mrf.mxu0
      %v7102 = vadd.f32 %v1078, %v7101
      %7103 = vdwg.mxu0
      %7104 = vrot.lane.b32.xlu0 %v1711, 96
      %v7105 = vpop.permute.xlu0 %7104
      %7106 = vrot.lane.b32.xlu0 %v1711, 32
      %v7107 = vpop.permute.xlu0 %7106
      %v7109 = vsel %vm1092, %v7105, 0
      %v7112 = vsel %vm1092, %v7107, 0
      %7114 = vmatpush.bf16.xpose.msra.mxu0 0
      %7115 = vmatpush.bf16.xpose.msra.mxu0 0
      %7116 = vmatpush.bf16.xpose.msra.mxu0 0
      %7117 = vmatpush.bf16.xpose.msra.mxu0 0
      %7118 = vmatpush.bf16.xpose.msra.mxu0 0
      %7119 = vmatpush.bf16.xpose.msra.mxu0 0
      %7120 = vmatpush.bf16.xpose.msra.mxu0 0
      %7121 = vmatpush.bf16.xpose.msra.mxu0 %v7112
      %7122 = vmatmul.bf16.gmra.mxu0 %v7109
      %v7123 = vpop.f32.mrf.mxu0
      %v7124 = vadd.f32 %v1077, %v7123
      %v7125 = vpop.f32.mrf.mxu0
      %v7126 = vadd.f32 %v1078, %v7125
      %7127 = vdwg.mxu0
      %7128 = vrot.lane.b32.xlu0 %v1738, 96
      %v7129 = vpop.permute.xlu0 %7128
      %7130 = vrot.lane.b32.xlu0 %v1738, 32
      %v7131 = vpop.permute.xlu0 %7130
      %v7133 = vsel %vm1092, %v7129, 0
      %v7136 = vsel %vm1092, %v7131, 0
      %7138 = vmatpush.bf16.xpose.msra.mxu0 0
      %7139 = vmatpush.bf16.xpose.msra.mxu0 0
      %7140 = vmatpush.bf16.xpose.msra.mxu0 0
      %7141 = vmatpush.bf16.xpose.msra.mxu0 0
      %7142 = vmatpush.bf16.xpose.msra.mxu0 0
      %7143 = vmatpush.bf16.xpose.msra.mxu0 0
      %7144 = vmatpush.bf16.xpose.msra.mxu0 0
      %7145 = vmatpush.bf16.xpose.msra.mxu0 %v7136
      %7146 = vmatmul.bf16.gmra.mxu0 %v7133
      %v7147 = vpop.f32.mrf.mxu0
      %v7148 = vadd.f32 %v1077, %v7147
      %v7149 = vpop.f32.mrf.mxu0
      %v7150 = vadd.f32 %v1078, %v7149
      %7151 = vdwg.mxu0
      %7152 = vrot.lane.b32.xlu0 %v1765, 96
      %v7153 = vpop.permute.xlu0 %7152
      %7154 = vrot.lane.b32.xlu0 %v1765, 32
      %v7155 = vpop.permute.xlu0 %7154
      %v7157 = vsel %vm1092, %v7153, 0
      %v7160 = vsel %vm1092, %v7155, 0
      %7162 = vmatpush.bf16.xpose.msra.mxu0 0
      %7163 = vmatpush.bf16.xpose.msra.mxu0 0
      %7164 = vmatpush.bf16.xpose.msra.mxu0 0
      %7165 = vmatpush.bf16.xpose.msra.mxu0 0
      %7166 = vmatpush.bf16.xpose.msra.mxu0 0
      %7167 = vmatpush.bf16.xpose.msra.mxu0 0
      %7168 = vmatpush.bf16.xpose.msra.mxu0 0
      %7169 = vmatpush.bf16.xpose.msra.mxu0 %v7160
      %7170 = vmatmul.bf16.gmra.mxu0 %v7157
      %v7171 = vpop.f32.mrf.mxu0
      %v7172 = vadd.f32 %v1077, %v7171
      %v7173 = vpop.f32.mrf.mxu0
      %v7174 = vadd.f32 %v1078, %v7173
      %7175 = vdwg.mxu0
      %7176 = vrot.lane.b32.xlu0 %v1792, 96
      %v7177 = vpop.permute.xlu0 %7176
      %7178 = vrot.lane.b32.xlu0 %v1792, 32
      %v7179 = vpop.permute.xlu0 %7178
      %v7181 = vsel %vm1092, %v7177, 0
      %v7184 = vsel %vm1092, %v7179, 0
      %7186 = vmatpush.bf16.xpose.msra.mxu0 0
      %7187 = vmatpush.bf16.xpose.msra.mxu0 0
      %7188 = vmatpush.bf16.xpose.msra.mxu0 0
      %7189 = vmatpush.bf16.xpose.msra.mxu0 0
      %7190 = vmatpush.bf16.xpose.msra.mxu0 0
      %7191 = vmatpush.bf16.xpose.msra.mxu0 0
      %7192 = vmatpush.bf16.xpose.msra.mxu0 0
      %7193 = vmatpush.bf16.xpose.msra.mxu0 %v7184
      %7194 = vmatmul.bf16.gmra.mxu0 %v7181
      %v7195 = vpop.f32.mrf.mxu0
      %v7196 = vadd.f32 %v1077, %v7195
      %v7197 = vpop.f32.mrf.mxu0
      %v7198 = vadd.f32 %v1078, %v7197
      %7199 = vdwg.mxu0
      %7200 = vrot.lane.b32.xlu0 %v1819, 96
      %v7201 = vpop.permute.xlu0 %7200
      %7202 = vrot.lane.b32.xlu0 %v1819, 32
      %v7203 = vpop.permute.xlu0 %7202
      %v7205 = vsel %vm1092, %v7201, 0
      %v7208 = vsel %vm1092, %v7203, 0
      %7210 = vmatpush.bf16.xpose.msra.mxu0 0
      %7211 = vmatpush.bf16.xpose.msra.mxu0 0
      %7212 = vmatpush.bf16.xpose.msra.mxu0 0
      %7213 = vmatpush.bf16.xpose.msra.mxu0 0
      %7214 = vmatpush.bf16.xpose.msra.mxu0 0
      %7215 = vmatpush.bf16.xpose.msra.mxu0 0
      %7216 = vmatpush.bf16.xpose.msra.mxu0 0
      %7217 = vmatpush.bf16.xpose.msra.mxu0 %v7208
      %7218 = vmatmul.bf16.gmra.mxu0 %v7205
      %v7219 = vpop.f32.mrf.mxu0
      %v7220 = vadd.f32 %v1077, %v7219
      %v7221 = vpop.f32.mrf.mxu0
      %v7222 = vadd.f32 %v1078, %v7221
      %7223 = vdwg.mxu0
      %7224 = vrot.lane.b32.xlu0 %v1846, 96
      %v7225 = vpop.permute.xlu0 %7224
      %7226 = vrot.lane.b32.xlu0 %v1846, 32
      %v7227 = vpop.permute.xlu0 %7226
      %v7229 = vsel %vm1092, %v7225, 0
      %v7232 = vsel %vm1092, %v7227, 0
      %7234 = vmatpush.bf16.xpose.msra.mxu0 0
      %7235 = vmatpush.bf16.xpose.msra.mxu0 0
      %7236 = vmatpush.bf16.xpose.msra.mxu0 0
      %7237 = vmatpush.bf16.xpose.msra.mxu0 0
      %7238 = vmatpush.bf16.xpose.msra.mxu0 0
      %7239 = vmatpush.bf16.xpose.msra.mxu0 0
      %7240 = vmatpush.bf16.xpose.msra.mxu0 0
      %7241 = vmatpush.bf16.xpose.msra.mxu0 %v7232
      %7242 = vmatmul.bf16.gmra.mxu0 %v7229
      %v7243 = vpop.f32.mrf.mxu0
      %v7244 = vadd.f32 %v1077, %v7243
      %v7245 = vpop.f32.mrf.mxu0
      %v7246 = vadd.f32 %v1078, %v7245
      %7247 = vdwg.mxu0
      %7248 = vrot.lane.b32.xlu0 %v1873, 96
      %v7249 = vpop.permute.xlu0 %7248
      %7250 = vrot.lane.b32.xlu0 %v1873, 32
      %v7251 = vpop.permute.xlu0 %7250
      %v7253 = vsel %vm1092, %v7249, 0
      %v7256 = vsel %vm1092, %v7251, 0
      %7258 = vmatpush.bf16.xpose.msra.mxu0 0
      %7259 = vmatpush.bf16.xpose.msra.mxu0 0
      %7260 = vmatpush.bf16.xpose.msra.mxu0 0
      %7261 = vmatpush.bf16.xpose.msra.mxu0 0
      %7262 = vmatpush.bf16.xpose.msra.mxu0 0
      %7263 = vmatpush.bf16.xpose.msra.mxu0 0
      %7264 = vmatpush.bf16.xpose.msra.mxu0 0
      %7265 = vmatpush.bf16.xpose.msra.mxu0 %v7256
      %7266 = vmatmul.bf16.gmra.mxu0 %v7253
      %v7267 = vpop.f32.mrf.mxu0
      %v7268 = vadd.f32 %v1077, %v7267
      %v7269 = vpop.f32.mrf.mxu0
      %v7270 = vadd.f32 %v1078, %v7269
      %7271 = vdwg.mxu0
      %7272 = vrot.lane.b32.xlu0 %v1900, 96
      %v7273 = vpop.permute.xlu0 %7272
      %7274 = vrot.lane.b32.xlu0 %v1900, 32
      %v7275 = vpop.permute.xlu0 %7274
      %v7277 = vsel %vm1092, %v7273, 0
      %v7280 = vsel %vm1092, %v7275, 0
      %7282 = vmatpush.bf16.xpose.msra.mxu0 0
      %7283 = vmatpush.bf16.xpose.msra.mxu0 0
      %7284 = vmatpush.bf16.xpose.msra.mxu0 0
      %7285 = vmatpush.bf16.xpose.msra.mxu0 0
      %7286 = vmatpush.bf16.xpose.msra.mxu0 0
      %7287 = vmatpush.bf16.xpose.msra.mxu0 0
      %7288 = vmatpush.bf16.xpose.msra.mxu0 0
      %7289 = vmatpush.bf16.xpose.msra.mxu0 %v7280
      %7290 = vmatmul.bf16.gmra.mxu0 %v7277
      %v7291 = vpop.f32.mrf.mxu0
      %v7292 = vadd.f32 %v1077, %v7291
      %v7293 = vpop.f32.mrf.mxu0
      %v7294 = vadd.f32 %v1078, %v7293
      %7295 = vdwg.mxu0
      %7296 = vrot.lane.b32.xlu0 %v1927, 96
      %v7297 = vpop.permute.xlu0 %7296
      %7298 = vrot.lane.b32.xlu0 %v1927, 32
      %v7299 = vpop.permute.xlu0 %7298
      %v7301 = vsel %vm1092, %v7297, 0
      %v7304 = vsel %vm1092, %v7299, 0
      %7306 = vmatpush.bf16.xpose.msra.mxu0 0
      %7307 = vmatpush.bf16.xpose.msra.mxu0 0
      %7308 = vmatpush.bf16.xpose.msra.mxu0 0
      %7309 = vmatpush.bf16.xpose.msra.mxu0 0
      %7310 = vmatpush.bf16.xpose.msra.mxu0 0
      %7311 = vmatpush.bf16.xpose.msra.mxu0 0
      %7312 = vmatpush.bf16.xpose.msra.mxu0 0
      %7313 = vmatpush.bf16.xpose.msra.mxu0 %v7304
      %7314 = vmatmul.bf16.gmra.mxu0 %v7301
      %v7315 = vpop.f32.mrf.mxu0
      %v7316 = vadd.f32 %v1077, %v7315
      %v7317 = vpop.f32.mrf.mxu0
      %v7318 = vadd.f32 %v1078, %v7317
      %7319 = vdwg.mxu0
      %v7320 = vsel %vm1092, %v6572, -inf
      %7321 = vmax.xlane.f32.xlu0 %v7320
      %v7322 = vpop.xlane.xlu0 %7321
      %v7323 = vsel %vm1092, %v6574, -inf
      %7324 = vmax.xlane.f32.xlu0 %v7323
      %v7325 = vpop.xlane.xlu0 %7324
      %v7326 = vsel %vm1092, %v6596, -inf
      %7327 = vmax.xlane.f32.xlu0 %v7326
      %v7328 = vpop.xlane.xlu0 %7327
      %v7329 = vsel %vm1092, %v6598, -inf
      %7330 = vmax.xlane.f32.xlu0 %v7329
      %v7331 = vpop.xlane.xlu0 %7330
      %v7332 = vsel %vm1092, %v6620, -inf
      %7333 = vmax.xlane.f32.xlu0 %v7332
      %v7334 = vpop.xlane.xlu0 %7333
      %v7335 = vsel %vm1092, %v6622, -inf
      %7336 = vmax.xlane.f32.xlu0 %v7335
      %v7337 = vpop.xlane.xlu0 %7336
      %v7338 = vsel %vm1092, %v6644, -inf
      %7339 = vmax.xlane.f32.xlu0 %v7338
      %v7340 = vpop.xlane.xlu0 %7339
      %v7341 = vsel %vm1092, %v6646, -inf
      %7342 = vmax.xlane.f32.xlu0 %v7341
      %v7343 = vpop.xlane.xlu0 %7342
      %v7344 = vsel %vm1092, %v6668, -inf
      %7345 = vmax.xlane.f32.xlu0 %v7344
      %v7346 = vpop.xlane.xlu0 %7345
      %v7347 = vsel %vm1092, %v6670, -inf
      %7348 = vmax.xlane.f32.xlu0 %v7347
      %v7349 = vpop.xlane.xlu0 %7348
      %v7350 = vsel %vm1092, %v6692, -inf
      %7351 = vmax.xlane.f32.xlu0 %v7350
      %v7352 = vpop.xlane.xlu0 %7351
      %v7353 = vsel %vm1092, %v6694, -inf
      %7354 = vmax.xlane.f32.xlu0 %v7353
      %v7355 = vpop.xlane.xlu0 %7354
      %v7356 = vsel %vm1092, %v6716, -inf
      %7357 = vmax.xlane.f32.xlu0 %v7356
      %v7358 = vpop.xlane.xlu0 %7357
      %v7359 = vsel %vm1092, %v6718, -inf
      %7360 = vmax.xlane.f32.xlu0 %v7359
      %v7361 = vpop.xlane.xlu0 %7360
      %v7362 = vsel %vm1092, %v6740, -inf
      %7363 = vmax.xlane.f32.xlu0 %v7362
      %v7364 = vpop.xlane.xlu0 %7363
      %v7365 = vsel %vm1092, %v6742, -inf
      %7366 = vmax.xlane.f32.xlu0 %v7365
      %v7367 = vpop.xlane.xlu0 %7366
      %v7368 = vsel %vm1092, %v6764, -inf
      %7369 = vmax.xlane.f32.xlu0 %v7368
      %v7370 = vpop.xlane.xlu0 %7369
      %v7371 = vsel %vm1092, %v6766, -inf
      %7372 = vmax.xlane.f32.xlu0 %v7371
      %v7373 = vpop.xlane.xlu0 %7372
      %v7374 = vsel %vm1092, %v6788, -inf
      %7375 = vmax.xlane.f32.xlu0 %v7374
      %v7376 = vpop.xlane.xlu0 %7375
      %v7377 = vsel %vm1092, %v6790, -inf
      %7378 = vmax.xlane.f32.xlu0 %v7377
      %v7379 = vpop.xlane.xlu0 %7378
      %v7380 = vsel %vm1092, %v6812, -inf
      %7381 = vmax.xlane.f32.xlu0 %v7380
      %v7382 = vpop.xlane.xlu0 %7381
      %v7383 = vsel %vm1092, %v6814, -inf
      %7384 = vmax.xlane.f32.xlu0 %v7383
      %v7385 = vpop.xlane.xlu0 %7384
      %v7386 = vsel %vm1092, %v6836, -inf
      %7387 = vmax.xlane.f32.xlu0 %v7386
      %v7388 = vpop.xlane.xlu0 %7387
      %v7389 = vsel %vm1092, %v6838, -inf
      %7390 = vmax.xlane.f32.xlu0 %v7389
      %v7391 = vpop.xlane.xlu0 %7390
      %v7392 = vsel %vm1092, %v6860, -inf
      %7393 = vmax.xlane.f32.xlu0 %v7392
      %v7394 = vpop.xlane.xlu0 %7393
      %v7395 = vsel %vm1092, %v6862, -inf
      %7396 = vmax.xlane.f32.xlu0 %v7395
      %v7397 = vpop.xlane.xlu0 %7396
      %v7398 = vsel %vm1092, %v6884, -inf
      %7399 = vmax.xlane.f32.xlu0 %v7398
      %v7400 = vpop.xlane.xlu0 %7399
      %v7401 = vsel %vm1092, %v6886, -inf
      %7402 = vmax.xlane.f32.xlu0 %v7401
      %v7403 = vpop.xlane.xlu0 %7402
      %v7404 = vsel %vm1092, %v6908, -inf
      %7405 = vmax.xlane.f32.xlu0 %v7404
      %v7406 = vpop.xlane.xlu0 %7405
      %v7407 = vsel %vm1092, %v6910, -inf
      %7408 = vmax.xlane.f32.xlu0 %v7407
      %v7409 = vpop.xlane.xlu0 %7408
      %v7410 = vsel %vm1092, %v6932, -inf
      %7411 = vmax.xlane.f32.xlu0 %v7410
      %v7412 = vpop.xlane.xlu0 %7411
      %v7413 = vsel %vm1092, %v6934, -inf
      %7414 = vmax.xlane.f32.xlu0 %v7413
      %v7415 = vpop.xlane.xlu0 %7414
      %v7416 = vsel %vm1092, %v6956, -inf
      %7417 = vmax.xlane.f32.xlu0 %v7416
      %v7418 = vpop.xlane.xlu0 %7417
      %v7419 = vsel %vm1092, %v6958, -inf
      %7420 = vmax.xlane.f32.xlu0 %v7419
      %v7421 = vpop.xlane.xlu0 %7420
      %v7422 = vsel %vm1092, %v6980, -inf
      %7423 = vmax.xlane.f32.xlu0 %v7422
      %v7424 = vpop.xlane.xlu0 %7423
      %v7425 = vsel %vm1092, %v6982, -inf
      %7426 = vmax.xlane.f32.xlu0 %v7425
      %v7427 = vpop.xlane.xlu0 %7426
      %v7428 = vsel %vm1092, %v7004, -inf
      %7429 = vmax.xlane.f32.xlu0 %v7428
      %v7430 = vpop.xlane.xlu0 %7429
      %v7431 = vsel %vm1092, %v7006, -inf
      %7432 = vmax.xlane.f32.xlu0 %v7431
      %v7433 = vpop.xlane.xlu0 %7432
      %v7434 = vsel %vm1092, %v7028, -inf
      %7435 = vmax.xlane.f32.xlu0 %v7434
      %v7436 = vpop.xlane.xlu0 %7435
      %v7437 = vsel %vm1092, %v7030, -inf
      %7438 = vmax.xlane.f32.xlu0 %v7437
      %v7439 = vpop.xlane.xlu0 %7438
      %v7440 = vsel %vm1092, %v7052, -inf
      %7441 = vmax.xlane.f32.xlu0 %v7440
      %v7442 = vpop.xlane.xlu0 %7441
      %v7443 = vsel %vm1092, %v7054, -inf
      %7444 = vmax.xlane.f32.xlu0 %v7443
      %v7445 = vpop.xlane.xlu0 %7444
      %v7446 = vsel %vm1092, %v7076, -inf
      %7447 = vmax.xlane.f32.xlu0 %v7446
      %v7448 = vpop.xlane.xlu0 %7447
      %v7449 = vsel %vm1092, %v7078, -inf
      %7450 = vmax.xlane.f32.xlu0 %v7449
      %v7451 = vpop.xlane.xlu0 %7450
      %v7452 = vsel %vm1092, %v7100, -inf
      %7453 = vmax.xlane.f32.xlu0 %v7452
      %v7454 = vpop.xlane.xlu0 %7453
      %v7455 = vsel %vm1092, %v7102, -inf
      %7456 = vmax.xlane.f32.xlu0 %v7455
      %v7457 = vpop.xlane.xlu0 %7456
      %v7458 = vsel %vm1092, %v7124, -inf
      %7459 = vmax.xlane.f32.xlu0 %v7458
      %v7460 = vpop.xlane.xlu0 %7459
      %v7461 = vsel %vm1092, %v7126, -inf
      %7462 = vmax.xlane.f32.xlu0 %v7461
      %v7463 = vpop.xlane.xlu0 %7462
      %v7464 = vsel %vm1092, %v7148, -inf
      %7465 = vmax.xlane.f32.xlu0 %v7464
      %v7466 = vpop.xlane.xlu0 %7465
      %v7467 = vsel %vm1092, %v7150, -inf
      %7468 = vmax.xlane.f32.xlu0 %v7467
      %v7469 = vpop.xlane.xlu0 %7468
      %v7470 = vsel %vm1092, %v7172, -inf
      %7471 = vmax.xlane.f32.xlu0 %v7470
      %v7472 = vpop.xlane.xlu0 %7471
      %v7473 = vsel %vm1092, %v7174, -inf
      %7474 = vmax.xlane.f32.xlu0 %v7473
      %v7475 = vpop.xlane.xlu0 %7474
      %v7476 = vsel %vm1092, %v7196, -inf
      %7477 = vmax.xlane.f32.xlu0 %v7476
      %v7478 = vpop.xlane.xlu0 %7477
      %v7479 = vsel %vm1092, %v7198, -inf
      %7480 = vmax.xlane.f32.xlu0 %v7479
      %v7481 = vpop.xlane.xlu0 %7480
      %v7482 = vsel %vm1092, %v7220, -inf
      %7483 = vmax.xlane.f32.xlu0 %v7482
      %v7484 = vpop.xlane.xlu0 %7483
      %v7485 = vsel %vm1092, %v7222, -inf
      %7486 = vmax.xlane.f32.xlu0 %v7485
      %v7487 = vpop.xlane.xlu0 %7486
      %v7488 = vsel %vm1092, %v7244, -inf
      %7489 = vmax.xlane.f32.xlu0 %v7488
      %v7490 = vpop.xlane.xlu0 %7489
      %v7491 = vsel %vm1092, %v7246, -inf
      %7492 = vmax.xlane.f32.xlu0 %v7491
      %v7493 = vpop.xlane.xlu0 %7492
      %v7494 = vsel %vm1092, %v7268, -inf
      %7495 = vmax.xlane.f32.xlu0 %v7494
      %v7496 = vpop.xlane.xlu0 %7495
      %v7497 = vsel %vm1092, %v7270, -inf
      %7498 = vmax.xlane.f32.xlu0 %v7497
      %v7499 = vpop.xlane.xlu0 %7498
      %v7500 = vsel %vm1092, %v7292, -inf
      %7501 = vmax.xlane.f32.xlu0 %v7500
      %v7502 = vpop.xlane.xlu0 %7501
      %v7503 = vsel %vm1092, %v7294, -inf
      %7504 = vmax.xlane.f32.xlu0 %v7503
      %v7505 = vpop.xlane.xlu0 %7504
      %v7506 = vsel %vm1092, %v7316, -inf
      %7507 = vmax.xlane.f32.xlu0 %v7506
      %v7508 = vpop.xlane.xlu0 %7507
      %v7509 = vsel %vm1092, %v7318, -inf
      %7510 = vmax.xlane.f32.xlu0 %v7509
      %v7511 = vpop.xlane.xlu0 %7510
      %v7512 = vsub.f32 %v6572, %v7322
      %v7513 = vsub.f32 %v6574, %v7325
      %v7514 = vsub.f32 %v6596, %v7328
      %v7515 = vsub.f32 %v6598, %v7331
      %v7516 = vsub.f32 %v6620, %v7334
      %v7517 = vsub.f32 %v6622, %v7337
      %v7518 = vsub.f32 %v6644, %v7340
      %v7519 = vsub.f32 %v6646, %v7343
      %v7520 = vsub.f32 %v6668, %v7346
      %v7521 = vsub.f32 %v6670, %v7349
      %v7522 = vsub.f32 %v6692, %v7352
      %v7523 = vsub.f32 %v6694, %v7355
      %v7524 = vsub.f32 %v6716, %v7358
      %v7525 = vsub.f32 %v6718, %v7361
      %v7526 = vsub.f32 %v6740, %v7364
      %v7527 = vsub.f32 %v6742, %v7367
      %v7528 = vsub.f32 %v6764, %v7370
      %v7529 = vsub.f32 %v6766, %v7373
      %v7530 = vsub.f32 %v6788, %v7376
      %v7531 = vsub.f32 %v6790, %v7379
      %v7532 = vsub.f32 %v6812, %v7382
      %v7533 = vsub.f32 %v6814, %v7385
      %v7534 = vsub.f32 %v6836, %v7388
      %v7535 = vsub.f32 %v6838, %v7391
      %v7536 = vsub.f32 %v6860, %v7394
      %v7537 = vsub.f32 %v6862, %v7397
      %v7538 = vsub.f32 %v6884, %v7400
      %v7539 = vsub.f32 %v6886, %v7403
      %v7540 = vsub.f32 %v6908, %v7406
      %v7541 = vsub.f32 %v6910, %v7409
      %v7542 = vsub.f32 %v6932, %v7412
      %v7543 = vsub.f32 %v6934, %v7415
      %v7544 = vsub.f32 %v6956, %v7418
      %v7545 = vsub.f32 %v6958, %v7421
      %v7546 = vsub.f32 %v6980, %v7424
      %v7547 = vsub.f32 %v6982, %v7427
      %v7548 = vsub.f32 %v7004, %v7430
      %v7549 = vsub.f32 %v7006, %v7433
      %v7550 = vsub.f32 %v7028, %v7436
      %v7551 = vsub.f32 %v7030, %v7439
      %v7552 = vsub.f32 %v7052, %v7442
      %v7553 = vsub.f32 %v7054, %v7445
      %v7554 = vsub.f32 %v7076, %v7448
      %v7555 = vsub.f32 %v7078, %v7451
      %v7556 = vsub.f32 %v7100, %v7454
      %v7557 = vsub.f32 %v7102, %v7457
      %v7558 = vsub.f32 %v7124, %v7460
      %v7559 = vsub.f32 %v7126, %v7463
      %v7560 = vsub.f32 %v7148, %v7466
      %v7561 = vsub.f32 %v7150, %v7469
      %v7562 = vsub.f32 %v7172, %v7472
      %v7563 = vsub.f32 %v7174, %v7475
      %v7564 = vsub.f32 %v7196, %v7478
      %v7565 = vsub.f32 %v7198, %v7481
      %v7566 = vsub.f32 %v7220, %v7484
      %v7567 = vsub.f32 %v7222, %v7487
      %v7568 = vsub.f32 %v7244, %v7490
      %v7569 = vsub.f32 %v7246, %v7493
      %v7570 = vsub.f32 %v7268, %v7496
      %v7571 = vsub.f32 %v7270, %v7499
      %v7572 = vsub.f32 %v7292, %v7502
      %v7573 = vsub.f32 %v7294, %v7505
      %v7574 = vsub.f32 %v7316, %v7508
      %v7575 = vsub.f32 %v7318, %v7511
      %v7576 = vmul.f32 %v7512, 1.442695
      %v7577 = vpow.pop %v7576
      %v7578 = vmul.f32 %v7513, 1.442695
      %v7579 = vpow.pop %v7578
      %v7580 = vmul.f32 %v7514, 1.442695
      %v7581 = vpow.pop %v7580
      %v7582 = vmul.f32 %v7515, 1.442695
      %v7583 = vpow.pop %v7582
      %v7584 = vmul.f32 %v7516, 1.442695
      %v7585 = vpow.pop %v7584
      %v7586 = vmul.f32 %v7517, 1.442695
      %v7587 = vpow.pop %v7586
      %v7588 = vmul.f32 %v7518, 1.442695
      %v7589 = vpow.pop %v7588
      %v7590 = vmul.f32 %v7519, 1.442695
      %v7591 = vpow.pop %v7590
      %v7592 = vmul.f32 %v7520, 1.442695
      %v7593 = vpow.pop %v7592
      %v7594 = vmul.f32 %v7521, 1.442695
      %v7595 = vpow.pop %v7594
      %v7596 = vmul.f32 %v7522, 1.442695
      %v7597 = vpow.pop %v7596
      %v7598 = vmul.f32 %v7523, 1.442695
      %v7599 = vpow.pop %v7598
      %v7600 = vmul.f32 %v7524, 1.442695
      %v7601 = vpow.pop %v7600
      %v7602 = vmul.f32 %v7525, 1.442695
      %v7603 = vpow.pop %v7602
      %v7604 = vmul.f32 %v7526, 1.442695
      %v7605 = vpow.pop %v7604
      %v7606 = vmul.f32 %v7527, 1.442695
      %v7607 = vpow.pop %v7606
      %v7608 = vmul.f32 %v7528, 1.442695
      %v7609 = vpow.pop %v7608
      %v7610 = vmul.f32 %v7529, 1.442695
      %v7611 = vpow.pop %v7610
      %v7612 = vmul.f32 %v7530, 1.442695
      %v7613 = vpow.pop %v7612
      %v7614 = vmul.f32 %v7531, 1.442695
      %v7615 = vpow.pop %v7614
      %v7616 = vmul.f32 %v7532, 1.442695
      %v7617 = vpow.pop %v7616
      %v7618 = vmul.f32 %v7533, 1.442695
      %v7619 = vpow.pop %v7618
      %v7620 = vmul.f32 %v7534, 1.442695
      %v7621 = vpow.pop %v7620
      %v7622 = vmul.f32 %v7535, 1.442695
      %v7623 = vpow.pop %v7622
      %v7624 = vmul.f32 %v7536, 1.442695
      %v7625 = vpow.pop %v7624
      %v7626 = vmul.f32 %v7537, 1.442695
      %v7627 = vpow.pop %v7626
      %v7628 = vmul.f32 %v7538, 1.442695
      %v7629 = vpow.pop %v7628
      %v7630 = vmul.f32 %v7539, 1.442695
      %v7631 = vpow.pop %v7630
      %v7632 = vmul.f32 %v7540, 1.442695
      %v7633 = vpow.pop %v7632
      %v7634 = vmul.f32 %v7541, 1.442695
      %v7635 = vpow.pop %v7634
      %v7636 = vmul.f32 %v7542, 1.442695
      %v7637 = vpow.pop %v7636
      %v7638 = vmul.f32 %v7543, 1.442695
      %v7639 = vpow.pop %v7638
      %v7640 = vmul.f32 %v7544, 1.442695
      %v7641 = vpow.pop %v7640
      %v7642 = vmul.f32 %v7545, 1.442695
      %v7643 = vpow.pop %v7642
      %v7644 = vmul.f32 %v7546, 1.442695
      %v7645 = vpow.pop %v7644
      %v7646 = vmul.f32 %v7547, 1.442695
      %v7647 = vpow.pop %v7646
      %v7648 = vmul.f32 %v7548, 1.442695
      %v7649 = vpow.pop %v7648
      %v7650 = vmul.f32 %v7549, 1.442695
      %v7651 = vpow.pop %v7650
      %v7652 = vmul.f32 %v7550, 1.442695
      %v7653 = vpow.pop %v7652
      %v7654 = vmul.f32 %v7551, 1.442695
      %v7655 = vpow.pop %v7654
      %v7656 = vmul.f32 %v7552, 1.442695
      %v7657 = vpow.pop %v7656
      %v7658 = vmul.f32 %v7553, 1.442695
      %v7659 = vpow.pop %v7658
      %v7660 = vmul.f32 %v7554, 1.442695
      %v7661 = vpow.pop %v7660
      %v7662 = vmul.f32 %v7555, 1.442695
      %v7663 = vpow.pop %v7662
      %v7664 = vmul.f32 %v7556, 1.442695
      %v7665 = vpow.pop %v7664
      %v7666 = vmul.f32 %v7557, 1.442695
      %v7667 = vpow.pop %v7666
      %v7668 = vmul.f32 %v7558, 1.442695
      %v7669 = vpow.pop %v7668
      %v7670 = vmul.f32 %v7559, 1.442695
      %v7671 = vpow.pop %v7670
      %v7672 = vmul.f32 %v7560, 1.442695
      %v7673 = vpow.pop %v7672
      %v7674 = vmul.f32 %v7561, 1.442695
      %v7675 = vpow.pop %v7674
      %v7676 = vmul.f32 %v7562, 1.442695
      %v7677 = vpow.pop %v7676
      %v7678 = vmul.f32 %v7563, 1.442695
      %v7679 = vpow.pop %v7678
      %v7680 = vmul.f32 %v7564, 1.442695
      %v7681 = vpow.pop %v7680
      %v7682 = vmul.f32 %v7565, 1.442695
      %v7683 = vpow.pop %v7682
      %v7684 = vmul.f32 %v7566, 1.442695
      %v7685 = vpow.pop %v7684
      %v7686 = vmul.f32 %v7567, 1.442695
      %v7687 = vpow.pop %v7686
      %v7688 = vmul.f32 %v7568, 1.442695
      %v7689 = vpow.pop %v7688
      %v7690 = vmul.f32 %v7569, 1.442695
      %v7691 = vpow.pop %v7690
      %v7692 = vmul.f32 %v7570, 1.442695
      %v7693 = vpow.pop %v7692
      %v7694 = vmul.f32 %v7571, 1.442695
      %v7695 = vpow.pop %v7694
      %v7696 = vmul.f32 %v7572, 1.442695
      %v7697 = vpow.pop %v7696
      %v7698 = vmul.f32 %v7573, 1.442695
      %v7699 = vpow.pop %v7698
      %v7700 = vmul.f32 %v7574, 1.442695
      %v7701 = vpow.pop %v7700
      %v7702 = vmul.f32 %v7575, 1.442695
      %v7703 = vpow.pop %v7702
      %v7704 = vsel %vm1092, %v7577, 0.0
      %7705 = vadd.xlane.f32.xlu0 %v7704
      %v7706 = vpop.xlane.xlu0 %7705
      %v7707 = vsel %vm1092, %v7579, 0.0
      %7708 = vadd.xlane.f32.xlu0 %v7707
      %v7709 = vpop.xlane.xlu0 %7708
      %v7710 = vsel %vm1092, %v7581, 0.0
      %7711 = vadd.xlane.f32.xlu0 %v7710
      %v7712 = vpop.xlane.xlu0 %7711
      %v7713 = vsel %vm1092, %v7583, 0.0
      %7714 = vadd.xlane.f32.xlu0 %v7713
      %v7715 = vpop.xlane.xlu0 %7714
      %v7716 = vsel %vm1092, %v7585, 0.0
      %7717 = vadd.xlane.f32.xlu0 %v7716
      %v7718 = vpop.xlane.xlu0 %7717
      %v7719 = vsel %vm1092, %v7587, 0.0
      %7720 = vadd.xlane.f32.xlu0 %v7719
      %v7721 = vpop.xlane.xlu0 %7720
      %v7722 = vsel %vm1092, %v7589, 0.0
      %7723 = vadd.xlane.f32.xlu0 %v7722
      %v7724 = vpop.xlane.xlu0 %7723
      %v7725 = vsel %vm1092, %v7591, 0.0
      %7726 = vadd.xlane.f32.xlu0 %v7725
      %v7727 = vpop.xlane.xlu0 %7726
      %v7728 = vsel %vm1092, %v7593, 0.0
      %7729 = vadd.xlane.f32.xlu0 %v7728
      %v7730 = vpop.xlane.xlu0 %7729
      %v7731 = vsel %vm1092, %v7595, 0.0
      %7732 = vadd.xlane.f32.xlu0 %v7731
      %v7733 = vpop.xlane.xlu0 %7732
      %v7734 = vsel %vm1092, %v7597, 0.0
      %7735 = vadd.xlane.f32.xlu0 %v7734
      %v7736 = vpop.xlane.xlu0 %7735
      %v7737 = vsel %vm1092, %v7599, 0.0
      %7738 = vadd.xlane.f32.xlu0 %v7737
      %v7739 = vpop.xlane.xlu0 %7738
      %v7740 = vsel %vm1092, %v7601, 0.0
      %7741 = vadd.xlane.f32.xlu0 %v7740
      %v7742 = vpop.xlane.xlu0 %7741
      %v7743 = vsel %vm1092, %v7603, 0.0
      %7744 = vadd.xlane.f32.xlu0 %v7743
      %v7745 = vpop.xlane.xlu0 %7744
      %v7746 = vsel %vm1092, %v7605, 0.0
      %7747 = vadd.xlane.f32.xlu0 %v7746
      %v7748 = vpop.xlane.xlu0 %7747
      %v7749 = vsel %vm1092, %v7607, 0.0
      %7750 = vadd.xlane.f32.xlu0 %v7749
      %v7751 = vpop.xlane.xlu0 %7750
      %v7752 = vsel %vm1092, %v7609, 0.0
      %7753 = vadd.xlane.f32.xlu0 %v7752
      %v7754 = vpop.xlane.xlu0 %7753
      %v7755 = vsel %vm1092, %v7611, 0.0
      %7756 = vadd.xlane.f32.xlu0 %v7755
      %v7757 = vpop.xlane.xlu0 %7756
      %v7758 = vsel %vm1092, %v7613, 0.0
      %7759 = vadd.xlane.f32.xlu0 %v7758
      %v7760 = vpop.xlane.xlu0 %7759
      %v7761 = vsel %vm1092, %v7615, 0.0
      %7762 = vadd.xlane.f32.xlu0 %v7761
      %v7763 = vpop.xlane.xlu0 %7762
      %v7764 = vsel %vm1092, %v7617, 0.0
      %7765 = vadd.xlane.f32.xlu0 %v7764
      %v7766 = vpop.xlane.xlu0 %7765
      %v7767 = vsel %vm1092, %v7619, 0.0
      %7768 = vadd.xlane.f32.xlu0 %v7767
      %v7769 = vpop.xlane.xlu0 %7768
      %v7770 = vsel %vm1092, %v7621, 0.0
      %7771 = vadd.xlane.f32.xlu0 %v7770
      %v7772 = vpop.xlane.xlu0 %7771
      %v7773 = vsel %vm1092, %v7623, 0.0
      %7774 = vadd.xlane.f32.xlu0 %v7773
      %v7775 = vpop.xlane.xlu0 %7774
      %v7776 = vsel %vm1092, %v7625, 0.0
      %7777 = vadd.xlane.f32.xlu0 %v7776
      %v7778 = vpop.xlane.xlu0 %7777
      %v7779 = vsel %vm1092, %v7627, 0.0
      %7780 = vadd.xlane.f32.xlu0 %v7779
      %v7781 = vpop.xlane.xlu0 %7780
      %v7782 = vsel %vm1092, %v7629, 0.0
      %7783 = vadd.xlane.f32.xlu0 %v7782
      %v7784 = vpop.xlane.xlu0 %7783
      %v7785 = vsel %vm1092, %v7631, 0.0
      %7786 = vadd.xlane.f32.xlu0 %v7785
      %v7787 = vpop.xlane.xlu0 %7786
      %v7788 = vsel %vm1092, %v7633, 0.0
      %7789 = vadd.xlane.f32.xlu0 %v7788
      %v7790 = vpop.xlane.xlu0 %7789
      %v7791 = vsel %vm1092, %v7635, 0.0
      %7792 = vadd.xlane.f32.xlu0 %v7791
      %v7793 = vpop.xlane.xlu0 %7792
      %v7794 = vsel %vm1092, %v7637, 0.0
      %7795 = vadd.xlane.f32.xlu0 %v7794
      %v7796 = vpop.xlane.xlu0 %7795
      %v7797 = vsel %vm1092, %v7639, 0.0
      %7798 = vadd.xlane.f32.xlu0 %v7797
      %v7799 = vpop.xlane.xlu0 %7798
      %v7800 = vsel %vm1092, %v7641, 0.0
      %7801 = vadd.xlane.f32.xlu0 %v7800
      %v7802 = vpop.xlane.xlu0 %7801
      %v7803 = vsel %vm1092, %v7643, 0.0
      %7804 = vadd.xlane.f32.xlu0 %v7803
      %v7805 = vpop.xlane.xlu0 %7804
      %v7806 = vsel %vm1092, %v7645, 0.0
      %7807 = vadd.xlane.f32.xlu0 %v7806
      %v7808 = vpop.xlane.xlu0 %7807
      %v7809 = vsel %vm1092, %v7647, 0.0
      %7810 = vadd.xlane.f32.xlu0 %v7809
      %v7811 = vpop.xlane.xlu0 %7810
      %v7812 = vsel %vm1092, %v7649, 0.0
      %7813 = vadd.xlane.f32.xlu0 %v7812
      %v7814 = vpop.xlane.xlu0 %7813
      %v7815 = vsel %vm1092, %v7651, 0.0
      %7816 = vadd.xlane.f32.xlu0 %v7815
      %v7817 = vpop.xlane.xlu0 %7816
      %v7818 = vsel %vm1092, %v7653, 0.0
      %7819 = vadd.xlane.f32.xlu0 %v7818
      %v7820 = vpop.xlane.xlu0 %7819
      %v7821 = vsel %vm1092, %v7655, 0.0
      %7822 = vadd.xlane.f32.xlu0 %v7821
      %v7823 = vpop.xlane.xlu0 %7822
      %v7824 = vsel %vm1092, %v7657, 0.0
      %7825 = vadd.xlane.f32.xlu0 %v7824
      %v7826 = vpop.xlane.xlu0 %7825
      %v7827 = vsel %vm1092, %v7659, 0.0
      %7828 = vadd.xlane.f32.xlu0 %v7827
      %v7829 = vpop.xlane.xlu0 %7828
      %v7830 = vsel %vm1092, %v7661, 0.0
      %7831 = vadd.xlane.f32.xlu0 %v7830
      %v7832 = vpop.xlane.xlu0 %7831
      %v7833 = vsel %vm1092, %v7663, 0.0
      %7834 = vadd.xlane.f32.xlu0 %v7833
      %v7835 = vpop.xlane.xlu0 %7834
      %v7836 = vsel %vm1092, %v7665, 0.0
      %7837 = vadd.xlane.f32.xlu0 %v7836
      %v7838 = vpop.xlane.xlu0 %7837
      %v7839 = vsel %vm1092, %v7667, 0.0
      %7840 = vadd.xlane.f32.xlu0 %v7839
      %v7841 = vpop.xlane.xlu0 %7840
      %v7842 = vsel %vm1092, %v7669, 0.0
      %7843 = vadd.xlane.f32.xlu0 %v7842
      %v7844 = vpop.xlane.xlu0 %7843
      %v7845 = vsel %vm1092, %v7671, 0.0
      %7846 = vadd.xlane.f32.xlu0 %v7845
      %v7847 = vpop.xlane.xlu0 %7846
      %v7848 = vsel %vm1092, %v7673, 0.0
      %7849 = vadd.xlane.f32.xlu0 %v7848
      %v7850 = vpop.xlane.xlu0 %7849
      %v7851 = vsel %vm1092, %v7675, 0.0
      %7852 = vadd.xlane.f32.xlu0 %v7851
      %v7853 = vpop.xlane.xlu0 %7852
      %v7854 = vsel %vm1092, %v7677, 0.0
      %7855 = vadd.xlane.f32.xlu0 %v7854
      %v7856 = vpop.xlane.xlu0 %7855
      %v7857 = vsel %vm1092, %v7679, 0.0
      %7858 = vadd.xlane.f32.xlu0 %v7857
      %v7859 = vpop.xlane.xlu0 %7858
      %v7860 = vsel %vm1092, %v7681, 0.0
      %7861 = vadd.xlane.f32.xlu0 %v7860
      %v7862 = vpop.xlane.xlu0 %7861
      %v7863 = vsel %vm1092, %v7683, 0.0
      %7864 = vadd.xlane.f32.xlu0 %v7863
      %v7865 = vpop.xlane.xlu0 %7864
      %v7866 = vsel %vm1092, %v7685, 0.0
      %7867 = vadd.xlane.f32.xlu0 %v7866
      %v7868 = vpop.xlane.xlu0 %7867
      %v7869 = vsel %vm1092, %v7687, 0.0
      %7870 = vadd.xlane.f32.xlu0 %v7869
      %v7871 = vpop.xlane.xlu0 %7870
      %v7872 = vsel %vm1092, %v7689, 0.0
      %7873 = vadd.xlane.f32.xlu0 %v7872
      %v7874 = vpop.xlane.xlu0 %7873
      %v7875 = vsel %vm1092, %v7691, 0.0
      %7876 = vadd.xlane.f32.xlu0 %v7875
      %v7877 = vpop.xlane.xlu0 %7876
      %v7878 = vsel %vm1092, %v7693, 0.0
      %7879 = vadd.xlane.f32.xlu0 %v7878
      %v7880 = vpop.xlane.xlu0 %7879
      %v7881 = vsel %vm1092, %v7695, 0.0
      %7882 = vadd.xlane.f32.xlu0 %v7881
      %v7883 = vpop.xlane.xlu0 %7882
      %v7884 = vsel %vm1092, %v7697, 0.0
      %7885 = vadd.xlane.f32.xlu0 %v7884
      %v7886 = vpop.xlane.xlu0 %7885
      %v7887 = vsel %vm1092, %v7699, 0.0
      %7888 = vadd.xlane.f32.xlu0 %v7887
      %v7889 = vpop.xlane.xlu0 %7888
      %v7890 = vsel %vm1092, %v7701, 0.0
      %7891 = vadd.xlane.f32.xlu0 %v7890
      %v7892 = vpop.xlane.xlu0 %7891
      %v7893 = vsel %vm1092, %v7703, 0.0
      %7894 = vadd.xlane.f32.xlu0 %v7893
      %v7895 = vpop.xlane.xlu0 %7894
      %v7896 = vrcp.pop %v7706
      %v7897 = vrcp.pop %v7709
      %v7898 = vrcp.pop %v7712
      %v7899 = vrcp.pop %v7715
      %v7900 = vrcp.pop %v7718
      %v7901 = vrcp.pop %v7721
      %v7902 = vrcp.pop %v7724
      %v7903 = vrcp.pop %v7727
      %v7904 = vrcp.pop %v7730
      %v7905 = vrcp.pop %v7733
      %v7906 = vrcp.pop %v7736
      %v7907 = vrcp.pop %v7739
      %v7908 = vrcp.pop %v7742
      %v7909 = vrcp.pop %v7745
      %v7910 = vrcp.pop %v7748
      %v7911 = vrcp.pop %v7751
      %v7912 = vrcp.pop %v7754
      %v7913 = vrcp.pop %v7757
      %v7914 = vrcp.pop %v7760
      %v7915 = vrcp.pop %v7763
      %v7916 = vrcp.pop %v7766
      %v7917 = vrcp.pop %v7769
      %v7918 = vrcp.pop %v7772
      %v7919 = vrcp.pop %v7775
      %v7920 = vrcp.pop %v7778
      %v7921 = vrcp.pop %v7781
      %v7922 = vrcp.pop %v7784
      %v7923 = vrcp.pop %v7787
      %v7924 = vrcp.pop %v7790
      %v7925 = vrcp.pop %v7793
      %v7926 = vrcp.pop %v7796
      %v7927 = vrcp.pop %v7799
      %v7928 = vrcp.pop %v7802
      %v7929 = vrcp.pop %v7805
      %v7930 = vrcp.pop %v7808
      %v7931 = vrcp.pop %v7811
      %v7932 = vrcp.pop %v7814
      %v7933 = vrcp.pop %v7817
      %v7934 = vrcp.pop %v7820
      %v7935 = vrcp.pop %v7823
      %v7936 = vrcp.pop %v7826
      %v7937 = vrcp.pop %v7829
      %v7938 = vrcp.pop %v7832
      %v7939 = vrcp.pop %v7835
      %v7940 = vrcp.pop %v7838
      %v7941 = vrcp.pop %v7841
      %v7942 = vrcp.pop %v7844
      %v7943 = vrcp.pop %v7847
      %v7944 = vrcp.pop %v7850
      %v7945 = vrcp.pop %v7853
      %v7946 = vrcp.pop %v7856
      %v7947 = vrcp.pop %v7859
      %v7948 = vrcp.pop %v7862
      %v7949 = vrcp.pop %v7865
      %v7950 = vrcp.pop %v7868
      %v7951 = vrcp.pop %v7871
      %v7952 = vrcp.pop %v7874
      %v7953 = vrcp.pop %v7877
      %v7954 = vrcp.pop %v7880
      %v7955 = vrcp.pop %v7883
      %v7956 = vrcp.pop %v7886
      %v7957 = vrcp.pop %v7889
      %v7958 = vrcp.pop %v7892
      %v7959 = vrcp.pop %v7895
      %v7960 = vmul.f32 %v7577, %v7896
      %v7961 = vmul.f32 %v7579, %v7897
      %v7962 = vmul.f32 %v7581, %v7898
      %v7963 = vmul.f32 %v7583, %v7899
      %v7964 = vmul.f32 %v7585, %v7900
      %v7965 = vmul.f32 %v7587, %v7901
      %v7966 = vmul.f32 %v7589, %v7902
      %v7967 = vmul.f32 %v7591, %v7903
      %v7968 = vmul.f32 %v7593, %v7904
      %v7969 = vmul.f32 %v7595, %v7905
      %v7970 = vmul.f32 %v7597, %v7906
      %v7971 = vmul.f32 %v7599, %v7907
      %v7972 = vmul.f32 %v7601, %v7908
      %v7973 = vmul.f32 %v7603, %v7909
      %v7974 = vmul.f32 %v7605, %v7910
      %v7975 = vmul.f32 %v7607, %v7911
      %v7976 = vmul.f32 %v7609, %v7912
      %v7977 = vmul.f32 %v7611, %v7913
      %v7978 = vmul.f32 %v7613, %v7914
      %v7979 = vmul.f32 %v7615, %v7915
      %v7980 = vmul.f32 %v7617, %v7916
      %v7981 = vmul.f32 %v7619, %v7917
      %v7982 = vmul.f32 %v7621, %v7918
      %v7983 = vmul.f32 %v7623, %v7919
      %v7984 = vmul.f32 %v7625, %v7920
      %v7985 = vmul.f32 %v7627, %v7921
      %v7986 = vmul.f32 %v7629, %v7922
      %v7987 = vmul.f32 %v7631, %v7923
      %v7988 = vmul.f32 %v7633, %v7924
      %v7989 = vmul.f32 %v7635, %v7925
      %v7990 = vmul.f32 %v7637, %v7926
      %v7991 = vmul.f32 %v7639, %v7927
      %v7992 = vmul.f32 %v7641, %v7928
      %v7993 = vmul.f32 %v7643, %v7929
      %v7994 = vmul.f32 %v7645, %v7930
      %v7995 = vmul.f32 %v7647, %v7931
      %v7996 = vmul.f32 %v7649, %v7932
      %v7997 = vmul.f32 %v7651, %v7933
      %v7998 = vmul.f32 %v7653, %v7934
      %v7999 = vmul.f32 %v7655, %v7935
      %v8000 = vmul.f32 %v7657, %v7936
      %v8001 = vmul.f32 %v7659, %v7937
      %v8002 = vmul.f32 %v7661, %v7938
      %v8003 = vmul.f32 %v7663, %v7939
      %v8004 = vmul.f32 %v7665, %v7940
      %v8005 = vmul.f32 %v7667, %v7941
      %v8006 = vmul.f32 %v7669, %v7942
      %v8007 = vmul.f32 %v7671, %v7943
      %v8008 = vmul.f32 %v7673, %v7944
      %v8009 = vmul.f32 %v7675, %v7945
      %v8010 = vmul.f32 %v7677, %v7946
      %v8011 = vmul.f32 %v7679, %v7947
      %v8012 = vmul.f32 %v7681, %v7948
      %v8013 = vmul.f32 %v7683, %v7949
      %v8014 = vmul.f32 %v7685, %v7950
      %v8015 = vmul.f32 %v7687, %v7951
      %v8016 = vmul.f32 %v7689, %v7952
      %v8017 = vmul.f32 %v7691, %v7953
      %v8018 = vmul.f32 %v7693, %v7954
      %v8019 = vmul.f32 %v7695, %v7955
      %v8020 = vmul.f32 %v7697, %v7956
      %v8021 = vmul.f32 %v7699, %v7957
      %v8022 = vmul.f32 %v7701, %v7958
      %v8023 = vmul.f32 %v7703, %v7959
      %v8024 = vpack.c.bf16 %v7960, %v7960
      %v8025 = vpack.c.bf16 %v7961, %v7961
      %v8026 = vpack.c.bf16 %v7962, %v7962
      %v8027 = vpack.c.bf16 %v7963, %v7963
      %v8028 = vpack.c.bf16 %v7964, %v7964
      %v8029 = vpack.c.bf16 %v7965, %v7965
      %v8030 = vpack.c.bf16 %v7966, %v7966
      %v8031 = vpack.c.bf16 %v7967, %v7967
      %v8032 = vpack.c.bf16 %v7968, %v7968
      %v8033 = vpack.c.bf16 %v7969, %v7969
      %v8034 = vpack.c.bf16 %v7970, %v7970
      %v8035 = vpack.c.bf16 %v7971, %v7971
      %v8036 = vpack.c.bf16 %v7972, %v7972
      %v8037 = vpack.c.bf16 %v7973, %v7973
      %v8038 = vpack.c.bf16 %v7974, %v7974
      %v8039 = vpack.c.bf16 %v7975, %v7975
      %v8040 = vpack.c.bf16 %v7976, %v7976
      %v8041 = vpack.c.bf16 %v7977, %v7977
      %v8042 = vpack.c.bf16 %v7978, %v7978
      %v8043 = vpack.c.bf16 %v7979, %v7979
      %v8044 = vpack.c.bf16 %v7980, %v7980
      %v8045 = vpack.c.bf16 %v7981, %v7981
      %v8046 = vpack.c.bf16 %v7982, %v7982
      %v8047 = vpack.c.bf16 %v7983, %v7983
      %v8048 = vpack.c.bf16 %v7984, %v7984
      %v8049 = vpack.c.bf16 %v7985, %v7985
      %v8050 = vpack.c.bf16 %v7986, %v7986
      %v8051 = vpack.c.bf16 %v7987, %v7987
      %v8052 = vpack.c.bf16 %v7988, %v7988
      %v8053 = vpack.c.bf16 %v7989, %v7989
      %v8054 = vpack.c.bf16 %v7990, %v7990
      %v8055 = vpack.c.bf16 %v7991, %v7991
      %v8056 = vpack.c.bf16 %v7992, %v7992
      %v8057 = vpack.c.bf16 %v7993, %v7993
      %v8058 = vpack.c.bf16 %v7994, %v7994
      %v8059 = vpack.c.bf16 %v7995, %v7995
      %v8060 = vpack.c.bf16 %v7996, %v7996
      %v8061 = vpack.c.bf16 %v7997, %v7997
      %v8062 = vpack.c.bf16 %v7998, %v7998
      %v8063 = vpack.c.bf16 %v7999, %v7999
      %v8064 = vpack.c.bf16 %v8000, %v8000
      %v8065 = vpack.c.bf16 %v8001, %v8001
      %v8066 = vpack.c.bf16 %v8002, %v8002
      %v8067 = vpack.c.bf16 %v8003, %v8003
      %v8068 = vpack.c.bf16 %v8004, %v8004
      %v8069 = vpack.c.bf16 %v8005, %v8005
      %v8070 = vpack.c.bf16 %v8006, %v8006
      %v8071 = vpack.c.bf16 %v8007, %v8007
      %v8072 = vpack.c.bf16 %v8008, %v8008
      %v8073 = vpack.c.bf16 %v8009, %v8009
      %v8074 = vpack.c.bf16 %v8010, %v8010
      %v8075 = vpack.c.bf16 %v8011, %v8011
      %v8076 = vpack.c.bf16 %v8012, %v8012
      %v8077 = vpack.c.bf16 %v8013, %v8013
      %v8078 = vpack.c.bf16 %v8014, %v8014
      %v8079 = vpack.c.bf16 %v8015, %v8015
      %v8080 = vpack.c.bf16 %v8016, %v8016
      %v8081 = vpack.c.bf16 %v8017, %v8017
      %v8082 = vpack.c.bf16 %v8018, %v8018
      %v8083 = vpack.c.bf16 %v8019, %v8019
      %v8084 = vpack.c.bf16 %v8020, %v8020
      %v8085 = vpack.c.bf16 %v8021, %v8021
      %v8086 = vpack.c.bf16 %v8022, %v8022
      %v8087 = vpack.c.bf16 %v8023, %v8023
      %v8090 = vunpack.c.l.b16 %v8024
      %v8091 = vunpack.c.l.b16 %v8025
      %v8092 = vpack.c.b16 %v8091, %v8090
      %8093 = vrot.lane.b32.xlu0 %v2727, 112
      %v8094 = vpop.permute.xlu0 %8093
      %v8097 = vsel %vm1092, %v8092, 0
      %8099 = vmatpush.bf16.msra.mxu0 0
      %8100 = vmatpush.bf16.msra.mxu0 0
      %8101 = vmatpush.bf16.msra.mxu0 0
      %8102 = vmatpush.bf16.msra.mxu0 0
      %8103 = vmatpush.bf16.msra.mxu0 0
      %8104 = vmatpush.bf16.msra.mxu0 0
      %8105 = vmatpush.bf16.msra.mxu0 0
      %8106 = vmatpush.bf16.msra.mxu0 %v8094
      %8107 = vmatmul.bf16.gmra.mxu0 %v8097
      %v8108 = vpop.f32.mrf.mxu0
      %v8109 = vadd.f32 0.0, %v8108
      %v8110 = vpop.f32.mrf.mxu0
      %v8111 = vadd.f32 0.0, %v8110
      %8112 = vdwg.mxu0
      %v8115 = vunpack.c.l.b16 %v8026
      %v8116 = vunpack.c.l.b16 %v8027
      %v8117 = vpack.c.b16 %v8116, %v8115
      %8118 = vrot.lane.b32.xlu0 %v2755, 112
      %v8119 = vpop.permute.xlu0 %8118
      %v8122 = vsel %vm1092, %v8117, 0
      %8124 = vmatpush.bf16.msra.mxu0 0
      %8125 = vmatpush.bf16.msra.mxu0 0
      %8126 = vmatpush.bf16.msra.mxu0 0
      %8127 = vmatpush.bf16.msra.mxu0 0
      %8128 = vmatpush.bf16.msra.mxu0 0
      %8129 = vmatpush.bf16.msra.mxu0 0
      %8130 = vmatpush.bf16.msra.mxu0 0
      %8131 = vmatpush.bf16.msra.mxu0 %v8119
      %8132 = vmatmul.bf16.gmra.mxu0 %v8122
      %v8133 = vpop.f32.mrf.mxu0
      %v8134 = vadd.f32 0.0, %v8133
      %v8135 = vpop.f32.mrf.mxu0
      %v8136 = vadd.f32 0.0, %v8135
      %8137 = vdwg.mxu0
      %v8140 = vunpack.c.l.b16 %v8028
      %v8141 = vunpack.c.l.b16 %v8029
      %v8142 = vpack.c.b16 %v8141, %v8140
      %8143 = vrot.lane.b32.xlu0 %v2783, 112
      %v8144 = vpop.permute.xlu0 %8143
      %v8147 = vsel %vm1092, %v8142, 0
      %8149 = vmatpush.bf16.msra.mxu0 0
      %8150 = vmatpush.bf16.msra.mxu0 0
      %8151 = vmatpush.bf16.msra.mxu0 0
      %8152 = vmatpush.bf16.msra.mxu0 0
      %8153 = vmatpush.bf16.msra.mxu0 0
      %8154 = vmatpush.bf16.msra.mxu0 0
      %8155 = vmatpush.bf16.msra.mxu0 0
      %8156 = vmatpush.bf16.msra.mxu0 %v8144
      %8157 = vmatmul.bf16.gmra.mxu0 %v8147
      %v8158 = vpop.f32.mrf.mxu0
      %v8159 = vadd.f32 0.0, %v8158
      %v8160 = vpop.f32.mrf.mxu0
      %v8161 = vadd.f32 0.0, %v8160
      %8162 = vdwg.mxu0
      %v8165 = vunpack.c.l.b16 %v8030
      %v8166 = vunpack.c.l.b16 %v8031
      %v8167 = vpack.c.b16 %v8166, %v8165
      %8168 = vrot.lane.b32.xlu0 %v2811, 112
      %v8169 = vpop.permute.xlu0 %8168
      %v8172 = vsel %vm1092, %v8167, 0
      %8174 = vmatpush.bf16.msra.mxu0 0
      %8175 = vmatpush.bf16.msra.mxu0 0
      %8176 = vmatpush.bf16.msra.mxu0 0
      %8177 = vmatpush.bf16.msra.mxu0 0
      %8178 = vmatpush.bf16.msra.mxu0 0
      %8179 = vmatpush.bf16.msra.mxu0 0
      %8180 = vmatpush.bf16.msra.mxu0 0
      %8181 = vmatpush.bf16.msra.mxu0 %v8169
      %8182 = vmatmul.bf16.gmra.mxu0 %v8172
      %v8183 = vpop.f32.mrf.mxu0
      %v8184 = vadd.f32 0.0, %v8183
      %v8185 = vpop.f32.mrf.mxu0
      %v8186 = vadd.f32 0.0, %v8185
      %8187 = vdwg.mxu0
      %v8190 = vunpack.c.l.b16 %v8032
      %v8191 = vunpack.c.l.b16 %v8033
      %v8192 = vpack.c.b16 %v8191, %v8190
      %8193 = vrot.lane.b32.xlu0 %v2839, 112
      %v8194 = vpop.permute.xlu0 %8193
      %v8197 = vsel %vm1092, %v8192, 0
      %8199 = vmatpush.bf16.msra.mxu0 0
      %8200 = vmatpush.bf16.msra.mxu0 0
      %8201 = vmatpush.bf16.msra.mxu0 0
      %8202 = vmatpush.bf16.msra.mxu0 0
      %8203 = vmatpush.bf16.msra.mxu0 0
      %8204 = vmatpush.bf16.msra.mxu0 0
      %8205 = vmatpush.bf16.msra.mxu0 0
      %8206 = vmatpush.bf16.msra.mxu0 %v8194
      %8207 = vmatmul.bf16.gmra.mxu0 %v8197
      %v8208 = vpop.f32.mrf.mxu0
      %v8209 = vadd.f32 0.0, %v8208
      %v8210 = vpop.f32.mrf.mxu0
      %v8211 = vadd.f32 0.0, %v8210
      %8212 = vdwg.mxu0
      %v8215 = vunpack.c.l.b16 %v8034
      %v8216 = vunpack.c.l.b16 %v8035
      %v8217 = vpack.c.b16 %v8216, %v8215
      %8218 = vrot.lane.b32.xlu0 %v2867, 112
      %v8219 = vpop.permute.xlu0 %8218
      %v8222 = vsel %vm1092, %v8217, 0
      %8224 = vmatpush.bf16.msra.mxu0 0
      %8225 = vmatpush.bf16.msra.mxu0 0
      %8226 = vmatpush.bf16.msra.mxu0 0
      %8227 = vmatpush.bf16.msra.mxu0 0
      %8228 = vmatpush.bf16.msra.mxu0 0
      %8229 = vmatpush.bf16.msra.mxu0 0
      %8230 = vmatpush.bf16.msra.mxu0 0
      %8231 = vmatpush.bf16.msra.mxu0 %v8219
      %8232 = vmatmul.bf16.gmra.mxu0 %v8222
      %v8233 = vpop.f32.mrf.mxu0
      %v8234 = vadd.f32 0.0, %v8233
      %v8235 = vpop.f32.mrf.mxu0
      %v8236 = vadd.f32 0.0, %v8235
      %8237 = vdwg.mxu0
      %v8240 = vunpack.c.l.b16 %v8036
      %v8241 = vunpack.c.l.b16 %v8037
      %v8242 = vpack.c.b16 %v8241, %v8240
      %8243 = vrot.lane.b32.xlu0 %v2895, 112
      %v8244 = vpop.permute.xlu0 %8243
      %v8247 = vsel %vm1092, %v8242, 0
      %8249 = vmatpush.bf16.msra.mxu0 0
      %8250 = vmatpush.bf16.msra.mxu0 0
      %8251 = vmatpush.bf16.msra.mxu0 0
      %8252 = vmatpush.bf16.msra.mxu0 0
      %8253 = vmatpush.bf16.msra.mxu0 0
      %8254 = vmatpush.bf16.msra.mxu0 0
      %8255 = vmatpush.bf16.msra.mxu0 0
      %8256 = vmatpush.bf16.msra.mxu0 %v8244
      %8257 = vmatmul.bf16.gmra.mxu0 %v8247
      %v8258 = vpop.f32.mrf.mxu0
      %v8259 = vadd.f32 0.0, %v8258
      %v8260 = vpop.f32.mrf.mxu0
      %v8261 = vadd.f32 0.0, %v8260
      %8262 = vdwg.mxu0
      %v8265 = vunpack.c.l.b16 %v8038
      %v8266 = vunpack.c.l.b16 %v8039
      %v8267 = vpack.c.b16 %v8266, %v8265
      %8268 = vrot.lane.b32.xlu0 %v2923, 112
      %v8269 = vpop.permute.xlu0 %8268
      %v8272 = vsel %vm1092, %v8267, 0
      %8274 = vmatpush.bf16.msra.mxu0 0
      %8275 = vmatpush.bf16.msra.mxu0 0
      %8276 = vmatpush.bf16.msra.mxu0 0
      %8277 = vmatpush.bf16.msra.mxu0 0
      %8278 = vmatpush.bf16.msra.mxu0 0
      %8279 = vmatpush.bf16.msra.mxu0 0
      %8280 = vmatpush.bf16.msra.mxu0 0
      %8281 = vmatpush.bf16.msra.mxu0 %v8269
      %8282 = vmatmul.bf16.gmra.mxu0 %v8272
      %v8283 = vpop.f32.mrf.mxu0
      %v8284 = vadd.f32 0.0, %v8283
      %v8285 = vpop.f32.mrf.mxu0
      %v8286 = vadd.f32 0.0, %v8285
      %8287 = vdwg.mxu0
      %v8290 = vunpack.c.l.b16 %v8040
      %v8291 = vunpack.c.l.b16 %v8041
      %v8292 = vpack.c.b16 %v8291, %v8290
      %8293 = vrot.lane.b32.xlu0 %v2951, 112
      %v8294 = vpop.permute.xlu0 %8293
      %v8297 = vsel %vm1092, %v8292, 0
      %8299 = vmatpush.bf16.msra.mxu0 0
      %8300 = vmatpush.bf16.msra.mxu0 0
      %8301 = vmatpush.bf16.msra.mxu0 0
      %8302 = vmatpush.bf16.msra.mxu0 0
      %8303 = vmatpush.bf16.msra.mxu0 0
      %8304 = vmatpush.bf16.msra.mxu0 0
      %8305 = vmatpush.bf16.msra.mxu0 0
      %8306 = vmatpush.bf16.msra.mxu0 %v8294
      %8307 = vmatmul.bf16.gmra.mxu0 %v8297
      %v8308 = vpop.f32.mrf.mxu0
      %v8309 = vadd.f32 0.0, %v8308
      %v8310 = vpop.f32.mrf.mxu0
      %v8311 = vadd.f32 0.0, %v8310
      %8312 = vdwg.mxu0
      %v8315 = vunpack.c.l.b16 %v8042
      %v8316 = vunpack.c.l.b16 %v8043
      %v8317 = vpack.c.b16 %v8316, %v8315
      %8318 = vrot.lane.b32.xlu0 %v2979, 112
      %v8319 = vpop.permute.xlu0 %8318
      %v8322 = vsel %vm1092, %v8317, 0
      %8324 = vmatpush.bf16.msra.mxu0 0
      %8325 = vmatpush.bf16.msra.mxu0 0
      %8326 = vmatpush.bf16.msra.mxu0 0
      %8327 = vmatpush.bf16.msra.mxu0 0
      %8328 = vmatpush.bf16.msra.mxu0 0
      %8329 = vmatpush.bf16.msra.mxu0 0
      %8330 = vmatpush.bf16.msra.mxu0 0
      %8331 = vmatpush.bf16.msra.mxu0 %v8319
      %8332 = vmatmul.bf16.gmra.mxu0 %v8322
      %v8333 = vpop.f32.mrf.mxu0
      %v8334 = vadd.f32 0.0, %v8333
      %v8335 = vpop.f32.mrf.mxu0
      %v8336 = vadd.f32 0.0, %v8335
      %8337 = vdwg.mxu0
      %v8340 = vunpack.c.l.b16 %v8044
      %v8341 = vunpack.c.l.b16 %v8045
      %v8342 = vpack.c.b16 %v8341, %v8340
      %8343 = vrot.lane.b32.xlu0 %v3007, 112
      %v8344 = vpop.permute.xlu0 %8343
      %v8347 = vsel %vm1092, %v8342, 0
      %8349 = vmatpush.bf16.msra.mxu0 0
      %8350 = vmatpush.bf16.msra.mxu0 0
      %8351 = vmatpush.bf16.msra.mxu0 0
      %8352 = vmatpush.bf16.msra.mxu0 0
      %8353 = vmatpush.bf16.msra.mxu0 0
      %8354 = vmatpush.bf16.msra.mxu0 0
      %8355 = vmatpush.bf16.msra.mxu0 0
      %8356 = vmatpush.bf16.msra.mxu0 %v8344
      %8357 = vmatmul.bf16.gmra.mxu0 %v8347
      %v8358 = vpop.f32.mrf.mxu0
      %v8359 = vadd.f32 0.0, %v8358
      %v8360 = vpop.f32.mrf.mxu0
      %v8361 = vadd.f32 0.0, %v8360
      %8362 = vdwg.mxu0
      %v8365 = vunpack.c.l.b16 %v8046
      %v8366 = vunpack.c.l.b16 %v8047
      %v8367 = vpack.c.b16 %v8366, %v8365
      %8368 = vrot.lane.b32.xlu0 %v3035, 112
      %v8369 = vpop.permute.xlu0 %8368
      %v8372 = vsel %vm1092, %v8367, 0
      %8374 = vmatpush.bf16.msra.mxu0 0
      %8375 = vmatpush.bf16.msra.mxu0 0
      %8376 = vmatpush.bf16.msra.mxu0 0
      %8377 = vmatpush.bf16.msra.mxu0 0
      %8378 = vmatpush.bf16.msra.mxu0 0
      %8379 = vmatpush.bf16.msra.mxu0 0
      %8380 = vmatpush.bf16.msra.mxu0 0
      %8381 = vmatpush.bf16.msra.mxu0 %v8369
      %8382 = vmatmul.bf16.gmra.mxu0 %v8372
      %v8383 = vpop.f32.mrf.mxu0
      %v8384 = vadd.f32 0.0, %v8383
      %v8385 = vpop.f32.mrf.mxu0
      %v8386 = vadd.f32 0.0, %v8385
      %8387 = vdwg.mxu0
      %v8390 = vunpack.c.l.b16 %v8048
      %v8391 = vunpack.c.l.b16 %v8049
      %v8392 = vpack.c.b16 %v8391, %v8390
      %8393 = vrot.lane.b32.xlu0 %v3063, 112
      %v8394 = vpop.permute.xlu0 %8393
      %v8397 = vsel %vm1092, %v8392, 0
      %8399 = vmatpush.bf16.msra.mxu0 0
      %8400 = vmatpush.bf16.msra.mxu0 0
      %8401 = vmatpush.bf16.msra.mxu0 0
      %8402 = vmatpush.bf16.msra.mxu0 0
      %8403 = vmatpush.bf16.msra.mxu0 0
      %8404 = vmatpush.bf16.msra.mxu0 0
      %8405 = vmatpush.bf16.msra.mxu0 0
      %8406 = vmatpush.bf16.msra.mxu0 %v8394
      %8407 = vmatmul.bf16.gmra.mxu0 %v8397
      %v8408 = vpop.f32.mrf.mxu0
      %v8409 = vadd.f32 0.0, %v8408
      %v8410 = vpop.f32.mrf.mxu0
      %v8411 = vadd.f32 0.0, %v8410
      %8412 = vdwg.mxu0
      %v8415 = vunpack.c.l.b16 %v8050
      %v8416 = vunpack.c.l.b16 %v8051
      %v8417 = vpack.c.b16 %v8416, %v8415
      %8418 = vrot.lane.b32.xlu0 %v3091, 112
      %v8419 = vpop.permute.xlu0 %8418
      %v8422 = vsel %vm1092, %v8417, 0
      %8424 = vmatpush.bf16.msra.mxu0 0
      %8425 = vmatpush.bf16.msra.mxu0 0
      %8426 = vmatpush.bf16.msra.mxu0 0
      %8427 = vmatpush.bf16.msra.mxu0 0
      %8428 = vmatpush.bf16.msra.mxu0 0
      %8429 = vmatpush.bf16.msra.mxu0 0
      %8430 = vmatpush.bf16.msra.mxu0 0
      %8431 = vmatpush.bf16.msra.mxu0 %v8419
      %8432 = vmatmul.bf16.gmra.mxu0 %v8422
      %v8433 = vpop.f32.mrf.mxu0
      %v8434 = vadd.f32 0.0, %v8433
      %v8435 = vpop.f32.mrf.mxu0
      %v8436 = vadd.f32 0.0, %v8435
      %8437 = vdwg.mxu0
      %v8440 = vunpack.c.l.b16 %v8052
      %v8441 = vunpack.c.l.b16 %v8053
      %v8442 = vpack.c.b16 %v8441, %v8440
      %8443 = vrot.lane.b32.xlu0 %v3119, 112
      %v8444 = vpop.permute.xlu0 %8443
      %v8447 = vsel %vm1092, %v8442, 0
      %8449 = vmatpush.bf16.msra.mxu0 0
      %8450 = vmatpush.bf16.msra.mxu0 0
      %8451 = vmatpush.bf16.msra.mxu0 0
      %8452 = vmatpush.bf16.msra.mxu0 0
      %8453 = vmatpush.bf16.msra.mxu0 0
      %8454 = vmatpush.bf16.msra.mxu0 0
      %8455 = vmatpush.bf16.msra.mxu0 0
      %8456 = vmatpush.bf16.msra.mxu0 %v8444
      %8457 = vmatmul.bf16.gmra.mxu0 %v8447
      %v8458 = vpop.f32.mrf.mxu0
      %v8459 = vadd.f32 0.0, %v8458
      %v8460 = vpop.f32.mrf.mxu0
      %v8461 = vadd.f32 0.0, %v8460
      %8462 = vdwg.mxu0
      %v8465 = vunpack.c.l.b16 %v8054
      %v8466 = vunpack.c.l.b16 %v8055
      %v8467 = vpack.c.b16 %v8466, %v8465
      %8468 = vrot.lane.b32.xlu0 %v3147, 112
      %v8469 = vpop.permute.xlu0 %8468
      %v8472 = vsel %vm1092, %v8467, 0
      %8474 = vmatpush.bf16.msra.mxu0 0
      %8475 = vmatpush.bf16.msra.mxu0 0
      %8476 = vmatpush.bf16.msra.mxu0 0
      %8477 = vmatpush.bf16.msra.mxu0 0
      %8478 = vmatpush.bf16.msra.mxu0 0
      %8479 = vmatpush.bf16.msra.mxu0 0
      %8480 = vmatpush.bf16.msra.mxu0 0
      %8481 = vmatpush.bf16.msra.mxu0 %v8469
      %8482 = vmatmul.bf16.gmra.mxu0 %v8472
      %v8483 = vpop.f32.mrf.mxu0
      %v8484 = vadd.f32 0.0, %v8483
      %v8485 = vpop.f32.mrf.mxu0
      %v8486 = vadd.f32 0.0, %v8485
      %8487 = vdwg.mxu0
      %v8490 = vunpack.c.l.b16 %v8056
      %v8491 = vunpack.c.l.b16 %v8057
      %v8492 = vpack.c.b16 %v8491, %v8490
      %8493 = vrot.lane.b32.xlu0 %v3175, 112
      %v8494 = vpop.permute.xlu0 %8493
      %v8497 = vsel %vm1092, %v8492, 0
      %8499 = vmatpush.bf16.msra.mxu0 0
      %8500 = vmatpush.bf16.msra.mxu0 0
      %8501 = vmatpush.bf16.msra.mxu0 0
      %8502 = vmatpush.bf16.msra.mxu0 0
      %8503 = vmatpush.bf16.msra.mxu0 0
      %8504 = vmatpush.bf16.msra.mxu0 0
      %8505 = vmatpush.bf16.msra.mxu0 0
      %8506 = vmatpush.bf16.msra.mxu0 %v8494
      %8507 = vmatmul.bf16.gmra.mxu0 %v8497
      %v8508 = vpop.f32.mrf.mxu0
      %v8509 = vadd.f32 0.0, %v8508
      %v8510 = vpop.f32.mrf.mxu0
      %v8511 = vadd.f32 0.0, %v8510
      %8512 = vdwg.mxu0
      %v8515 = vunpack.c.l.b16 %v8058
      %v8516 = vunpack.c.l.b16 %v8059
      %v8517 = vpack.c.b16 %v8516, %v8515
      %8518 = vrot.lane.b32.xlu0 %v3203, 112
      %v8519 = vpop.permute.xlu0 %8518
      %v8522 = vsel %vm1092, %v8517, 0
      %8524 = vmatpush.bf16.msra.mxu0 0
      %8525 = vmatpush.bf16.msra.mxu0 0
      %8526 = vmatpush.bf16.msra.mxu0 0
      %8527 = vmatpush.bf16.msra.mxu0 0
      %8528 = vmatpush.bf16.msra.mxu0 0
      %8529 = vmatpush.bf16.msra.mxu0 0
      %8530 = vmatpush.bf16.msra.mxu0 0
      %8531 = vmatpush.bf16.msra.mxu0 %v8519
      %8532 = vmatmul.bf16.gmra.mxu0 %v8522
      %v8533 = vpop.f32.mrf.mxu0
      %v8534 = vadd.f32 0.0, %v8533
      %v8535 = vpop.f32.mrf.mxu0
      %v8536 = vadd.f32 0.0, %v8535
      %8537 = vdwg.mxu0
      %v8540 = vunpack.c.l.b16 %v8060
      %v8541 = vunpack.c.l.b16 %v8061
      %v8542 = vpack.c.b16 %v8541, %v8540
      %8543 = vrot.lane.b32.xlu0 %v3231, 112
      %v8544 = vpop.permute.xlu0 %8543
      %v8547 = vsel %vm1092, %v8542, 0
      %8549 = vmatpush.bf16.msra.mxu0 0
      %8550 = vmatpush.bf16.msra.mxu0 0
      %8551 = vmatpush.bf16.msra.mxu0 0
      %8552 = vmatpush.bf16.msra.mxu0 0
      %8553 = vmatpush.bf16.msra.mxu0 0
      %8554 = vmatpush.bf16.msra.mxu0 0
      %8555 = vmatpush.bf16.msra.mxu0 0
      %8556 = vmatpush.bf16.msra.mxu0 %v8544
      %8557 = vmatmul.bf16.gmra.mxu0 %v8547
      %v8558 = vpop.f32.mrf.mxu0
      %v8559 = vadd.f32 0.0, %v8558
      %v8560 = vpop.f32.mrf.mxu0
      %v8561 = vadd.f32 0.0, %v8560
      %8562 = vdwg.mxu0
      %v8565 = vunpack.c.l.b16 %v8062
      %v8566 = vunpack.c.l.b16 %v8063
      %v8567 = vpack.c.b16 %v8566, %v8565
      %8568 = vrot.lane.b32.xlu0 %v3259, 112
      %v8569 = vpop.permute.xlu0 %8568
      %v8572 = vsel %vm1092, %v8567, 0
      %8574 = vmatpush.bf16.msra.mxu0 0
      %8575 = vmatpush.bf16.msra.mxu0 0
      %8576 = vmatpush.bf16.msra.mxu0 0
      %8577 = vmatpush.bf16.msra.mxu0 0
      %8578 = vmatpush.bf16.msra.mxu0 0
      %8579 = vmatpush.bf16.msra.mxu0 0
      %8580 = vmatpush.bf16.msra.mxu0 0
      %8581 = vmatpush.bf16.msra.mxu0 %v8569
      %8582 = vmatmul.bf16.gmra.mxu0 %v8572
      %v8583 = vpop.f32.mrf.mxu0
      %v8584 = vadd.f32 0.0, %v8583
      %v8585 = vpop.f32.mrf.mxu0
      %v8586 = vadd.f32 0.0, %v8585
      %8587 = vdwg.mxu0
      %v8590 = vunpack.c.l.b16 %v8064
      %v8591 = vunpack.c.l.b16 %v8065
      %v8592 = vpack.c.b16 %v8591, %v8590
      %8593 = vrot.lane.b32.xlu0 %v3287, 112
      %v8594 = vpop.permute.xlu0 %8593
      %v8597 = vsel %vm1092, %v8592, 0
      %8599 = vmatpush.bf16.msra.mxu0 0
      %8600 = vmatpush.bf16.msra.mxu0 0
      %8601 = vmatpush.bf16.msra.mxu0 0
      %8602 = vmatpush.bf16.msra.mxu0 0
      %8603 = vmatpush.bf16.msra.mxu0 0
      %8604 = vmatpush.bf16.msra.mxu0 0
      %8605 = vmatpush.bf16.msra.mxu0 0
      %8606 = vmatpush.bf16.msra.mxu0 %v8594
      %8607 = vmatmul.bf16.gmra.mxu0 %v8597
      %v8608 = vpop.f32.mrf.mxu0
      %v8609 = vadd.f32 0.0, %v8608
      %v8610 = vpop.f32.mrf.mxu0
      %v8611 = vadd.f32 0.0, %v8610
      %8612 = vdwg.mxu0
      %v8615 = vunpack.c.l.b16 %v8066
      %v8616 = vunpack.c.l.b16 %v8067
      %v8617 = vpack.c.b16 %v8616, %v8615
      %8618 = vrot.lane.b32.xlu0 %v3315, 112
      %v8619 = vpop.permute.xlu0 %8618
      %v8622 = vsel %vm1092, %v8617, 0
      %8624 = vmatpush.bf16.msra.mxu0 0
      %8625 = vmatpush.bf16.msra.mxu0 0
      %8626 = vmatpush.bf16.msra.mxu0 0
      %8627 = vmatpush.bf16.msra.mxu0 0
      %8628 = vmatpush.bf16.msra.mxu0 0
      %8629 = vmatpush.bf16.msra.mxu0 0
      %8630 = vmatpush.bf16.msra.mxu0 0
      %8631 = vmatpush.bf16.msra.mxu0 %v8619
      %8632 = vmatmul.bf16.gmra.mxu0 %v8622
      %v8633 = vpop.f32.mrf.mxu0
      %v8634 = vadd.f32 0.0, %v8633
      %v8635 = vpop.f32.mrf.mxu0
      %v8636 = vadd.f32 0.0, %v8635
      %8637 = vdwg.mxu0
      %v8640 = vunpack.c.l.b16 %v8068
      %v8641 = vunpack.c.l.b16 %v8069
      %v8642 = vpack.c.b16 %v8641, %v8640
      %8643 = vrot.lane.b32.xlu0 %v3343, 112
      %v8644 = vpop.permute.xlu0 %8643
      %v8647 = vsel %vm1092, %v8642, 0
      %8649 = vmatpush.bf16.msra.mxu0 0
      %8650 = vmatpush.bf16.msra.mxu0 0
      %8651 = vmatpush.bf16.msra.mxu0 0
      %8652 = vmatpush.bf16.msra.mxu0 0
      %8653 = vmatpush.bf16.msra.mxu0 0
      %8654 = vmatpush.bf16.msra.mxu0 0
      %8655 = vmatpush.bf16.msra.mxu0 0
      %8656 = vmatpush.bf16.msra.mxu0 %v8644
      %8657 = vmatmul.bf16.gmra.mxu0 %v8647
      %v8658 = vpop.f32.mrf.mxu0
      %v8659 = vadd.f32 0.0, %v8658
      %v8660 = vpop.f32.mrf.mxu0
      %v8661 = vadd.f32 0.0, %v8660
      %8662 = vdwg.mxu0
      %v8665 = vunpack.c.l.b16 %v8070
      %v8666 = vunpack.c.l.b16 %v8071
      %v8667 = vpack.c.b16 %v8666, %v8665
      %8668 = vrot.lane.b32.xlu0 %v3371, 112
      %v8669 = vpop.permute.xlu0 %8668
      %v8672 = vsel %vm1092, %v8667, 0
      %8674 = vmatpush.bf16.msra.mxu0 0
      %8675 = vmatpush.bf16.msra.mxu0 0
      %8676 = vmatpush.bf16.msra.mxu0 0
      %8677 = vmatpush.bf16.msra.mxu0 0
      %8678 = vmatpush.bf16.msra.mxu0 0
      %8679 = vmatpush.bf16.msra.mxu0 0
      %8680 = vmatpush.bf16.msra.mxu0 0
      %8681 = vmatpush.bf16.msra.mxu0 %v8669
      %8682 = vmatmul.bf16.gmra.mxu0 %v8672
      %v8683 = vpop.f32.mrf.mxu0
      %v8684 = vadd.f32 0.0, %v8683
      %v8685 = vpop.f32.mrf.mxu0
      %v8686 = vadd.f32 0.0, %v8685
      %8687 = vdwg.mxu0
      %v8690 = vunpack.c.l.b16 %v8072
      %v8691 = vunpack.c.l.b16 %v8073
      %v8692 = vpack.c.b16 %v8691, %v8690
      %8693 = vrot.lane.b32.xlu0 %v3399, 112
      %v8694 = vpop.permute.xlu0 %8693
      %v8697 = vsel %vm1092, %v8692, 0
      %8699 = vmatpush.bf16.msra.mxu0 0
      %8700 = vmatpush.bf16.msra.mxu0 0
      %8701 = vmatpush.bf16.msra.mxu0 0
      %8702 = vmatpush.bf16.msra.mxu0 0
      %8703 = vmatpush.bf16.msra.mxu0 0
      %8704 = vmatpush.bf16.msra.mxu0 0
      %8705 = vmatpush.bf16.msra.mxu0 0
      %8706 = vmatpush.bf16.msra.mxu0 %v8694
      %8707 = vmatmul.bf16.gmra.mxu0 %v8697
      %v8708 = vpop.f32.mrf.mxu0
      %v8709 = vadd.f32 0.0, %v8708
      %v8710 = vpop.f32.mrf.mxu0
      %v8711 = vadd.f32 0.0, %v8710
      %8712 = vdwg.mxu0
      %v8715 = vunpack.c.l.b16 %v8074
      %v8716 = vunpack.c.l.b16 %v8075
      %v8717 = vpack.c.b16 %v8716, %v8715
      %8718 = vrot.lane.b32.xlu0 %v3427, 112
      %v8719 = vpop.permute.xlu0 %8718
      %v8722 = vsel %vm1092, %v8717, 0
      %8724 = vmatpush.bf16.msra.mxu0 0
      %8725 = vmatpush.bf16.msra.mxu0 0
      %8726 = vmatpush.bf16.msra.mxu0 0
      %8727 = vmatpush.bf16.msra.mxu0 0
      %8728 = vmatpush.bf16.msra.mxu0 0
      %8729 = vmatpush.bf16.msra.mxu0 0
      %8730 = vmatpush.bf16.msra.mxu0 0
      %8731 = vmatpush.bf16.msra.mxu0 %v8719
      %8732 = vmatmul.bf16.gmra.mxu0 %v8722
      %v8733 = vpop.f32.mrf.mxu0
      %v8734 = vadd.f32 0.0, %v8733
      %v8735 = vpop.f32.mrf.mxu0
      %v8736 = vadd.f32 0.0, %v8735
      %8737 = vdwg.mxu0
      %v8740 = vunpack.c.l.b16 %v8076
      %v8741 = vunpack.c.l.b16 %v8077
      %v8742 = vpack.c.b16 %v8741, %v8740
      %8743 = vrot.lane.b32.xlu0 %v3455, 112
      %v8744 = vpop.permute.xlu0 %8743
      %v8747 = vsel %vm1092, %v8742, 0
      %8749 = vmatpush.bf16.msra.mxu0 0
      %8750 = vmatpush.bf16.msra.mxu0 0
      %8751 = vmatpush.bf16.msra.mxu0 0
      %8752 = vmatpush.bf16.msra.mxu0 0
      %8753 = vmatpush.bf16.msra.mxu0 0
      %8754 = vmatpush.bf16.msra.mxu0 0
      %8755 = vmatpush.bf16.msra.mxu0 0
      %8756 = vmatpush.bf16.msra.mxu0 %v8744
      %8757 = vmatmul.bf16.gmra.mxu0 %v8747
      %v8758 = vpop.f32.mrf.mxu0
      %v8759 = vadd.f32 0.0, %v8758
      %v8760 = vpop.f32.mrf.mxu0
      %v8761 = vadd.f32 0.0, %v8760
      %8762 = vdwg.mxu0
      %v8765 = vunpack.c.l.b16 %v8078
      %v8766 = vunpack.c.l.b16 %v8079
      %v8767 = vpack.c.b16 %v8766, %v8765
      %8768 = vrot.lane.b32.xlu0 %v3483, 112
      %v8769 = vpop.permute.xlu0 %8768
      %v8772 = vsel %vm1092, %v8767, 0
      %8774 = vmatpush.bf16.msra.mxu0 0
      %8775 = vmatpush.bf16.msra.mxu0 0
      %8776 = vmatpush.bf16.msra.mxu0 0
      %8777 = vmatpush.bf16.msra.mxu0 0
      %8778 = vmatpush.bf16.msra.mxu0 0
      %8779 = vmatpush.bf16.msra.mxu0 0
      %8780 = vmatpush.bf16.msra.mxu0 0
      %8781 = vmatpush.bf16.msra.mxu0 %v8769
      %8782 = vmatmul.bf16.gmra.mxu0 %v8772
      %v8783 = vpop.f32.mrf.mxu0
      %v8784 = vadd.f32 0.0, %v8783
      %v8785 = vpop.f32.mrf.mxu0
      %v8786 = vadd.f32 0.0, %v8785
      %8787 = vdwg.mxu0
      %v8790 = vunpack.c.l.b16 %v8080
      %v8791 = vunpack.c.l.b16 %v8081
      %v8792 = vpack.c.b16 %v8791, %v8790
      %8793 = vrot.lane.b32.xlu0 %v3511, 112
      %v8794 = vpop.permute.xlu0 %8793
      %v8797 = vsel %vm1092, %v8792, 0
      %8799 = vmatpush.bf16.msra.mxu0 0
      %8800 = vmatpush.bf16.msra.mxu0 0
      %8801 = vmatpush.bf16.msra.mxu0 0
      %8802 = vmatpush.bf16.msra.mxu0 0
      %8803 = vmatpush.bf16.msra.mxu0 0
      %8804 = vmatpush.bf16.msra.mxu0 0
      %8805 = vmatpush.bf16.msra.mxu0 0
      %8806 = vmatpush.bf16.msra.mxu0 %v8794
      %8807 = vmatmul.bf16.gmra.mxu0 %v8797
      %v8808 = vpop.f32.mrf.mxu0
      %v8809 = vadd.f32 0.0, %v8808
      %v8810 = vpop.f32.mrf.mxu0
      %v8811 = vadd.f32 0.0, %v8810
      %8812 = vdwg.mxu0
      %v8815 = vunpack.c.l.b16 %v8082
      %v8816 = vunpack.c.l.b16 %v8083
      %v8817 = vpack.c.b16 %v8816, %v8815
      %8818 = vrot.lane.b32.xlu0 %v3539, 112
      %v8819 = vpop.permute.xlu0 %8818
      %v8822 = vsel %vm1092, %v8817, 0
      %8824 = vmatpush.bf16.msra.mxu0 0
      %8825 = vmatpush.bf16.msra.mxu0 0
      %8826 = vmatpush.bf16.msra.mxu0 0
      %8827 = vmatpush.bf16.msra.mxu0 0
      %8828 = vmatpush.bf16.msra.mxu0 0
      %8829 = vmatpush.bf16.msra.mxu0 0
      %8830 = vmatpush.bf16.msra.mxu0 0
      %8831 = vmatpush.bf16.msra.mxu0 %v8819
      %8832 = vmatmul.bf16.gmra.mxu0 %v8822
      %v8833 = vpop.f32.mrf.mxu0
      %v8834 = vadd.f32 0.0, %v8833
      %v8835 = vpop.f32.mrf.mxu0
      %v8836 = vadd.f32 0.0, %v8835
      %8837 = vdwg.mxu0
      %v8840 = vunpack.c.l.b16 %v8084
      %v8841 = vunpack.c.l.b16 %v8085
      %v8842 = vpack.c.b16 %v8841, %v8840
      %8843 = vrot.lane.b32.xlu0 %v3567, 112
      %v8844 = vpop.permute.xlu0 %8843
      %v8847 = vsel %vm1092, %v8842, 0
      %8849 = vmatpush.bf16.msra.mxu0 0
      %8850 = vmatpush.bf16.msra.mxu0 0
      %8851 = vmatpush.bf16.msra.mxu0 0
      %8852 = vmatpush.bf16.msra.mxu0 0
      %8853 = vmatpush.bf16.msra.mxu0 0
      %8854 = vmatpush.bf16.msra.mxu0 0
      %8855 = vmatpush.bf16.msra.mxu0 0
      %8856 = vmatpush.bf16.msra.mxu0 %v8844
      %8857 = vmatmul.bf16.gmra.mxu0 %v8847
      %v8858 = vpop.f32.mrf.mxu0
      %v8859 = vadd.f32 0.0, %v8858
      %v8860 = vpop.f32.mrf.mxu0
      %v8861 = vadd.f32 0.0, %v8860
      %8862 = vdwg.mxu0
      %v8865 = vunpack.c.l.b16 %v8086
      %v8866 = vunpack.c.l.b16 %v8087
      %v8867 = vpack.c.b16 %v8866, %v8865
      %8868 = vrot.lane.b32.xlu0 %v3595, 112
      %v8869 = vpop.permute.xlu0 %8868
      %v8872 = vsel %vm1092, %v8867, 0
      %8874 = vmatpush.bf16.msra.mxu0 0
      %8875 = vmatpush.bf16.msra.mxu0 0
      %8876 = vmatpush.bf16.msra.mxu0 0
      %8877 = vmatpush.bf16.msra.mxu0 0
      %8878 = vmatpush.bf16.msra.mxu0 0
      %8879 = vmatpush.bf16.msra.mxu0 0
      %8880 = vmatpush.bf16.msra.mxu0 0
      %8881 = vmatpush.bf16.msra.mxu0 %v8869
      %8882 = vmatmul.bf16.gmra.mxu0 %v8872
      %v8883 = vpop.f32.mrf.mxu0
      %v8884 = vadd.f32 0.0, %v8883
      %v8885 = vpop.f32.mrf.mxu0
      %v8886 = vadd.f32 0.0, %v8885
      %8887 = vdwg.mxu0
      %v8888 = vpack.c.bf16 %v8111, %v8109
      %v8889 = vpack.c.bf16 %v8136, %v8134
      %v8890 = vpack.c.bf16 %v8161, %v8159
      %v8891 = vpack.c.bf16 %v8186, %v8184
      %v8892 = vpack.c.bf16 %v8211, %v8209
      %v8893 = vpack.c.bf16 %v8236, %v8234
      %v8894 = vpack.c.bf16 %v8261, %v8259
      %v8895 = vpack.c.bf16 %v8286, %v8284
      %v8896 = vpack.c.bf16 %v8311, %v8309
      %v8897 = vpack.c.bf16 %v8336, %v8334
      %v8898 = vpack.c.bf16 %v8361, %v8359
      %v8899 = vpack.c.bf16 %v8386, %v8384
      %v8900 = vpack.c.bf16 %v8411, %v8409
      %v8901 = vpack.c.bf16 %v8436, %v8434
      %v8902 = vpack.c.bf16 %v8461, %v8459
      %v8903 = vpack.c.bf16 %v8486, %v8484
      %v8904 = vpack.c.bf16 %v8511, %v8509
      %v8905 = vpack.c.bf16 %v8536, %v8534
      %v8906 = vpack.c.bf16 %v8561, %v8559
      %v8907 = vpack.c.bf16 %v8586, %v8584
      %v8908 = vpack.c.bf16 %v8611, %v8609
      %v8909 = vpack.c.bf16 %v8636, %v8634
      %v8910 = vpack.c.bf16 %v8661, %v8659
      %v8911 = vpack.c.bf16 %v8686, %v8684
      %v8912 = vpack.c.bf16 %v8711, %v8709
      %v8913 = vpack.c.bf16 %v8736, %v8734
      %v8914 = vpack.c.bf16 %v8761, %v8759
      %v8915 = vpack.c.bf16 %v8786, %v8784
      %v8916 = vpack.c.bf16 %v8811, %v8809
      %v8917 = vpack.c.bf16 %v8836, %v8834
      %v8918 = vpack.c.bf16 %v8861, %v8859
      %v8919 = vpack.c.bf16 %v8886, %v8884
      %v8921 = vsel %vm6014, %v8888, 0
      %v8924 = vsel %vm6014, %v8889, 0
      %v8927 = vsel %vm6014, %v8890, 0
      %v8930 = vsel %vm6014, %v8891, 0
      %v8933 = vsel %vm6014, %v8892, 0
      %v8936 = vsel %vm6014, %v8893, 0
      %v8939 = vsel %vm6014, %v8894, 0
      %v8942 = vsel %vm6014, %v8895, 0
      %v8945 = vsel %vm6014, %v8896, 0
      %v8948 = vsel %vm6014, %v8897, 0
      %v8951 = vsel %vm6014, %v8898, 0
      %v8954 = vsel %vm6014, %v8899, 0
      %v8957 = vsel %vm6014, %v8900, 0
      %v8960 = vsel %vm6014, %v8901, 0
      %v8963 = vsel %vm6014, %v8902, 0
      %v8966 = vsel %vm6014, %v8903, 0
      %v8969 = vsel %vm6014, %v8904, 0
      %v8972 = vsel %vm6014, %v8905, 0
      %v8975 = vsel %vm6014, %v8906, 0
      %v8978 = vsel %vm6014, %v8907, 0
      %v8981 = vsel %vm6014, %v8908, 0
      %v8984 = vsel %vm6014, %v8909, 0
      %v8987 = vsel %vm6014, %v8910, 0
      %v8990 = vsel %vm6014, %v8911, 0
      %v8993 = vsel %vm6014, %v8912, 0
      %v8996 = vsel %vm6014, %v8913, 0
      %v8999 = vsel %vm6014, %v8914, 0
      %v9002 = vsel %vm6014, %v8915, 0
      %v9005 = vsel %vm6014, %v8916, 0
      %v9008 = vsel %vm6014, %v8917, 0
      %v9011 = vsel %vm6014, %v8918, 0
      %v9014 = vsel %vm6014, %v8919, 0
      %v9017 = vsel %vm6111, %v1083, 0
      %9019 = vmatpush.bf16.msra.mxu0 0
      %9020 = vmatpush.bf16.msra.mxu0 0
      %9021 = vmatpush.bf16.msra.mxu0 0
      %9022 = vmatpush.bf16.msra.mxu0 0
      %9023 = vmatpush.bf16.msra.mxu0 0
      %9024 = vmatpush.bf16.msra.mxu0 0
      %9025 = vmatpush.bf16.msra.mxu0 0
      %9026 = vmatpush.bf16.msra.mxu0 %v9017
      %9027 = vmatmul.bf16.gmra.mxu0 %v8921
      %v9028 = vpop.f32.mrf.mxu0
      %v9029 = vadd.f32 0.0, %v9028
      %v9030 = vpop.f32.mrf.mxu0
      %v9031 = vadd.f32 0.0, %v9030
      %9032 = vmatmul.bf16.gmra.mxu0 %v8924
      %v9033 = vpop.f32.mrf.mxu0
      %v9034 = vadd.f32 0.0, %v9033
      %v9035 = vpop.f32.mrf.mxu0
      %v9036 = vadd.f32 0.0, %v9035
      %9037 = vmatmul.bf16.gmra.mxu0 %v8927
      %v9038 = vpop.f32.mrf.mxu0
      %v9039 = vadd.f32 0.0, %v9038
      %v9040 = vpop.f32.mrf.mxu0
      %v9041 = vadd.f32 0.0, %v9040
      %9042 = vmatmul.bf16.gmra.mxu0 %v8930
      %v9043 = vpop.f32.mrf.mxu0
      %v9044 = vadd.f32 0.0, %v9043
      %v9045 = vpop.f32.mrf.mxu0
      %v9046 = vadd.f32 0.0, %v9045
      %9047 = vmatmul.bf16.gmra.mxu0 %v8933
      %v9048 = vpop.f32.mrf.mxu0
      %v9049 = vadd.f32 0.0, %v9048
      %v9050 = vpop.f32.mrf.mxu0
      %v9051 = vadd.f32 0.0, %v9050
      %9052 = vmatmul.bf16.gmra.mxu0 %v8936
      %v9053 = vpop.f32.mrf.mxu0
      %v9054 = vadd.f32 0.0, %v9053
      %v9055 = vpop.f32.mrf.mxu0
      %v9056 = vadd.f32 0.0, %v9055
      %9057 = vmatmul.bf16.gmra.mxu0 %v8939
      %v9058 = vpop.f32.mrf.mxu0
      %v9059 = vadd.f32 0.0, %v9058
      %v9060 = vpop.f32.mrf.mxu0
      %v9061 = vadd.f32 0.0, %v9060
      %9062 = vmatmul.bf16.gmra.mxu0 %v8942
      %v9063 = vpop.f32.mrf.mxu0
      %v9064 = vadd.f32 0.0, %v9063
      %v9065 = vpop.f32.mrf.mxu0
      %v9066 = vadd.f32 0.0, %v9065
      %9067 = vmatmul.bf16.gmra.mxu0 %v8945
      %v9068 = vpop.f32.mrf.mxu0
      %v9069 = vadd.f32 0.0, %v9068
      %v9070 = vpop.f32.mrf.mxu0
      %v9071 = vadd.f32 0.0, %v9070
      %9072 = vmatmul.bf16.gmra.mxu0 %v8948
      %v9073 = vpop.f32.mrf.mxu0
      %v9074 = vadd.f32 0.0, %v9073
      %v9075 = vpop.f32.mrf.mxu0
      %v9076 = vadd.f32 0.0, %v9075
      %9077 = vmatmul.bf16.gmra.mxu0 %v8951
      %v9078 = vpop.f32.mrf.mxu0
      %v9079 = vadd.f32 0.0, %v9078
      %v9080 = vpop.f32.mrf.mxu0
      %v9081 = vadd.f32 0.0, %v9080
      %9082 = vmatmul.bf16.gmra.mxu0 %v8954
      %v9083 = vpop.f32.mrf.mxu0
      %v9084 = vadd.f32 0.0, %v9083
      %v9085 = vpop.f32.mrf.mxu0
      %v9086 = vadd.f32 0.0, %v9085
      %9087 = vmatmul.bf16.gmra.mxu0 %v8957
      %v9088 = vpop.f32.mrf.mxu0
      %v9089 = vadd.f32 0.0, %v9088
      %v9090 = vpop.f32.mrf.mxu0
      %v9091 = vadd.f32 0.0, %v9090
      %9092 = vmatmul.bf16.gmra.mxu0 %v8960
      %v9093 = vpop.f32.mrf.mxu0
      %v9094 = vadd.f32 0.0, %v9093
      %v9095 = vpop.f32.mrf.mxu0
      %v9096 = vadd.f32 0.0, %v9095
      %9097 = vmatmul.bf16.gmra.mxu0 %v8963
      %v9098 = vpop.f32.mrf.mxu0
      %v9099 = vadd.f32 0.0, %v9098
      %v9100 = vpop.f32.mrf.mxu0
      %v9101 = vadd.f32 0.0, %v9100
      %9102 = vmatmul.bf16.gmra.mxu0 %v8966
      %v9103 = vpop.f32.mrf.mxu0
      %v9104 = vadd.f32 0.0, %v9103
      %v9105 = vpop.f32.mrf.mxu0
      %v9106 = vadd.f32 0.0, %v9105
      %9107 = vmatmul.bf16.gmra.mxu0 %v8969
      %v9108 = vpop.f32.mrf.mxu0
      %v9109 = vadd.f32 0.0, %v9108
      %v9110 = vpop.f32.mrf.mxu0
      %v9111 = vadd.f32 0.0, %v9110
      %9112 = vmatmul.bf16.gmra.mxu0 %v8972
      %v9113 = vpop.f32.mrf.mxu0
      %v9114 = vadd.f32 0.0, %v9113
      %v9115 = vpop.f32.mrf.mxu0
      %v9116 = vadd.f32 0.0, %v9115
      %9117 = vmatmul.bf16.gmra.mxu0 %v8975
      %v9118 = vpop.f32.mrf.mxu0
      %v9119 = vadd.f32 0.0, %v9118
      %v9120 = vpop.f32.mrf.mxu0
      %v9121 = vadd.f32 0.0, %v9120
      %9122 = vmatmul.bf16.gmra.mxu0 %v8978
      %v9123 = vpop.f32.mrf.mxu0
      %v9124 = vadd.f32 0.0, %v9123
      %v9125 = vpop.f32.mrf.mxu0
      %v9126 = vadd.f32 0.0, %v9125
      %9127 = vmatmul.bf16.gmra.mxu0 %v8981
      %v9128 = vpop.f32.mrf.mxu0
      %v9129 = vadd.f32 0.0, %v9128
      %v9130 = vpop.f32.mrf.mxu0
      %v9131 = vadd.f32 0.0, %v9130
      %9132 = vmatmul.bf16.gmra.mxu0 %v8984
      %v9133 = vpop.f32.mrf.mxu0
      %v9134 = vadd.f32 0.0, %v9133
      %v9135 = vpop.f32.mrf.mxu0
      %v9136 = vadd.f32 0.0, %v9135
      %9137 = vmatmul.bf16.gmra.mxu0 %v8987
      %v9138 = vpop.f32.mrf.mxu0
      %v9139 = vadd.f32 0.0, %v9138
      %v9140 = vpop.f32.mrf.mxu0
      %v9141 = vadd.f32 0.0, %v9140
      %9142 = vmatmul.bf16.gmra.mxu0 %v8990
      %v9143 = vpop.f32.mrf.mxu0
      %v9144 = vadd.f32 0.0, %v9143
      %v9145 = vpop.f32.mrf.mxu0
      %v9146 = vadd.f32 0.0, %v9145
      %9147 = vmatmul.bf16.gmra.mxu0 %v8993
      %v9148 = vpop.f32.mrf.mxu0
      %v9149 = vadd.f32 0.0, %v9148
      %v9150 = vpop.f32.mrf.mxu0
      %v9151 = vadd.f32 0.0, %v9150
      %9152 = vmatmul.bf16.gmra.mxu0 %v8996
      %v9153 = vpop.f32.mrf.mxu0
      %v9154 = vadd.f32 0.0, %v9153
      %v9155 = vpop.f32.mrf.mxu0
      %v9156 = vadd.f32 0.0, %v9155
      %9157 = vmatmul.bf16.gmra.mxu0 %v8999
      %v9158 = vpop.f32.mrf.mxu0
      %v9159 = vadd.f32 0.0, %v9158
      %v9160 = vpop.f32.mrf.mxu0
      %v9161 = vadd.f32 0.0, %v9160
      %9162 = vmatmul.bf16.gmra.mxu0 %v9002
      %v9163 = vpop.f32.mrf.mxu0
      %v9164 = vadd.f32 0.0, %v9163
      %v9165 = vpop.f32.mrf.mxu0
      %v9166 = vadd.f32 0.0, %v9165
      %9167 = vmatmul.bf16.gmra.mxu0 %v9005
      %v9168 = vpop.f32.mrf.mxu0
      %v9169 = vadd.f32 0.0, %v9168
      %v9170 = vpop.f32.mrf.mxu0
      %v9171 = vadd.f32 0.0, %v9170
      %9172 = vmatmul.bf16.gmra.mxu0 %v9008
      %v9173 = vpop.f32.mrf.mxu0
      %v9174 = vadd.f32 0.0, %v9173
      %v9175 = vpop.f32.mrf.mxu0
      %v9176 = vadd.f32 0.0, %v9175
      %9177 = vmatmul.bf16.gmra.mxu0 %v9011
      %v9178 = vpop.f32.mrf.mxu0
      %v9179 = vadd.f32 0.0, %v9178
      %v9180 = vpop.f32.mrf.mxu0
      %v9181 = vadd.f32 0.0, %v9180
      %9182 = vmatmul.bf16.gmra.mxu0 %v9014
      %v9183 = vpop.f32.mrf.mxu0
      %v9184 = vadd.f32 0.0, %v9183
      %v9185 = vpop.f32.mrf.mxu0
      %v9186 = vadd.f32 0.0, %v9185
      %9187 = vdwg.mxu0
      %v9188 = vadd.f32 %v6393, %v9029
      %v9189 = vadd.f32 %v6395, %v9031
      %v9190 = vadd.f32 %v6398, %v9034
      %v9191 = vadd.f32 %v6400, %v9036
      %v9192 = vadd.f32 %v6403, %v9039
      %v9193 = vadd.f32 %v6405, %v9041
      %v9194 = vadd.f32 %v6408, %v9044
      %v9195 = vadd.f32 %v6410, %v9046
      %v9196 = vadd.f32 %v6413, %v9049
      %v9197 = vadd.f32 %v6415, %v9051
      %v9198 = vadd.f32 %v6418, %v9054
      %v9199 = vadd.f32 %v6420, %v9056
      %v9200 = vadd.f32 %v6423, %v9059
      %v9201 = vadd.f32 %v6425, %v9061
      %v9202 = vadd.f32 %v6428, %v9064
      %v9203 = vadd.f32 %v6430, %v9066
      %v9204 = vadd.f32 %v6433, %v9069
      %v9205 = vadd.f32 %v6435, %v9071
      %v9206 = vadd.f32 %v6438, %v9074
      %v9207 = vadd.f32 %v6440, %v9076
      %v9208 = vadd.f32 %v6443, %v9079
      %v9209 = vadd.f32 %v6445, %v9081
      %v9210 = vadd.f32 %v6448, %v9084
      %v9211 = vadd.f32 %v6450, %v9086
      %v9212 = vadd.f32 %v6453, %v9089
      %v9213 = vadd.f32 %v6455, %v9091
      %v9214 = vadd.f32 %v6458, %v9094
      %v9215 = vadd.f32 %v6460, %v9096
      %v9216 = vadd.f32 %v6463, %v9099
      %v9217 = vadd.f32 %v6465, %v9101
      %v9218 = vadd.f32 %v6468, %v9104
      %v9219 = vadd.f32 %v6470, %v9106
      %v9220 = vadd.f32 %v6473, %v9109
      %v9221 = vadd.f32 %v6475, %v9111
      %v9222 = vadd.f32 %v6478, %v9114
      %v9223 = vadd.f32 %v6480, %v9116
      %v9224 = vadd.f32 %v6483, %v9119
      %v9225 = vadd.f32 %v6485, %v9121
      %v9226 = vadd.f32 %v6488, %v9124
      %v9227 = vadd.f32 %v6490, %v9126
      %v9228 = vadd.f32 %v6493, %v9129
      %v9229 = vadd.f32 %v6495, %v9131
      %v9230 = vadd.f32 %v6498, %v9134
      %v9231 = vadd.f32 %v6500, %v9136
      %v9232 = vadd.f32 %v6503, %v9139
      %v9233 = vadd.f32 %v6505, %v9141
      %v9234 = vadd.f32 %v6508, %v9144
      %v9235 = vadd.f32 %v6510, %v9146
      %v9236 = vadd.f32 %v6513, %v9149
      %v9237 = vadd.f32 %v6515, %v9151
      %v9238 = vadd.f32 %v6518, %v9154
      %v9239 = vadd.f32 %v6520, %v9156
      %v9240 = vadd.f32 %v6523, %v9159
      %v9241 = vadd.f32 %v6525, %v9161
      %v9242 = vadd.f32 %v6528, %v9164
      %v9243 = vadd.f32 %v6530, %v9166
      %v9244 = vadd.f32 %v6533, %v9169
      %v9245 = vadd.f32 %v6535, %v9171
      %v9246 = vadd.f32 %v6538, %v9174
      %v9247 = vadd.f32 %v6540, %v9176
      %v9248 = vadd.f32 %v6543, %v9179
      %v9249 = vadd.f32 %v6545, %v9181
      %v9250 = vadd.f32 %v6548, %v9184
      %v9251 = vadd.f32 %v6550, %v9186
      %9252 = vrot.lane.b32.xlu0 %v1089, 80
      %v9253 = vpop.permute.xlu0 %9252
      %9254 = vrot.lane.b32.xlu0 %v1089, 16
      %v9255 = vpop.permute.xlu0 %9254
      %v9257 = vsel %vm1092, %v9253, 0
      %v9260 = vsel %vm1092, %v9255, 0
      %9262 = vmatpush.bf16.xpose.msra.mxu0 0
      %9263 = vmatpush.bf16.xpose.msra.mxu0 0
      %9264 = vmatpush.bf16.xpose.msra.mxu0 0
      %9265 = vmatpush.bf16.xpose.msra.mxu0 0
      %9266 = vmatpush.bf16.xpose.msra.mxu0 0
      %9267 = vmatpush.bf16.xpose.msra.mxu0 0
      %9268 = vmatpush.bf16.xpose.msra.mxu0 0
      %9269 = vmatpush.bf16.xpose.msra.mxu0 %v9260
      %9270 = vmatmul.bf16.gmra.mxu0 %v9257
      %v9271 = vpop.f32.mrf.mxu0
      %v9272 = vadd.f32 %v1079, %v9271
      %v9273 = vpop.f32.mrf.mxu0
      %v9274 = vadd.f32 %v1080, %v9273
      %9275 = vdwg.mxu0
      %9276 = vrot.lane.b32.xlu0 %v1117, 80
      %v9277 = vpop.permute.xlu0 %9276
      %9278 = vrot.lane.b32.xlu0 %v1117, 16
      %v9279 = vpop.permute.xlu0 %9278
      %v9281 = vsel %vm1092, %v9277, 0
      %v9284 = vsel %vm1092, %v9279, 0
      %9286 = vmatpush.bf16.xpose.msra.mxu0 0
      %9287 = vmatpush.bf16.xpose.msra.mxu0 0
      %9288 = vmatpush.bf16.xpose.msra.mxu0 0
      %9289 = vmatpush.bf16.xpose.msra.mxu0 0
      %9290 = vmatpush.bf16.xpose.msra.mxu0 0
      %9291 = vmatpush.bf16.xpose.msra.mxu0 0
      %9292 = vmatpush.bf16.xpose.msra.mxu0 0
      %9293 = vmatpush.bf16.xpose.msra.mxu0 %v9284
      %9294 = vmatmul.bf16.gmra.mxu0 %v9281
      %v9295 = vpop.f32.mrf.mxu0
      %v9296 = vadd.f32 %v1079, %v9295
      %v9297 = vpop.f32.mrf.mxu0
      %v9298 = vadd.f32 %v1080, %v9297
      %9299 = vdwg.mxu0
      %9300 = vrot.lane.b32.xlu0 %v1144, 80
      %v9301 = vpop.permute.xlu0 %9300
      %9302 = vrot.lane.b32.xlu0 %v1144, 16
      %v9303 = vpop.permute.xlu0 %9302
      %v9305 = vsel %vm1092, %v9301, 0
      %v9308 = vsel %vm1092, %v9303, 0
      %9310 = vmatpush.bf16.xpose.msra.mxu0 0
      %9311 = vmatpush.bf16.xpose.msra.mxu0 0
      %9312 = vmatpush.bf16.xpose.msra.mxu0 0
      %9313 = vmatpush.bf16.xpose.msra.mxu0 0
      %9314 = vmatpush.bf16.xpose.msra.mxu0 0
      %9315 = vmatpush.bf16.xpose.msra.mxu0 0
      %9316 = vmatpush.bf16.xpose.msra.mxu0 0
      %9317 = vmatpush.bf16.xpose.msra.mxu0 %v9308
      %9318 = vmatmul.bf16.gmra.mxu0 %v9305
      %v9319 = vpop.f32.mrf.mxu0
      %v9320 = vadd.f32 %v1079, %v9319
      %v9321 = vpop.f32.mrf.mxu0
      %v9322 = vadd.f32 %v1080, %v9321
      %9323 = vdwg.mxu0
      %9324 = vrot.lane.b32.xlu0 %v1171, 80
      %v9325 = vpop.permute.xlu0 %9324
      %9326 = vrot.lane.b32.xlu0 %v1171, 16
      %v9327 = vpop.permute.xlu0 %9326
      %v9329 = vsel %vm1092, %v9325, 0
      %v9332 = vsel %vm1092, %v9327, 0
      %9334 = vmatpush.bf16.xpose.msra.mxu0 0
      %9335 = vmatpush.bf16.xpose.msra.mxu0 0
      %9336 = vmatpush.bf16.xpose.msra.mxu0 0
      %9337 = vmatpush.bf16.xpose.msra.mxu0 0
      %9338 = vmatpush.bf16.xpose.msra.mxu0 0
      %9339 = vmatpush.bf16.xpose.msra.mxu0 0
      %9340 = vmatpush.bf16.xpose.msra.mxu0 0
      %9341 = vmatpush.bf16.xpose.msra.mxu0 %v9332
      %9342 = vmatmul.bf16.gmra.mxu0 %v9329
      %v9343 = vpop.f32.mrf.mxu0
      %v9344 = vadd.f32 %v1079, %v9343
      %v9345 = vpop.f32.mrf.mxu0
      %v9346 = vadd.f32 %v1080, %v9345
      %9347 = vdwg.mxu0
      %9348 = vrot.lane.b32.xlu0 %v1198, 80
      %v9349 = vpop.permute.xlu0 %9348
      %9350 = vrot.lane.b32.xlu0 %v1198, 16
      %v9351 = vpop.permute.xlu0 %9350
      %v9353 = vsel %vm1092, %v9349, 0
      %v9356 = vsel %vm1092, %v9351, 0
      %9358 = vmatpush.bf16.xpose.msra.mxu0 0
      %9359 = vmatpush.bf16.xpose.msra.mxu0 0
      %9360 = vmatpush.bf16.xpose.msra.mxu0 0
      %9361 = vmatpush.bf16.xpose.msra.mxu0 0
      %9362 = vmatpush.bf16.xpose.msra.mxu0 0
      %9363 = vmatpush.bf16.xpose.msra.mxu0 0
      %9364 = vmatpush.bf16.xpose.msra.mxu0 0
      %9365 = vmatpush.bf16.xpose.msra.mxu0 %v9356
      %9366 = vmatmul.bf16.gmra.mxu0 %v9353
      %v9367 = vpop.f32.mrf.mxu0
      %v9368 = vadd.f32 %v1079, %v9367
      %v9369 = vpop.f32.mrf.mxu0
      %v9370 = vadd.f32 %v1080, %v9369
      %9371 = vdwg.mxu0
      %9372 = vrot.lane.b32.xlu0 %v1225, 80
      %v9373 = vpop.permute.xlu0 %9372
      %9374 = vrot.lane.b32.xlu0 %v1225, 16
      %v9375 = vpop.permute.xlu0 %9374
      %v9377 = vsel %vm1092, %v9373, 0
      %v9380 = vsel %vm1092, %v9375, 0
      %9382 = vmatpush.bf16.xpose.msra.mxu0 0
      %9383 = vmatpush.bf16.xpose.msra.mxu0 0
      %9384 = vmatpush.bf16.xpose.msra.mxu0 0
      %9385 = vmatpush.bf16.xpose.msra.mxu0 0
      %9386 = vmatpush.bf16.xpose.msra.mxu0 0
      %9387 = vmatpush.bf16.xpose.msra.mxu0 0
      %9388 = vmatpush.bf16.xpose.msra.mxu0 0
      %9389 = vmatpush.bf16.xpose.msra.mxu0 %v9380
      %9390 = vmatmul.bf16.gmra.mxu0 %v9377
      %v9391 = vpop.f32.mrf.mxu0
      %v9392 = vadd.f32 %v1079, %v9391
      %v9393 = vpop.f32.mrf.mxu0
      %v9394 = vadd.f32 %v1080, %v9393
      %9395 = vdwg.mxu0
      %9396 = vrot.lane.b32.xlu0 %v1252, 80
      %v9397 = vpop.permute.xlu0 %9396
      %9398 = vrot.lane.b32.xlu0 %v1252, 16
      %v9399 = vpop.permute.xlu0 %9398
      %v9401 = vsel %vm1092, %v9397, 0
      %v9404 = vsel %vm1092, %v9399, 0
      %9406 = vmatpush.bf16.xpose.msra.mxu0 0
      %9407 = vmatpush.bf16.xpose.msra.mxu0 0
      %9408 = vmatpush.bf16.xpose.msra.mxu0 0
      %9409 = vmatpush.bf16.xpose.msra.mxu0 0
      %9410 = vmatpush.bf16.xpose.msra.mxu0 0
      %9411 = vmatpush.bf16.xpose.msra.mxu0 0
      %9412 = vmatpush.bf16.xpose.msra.mxu0 0
      %9413 = vmatpush.bf16.xpose.msra.mxu0 %v9404
      %9414 = vmatmul.bf16.gmra.mxu0 %v9401
      %v9415 = vpop.f32.mrf.mxu0
      %v9416 = vadd.f32 %v1079, %v9415
      %v9417 = vpop.f32.mrf.mxu0
      %v9418 = vadd.f32 %v1080, %v9417
      %9419 = vdwg.mxu0
      %9420 = vrot.lane.b32.xlu0 %v1279, 80
      %v9421 = vpop.permute.xlu0 %9420
      %9422 = vrot.lane.b32.xlu0 %v1279, 16
      %v9423 = vpop.permute.xlu0 %9422
      %v9425 = vsel %vm1092, %v9421, 0
      %v9428 = vsel %vm1092, %v9423, 0
      %9430 = vmatpush.bf16.xpose.msra.mxu0 0
      %9431 = vmatpush.bf16.xpose.msra.mxu0 0
      %9432 = vmatpush.bf16.xpose.msra.mxu0 0
      %9433 = vmatpush.bf16.xpose.msra.mxu0 0
      %9434 = vmatpush.bf16.xpose.msra.mxu0 0
      %9435 = vmatpush.bf16.xpose.msra.mxu0 0
      %9436 = vmatpush.bf16.xpose.msra.mxu0 0
      %9437 = vmatpush.bf16.xpose.msra.mxu0 %v9428
      %9438 = vmatmul.bf16.gmra.mxu0 %v9425
      %v9439 = vpop.f32.mrf.mxu0
      %v9440 = vadd.f32 %v1079, %v9439
      %v9441 = vpop.f32.mrf.mxu0
      %v9442 = vadd.f32 %v1080, %v9441
      %9443 = vdwg.mxu0
      %9444 = vrot.lane.b32.xlu0 %v1306, 80
      %v9445 = vpop.permute.xlu0 %9444
      %9446 = vrot.lane.b32.xlu0 %v1306, 16
      %v9447 = vpop.permute.xlu0 %9446
      %v9449 = vsel %vm1092, %v9445, 0
      %v9452 = vsel %vm1092, %v9447, 0
      %9454 = vmatpush.bf16.xpose.msra.mxu0 0
      %9455 = vmatpush.bf16.xpose.msra.mxu0 0
      %9456 = vmatpush.bf16.xpose.msra.mxu0 0
      %9457 = vmatpush.bf16.xpose.msra.mxu0 0
      %9458 = vmatpush.bf16.xpose.msra.mxu0 0
      %9459 = vmatpush.bf16.xpose.msra.mxu0 0
      %9460 = vmatpush.bf16.xpose.msra.mxu0 0
      %9461 = vmatpush.bf16.xpose.msra.mxu0 %v9452
      %9462 = vmatmul.bf16.gmra.mxu0 %v9449
      %v9463 = vpop.f32.mrf.mxu0
      %v9464 = vadd.f32 %v1079, %v9463
      %v9465 = vpop.f32.mrf.mxu0
      %v9466 = vadd.f32 %v1080, %v9465
      %9467 = vdwg.mxu0
      %9468 = vrot.lane.b32.xlu0 %v1333, 80
      %v9469 = vpop.permute.xlu0 %9468
      %9470 = vrot.lane.b32.xlu0 %v1333, 16
      %v9471 = vpop.permute.xlu0 %9470
      %v9473 = vsel %vm1092, %v9469, 0
      %v9476 = vsel %vm1092, %v9471, 0
      %9478 = vmatpush.bf16.xpose.msra.mxu0 0
      %9479 = vmatpush.bf16.xpose.msra.mxu0 0
      %9480 = vmatpush.bf16.xpose.msra.mxu0 0
      %9481 = vmatpush.bf16.xpose.msra.mxu0 0
      %9482 = vmatpush.bf16.xpose.msra.mxu0 0
      %9483 = vmatpush.bf16.xpose.msra.mxu0 0
      %9484 = vmatpush.bf16.xpose.msra.mxu0 0
      %9485 = vmatpush.bf16.xpose.msra.mxu0 %v9476
      %9486 = vmatmul.bf16.gmra.mxu0 %v9473
      %v9487 = vpop.f32.mrf.mxu0
      %v9488 = vadd.f32 %v1079, %v9487
      %v9489 = vpop.f32.mrf.mxu0
      %v9490 = vadd.f32 %v1080, %v9489
      %9491 = vdwg.mxu0
      %9492 = vrot.lane.b32.xlu0 %v1360, 80
      %v9493 = vpop.permute.xlu0 %9492
      %9494 = vrot.lane.b32.xlu0 %v1360, 16
      %v9495 = vpop.permute.xlu0 %9494
      %v9497 = vsel %vm1092, %v9493, 0
      %v9500 = vsel %vm1092, %v9495, 0
      %9502 = vmatpush.bf16.xpose.msra.mxu0 0
      %9503 = vmatpush.bf16.xpose.msra.mxu0 0
      %9504 = vmatpush.bf16.xpose.msra.mxu0 0
      %9505 = vmatpush.bf16.xpose.msra.mxu0 0
      %9506 = vmatpush.bf16.xpose.msra.mxu0 0
      %9507 = vmatpush.bf16.xpose.msra.mxu0 0
      %9508 = vmatpush.bf16.xpose.msra.mxu0 0
      %9509 = vmatpush.bf16.xpose.msra.mxu0 %v9500
      %9510 = vmatmul.bf16.gmra.mxu0 %v9497
      %v9511 = vpop.f32.mrf.mxu0
      %v9512 = vadd.f32 %v1079, %v9511
      %v9513 = vpop.f32.mrf.mxu0
      %v9514 = vadd.f32 %v1080, %v9513
      %9515 = vdwg.mxu0
      %9516 = vrot.lane.b32.xlu0 %v1387, 80
      %v9517 = vpop.permute.xlu0 %9516
      %9518 = vrot.lane.b32.xlu0 %v1387, 16
      %v9519 = vpop.permute.xlu0 %9518
      %v9521 = vsel %vm1092, %v9517, 0
      %v9524 = vsel %vm1092, %v9519, 0
      %9526 = vmatpush.bf16.xpose.msra.mxu0 0
      %9527 = vmatpush.bf16.xpose.msra.mxu0 0
      %9528 = vmatpush.bf16.xpose.msra.mxu0 0
      %9529 = vmatpush.bf16.xpose.msra.mxu0 0
      %9530 = vmatpush.bf16.xpose.msra.mxu0 0
      %9531 = vmatpush.bf16.xpose.msra.mxu0 0
      %9532 = vmatpush.bf16.xpose.msra.mxu0 0
      %9533 = vmatpush.bf16.xpose.msra.mxu0 %v9524
      %9534 = vmatmul.bf16.gmra.mxu0 %v9521
      %v9535 = vpop.f32.mrf.mxu0
      %v9536 = vadd.f32 %v1079, %v9535
      %v9537 = vpop.f32.mrf.mxu0
      %v9538 = vadd.f32 %v1080, %v9537
      %9539 = vdwg.mxu0
      %9540 = vrot.lane.b32.xlu0 %v1414, 80
      %v9541 = vpop.permute.xlu0 %9540
      %9542 = vrot.lane.b32.xlu0 %v1414, 16
      %v9543 = vpop.permute.xlu0 %9542
      %v9545 = vsel %vm1092, %v9541, 0
      %v9548 = vsel %vm1092, %v9543, 0
      %9550 = vmatpush.bf16.xpose.msra.mxu0 0
      %9551 = vmatpush.bf16.xpose.msra.mxu0 0
      %9552 = vmatpush.bf16.xpose.msra.mxu0 0
      %9553 = vmatpush.bf16.xpose.msra.mxu0 0
      %9554 = vmatpush.bf16.xpose.msra.mxu0 0
      %9555 = vmatpush.bf16.xpose.msra.mxu0 0
      %9556 = vmatpush.bf16.xpose.msra.mxu0 0
      %9557 = vmatpush.bf16.xpose.msra.mxu0 %v9548
      %9558 = vmatmul.bf16.gmra.mxu0 %v9545
      %v9559 = vpop.f32.mrf.mxu0
      %v9560 = vadd.f32 %v1079, %v9559
      %v9561 = vpop.f32.mrf.mxu0
      %v9562 = vadd.f32 %v1080, %v9561
      %9563 = vdwg.mxu0
      %9564 = vrot.lane.b32.xlu0 %v1441, 80
      %v9565 = vpop.permute.xlu0 %9564
      %9566 = vrot.lane.b32.xlu0 %v1441, 16
      %v9567 = vpop.permute.xlu0 %9566
      %v9569 = vsel %vm1092, %v9565, 0
      %v9572 = vsel %vm1092, %v9567, 0
      %9574 = vmatpush.bf16.xpose.msra.mxu0 0
      %9575 = vmatpush.bf16.xpose.msra.mxu0 0
      %9576 = vmatpush.bf16.xpose.msra.mxu0 0
      %9577 = vmatpush.bf16.xpose.msra.mxu0 0
      %9578 = vmatpush.bf16.xpose.msra.mxu0 0
      %9579 = vmatpush.bf16.xpose.msra.mxu0 0
      %9580 = vmatpush.bf16.xpose.msra.mxu0 0
      %9581 = vmatpush.bf16.xpose.msra.mxu0 %v9572
      %9582 = vmatmul.bf16.gmra.mxu0 %v9569
      %v9583 = vpop.f32.mrf.mxu0
      %v9584 = vadd.f32 %v1079, %v9583
      %v9585 = vpop.f32.mrf.mxu0
      %v9586 = vadd.f32 %v1080, %v9585
      %9587 = vdwg.mxu0
      %9588 = vrot.lane.b32.xlu0 %v1468, 80
      %v9589 = vpop.permute.xlu0 %9588
      %9590 = vrot.lane.b32.xlu0 %v1468, 16
      %v9591 = vpop.permute.xlu0 %9590
      %v9593 = vsel %vm1092, %v9589, 0
      %v9596 = vsel %vm1092, %v9591, 0
      %9598 = vmatpush.bf16.xpose.msra.mxu0 0
      %9599 = vmatpush.bf16.xpose.msra.mxu0 0
      %9600 = vmatpush.bf16.xpose.msra.mxu0 0
      %9601 = vmatpush.bf16.xpose.msra.mxu0 0
      %9602 = vmatpush.bf16.xpose.msra.mxu0 0
      %9603 = vmatpush.bf16.xpose.msra.mxu0 0
      %9604 = vmatpush.bf16.xpose.msra.mxu0 0
      %9605 = vmatpush.bf16.xpose.msra.mxu0 %v9596
      %9606 = vmatmul.bf16.gmra.mxu0 %v9593
      %v9607 = vpop.f32.mrf.mxu0
      %v9608 = vadd.f32 %v1079, %v9607
      %v9609 = vpop.f32.mrf.mxu0
      %v9610 = vadd.f32 %v1080, %v9609
      %9611 = vdwg.mxu0
      %9612 = vrot.lane.b32.xlu0 %v1495, 80
      %v9613 = vpop.permute.xlu0 %9612
      %9614 = vrot.lane.b32.xlu0 %v1495, 16
      %v9615 = vpop.permute.xlu0 %9614
      %v9617 = vsel %vm1092, %v9613, 0
      %v9620 = vsel %vm1092, %v9615, 0
      %9622 = vmatpush.bf16.xpose.msra.mxu0 0
      %9623 = vmatpush.bf16.xpose.msra.mxu0 0
      %9624 = vmatpush.bf16.xpose.msra.mxu0 0
      %9625 = vmatpush.bf16.xpose.msra.mxu0 0
      %9626 = vmatpush.bf16.xpose.msra.mxu0 0
      %9627 = vmatpush.bf16.xpose.msra.mxu0 0
      %9628 = vmatpush.bf16.xpose.msra.mxu0 0
      %9629 = vmatpush.bf16.xpose.msra.mxu0 %v9620
      %9630 = vmatmul.bf16.gmra.mxu0 %v9617
      %v9631 = vpop.f32.mrf.mxu0
      %v9632 = vadd.f32 %v1079, %v9631
      %v9633 = vpop.f32.mrf.mxu0
      %v9634 = vadd.f32 %v1080, %v9633
      %9635 = vdwg.mxu0
      %9636 = vrot.lane.b32.xlu0 %v1522, 80
      %v9637 = vpop.permute.xlu0 %9636
      %9638 = vrot.lane.b32.xlu0 %v1522, 16
      %v9639 = vpop.permute.xlu0 %9638
      %v9641 = vsel %vm1092, %v9637, 0
      %v9644 = vsel %vm1092, %v9639, 0
      %9646 = vmatpush.bf16.xpose.msra.mxu0 0
      %9647 = vmatpush.bf16.xpose.msra.mxu0 0
      %9648 = vmatpush.bf16.xpose.msra.mxu0 0
      %9649 = vmatpush.bf16.xpose.msra.mxu0 0
      %9650 = vmatpush.bf16.xpose.msra.mxu0 0
      %9651 = vmatpush.bf16.xpose.msra.mxu0 0
      %9652 = vmatpush.bf16.xpose.msra.mxu0 0
      %9653 = vmatpush.bf16.xpose.msra.mxu0 %v9644
      %9654 = vmatmul.bf16.gmra.mxu0 %v9641
      %v9655 = vpop.f32.mrf.mxu0
      %v9656 = vadd.f32 %v1079, %v9655
      %v9657 = vpop.f32.mrf.mxu0
      %v9658 = vadd.f32 %v1080, %v9657
      %9659 = vdwg.mxu0
      %9660 = vrot.lane.b32.xlu0 %v1549, 80
      %v9661 = vpop.permute.xlu0 %9660
      %9662 = vrot.lane.b32.xlu0 %v1549, 16
      %v9663 = vpop.permute.xlu0 %9662
      %v9665 = vsel %vm1092, %v9661, 0
      %v9668 = vsel %vm1092, %v9663, 0
      %9670 = vmatpush.bf16.xpose.msra.mxu0 0
      %9671 = vmatpush.bf16.xpose.msra.mxu0 0
      %9672 = vmatpush.bf16.xpose.msra.mxu0 0
      %9673 = vmatpush.bf16.xpose.msra.mxu0 0
      %9674 = vmatpush.bf16.xpose.msra.mxu0 0
      %9675 = vmatpush.bf16.xpose.msra.mxu0 0
      %9676 = vmatpush.bf16.xpose.msra.mxu0 0
      %9677 = vmatpush.bf16.xpose.msra.mxu0 %v9668
      %9678 = vmatmul.bf16.gmra.mxu0 %v9665
      %v9679 = vpop.f32.mrf.mxu0
      %v9680 = vadd.f32 %v1079, %v9679
      %v9681 = vpop.f32.mrf.mxu0
      %v9682 = vadd.f32 %v1080, %v9681
      %9683 = vdwg.mxu0
      %9684 = vrot.lane.b32.xlu0 %v1576, 80
      %v9685 = vpop.permute.xlu0 %9684
      %9686 = vrot.lane.b32.xlu0 %v1576, 16
      %v9687 = vpop.permute.xlu0 %9686
      %v9689 = vsel %vm1092, %v9685, 0
      %v9692 = vsel %vm1092, %v9687, 0
      %9694 = vmatpush.bf16.xpose.msra.mxu0 0
      %9695 = vmatpush.bf16.xpose.msra.mxu0 0
      %9696 = vmatpush.bf16.xpose.msra.mxu0 0
      %9697 = vmatpush.bf16.xpose.msra.mxu0 0
      %9698 = vmatpush.bf16.xpose.msra.mxu0 0
      %9699 = vmatpush.bf16.xpose.msra.mxu0 0
      %9700 = vmatpush.bf16.xpose.msra.mxu0 0
      %9701 = vmatpush.bf16.xpose.msra.mxu0 %v9692
      %9702 = vmatmul.bf16.gmra.mxu0 %v9689
      %v9703 = vpop.f32.mrf.mxu0
      %v9704 = vadd.f32 %v1079, %v9703
      %v9705 = vpop.f32.mrf.mxu0
      %v9706 = vadd.f32 %v1080, %v9705
      %9707 = vdwg.mxu0
      %9708 = vrot.lane.b32.xlu0 %v1603, 80
      %v9709 = vpop.permute.xlu0 %9708
      %9710 = vrot.lane.b32.xlu0 %v1603, 16
      %v9711 = vpop.permute.xlu0 %9710
      %v9713 = vsel %vm1092, %v9709, 0
      %v9716 = vsel %vm1092, %v9711, 0
      %9718 = vmatpush.bf16.xpose.msra.mxu0 0
      %9719 = vmatpush.bf16.xpose.msra.mxu0 0
      %9720 = vmatpush.bf16.xpose.msra.mxu0 0
      %9721 = vmatpush.bf16.xpose.msra.mxu0 0
      %9722 = vmatpush.bf16.xpose.msra.mxu0 0
      %9723 = vmatpush.bf16.xpose.msra.mxu0 0
      %9724 = vmatpush.bf16.xpose.msra.mxu0 0
      %9725 = vmatpush.bf16.xpose.msra.mxu0 %v9716
      %9726 = vmatmul.bf16.gmra.mxu0 %v9713
      %v9727 = vpop.f32.mrf.mxu0
      %v9728 = vadd.f32 %v1079, %v9727
      %v9729 = vpop.f32.mrf.mxu0
      %v9730 = vadd.f32 %v1080, %v9729
      %9731 = vdwg.mxu0
      %9732 = vrot.lane.b32.xlu0 %v1630, 80
      %v9733 = vpop.permute.xlu0 %9732
      %9734 = vrot.lane.b32.xlu0 %v1630, 16
      %v9735 = vpop.permute.xlu0 %9734
      %v9737 = vsel %vm1092, %v9733, 0
      %v9740 = vsel %vm1092, %v9735, 0
      %9742 = vmatpush.bf16.xpose.msra.mxu0 0
      %9743 = vmatpush.bf16.xpose.msra.mxu0 0
      %9744 = vmatpush.bf16.xpose.msra.mxu0 0
      %9745 = vmatpush.bf16.xpose.msra.mxu0 0
      %9746 = vmatpush.bf16.xpose.msra.mxu0 0
      %9747 = vmatpush.bf16.xpose.msra.mxu0 0
      %9748 = vmatpush.bf16.xpose.msra.mxu0 0
      %9749 = vmatpush.bf16.xpose.msra.mxu0 %v9740
      %9750 = vmatmul.bf16.gmra.mxu0 %v9737
      %v9751 = vpop.f32.mrf.mxu0
      %v9752 = vadd.f32 %v1079, %v9751
      %v9753 = vpop.f32.mrf.mxu0
      %v9754 = vadd.f32 %v1080, %v9753
      %9755 = vdwg.mxu0
      %9756 = vrot.lane.b32.xlu0 %v1657, 80
      %v9757 = vpop.permute.xlu0 %9756
      %9758 = vrot.lane.b32.xlu0 %v1657, 16
      %v9759 = vpop.permute.xlu0 %9758
      %v9761 = vsel %vm1092, %v9757, 0
      %v9764 = vsel %vm1092, %v9759, 0
      %9766 = vmatpush.bf16.xpose.msra.mxu0 0
      %9767 = vmatpush.bf16.xpose.msra.mxu0 0
      %9768 = vmatpush.bf16.xpose.msra.mxu0 0
      %9769 = vmatpush.bf16.xpose.msra.mxu0 0
      %9770 = vmatpush.bf16.xpose.msra.mxu0 0
      %9771 = vmatpush.bf16.xpose.msra.mxu0 0
      %9772 = vmatpush.bf16.xpose.msra.mxu0 0
      %9773 = vmatpush.bf16.xpose.msra.mxu0 %v9764
      %9774 = vmatmul.bf16.gmra.mxu0 %v9761
      %v9775 = vpop.f32.mrf.mxu0
      %v9776 = vadd.f32 %v1079, %v9775
      %v9777 = vpop.f32.mrf.mxu0
      %v9778 = vadd.f32 %v1080, %v9777
      %9779 = vdwg.mxu0
      %9780 = vrot.lane.b32.xlu0 %v1684, 80
      %v9781 = vpop.permute.xlu0 %9780
      %9782 = vrot.lane.b32.xlu0 %v1684, 16
      %v9783 = vpop.permute.xlu0 %9782
      %v9785 = vsel %vm1092, %v9781, 0
      %v9788 = vsel %vm1092, %v9783, 0
      %9790 = vmatpush.bf16.xpose.msra.mxu0 0
      %9791 = vmatpush.bf16.xpose.msra.mxu0 0
      %9792 = vmatpush.bf16.xpose.msra.mxu0 0
      %9793 = vmatpush.bf16.xpose.msra.mxu0 0
      %9794 = vmatpush.bf16.xpose.msra.mxu0 0
      %9795 = vmatpush.bf16.xpose.msra.mxu0 0
      %9796 = vmatpush.bf16.xpose.msra.mxu0 0
      %9797 = vmatpush.bf16.xpose.msra.mxu0 %v9788
      %9798 = vmatmul.bf16.gmra.mxu0 %v9785
      %v9799 = vpop.f32.mrf.mxu0
      %v9800 = vadd.f32 %v1079, %v9799
      %v9801 = vpop.f32.mrf.mxu0
      %v9802 = vadd.f32 %v1080, %v9801
      %9803 = vdwg.mxu0
      %9804 = vrot.lane.b32.xlu0 %v1711, 80
      %v9805 = vpop.permute.xlu0 %9804
      %9806 = vrot.lane.b32.xlu0 %v1711, 16
      %v9807 = vpop.permute.xlu0 %9806
      %v9809 = vsel %vm1092, %v9805, 0
      %v9812 = vsel %vm1092, %v9807, 0
      %9814 = vmatpush.bf16.xpose.msra.mxu0 0
      %9815 = vmatpush.bf16.xpose.msra.mxu0 0
      %9816 = vmatpush.bf16.xpose.msra.mxu0 0
      %9817 = vmatpush.bf16.xpose.msra.mxu0 0
      %9818 = vmatpush.bf16.xpose.msra.mxu0 0
      %9819 = vmatpush.bf16.xpose.msra.mxu0 0
      %9820 = vmatpush.bf16.xpose.msra.mxu0 0
      %9821 = vmatpush.bf16.xpose.msra.mxu0 %v9812
      %9822 = vmatmul.bf16.gmra.mxu0 %v9809
      %v9823 = vpop.f32.mrf.mxu0
      %v9824 = vadd.f32 %v1079, %v9823
      %v9825 = vpop.f32.mrf.mxu0
      %v9826 = vadd.f32 %v1080, %v9825
      %9827 = vdwg.mxu0
      %9828 = vrot.lane.b32.xlu0 %v1738, 80
      %v9829 = vpop.permute.xlu0 %9828
      %9830 = vrot.lane.b32.xlu0 %v1738, 16
      %v9831 = vpop.permute.xlu0 %9830
      %v9833 = vsel %vm1092, %v9829, 0
      %v9836 = vsel %vm1092, %v9831, 0
      %9838 = vmatpush.bf16.xpose.msra.mxu0 0
      %9839 = vmatpush.bf16.xpose.msra.mxu0 0
      %9840 = vmatpush.bf16.xpose.msra.mxu0 0
      %9841 = vmatpush.bf16.xpose.msra.mxu0 0
      %9842 = vmatpush.bf16.xpose.msra.mxu0 0
      %9843 = vmatpush.bf16.xpose.msra.mxu0 0
      %9844 = vmatpush.bf16.xpose.msra.mxu0 0
      %9845 = vmatpush.bf16.xpose.msra.mxu0 %v9836
      %9846 = vmatmul.bf16.gmra.mxu0 %v9833
      %v9847 = vpop.f32.mrf.mxu0
      %v9848 = vadd.f32 %v1079, %v9847
      %v9849 = vpop.f32.mrf.mxu0
      %v9850 = vadd.f32 %v1080, %v9849
      %9851 = vdwg.mxu0
      %9852 = vrot.lane.b32.xlu0 %v1765, 80
      %v9853 = vpop.permute.xlu0 %9852
      %9854 = vrot.lane.b32.xlu0 %v1765, 16
      %v9855 = vpop.permute.xlu0 %9854
      %v9857 = vsel %vm1092, %v9853, 0
      %v9860 = vsel %vm1092, %v9855, 0
      %9862 = vmatpush.bf16.xpose.msra.mxu0 0
      %9863 = vmatpush.bf16.xpose.msra.mxu0 0
      %9864 = vmatpush.bf16.xpose.msra.mxu0 0
      %9865 = vmatpush.bf16.xpose.msra.mxu0 0
      %9866 = vmatpush.bf16.xpose.msra.mxu0 0
      %9867 = vmatpush.bf16.xpose.msra.mxu0 0
      %9868 = vmatpush.bf16.xpose.msra.mxu0 0
      %9869 = vmatpush.bf16.xpose.msra.mxu0 %v9860
      %9870 = vmatmul.bf16.gmra.mxu0 %v9857
      %v9871 = vpop.f32.mrf.mxu0
      %v9872 = vadd.f32 %v1079, %v9871
      %v9873 = vpop.f32.mrf.mxu0
      %v9874 = vadd.f32 %v1080, %v9873
      %9875 = vdwg.mxu0
      %9876 = vrot.lane.b32.xlu0 %v1792, 80
      %v9877 = vpop.permute.xlu0 %9876
      %9878 = vrot.lane.b32.xlu0 %v1792, 16
      %v9879 = vpop.permute.xlu0 %9878
      %v9881 = vsel %vm1092, %v9877, 0
      %v9884 = vsel %vm1092, %v9879, 0
      %9886 = vmatpush.bf16.xpose.msra.mxu0 0
      %9887 = vmatpush.bf16.xpose.msra.mxu0 0
      %9888 = vmatpush.bf16.xpose.msra.mxu0 0
      %9889 = vmatpush.bf16.xpose.msra.mxu0 0
      %9890 = vmatpush.bf16.xpose.msra.mxu0 0
      %9891 = vmatpush.bf16.xpose.msra.mxu0 0
      %9892 = vmatpush.bf16.xpose.msra.mxu0 0
      %9893 = vmatpush.bf16.xpose.msra.mxu0 %v9884
      %9894 = vmatmul.bf16.gmra.mxu0 %v9881
      %v9895 = vpop.f32.mrf.mxu0
      %v9896 = vadd.f32 %v1079, %v9895
      %v9897 = vpop.f32.mrf.mxu0
      %v9898 = vadd.f32 %v1080, %v9897
      %9899 = vdwg.mxu0
      %9900 = vrot.lane.b32.xlu0 %v1819, 80
      %v9901 = vpop.permute.xlu0 %9900
      %9902 = vrot.lane.b32.xlu0 %v1819, 16
      %v9903 = vpop.permute.xlu0 %9902
      %v9905 = vsel %vm1092, %v9901, 0
      %v9908 = vsel %vm1092, %v9903, 0
      %9910 = vmatpush.bf16.xpose.msra.mxu0 0
      %9911 = vmatpush.bf16.xpose.msra.mxu0 0
      %9912 = vmatpush.bf16.xpose.msra.mxu0 0
      %9913 = vmatpush.bf16.xpose.msra.mxu0 0
      %9914 = vmatpush.bf16.xpose.msra.mxu0 0
      %9915 = vmatpush.bf16.xpose.msra.mxu0 0
      %9916 = vmatpush.bf16.xpose.msra.mxu0 0
      %9917 = vmatpush.bf16.xpose.msra.mxu0 %v9908
      %9918 = vmatmul.bf16.gmra.mxu0 %v9905
      %v9919 = vpop.f32.mrf.mxu0
      %v9920 = vadd.f32 %v1079, %v9919
      %v9921 = vpop.f32.mrf.mxu0
      %v9922 = vadd.f32 %v1080, %v9921
      %9923 = vdwg.mxu0
      %9924 = vrot.lane.b32.xlu0 %v1846, 80
      %v9925 = vpop.permute.xlu0 %9924
      %9926 = vrot.lane.b32.xlu0 %v1846, 16
      %v9927 = vpop.permute.xlu0 %9926
      %v9929 = vsel %vm1092, %v9925, 0
      %v9932 = vsel %vm1092, %v9927, 0
      %9934 = vmatpush.bf16.xpose.msra.mxu0 0
      %9935 = vmatpush.bf16.xpose.msra.mxu0 0
      %9936 = vmatpush.bf16.xpose.msra.mxu0 0
      %9937 = vmatpush.bf16.xpose.msra.mxu0 0
      %9938 = vmatpush.bf16.xpose.msra.mxu0 0
      %9939 = vmatpush.bf16.xpose.msra.mxu0 0
      %9940 = vmatpush.bf16.xpose.msra.mxu0 0
      %9941 = vmatpush.bf16.xpose.msra.mxu0 %v9932
      %9942 = vmatmul.bf16.gmra.mxu0 %v9929
      %v9943 = vpop.f32.mrf.mxu0
      %v9944 = vadd.f32 %v1079, %v9943
      %v9945 = vpop.f32.mrf.mxu0
      %v9946 = vadd.f32 %v1080, %v9945
      %9947 = vdwg.mxu0
      %9948 = vrot.lane.b32.xlu0 %v1873, 80
      %v9949 = vpop.permute.xlu0 %9948
      %9950 = vrot.lane.b32.xlu0 %v1873, 16
      %v9951 = vpop.permute.xlu0 %9950
      %v9953 = vsel %vm1092, %v9949, 0
      %v9956 = vsel %vm1092, %v9951, 0
      %9958 = vmatpush.bf16.xpose.msra.mxu0 0
      %9959 = vmatpush.bf16.xpose.msra.mxu0 0
      %9960 = vmatpush.bf16.xpose.msra.mxu0 0
      %9961 = vmatpush.bf16.xpose.msra.mxu0 0
      %9962 = vmatpush.bf16.xpose.msra.mxu0 0
      %9963 = vmatpush.bf16.xpose.msra.mxu0 0
      %9964 = vmatpush.bf16.xpose.msra.mxu0 0
      %9965 = vmatpush.bf16.xpose.msra.mxu0 %v9956
      %9966 = vmatmul.bf16.gmra.mxu0 %v9953
      %v9967 = vpop.f32.mrf.mxu0
      %v9968 = vadd.f32 %v1079, %v9967
      %v9969 = vpop.f32.mrf.mxu0
      %v9970 = vadd.f32 %v1080, %v9969
      %9971 = vdwg.mxu0
      %9972 = vrot.lane.b32.xlu0 %v1900, 80
      %v9973 = vpop.permute.xlu0 %9972
      %9974 = vrot.lane.b32.xlu0 %v1900, 16
      %v9975 = vpop.permute.xlu0 %9974
      %v9977 = vsel %vm1092, %v9973, 0
      %v9980 = vsel %vm1092, %v9975, 0
      %9982 = vmatpush.bf16.xpose.msra.mxu0 0
      %9983 = vmatpush.bf16.xpose.msra.mxu0 0
      %9984 = vmatpush.bf16.xpose.msra.mxu0 0
      %9985 = vmatpush.bf16.xpose.msra.mxu0 0
      %9986 = vmatpush.bf16.xpose.msra.mxu0 0
      %9987 = vmatpush.bf16.xpose.msra.mxu0 0
      %9988 = vmatpush.bf16.xpose.msra.mxu0 0
      %9989 = vmatpush.bf16.xpose.msra.mxu0 %v9980
      %9990 = vmatmul.bf16.gmra.mxu0 %v9977
      %v9991 = vpop.f32.mrf.mxu0
      %v9992 = vadd.f32 %v1079, %v9991
      %v9993 = vpop.f32.mrf.mxu0
      %v9994 = vadd.f32 %v1080, %v9993
      %9995 = vdwg.mxu0
      %9996 = vrot.lane.b32.xlu0 %v1927, 80
      %v9997 = vpop.permute.xlu0 %9996
      %9998 = vrot.lane.b32.xlu0 %v1927, 16
      %v9999 = vpop.permute.xlu0 %9998
      %v10001 = vsel %vm1092, %v9997, 0
      %v10004 = vsel %vm1092, %v9999, 0
      %10006 = vmatpush.bf16.xpose.msra.mxu0 0
      %10007 = vmatpush.bf16.xpose.msra.mxu0 0
      %10008 = vmatpush.bf16.xpose.msra.mxu0 0
      %10009 = vmatpush.bf16.xpose.msra.mxu0 0
      %10010 = vmatpush.bf16.xpose.msra.mxu0 0
      %10011 = vmatpush.bf16.xpose.msra.mxu0 0
      %10012 = vmatpush.bf16.xpose.msra.mxu0 0
      %10013 = vmatpush.bf16.xpose.msra.mxu0 %v10004
      %10014 = vmatmul.bf16.gmra.mxu0 %v10001
      %v10015 = vpop.f32.mrf.mxu0
      %v10016 = vadd.f32 %v1079, %v10015
      %v10017 = vpop.f32.mrf.mxu0
      %v10018 = vadd.f32 %v1080, %v10017
      %10019 = vdwg.mxu0
      %v10020 = vsel %vm1092, %v9272, -inf
      %10021 = vmax.xlane.f32.xlu0 %v10020
      %v10022 = vpop.xlane.xlu0 %10021
      %v10023 = vsel %vm1092, %v9274, -inf
      %10024 = vmax.xlane.f32.xlu0 %v10023
      %v10025 = vpop.xlane.xlu0 %10024
      %v10026 = vsel %vm1092, %v9296, -inf
      %10027 = vmax.xlane.f32.xlu0 %v10026
      %v10028 = vpop.xlane.xlu0 %10027
      %v10029 = vsel %vm1092, %v9298, -inf
      %10030 = vmax.xlane.f32.xlu0 %v10029
      %v10031 = vpop.xlane.xlu0 %10030
      %v10032 = vsel %vm1092, %v9320, -inf
      %10033 = vmax.xlane.f32.xlu0 %v10032
      %v10034 = vpop.xlane.xlu0 %10033
      %v10035 = vsel %vm1092, %v9322, -inf
      %10036 = vmax.xlane.f32.xlu0 %v10035
      %v10037 = vpop.xlane.xlu0 %10036
      %v10038 = vsel %vm1092, %v9344, -inf
      %10039 = vmax.xlane.f32.xlu0 %v10038
      %v10040 = vpop.xlane.xlu0 %10039
      %v10041 = vsel %vm1092, %v9346, -inf
      %10042 = vmax.xlane.f32.xlu0 %v10041
      %v10043 = vpop.xlane.xlu0 %10042
      %v10044 = vsel %vm1092, %v9368, -inf
      %10045 = vmax.xlane.f32.xlu0 %v10044
      %v10046 = vpop.xlane.xlu0 %10045
      %v10047 = vsel %vm1092, %v9370, -inf
      %10048 = vmax.xlane.f32.xlu0 %v10047
      %v10049 = vpop.xlane.xlu0 %10048
      %v10050 = vsel %vm1092, %v9392, -inf
      %10051 = vmax.xlane.f32.xlu0 %v10050
      %v10052 = vpop.xlane.xlu0 %10051
      %v10053 = vsel %vm1092, %v9394, -inf
      %10054 = vmax.xlane.f32.xlu0 %v10053
      %v10055 = vpop.xlane.xlu0 %10054
      %v10056 = vsel %vm1092, %v9416, -inf
      %10057 = vmax.xlane.f32.xlu0 %v10056
      %v10058 = vpop.xlane.xlu0 %10057
      %v10059 = vsel %vm1092, %v9418, -inf
      %10060 = vmax.xlane.f32.xlu0 %v10059
      %v10061 = vpop.xlane.xlu0 %10060
      %v10062 = vsel %vm1092, %v9440, -inf
      %10063 = vmax.xlane.f32.xlu0 %v10062
      %v10064 = vpop.xlane.xlu0 %10063
      %v10065 = vsel %vm1092, %v9442, -inf
      %10066 = vmax.xlane.f32.xlu0 %v10065
      %v10067 = vpop.xlane.xlu0 %10066
      %v10068 = vsel %vm1092, %v9464, -inf
      %10069 = vmax.xlane.f32.xlu0 %v10068
      %v10070 = vpop.xlane.xlu0 %10069
      %v10071 = vsel %vm1092, %v9466, -inf
      %10072 = vmax.xlane.f32.xlu0 %v10071
      %v10073 = vpop.xlane.xlu0 %10072
      %v10074 = vsel %vm1092, %v9488, -inf
      %10075 = vmax.xlane.f32.xlu0 %v10074
      %v10076 = vpop.xlane.xlu0 %10075
      %v10077 = vsel %vm1092, %v9490, -inf
      %10078 = vmax.xlane.f32.xlu0 %v10077
      %v10079 = vpop.xlane.xlu0 %10078
      %v10080 = vsel %vm1092, %v9512, -inf
      %10081 = vmax.xlane.f32.xlu0 %v10080
      %v10082 = vpop.xlane.xlu0 %10081
      %v10083 = vsel %vm1092, %v9514, -inf
      %10084 = vmax.xlane.f32.xlu0 %v10083
      %v10085 = vpop.xlane.xlu0 %10084
      %v10086 = vsel %vm1092, %v9536, -inf
      %10087 = vmax.xlane.f32.xlu0 %v10086
      %v10088 = vpop.xlane.xlu0 %10087
      %v10089 = vsel %vm1092, %v9538, -inf
      %10090 = vmax.xlane.f32.xlu0 %v10089
      %v10091 = vpop.xlane.xlu0 %10090
      %v10092 = vsel %vm1092, %v9560, -inf
      %10093 = vmax.xlane.f32.xlu0 %v10092
      %v10094 = vpop.xlane.xlu0 %10093
      %v10095 = vsel %vm1092, %v9562, -inf
      %10096 = vmax.xlane.f32.xlu0 %v10095
      %v10097 = vpop.xlane.xlu0 %10096
      %v10098 = vsel %vm1092, %v9584, -inf
      %10099 = vmax.xlane.f32.xlu0 %v10098
      %v10100 = vpop.xlane.xlu0 %10099
      %v10101 = vsel %vm1092, %v9586, -inf
      %10102 = vmax.xlane.f32.xlu0 %v10101
      %v10103 = vpop.xlane.xlu0 %10102
      %v10104 = vsel %vm1092, %v9608, -inf
      %10105 = vmax.xlane.f32.xlu0 %v10104
      %v10106 = vpop.xlane.xlu0 %10105
      %v10107 = vsel %vm1092, %v9610, -inf
      %10108 = vmax.xlane.f32.xlu0 %v10107
      %v10109 = vpop.xlane.xlu0 %10108
      %v10110 = vsel %vm1092, %v9632, -inf
      %10111 = vmax.xlane.f32.xlu0 %v10110
      %v10112 = vpop.xlane.xlu0 %10111
      %v10113 = vsel %vm1092, %v9634, -inf
      %10114 = vmax.xlane.f32.xlu0 %v10113
      %v10115 = vpop.xlane.xlu0 %10114
      %v10116 = vsel %vm1092, %v9656, -inf
      %10117 = vmax.xlane.f32.xlu0 %v10116
      %v10118 = vpop.xlane.xlu0 %10117
      %v10119 = vsel %vm1092, %v9658, -inf
      %10120 = vmax.xlane.f32.xlu0 %v10119
      %v10121 = vpop.xlane.xlu0 %10120
      %v10122 = vsel %vm1092, %v9680, -inf
      %10123 = vmax.xlane.f32.xlu0 %v10122
      %v10124 = vpop.xlane.xlu0 %10123
      %v10125 = vsel %vm1092, %v9682, -inf
      %10126 = vmax.xlane.f32.xlu0 %v10125
      %v10127 = vpop.xlane.xlu0 %10126
      %v10128 = vsel %vm1092, %v9704, -inf
      %10129 = vmax.xlane.f32.xlu0 %v10128
      %v10130 = vpop.xlane.xlu0 %10129
      %v10131 = vsel %vm1092, %v9706, -inf
      %10132 = vmax.xlane.f32.xlu0 %v10131
      %v10133 = vpop.xlane.xlu0 %10132
      %v10134 = vsel %vm1092, %v9728, -inf
      %10135 = vmax.xlane.f32.xlu0 %v10134
      %v10136 = vpop.xlane.xlu0 %10135
      %v10137 = vsel %vm1092, %v9730, -inf
      %10138 = vmax.xlane.f32.xlu0 %v10137
      %v10139 = vpop.xlane.xlu0 %10138
      %v10140 = vsel %vm1092, %v9752, -inf
      %10141 = vmax.xlane.f32.xlu0 %v10140
      %v10142 = vpop.xlane.xlu0 %10141
      %v10143 = vsel %vm1092, %v9754, -inf
      %10144 = vmax.xlane.f32.xlu0 %v10143
      %v10145 = vpop.xlane.xlu0 %10144
      %v10146 = vsel %vm1092, %v9776, -inf
      %10147 = vmax.xlane.f32.xlu0 %v10146
      %v10148 = vpop.xlane.xlu0 %10147
      %v10149 = vsel %vm1092, %v9778, -inf
      %10150 = vmax.xlane.f32.xlu0 %v10149
      %v10151 = vpop.xlane.xlu0 %10150
      %v10152 = vsel %vm1092, %v9800, -inf
      %10153 = vmax.xlane.f32.xlu0 %v10152
      %v10154 = vpop.xlane.xlu0 %10153
      %v10155 = vsel %vm1092, %v9802, -inf
      %10156 = vmax.xlane.f32.xlu0 %v10155
      %v10157 = vpop.xlane.xlu0 %10156
      %v10158 = vsel %vm1092, %v9824, -inf
      %10159 = vmax.xlane.f32.xlu0 %v10158
      %v10160 = vpop.xlane.xlu0 %10159
      %v10161 = vsel %vm1092, %v9826, -inf
      %10162 = vmax.xlane.f32.xlu0 %v10161
      %v10163 = vpop.xlane.xlu0 %10162
      %v10164 = vsel %vm1092, %v9848, -inf
      %10165 = vmax.xlane.f32.xlu0 %v10164
      %v10166 = vpop.xlane.xlu0 %10165
      %v10167 = vsel %vm1092, %v9850, -inf
      %10168 = vmax.xlane.f32.xlu0 %v10167
      %v10169 = vpop.xlane.xlu0 %10168
      %v10170 = vsel %vm1092, %v9872, -inf
      %10171 = vmax.xlane.f32.xlu0 %v10170
      %v10172 = vpop.xlane.xlu0 %10171
      %v10173 = vsel %vm1092, %v9874, -inf
      %10174 = vmax.xlane.f32.xlu0 %v10173
      %v10175 = vpop.xlane.xlu0 %10174
      %v10176 = vsel %vm1092, %v9896, -inf
      %10177 = vmax.xlane.f32.xlu0 %v10176
      %v10178 = vpop.xlane.xlu0 %10177
      %v10179 = vsel %vm1092, %v9898, -inf
      %10180 = vmax.xlane.f32.xlu0 %v10179
      %v10181 = vpop.xlane.xlu0 %10180
      %v10182 = vsel %vm1092, %v9920, -inf
      %10183 = vmax.xlane.f32.xlu0 %v10182
      %v10184 = vpop.xlane.xlu0 %10183
      %v10185 = vsel %vm1092, %v9922, -inf
      %10186 = vmax.xlane.f32.xlu0 %v10185
      %v10187 = vpop.xlane.xlu0 %10186
      %v10188 = vsel %vm1092, %v9944, -inf
      %10189 = vmax.xlane.f32.xlu0 %v10188
      %v10190 = vpop.xlane.xlu0 %10189
      %v10191 = vsel %vm1092, %v9946, -inf
      %10192 = vmax.xlane.f32.xlu0 %v10191
      %v10193 = vpop.xlane.xlu0 %10192
      %v10194 = vsel %vm1092, %v9968, -inf
      %10195 = vmax.xlane.f32.xlu0 %v10194
      %v10196 = vpop.xlane.xlu0 %10195
      %v10197 = vsel %vm1092, %v9970, -inf
      %10198 = vmax.xlane.f32.xlu0 %v10197
      %v10199 = vpop.xlane.xlu0 %10198
      %v10200 = vsel %vm1092, %v9992, -inf
      %10201 = vmax.xlane.f32.xlu0 %v10200
      %v10202 = vpop.xlane.xlu0 %10201
      %v10203 = vsel %vm1092, %v9994, -inf
      %10204 = vmax.xlane.f32.xlu0 %v10203
      %v10205 = vpop.xlane.xlu0 %10204
      %v10206 = vsel %vm1092, %v10016, -inf
      %10207 = vmax.xlane.f32.xlu0 %v10206
      %v10208 = vpop.xlane.xlu0 %10207
      %v10209 = vsel %vm1092, %v10018, -inf
      %10210 = vmax.xlane.f32.xlu0 %v10209
      %v10211 = vpop.xlane.xlu0 %10210
      %v10212 = vsub.f32 %v9272, %v10022
      %v10213 = vsub.f32 %v9274, %v10025
      %v10214 = vsub.f32 %v9296, %v10028
      %v10215 = vsub.f32 %v9298, %v10031
      %v10216 = vsub.f32 %v9320, %v10034
      %v10217 = vsub.f32 %v9322, %v10037
      %v10218 = vsub.f32 %v9344, %v10040
      %v10219 = vsub.f32 %v9346, %v10043
      %v10220 = vsub.f32 %v9368, %v10046
      %v10221 = vsub.f32 %v9370, %v10049
      %v10222 = vsub.f32 %v9392, %v10052
      %v10223 = vsub.f32 %v9394, %v10055
      %v10224 = vsub.f32 %v9416, %v10058
      %v10225 = vsub.f32 %v9418, %v10061
      %v10226 = vsub.f32 %v9440, %v10064
      %v10227 = vsub.f32 %v9442, %v10067
      %v10228 = vsub.f32 %v9464, %v10070
      %v10229 = vsub.f32 %v9466, %v10073
      %v10230 = vsub.f32 %v9488, %v10076
      %v10231 = vsub.f32 %v9490, %v10079
      %v10232 = vsub.f32 %v9512, %v10082
      %v10233 = vsub.f32 %v9514, %v10085
      %v10234 = vsub.f32 %v9536, %v10088
      %v10235 = vsub.f32 %v9538, %v10091
      %v10236 = vsub.f32 %v9560, %v10094
      %v10237 = vsub.f32 %v9562, %v10097
      %v10238 = vsub.f32 %v9584, %v10100
      %v10239 = vsub.f32 %v9586, %v10103
      %v10240 = vsub.f32 %v9608, %v10106
      %v10241 = vsub.f32 %v9610, %v10109
      %v10242 = vsub.f32 %v9632, %v10112
      %v10243 = vsub.f32 %v9634, %v10115
      %v10244 = vsub.f32 %v9656, %v10118
      %v10245 = vsub.f32 %v9658, %v10121
      %v10246 = vsub.f32 %v9680, %v10124
      %v10247 = vsub.f32 %v9682, %v10127
      %v10248 = vsub.f32 %v9704, %v10130
      %v10249 = vsub.f32 %v9706, %v10133
      %v10250 = vsub.f32 %v9728, %v10136
      %v10251 = vsub.f32 %v9730, %v10139
      %v10252 = vsub.f32 %v9752, %v10142
      %v10253 = vsub.f32 %v9754, %v10145
      %v10254 = vsub.f32 %v9776, %v10148
      %v10255 = vsub.f32 %v9778, %v10151
      %v10256 = vsub.f32 %v9800, %v10154
      %v10257 = vsub.f32 %v9802, %v10157
      %v10258 = vsub.f32 %v9824, %v10160
      %v10259 = vsub.f32 %v9826, %v10163
      %v10260 = vsub.f32 %v9848, %v10166
      %v10261 = vsub.f32 %v9850, %v10169
      %v10262 = vsub.f32 %v9872, %v10172
      %v10263 = vsub.f32 %v9874, %v10175
      %v10264 = vsub.f32 %v9896, %v10178
      %v10265 = vsub.f32 %v9898, %v10181
      %v10266 = vsub.f32 %v9920, %v10184
      %v10267 = vsub.f32 %v9922, %v10187
      %v10268 = vsub.f32 %v9944, %v10190
      %v10269 = vsub.f32 %v9946, %v10193
      %v10270 = vsub.f32 %v9968, %v10196
      %v10271 = vsub.f32 %v9970, %v10199
      %v10272 = vsub.f32 %v9992, %v10202
      %v10273 = vsub.f32 %v9994, %v10205
      %v10274 = vsub.f32 %v10016, %v10208
      %v10275 = vsub.f32 %v10018, %v10211
      %v10276 = vmul.f32 %v10212, 1.442695
      %v10277 = vpow.pop %v10276
      %v10278 = vmul.f32 %v10213, 1.442695
      %v10279 = vpow.pop %v10278
      %v10280 = vmul.f32 %v10214, 1.442695
      %v10281 = vpow.pop %v10280
      %v10282 = vmul.f32 %v10215, 1.442695
      %v10283 = vpow.pop %v10282
      %v10284 = vmul.f32 %v10216, 1.442695
      %v10285 = vpow.pop %v10284
      %v10286 = vmul.f32 %v10217, 1.442695
      %v10287 = vpow.pop %v10286
      %v10288 = vmul.f32 %v10218, 1.442695
      %v10289 = vpow.pop %v10288
      %v10290 = vmul.f32 %v10219, 1.442695
      %v10291 = vpow.pop %v10290
      %v10292 = vmul.f32 %v10220, 1.442695
      %v10293 = vpow.pop %v10292
      %v10294 = vmul.f32 %v10221, 1.442695
      %v10295 = vpow.pop %v10294
      %v10296 = vmul.f32 %v10222, 1.442695
      %v10297 = vpow.pop %v10296
      %v10298 = vmul.f32 %v10223, 1.442695
      %v10299 = vpow.pop %v10298
      %v10300 = vmul.f32 %v10224, 1.442695
      %v10301 = vpow.pop %v10300
      %v10302 = vmul.f32 %v10225, 1.442695
      %v10303 = vpow.pop %v10302
      %v10304 = vmul.f32 %v10226, 1.442695
      %v10305 = vpow.pop %v10304
      %v10306 = vmul.f32 %v10227, 1.442695
      %v10307 = vpow.pop %v10306
      %v10308 = vmul.f32 %v10228, 1.442695
      %v10309 = vpow.pop %v10308
      %v10310 = vmul.f32 %v10229, 1.442695
      %v10311 = vpow.pop %v10310
      %v10312 = vmul.f32 %v10230, 1.442695
      %v10313 = vpow.pop %v10312
      %v10314 = vmul.f32 %v10231, 1.442695
      %v10315 = vpow.pop %v10314
      %v10316 = vmul.f32 %v10232, 1.442695
      %v10317 = vpow.pop %v10316
      %v10318 = vmul.f32 %v10233, 1.442695
      %v10319 = vpow.pop %v10318
      %v10320 = vmul.f32 %v10234, 1.442695
      %v10321 = vpow.pop %v10320
      %v10322 = vmul.f32 %v10235, 1.442695
      %v10323 = vpow.pop %v10322
      %v10324 = vmul.f32 %v10236, 1.442695
      %v10325 = vpow.pop %v10324
      %v10326 = vmul.f32 %v10237, 1.442695
      %v10327 = vpow.pop %v10326
      %v10328 = vmul.f32 %v10238, 1.442695
      %v10329 = vpow.pop %v10328
      %v10330 = vmul.f32 %v10239, 1.442695
      %v10331 = vpow.pop %v10330
      %v10332 = vmul.f32 %v10240, 1.442695
      %v10333 = vpow.pop %v10332
      %v10334 = vmul.f32 %v10241, 1.442695
      %v10335 = vpow.pop %v10334
      %v10336 = vmul.f32 %v10242, 1.442695
      %v10337 = vpow.pop %v10336
      %v10338 = vmul.f32 %v10243, 1.442695
      %v10339 = vpow.pop %v10338
      %v10340 = vmul.f32 %v10244, 1.442695
      %v10341 = vpow.pop %v10340
      %v10342 = vmul.f32 %v10245, 1.442695
      %v10343 = vpow.pop %v10342
      %v10344 = vmul.f32 %v10246, 1.442695
      %v10345 = vpow.pop %v10344
      %v10346 = vmul.f32 %v10247, 1.442695
      %v10347 = vpow.pop %v10346
      %v10348 = vmul.f32 %v10248, 1.442695
      %v10349 = vpow.pop %v10348
      %v10350 = vmul.f32 %v10249, 1.442695
      %v10351 = vpow.pop %v10350
      %v10352 = vmul.f32 %v10250, 1.442695
      %v10353 = vpow.pop %v10352
      %v10354 = vmul.f32 %v10251, 1.442695
      %v10355 = vpow.pop %v10354
      %v10356 = vmul.f32 %v10252, 1.442695
      %v10357 = vpow.pop %v10356
      %v10358 = vmul.f32 %v10253, 1.442695
      %v10359 = vpow.pop %v10358
      %v10360 = vmul.f32 %v10254, 1.442695
      %v10361 = vpow.pop %v10360
      %v10362 = vmul.f32 %v10255, 1.442695
      %v10363 = vpow.pop %v10362
      %v10364 = vmul.f32 %v10256, 1.442695
      %v10365 = vpow.pop %v10364
      %v10366 = vmul.f32 %v10257, 1.442695
      %v10367 = vpow.pop %v10366
      %v10368 = vmul.f32 %v10258, 1.442695
      %v10369 = vpow.pop %v10368
      %v10370 = vmul.f32 %v10259, 1.442695
      %v10371 = vpow.pop %v10370
      %v10372 = vmul.f32 %v10260, 1.442695
      %v10373 = vpow.pop %v10372
      %v10374 = vmul.f32 %v10261, 1.442695
      %v10375 = vpow.pop %v10374
      %v10376 = vmul.f32 %v10262, 1.442695
      %v10377 = vpow.pop %v10376
      %v10378 = vmul.f32 %v10263, 1.442695
      %v10379 = vpow.pop %v10378
      %v10380 = vmul.f32 %v10264, 1.442695
      %v10381 = vpow.pop %v10380
      %v10382 = vmul.f32 %v10265, 1.442695
      %v10383 = vpow.pop %v10382
      %v10384 = vmul.f32 %v10266, 1.442695
      %v10385 = vpow.pop %v10384
      %v10386 = vmul.f32 %v10267, 1.442695
      %v10387 = vpow.pop %v10386
      %v10388 = vmul.f32 %v10268, 1.442695
      %v10389 = vpow.pop %v10388
      %v10390 = vmul.f32 %v10269, 1.442695
      %v10391 = vpow.pop %v10390
      %v10392 = vmul.f32 %v10270, 1.442695
      %v10393 = vpow.pop %v10392
      %v10394 = vmul.f32 %v10271, 1.442695
      %v10395 = vpow.pop %v10394
      %v10396 = vmul.f32 %v10272, 1.442695
      %v10397 = vpow.pop %v10396
      %v10398 = vmul.f32 %v10273, 1.442695
      %v10399 = vpow.pop %v10398
      %v10400 = vmul.f32 %v10274, 1.442695
      %v10401 = vpow.pop %v10400
      %v10402 = vmul.f32 %v10275, 1.442695
      %v10403 = vpow.pop %v10402
      %v10404 = vsel %vm1092, %v10277, 0.0
      %10405 = vadd.xlane.f32.xlu0 %v10404
      %v10406 = vpop.xlane.xlu0 %10405
      %v10407 = vsel %vm1092, %v10279, 0.0
      %10408 = vadd.xlane.f32.xlu0 %v10407
      %v10409 = vpop.xlane.xlu0 %10408
      %v10410 = vsel %vm1092, %v10281, 0.0
      %10411 = vadd.xlane.f32.xlu0 %v10410
      %v10412 = vpop.xlane.xlu0 %10411
      %v10413 = vsel %vm1092, %v10283, 0.0
      %10414 = vadd.xlane.f32.xlu0 %v10413
      %v10415 = vpop.xlane.xlu0 %10414
      %v10416 = vsel %vm1092, %v10285, 0.0
      %10417 = vadd.xlane.f32.xlu0 %v10416
      %v10418 = vpop.xlane.xlu0 %10417
      %v10419 = vsel %vm1092, %v10287, 0.0
      %10420 = vadd.xlane.f32.xlu0 %v10419
      %v10421 = vpop.xlane.xlu0 %10420
      %v10422 = vsel %vm1092, %v10289, 0.0
      %10423 = vadd.xlane.f32.xlu0 %v10422
      %v10424 = vpop.xlane.xlu0 %10423
      %v10425 = vsel %vm1092, %v10291, 0.0
      %10426 = vadd.xlane.f32.xlu0 %v10425
      %v10427 = vpop.xlane.xlu0 %10426
      %v10428 = vsel %vm1092, %v10293, 0.0
      %10429 = vadd.xlane.f32.xlu0 %v10428
      %v10430 = vpop.xlane.xlu0 %10429
      %v10431 = vsel %vm1092, %v10295, 0.0
      %10432 = vadd.xlane.f32.xlu0 %v10431
      %v10433 = vpop.xlane.xlu0 %10432
      %v10434 = vsel %vm1092, %v10297, 0.0
      %10435 = vadd.xlane.f32.xlu0 %v10434
      %v10436 = vpop.xlane.xlu0 %10435
      %v10437 = vsel %vm1092, %v10299, 0.0
      %10438 = vadd.xlane.f32.xlu0 %v10437
      %v10439 = vpop.xlane.xlu0 %10438
      %v10440 = vsel %vm1092, %v10301, 0.0
      %10441 = vadd.xlane.f32.xlu0 %v10440
      %v10442 = vpop.xlane.xlu0 %10441
      %v10443 = vsel %vm1092, %v10303, 0.0
      %10444 = vadd.xlane.f32.xlu0 %v10443
      %v10445 = vpop.xlane.xlu0 %10444
      %v10446 = vsel %vm1092, %v10305, 0.0
      %10447 = vadd.xlane.f32.xlu0 %v10446
      %v10448 = vpop.xlane.xlu0 %10447
      %v10449 = vsel %vm1092, %v10307, 0.0
      %10450 = vadd.xlane.f32.xlu0 %v10449
      %v10451 = vpop.xlane.xlu0 %10450
      %v10452 = vsel %vm1092, %v10309, 0.0
      %10453 = vadd.xlane.f32.xlu0 %v10452
      %v10454 = vpop.xlane.xlu0 %10453
      %v10455 = vsel %vm1092, %v10311, 0.0
      %10456 = vadd.xlane.f32.xlu0 %v10455
      %v10457 = vpop.xlane.xlu0 %10456
      %v10458 = vsel %vm1092, %v10313, 0.0
      %10459 = vadd.xlane.f32.xlu0 %v10458
      %v10460 = vpop.xlane.xlu0 %10459
      %v10461 = vsel %vm1092, %v10315, 0.0
      %10462 = vadd.xlane.f32.xlu0 %v10461
      %v10463 = vpop.xlane.xlu0 %10462
      %v10464 = vsel %vm1092, %v10317, 0.0
      %10465 = vadd.xlane.f32.xlu0 %v10464
      %v10466 = vpop.xlane.xlu0 %10465
      %v10467 = vsel %vm1092, %v10319, 0.0
      %10468 = vadd.xlane.f32.xlu0 %v10467
      %v10469 = vpop.xlane.xlu0 %10468
      %v10470 = vsel %vm1092, %v10321, 0.0
      %10471 = vadd.xlane.f32.xlu0 %v10470
      %v10472 = vpop.xlane.xlu0 %10471
      %v10473 = vsel %vm1092, %v10323, 0.0
      %10474 = vadd.xlane.f32.xlu0 %v10473
      %v10475 = vpop.xlane.xlu0 %10474
      %v10476 = vsel %vm1092, %v10325, 0.0
      %10477 = vadd.xlane.f32.xlu0 %v10476
      %v10478 = vpop.xlane.xlu0 %10477
      %v10479 = vsel %vm1092, %v10327, 0.0
      %10480 = vadd.xlane.f32.xlu0 %v10479
      %v10481 = vpop.xlane.xlu0 %10480
      %v10482 = vsel %vm1092, %v10329, 0.0
      %10483 = vadd.xlane.f32.xlu0 %v10482
      %v10484 = vpop.xlane.xlu0 %10483
      %v10485 = vsel %vm1092, %v10331, 0.0
      %10486 = vadd.xlane.f32.xlu0 %v10485
      %v10487 = vpop.xlane.xlu0 %10486
      %v10488 = vsel %vm1092, %v10333, 0.0
      %10489 = vadd.xlane.f32.xlu0 %v10488
      %v10490 = vpop.xlane.xlu0 %10489
      %v10491 = vsel %vm1092, %v10335, 0.0
      %10492 = vadd.xlane.f32.xlu0 %v10491
      %v10493 = vpop.xlane.xlu0 %10492
      %v10494 = vsel %vm1092, %v10337, 0.0
      %10495 = vadd.xlane.f32.xlu0 %v10494
      %v10496 = vpop.xlane.xlu0 %10495
      %v10497 = vsel %vm1092, %v10339, 0.0
      %10498 = vadd.xlane.f32.xlu0 %v10497
      %v10499 = vpop.xlane.xlu0 %10498
      %v10500 = vsel %vm1092, %v10341, 0.0
      %10501 = vadd.xlane.f32.xlu0 %v10500
      %v10502 = vpop.xlane.xlu0 %10501
      %v10503 = vsel %vm1092, %v10343, 0.0
      %10504 = vadd.xlane.f32.xlu0 %v10503
      %v10505 = vpop.xlane.xlu0 %10504
      %v10506 = vsel %vm1092, %v10345, 0.0
      %10507 = vadd.xlane.f32.xlu0 %v10506
      %v10508 = vpop.xlane.xlu0 %10507
      %v10509 = vsel %vm1092, %v10347, 0.0
      %10510 = vadd.xlane.f32.xlu0 %v10509
      %v10511 = vpop.xlane.xlu0 %10510
      %v10512 = vsel %vm1092, %v10349, 0.0
      %10513 = vadd.xlane.f32.xlu0 %v10512
      %v10514 = vpop.xlane.xlu0 %10513
      %v10515 = vsel %vm1092, %v10351, 0.0
      %10516 = vadd.xlane.f32.xlu0 %v10515
      %v10517 = vpop.xlane.xlu0 %10516
      %v10518 = vsel %vm1092, %v10353, 0.0
      %10519 = vadd.xlane.f32.xlu0 %v10518
      %v10520 = vpop.xlane.xlu0 %10519
      %v10521 = vsel %vm1092, %v10355, 0.0
      %10522 = vadd.xlane.f32.xlu0 %v10521
      %v10523 = vpop.xlane.xlu0 %10522
      %v10524 = vsel %vm1092, %v10357, 0.0
      %10525 = vadd.xlane.f32.xlu0 %v10524
      %v10526 = vpop.xlane.xlu0 %10525
      %v10527 = vsel %vm1092, %v10359, 0.0
      %10528 = vadd.xlane.f32.xlu0 %v10527
      %v10529 = vpop.xlane.xlu0 %10528
      %v10530 = vsel %vm1092, %v10361, 0.0
      %10531 = vadd.xlane.f32.xlu0 %v10530
      %v10532 = vpop.xlane.xlu0 %10531
      %v10533 = vsel %vm1092, %v10363, 0.0
      %10534 = vadd.xlane.f32.xlu0 %v10533
      %v10535 = vpop.xlane.xlu0 %10534
      %v10536 = vsel %vm1092, %v10365, 0.0
      %10537 = vadd.xlane.f32.xlu0 %v10536
      %v10538 = vpop.xlane.xlu0 %10537
      %v10539 = vsel %vm1092, %v10367, 0.0
      %10540 = vadd.xlane.f32.xlu0 %v10539
      %v10541 = vpop.xlane.xlu0 %10540
      %v10542 = vsel %vm1092, %v10369, 0.0
      %10543 = vadd.xlane.f32.xlu0 %v10542
      %v10544 = vpop.xlane.xlu0 %10543
      %v10545 = vsel %vm1092, %v10371, 0.0
      %10546 = vadd.xlane.f32.xlu0 %v10545
      %v10547 = vpop.xlane.xlu0 %10546
      %v10548 = vsel %vm1092, %v10373, 0.0
      %10549 = vadd.xlane.f32.xlu0 %v10548
      %v10550 = vpop.xlane.xlu0 %10549
      %v10551 = vsel %vm1092, %v10375, 0.0
      %10552 = vadd.xlane.f32.xlu0 %v10551
      %v10553 = vpop.xlane.xlu0 %10552
      %v10554 = vsel %vm1092, %v10377, 0.0
      %10555 = vadd.xlane.f32.xlu0 %v10554
      %v10556 = vpop.xlane.xlu0 %10555
      %v10557 = vsel %vm1092, %v10379, 0.0
      %10558 = vadd.xlane.f32.xlu0 %v10557
      %v10559 = vpop.xlane.xlu0 %10558
      %v10560 = vsel %vm1092, %v10381, 0.0
      %10561 = vadd.xlane.f32.xlu0 %v10560
      %v10562 = vpop.xlane.xlu0 %10561
      %v10563 = vsel %vm1092, %v10383, 0.0
      %10564 = vadd.xlane.f32.xlu0 %v10563
      %v10565 = vpop.xlane.xlu0 %10564
      %v10566 = vsel %vm1092, %v10385, 0.0
      %10567 = vadd.xlane.f32.xlu0 %v10566
      %v10568 = vpop.xlane.xlu0 %10567
      %v10569 = vsel %vm1092, %v10387, 0.0
      %10570 = vadd.xlane.f32.xlu0 %v10569
      %v10571 = vpop.xlane.xlu0 %10570
      %v10572 = vsel %vm1092, %v10389, 0.0
      %10573 = vadd.xlane.f32.xlu0 %v10572
      %v10574 = vpop.xlane.xlu0 %10573
      %v10575 = vsel %vm1092, %v10391, 0.0
      %10576 = vadd.xlane.f32.xlu0 %v10575
      %v10577 = vpop.xlane.xlu0 %10576
      %v10578 = vsel %vm1092, %v10393, 0.0
      %10579 = vadd.xlane.f32.xlu0 %v10578
      %v10580 = vpop.xlane.xlu0 %10579
      %v10581 = vsel %vm1092, %v10395, 0.0
      %10582 = vadd.xlane.f32.xlu0 %v10581
      %v10583 = vpop.xlane.xlu0 %10582
      %v10584 = vsel %vm1092, %v10397, 0.0
      %10585 = vadd.xlane.f32.xlu0 %v10584
      %v10586 = vpop.xlane.xlu0 %10585
      %v10587 = vsel %vm1092, %v10399, 0.0
      %10588 = vadd.xlane.f32.xlu0 %v10587
      %v10589 = vpop.xlane.xlu0 %10588
      %v10590 = vsel %vm1092, %v10401, 0.0
      %10591 = vadd.xlane.f32.xlu0 %v10590
      %v10592 = vpop.xlane.xlu0 %10591
      %v10593 = vsel %vm1092, %v10403, 0.0
      %10594 = vadd.xlane.f32.xlu0 %v10593
      %v10595 = vpop.xlane.xlu0 %10594
      %v10596 = vrcp.pop %v10406
      %v10597 = vrcp.pop %v10409
      %v10598 = vrcp.pop %v10412
      %v10599 = vrcp.pop %v10415
      %v10600 = vrcp.pop %v10418
      %v10601 = vrcp.pop %v10421
      %v10602 = vrcp.pop %v10424
      %v10603 = vrcp.pop %v10427
      %v10604 = vrcp.pop %v10430
      %v10605 = vrcp.pop %v10433
      %v10606 = vrcp.pop %v10436
      %v10607 = vrcp.pop %v10439
      %v10608 = vrcp.pop %v10442
      %v10609 = vrcp.pop %v10445
      %v10610 = vrcp.pop %v10448
      %v10611 = vrcp.pop %v10451
      %v10612 = vrcp.pop %v10454
      %v10613 = vrcp.pop %v10457
      %v10614 = vrcp.pop %v10460
      %v10615 = vrcp.pop %v10463
      %v10616 = vrcp.pop %v10466
      %v10617 = vrcp.pop %v10469
      %v10618 = vrcp.pop %v10472
      %v10619 = vrcp.pop %v10475
      %v10620 = vrcp.pop %v10478
      %v10621 = vrcp.pop %v10481
      %v10622 = vrcp.pop %v10484
      %v10623 = vrcp.pop %v10487
      %v10624 = vrcp.pop %v10490
      %v10625 = vrcp.pop %v10493
      %v10626 = vrcp.pop %v10496
      %v10627 = vrcp.pop %v10499
      %v10628 = vrcp.pop %v10502
      %v10629 = vrcp.pop %v10505
      %v10630 = vrcp.pop %v10508
      %v10631 = vrcp.pop %v10511
      %v10632 = vrcp.pop %v10514
      %v10633 = vrcp.pop %v10517
      %v10634 = vrcp.pop %v10520
      %v10635 = vrcp.pop %v10523
      %v10636 = vrcp.pop %v10526
      %v10637 = vrcp.pop %v10529
      %v10638 = vrcp.pop %v10532
      %v10639 = vrcp.pop %v10535
      %v10640 = vrcp.pop %v10538
      %v10641 = vrcp.pop %v10541
      %v10642 = vrcp.pop %v10544
      %v10643 = vrcp.pop %v10547
      %v10644 = vrcp.pop %v10550
      %v10645 = vrcp.pop %v10553
      %v10646 = vrcp.pop %v10556
      %v10647 = vrcp.pop %v10559
      %v10648 = vrcp.pop %v10562
      %v10649 = vrcp.pop %v10565
      %v10650 = vrcp.pop %v10568
      %v10651 = vrcp.pop %v10571
      %v10652 = vrcp.pop %v10574
      %v10653 = vrcp.pop %v10577
      %v10654 = vrcp.pop %v10580
      %v10655 = vrcp.pop %v10583
      %v10656 = vrcp.pop %v10586
      %v10657 = vrcp.pop %v10589
      %v10658 = vrcp.pop %v10592
      %v10659 = vrcp.pop %v10595
      %v10660 = vmul.f32 %v10277, %v10596
      %v10661 = vmul.f32 %v10279, %v10597
      %v10662 = vmul.f32 %v10281, %v10598
      %v10663 = vmul.f32 %v10283, %v10599
      %v10664 = vmul.f32 %v10285, %v10600
      %v10665 = vmul.f32 %v10287, %v10601
      %v10666 = vmul.f32 %v10289, %v10602
      %v10667 = vmul.f32 %v10291, %v10603
      %v10668 = vmul.f32 %v10293, %v10604
      %v10669 = vmul.f32 %v10295, %v10605
      %v10670 = vmul.f32 %v10297, %v10606
      %v10671 = vmul.f32 %v10299, %v10607
      %v10672 = vmul.f32 %v10301, %v10608
      %v10673 = vmul.f32 %v10303, %v10609
      %v10674 = vmul.f32 %v10305, %v10610
      %v10675 = vmul.f32 %v10307, %v10611
      %v10676 = vmul.f32 %v10309, %v10612
      %v10677 = vmul.f32 %v10311, %v10613
      %v10678 = vmul.f32 %v10313, %v10614
      %v10679 = vmul.f32 %v10315, %v10615
      %v10680 = vmul.f32 %v10317, %v10616
      %v10681 = vmul.f32 %v10319, %v10617
      %v10682 = vmul.f32 %v10321, %v10618
      %v10683 = vmul.f32 %v10323, %v10619
      %v10684 = vmul.f32 %v10325, %v10620
      %v10685 = vmul.f32 %v10327, %v10621
      %v10686 = vmul.f32 %v10329, %v10622
      %v10687 = vmul.f32 %v10331, %v10623
      %v10688 = vmul.f32 %v10333, %v10624
      %v10689 = vmul.f32 %v10335, %v10625
      %v10690 = vmul.f32 %v10337, %v10626
      %v10691 = vmul.f32 %v10339, %v10627
      %v10692 = vmul.f32 %v10341, %v10628
      %v10693 = vmul.f32 %v10343, %v10629
      %v10694 = vmul.f32 %v10345, %v10630
      %v10695 = vmul.f32 %v10347, %v10631
      %v10696 = vmul.f32 %v10349, %v10632
      %v10697 = vmul.f32 %v10351, %v10633
      %v10698 = vmul.f32 %v10353, %v10634
      %v10699 = vmul.f32 %v10355, %v10635
      %v10700 = vmul.f32 %v10357, %v10636
      %v10701 = vmul.f32 %v10359, %v10637
      %v10702 = vmul.f32 %v10361, %v10638
      %v10703 = vmul.f32 %v10363, %v10639
      %v10704 = vmul.f32 %v10365, %v10640
      %v10705 = vmul.f32 %v10367, %v10641
      %v10706 = vmul.f32 %v10369, %v10642
      %v10707 = vmul.f32 %v10371, %v10643
      %v10708 = vmul.f32 %v10373, %v10644
      %v10709 = vmul.f32 %v10375, %v10645
      %v10710 = vmul.f32 %v10377, %v10646
      %v10711 = vmul.f32 %v10379, %v10647
      %v10712 = vmul.f32 %v10381, %v10648
      %v10713 = vmul.f32 %v10383, %v10649
      %v10714 = vmul.f32 %v10385, %v10650
      %v10715 = vmul.f32 %v10387, %v10651
      %v10716 = vmul.f32 %v10389, %v10652
      %v10717 = vmul.f32 %v10391, %v10653
      %v10718 = vmul.f32 %v10393, %v10654
      %v10719 = vmul.f32 %v10395, %v10655
      %v10720 = vmul.f32 %v10397, %v10656
      %v10721 = vmul.f32 %v10399, %v10657
      %v10722 = vmul.f32 %v10401, %v10658
      %v10723 = vmul.f32 %v10403, %v10659
      %v10724 = vpack.c.bf16 %v10660, %v10660
      %v10725 = vpack.c.bf16 %v10661, %v10661
      %v10726 = vpack.c.bf16 %v10662, %v10662
      %v10727 = vpack.c.bf16 %v10663, %v10663
      %v10728 = vpack.c.bf16 %v10664, %v10664
      %v10729 = vpack.c.bf16 %v10665, %v10665
      %v10730 = vpack.c.bf16 %v10666, %v10666
      %v10731 = vpack.c.bf16 %v10667, %v10667
      %v10732 = vpack.c.bf16 %v10668, %v10668
      %v10733 = vpack.c.bf16 %v10669, %v10669
      %v10734 = vpack.c.bf16 %v10670, %v10670
      %v10735 = vpack.c.bf16 %v10671, %v10671
      %v10736 = vpack.c.bf16 %v10672, %v10672
      %v10737 = vpack.c.bf16 %v10673, %v10673
      %v10738 = vpack.c.bf16 %v10674, %v10674
      %v10739 = vpack.c.bf16 %v10675, %v10675
      %v10740 = vpack.c.bf16 %v10676, %v10676
      %v10741 = vpack.c.bf16 %v10677, %v10677
      %v10742 = vpack.c.bf16 %v10678, %v10678
      %v10743 = vpack.c.bf16 %v10679, %v10679
      %v10744 = vpack.c.bf16 %v10680, %v10680
      %v10745 = vpack.c.bf16 %v10681, %v10681
      %v10746 = vpack.c.bf16 %v10682, %v10682
      %v10747 = vpack.c.bf16 %v10683, %v10683
      %v10748 = vpack.c.bf16 %v10684, %v10684
      %v10749 = vpack.c.bf16 %v10685, %v10685
      %v10750 = vpack.c.bf16 %v10686, %v10686
      %v10751 = vpack.c.bf16 %v10687, %v10687
      %v10752 = vpack.c.bf16 %v10688, %v10688
      %v10753 = vpack.c.bf16 %v10689, %v10689
      %v10754 = vpack.c.bf16 %v10690, %v10690
      %v10755 = vpack.c.bf16 %v10691, %v10691
      %v10756 = vpack.c.bf16 %v10692, %v10692
      %v10757 = vpack.c.bf16 %v10693, %v10693
      %v10758 = vpack.c.bf16 %v10694, %v10694
      %v10759 = vpack.c.bf16 %v10695, %v10695
      %v10760 = vpack.c.bf16 %v10696, %v10696
      %v10761 = vpack.c.bf16 %v10697, %v10697
      %v10762 = vpack.c.bf16 %v10698, %v10698
      %v10763 = vpack.c.bf16 %v10699, %v10699
      %v10764 = vpack.c.bf16 %v10700, %v10700
      %v10765 = vpack.c.bf16 %v10701, %v10701
      %v10766 = vpack.c.bf16 %v10702, %v10702
      %v10767 = vpack.c.bf16 %v10703, %v10703
      %v10768 = vpack.c.bf16 %v10704, %v10704
      %v10769 = vpack.c.bf16 %v10705, %v10705
      %v10770 = vpack.c.bf16 %v10706, %v10706
      %v10771 = vpack.c.bf16 %v10707, %v10707
      %v10772 = vpack.c.bf16 %v10708, %v10708
      %v10773 = vpack.c.bf16 %v10709, %v10709
      %v10774 = vpack.c.bf16 %v10710, %v10710
      %v10775 = vpack.c.bf16 %v10711, %v10711
      %v10776 = vpack.c.bf16 %v10712, %v10712
      %v10777 = vpack.c.bf16 %v10713, %v10713
      %v10778 = vpack.c.bf16 %v10714, %v10714
      %v10779 = vpack.c.bf16 %v10715, %v10715
      %v10780 = vpack.c.bf16 %v10716, %v10716
      %v10781 = vpack.c.bf16 %v10717, %v10717
      %v10782 = vpack.c.bf16 %v10718, %v10718
      %v10783 = vpack.c.bf16 %v10719, %v10719
      %v10784 = vpack.c.bf16 %v10720, %v10720
      %v10785 = vpack.c.bf16 %v10721, %v10721
      %v10786 = vpack.c.bf16 %v10722, %v10722
      %v10787 = vpack.c.bf16 %v10723, %v10723
      %v10790 = vunpack.c.l.b16 %v10724
      %v10791 = vunpack.c.l.b16 %v10725
      %v10792 = vpack.c.b16 %v10791, %v10790
      %10793 = vrot.lane.b32.xlu0 %v2727, 104
      %v10794 = vpop.permute.xlu0 %10793
      %v10797 = vsel %vm1092, %v10792, 0
      %10799 = vmatpush.bf16.msra.mxu0 0
      %10800 = vmatpush.bf16.msra.mxu0 0
      %10801 = vmatpush.bf16.msra.mxu0 0
      %10802 = vmatpush.bf16.msra.mxu0 0
      %10803 = vmatpush.bf16.msra.mxu0 0
      %10804 = vmatpush.bf16.msra.mxu0 0
      %10805 = vmatpush.bf16.msra.mxu0 0
      %10806 = vmatpush.bf16.msra.mxu0 %v10794
      %10807 = vmatmul.bf16.gmra.mxu0 %v10797
      %v10808 = vpop.f32.mrf.mxu0
      %v10809 = vadd.f32 0.0, %v10808
      %v10810 = vpop.f32.mrf.mxu0
      %v10811 = vadd.f32 0.0, %v10810
      %10812 = vdwg.mxu0
      %v10815 = vunpack.c.l.b16 %v10726
      %v10816 = vunpack.c.l.b16 %v10727
      %v10817 = vpack.c.b16 %v10816, %v10815
      %10818 = vrot.lane.b32.xlu0 %v2755, 104
      %v10819 = vpop.permute.xlu0 %10818
      %v10822 = vsel %vm1092, %v10817, 0
      %10824 = vmatpush.bf16.msra.mxu0 0
      %10825 = vmatpush.bf16.msra.mxu0 0
      %10826 = vmatpush.bf16.msra.mxu0 0
      %10827 = vmatpush.bf16.msra.mxu0 0
      %10828 = vmatpush.bf16.msra.mxu0 0
      %10829 = vmatpush.bf16.msra.mxu0 0
      %10830 = vmatpush.bf16.msra.mxu0 0
      %10831 = vmatpush.bf16.msra.mxu0 %v10819
      %10832 = vmatmul.bf16.gmra.mxu0 %v10822
      %v10833 = vpop.f32.mrf.mxu0
      %v10834 = vadd.f32 0.0, %v10833
      %v10835 = vpop.f32.mrf.mxu0
      %v10836 = vadd.f32 0.0, %v10835
      %10837 = vdwg.mxu0
      %v10840 = vunpack.c.l.b16 %v10728
      %v10841 = vunpack.c.l.b16 %v10729
      %v10842 = vpack.c.b16 %v10841, %v10840
      %10843 = vrot.lane.b32.xlu0 %v2783, 104
      %v10844 = vpop.permute.xlu0 %10843
      %v10847 = vsel %vm1092, %v10842, 0
      %10849 = vmatpush.bf16.msra.mxu0 0
      %10850 = vmatpush.bf16.msra.mxu0 0
      %10851 = vmatpush.bf16.msra.mxu0 0
      %10852 = vmatpush.bf16.msra.mxu0 0
      %10853 = vmatpush.bf16.msra.mxu0 0
      %10854 = vmatpush.bf16.msra.mxu0 0
      %10855 = vmatpush.bf16.msra.mxu0 0
      %10856 = vmatpush.bf16.msra.mxu0 %v10844
      %10857 = vmatmul.bf16.gmra.mxu0 %v10847
      %v10858 = vpop.f32.mrf.mxu0
      %v10859 = vadd.f32 0.0, %v10858
      %v10860 = vpop.f32.mrf.mxu0
      %v10861 = vadd.f32 0.0, %v10860
      %10862 = vdwg.mxu0
      %v10865 = vunpack.c.l.b16 %v10730
      %v10866 = vunpack.c.l.b16 %v10731
      %v10867 = vpack.c.b16 %v10866, %v10865
      %10868 = vrot.lane.b32.xlu0 %v2811, 104
      %v10869 = vpop.permute.xlu0 %10868
      %v10872 = vsel %vm1092, %v10867, 0
      %10874 = vmatpush.bf16.msra.mxu0 0
      %10875 = vmatpush.bf16.msra.mxu0 0
      %10876 = vmatpush.bf16.msra.mxu0 0
      %10877 = vmatpush.bf16.msra.mxu0 0
      %10878 = vmatpush.bf16.msra.mxu0 0
      %10879 = vmatpush.bf16.msra.mxu0 0
      %10880 = vmatpush.bf16.msra.mxu0 0
      %10881 = vmatpush.bf16.msra.mxu0 %v10869
      %10882 = vmatmul.bf16.gmra.mxu0 %v10872
      %v10883 = vpop.f32.mrf.mxu0
      %v10884 = vadd.f32 0.0, %v10883
      %v10885 = vpop.f32.mrf.mxu0
      %v10886 = vadd.f32 0.0, %v10885
      %10887 = vdwg.mxu0
      %v10890 = vunpack.c.l.b16 %v10732
      %v10891 = vunpack.c.l.b16 %v10733
      %v10892 = vpack.c.b16 %v10891, %v10890
      %10893 = vrot.lane.b32.xlu0 %v2839, 104
      %v10894 = vpop.permute.xlu0 %10893
      %v10897 = vsel %vm1092, %v10892, 0
      %10899 = vmatpush.bf16.msra.mxu0 0
      %10900 = vmatpush.bf16.msra.mxu0 0
      %10901 = vmatpush.bf16.msra.mxu0 0
      %10902 = vmatpush.bf16.msra.mxu0 0
      %10903 = vmatpush.bf16.msra.mxu0 0
      %10904 = vmatpush.bf16.msra.mxu0 0
      %10905 = vmatpush.bf16.msra.mxu0 0
      %10906 = vmatpush.bf16.msra.mxu0 %v10894
      %10907 = vmatmul.bf16.gmra.mxu0 %v10897
      %v10908 = vpop.f32.mrf.mxu0
      %v10909 = vadd.f32 0.0, %v10908
      %v10910 = vpop.f32.mrf.mxu0
      %v10911 = vadd.f32 0.0, %v10910
      %10912 = vdwg.mxu0
      %v10915 = vunpack.c.l.b16 %v10734
      %v10916 = vunpack.c.l.b16 %v10735
      %v10917 = vpack.c.b16 %v10916, %v10915
      %10918 = vrot.lane.b32.xlu0 %v2867, 104
      %v10919 = vpop.permute.xlu0 %10918
      %v10922 = vsel %vm1092, %v10917, 0
      %10924 = vmatpush.bf16.msra.mxu0 0
      %10925 = vmatpush.bf16.msra.mxu0 0
      %10926 = vmatpush.bf16.msra.mxu0 0
      %10927 = vmatpush.bf16.msra.mxu0 0
      %10928 = vmatpush.bf16.msra.mxu0 0
      %10929 = vmatpush.bf16.msra.mxu0 0
      %10930 = vmatpush.bf16.msra.mxu0 0
      %10931 = vmatpush.bf16.msra.mxu0 %v10919
      %10932 = vmatmul.bf16.gmra.mxu0 %v10922
      %v10933 = vpop.f32.mrf.mxu0
      %v10934 = vadd.f32 0.0, %v10933
      %v10935 = vpop.f32.mrf.mxu0
      %v10936 = vadd.f32 0.0, %v10935
      %10937 = vdwg.mxu0
      %v10940 = vunpack.c.l.b16 %v10736
      %v10941 = vunpack.c.l.b16 %v10737
      %v10942 = vpack.c.b16 %v10941, %v10940
      %10943 = vrot.lane.b32.xlu0 %v2895, 104
      %v10944 = vpop.permute.xlu0 %10943
      %v10947 = vsel %vm1092, %v10942, 0
      %10949 = vmatpush.bf16.msra.mxu0 0
      %10950 = vmatpush.bf16.msra.mxu0 0
      %10951 = vmatpush.bf16.msra.mxu0 0
      %10952 = vmatpush.bf16.msra.mxu0 0
      %10953 = vmatpush.bf16.msra.mxu0 0
      %10954 = vmatpush.bf16.msra.mxu0 0
      %10955 = vmatpush.bf16.msra.mxu0 0
      %10956 = vmatpush.bf16.msra.mxu0 %v10944
      %10957 = vmatmul.bf16.gmra.mxu0 %v10947
      %v10958 = vpop.f32.mrf.mxu0
      %v10959 = vadd.f32 0.0, %v10958
      %v10960 = vpop.f32.mrf.mxu0
      %v10961 = vadd.f32 0.0, %v10960
      %10962 = vdwg.mxu0
      %v10965 = vunpack.c.l.b16 %v10738
      %v10966 = vunpack.c.l.b16 %v10739
      %v10967 = vpack.c.b16 %v10966, %v10965
      %10968 = vrot.lane.b32.xlu0 %v2923, 104
      %v10969 = vpop.permute.xlu0 %10968
      %v10972 = vsel %vm1092, %v10967, 0
      %10974 = vmatpush.bf16.msra.mxu0 0
      %10975 = vmatpush.bf16.msra.mxu0 0
      %10976 = vmatpush.bf16.msra.mxu0 0
      %10977 = vmatpush.bf16.msra.mxu0 0
      %10978 = vmatpush.bf16.msra.mxu0 0
      %10979 = vmatpush.bf16.msra.mxu0 0
      %10980 = vmatpush.bf16.msra.mxu0 0
      %10981 = vmatpush.bf16.msra.mxu0 %v10969
      %10982 = vmatmul.bf16.gmra.mxu0 %v10972
      %v10983 = vpop.f32.mrf.mxu0
      %v10984 = vadd.f32 0.0, %v10983
      %v10985 = vpop.f32.mrf.mxu0
      %v10986 = vadd.f32 0.0, %v10985
      %10987 = vdwg.mxu0
      %v10990 = vunpack.c.l.b16 %v10740
      %v10991 = vunpack.c.l.b16 %v10741
      %v10992 = vpack.c.b16 %v10991, %v10990
      %10993 = vrot.lane.b32.xlu0 %v2951, 104
      %v10994 = vpop.permute.xlu0 %10993
      %v10997 = vsel %vm1092, %v10992, 0
      %10999 = vmatpush.bf16.msra.mxu0 0
      %11000 = vmatpush.bf16.msra.mxu0 0
      %11001 = vmatpush.bf16.msra.mxu0 0
      %11002 = vmatpush.bf16.msra.mxu0 0
      %11003 = vmatpush.bf16.msra.mxu0 0
      %11004 = vmatpush.bf16.msra.mxu0 0
      %11005 = vmatpush.bf16.msra.mxu0 0
      %11006 = vmatpush.bf16.msra.mxu0 %v10994
      %11007 = vmatmul.bf16.gmra.mxu0 %v10997
      %v11008 = vpop.f32.mrf.mxu0
      %v11009 = vadd.f32 0.0, %v11008
      %v11010 = vpop.f32.mrf.mxu0
      %v11011 = vadd.f32 0.0, %v11010
      %11012 = vdwg.mxu0
      %v11015 = vunpack.c.l.b16 %v10742
      %v11016 = vunpack.c.l.b16 %v10743
      %v11017 = vpack.c.b16 %v11016, %v11015
      %11018 = vrot.lane.b32.xlu0 %v2979, 104
      %v11019 = vpop.permute.xlu0 %11018
      %v11022 = vsel %vm1092, %v11017, 0
      %11024 = vmatpush.bf16.msra.mxu0 0
      %11025 = vmatpush.bf16.msra.mxu0 0
      %11026 = vmatpush.bf16.msra.mxu0 0
      %11027 = vmatpush.bf16.msra.mxu0 0
      %11028 = vmatpush.bf16.msra.mxu0 0
      %11029 = vmatpush.bf16.msra.mxu0 0
      %11030 = vmatpush.bf16.msra.mxu0 0
      %11031 = vmatpush.bf16.msra.mxu0 %v11019
      %11032 = vmatmul.bf16.gmra.mxu0 %v11022
      %v11033 = vpop.f32.mrf.mxu0
      %v11034 = vadd.f32 0.0, %v11033
      %v11035 = vpop.f32.mrf.mxu0
      %v11036 = vadd.f32 0.0, %v11035
      %11037 = vdwg.mxu0
      %v11040 = vunpack.c.l.b16 %v10744
      %v11041 = vunpack.c.l.b16 %v10745
      %v11042 = vpack.c.b16 %v11041, %v11040
      %11043 = vrot.lane.b32.xlu0 %v3007, 104
      %v11044 = vpop.permute.xlu0 %11043
      %v11047 = vsel %vm1092, %v11042, 0
      %11049 = vmatpush.bf16.msra.mxu0 0
      %11050 = vmatpush.bf16.msra.mxu0 0
      %11051 = vmatpush.bf16.msra.mxu0 0
      %11052 = vmatpush.bf16.msra.mxu0 0
      %11053 = vmatpush.bf16.msra.mxu0 0
      %11054 = vmatpush.bf16.msra.mxu0 0
      %11055 = vmatpush.bf16.msra.mxu0 0
      %11056 = vmatpush.bf16.msra.mxu0 %v11044
      %11057 = vmatmul.bf16.gmra.mxu0 %v11047
      %v11058 = vpop.f32.mrf.mxu0
      %v11059 = vadd.f32 0.0, %v11058
      %v11060 = vpop.f32.mrf.mxu0
      %v11061 = vadd.f32 0.0, %v11060
      %11062 = vdwg.mxu0
      %v11065 = vunpack.c.l.b16 %v10746
      %v11066 = vunpack.c.l.b16 %v10747
      %v11067 = vpack.c.b16 %v11066, %v11065
      %11068 = vrot.lane.b32.xlu0 %v3035, 104
      %v11069 = vpop.permute.xlu0 %11068
      %v11072 = vsel %vm1092, %v11067, 0
      %11074 = vmatpush.bf16.msra.mxu0 0
      %11075 = vmatpush.bf16.msra.mxu0 0
      %11076 = vmatpush.bf16.msra.mxu0 0
      %11077 = vmatpush.bf16.msra.mxu0 0
      %11078 = vmatpush.bf16.msra.mxu0 0
      %11079 = vmatpush.bf16.msra.mxu0 0
      %11080 = vmatpush.bf16.msra.mxu0 0
      %11081 = vmatpush.bf16.msra.mxu0 %v11069
      %11082 = vmatmul.bf16.gmra.mxu0 %v11072
      %v11083 = vpop.f32.mrf.mxu0
      %v11084 = vadd.f32 0.0, %v11083
      %v11085 = vpop.f32.mrf.mxu0
      %v11086 = vadd.f32 0.0, %v11085
      %11087 = vdwg.mxu0
      %v11090 = vunpack.c.l.b16 %v10748
      %v11091 = vunpack.c.l.b16 %v10749
      %v11092 = vpack.c.b16 %v11091, %v11090
      %11093 = vrot.lane.b32.xlu0 %v3063, 104
      %v11094 = vpop.permute.xlu0 %11093
      %v11097 = vsel %vm1092, %v11092, 0
      %11099 = vmatpush.bf16.msra.mxu0 0
      %11100 = vmatpush.bf16.msra.mxu0 0
      %11101 = vmatpush.bf16.msra.mxu0 0
      %11102 = vmatpush.bf16.msra.mxu0 0
      %11103 = vmatpush.bf16.msra.mxu0 0
      %11104 = vmatpush.bf16.msra.mxu0 0
      %11105 = vmatpush.bf16.msra.mxu0 0
      %11106 = vmatpush.bf16.msra.mxu0 %v11094
      %11107 = vmatmul.bf16.gmra.mxu0 %v11097
      %v11108 = vpop.f32.mrf.mxu0
      %v11109 = vadd.f32 0.0, %v11108
      %v11110 = vpop.f32.mrf.mxu0
      %v11111 = vadd.f32 0.0, %v11110
      %11112 = vdwg.mxu0
      %v11115 = vunpack.c.l.b16 %v10750
      %v11116 = vunpack.c.l.b16 %v10751
      %v11117 = vpack.c.b16 %v11116, %v11115
      %11118 = vrot.lane.b32.xlu0 %v3091, 104
      %v11119 = vpop.permute.xlu0 %11118
      %v11122 = vsel %vm1092, %v11117, 0
      %11124 = vmatpush.bf16.msra.mxu0 0
      %11125 = vmatpush.bf16.msra.mxu0 0
      %11126 = vmatpush.bf16.msra.mxu0 0
      %11127 = vmatpush.bf16.msra.mxu0 0
      %11128 = vmatpush.bf16.msra.mxu0 0
      %11129 = vmatpush.bf16.msra.mxu0 0
      %11130 = vmatpush.bf16.msra.mxu0 0
      %11131 = vmatpush.bf16.msra.mxu0 %v11119
      %11132 = vmatmul.bf16.gmra.mxu0 %v11122
      %v11133 = vpop.f32.mrf.mxu0
      %v11134 = vadd.f32 0.0, %v11133
      %v11135 = vpop.f32.mrf.mxu0
      %v11136 = vadd.f32 0.0, %v11135
      %11137 = vdwg.mxu0
      %v11140 = vunpack.c.l.b16 %v10752
      %v11141 = vunpack.c.l.b16 %v10753
      %v11142 = vpack.c.b16 %v11141, %v11140
      %11143 = vrot.lane.b32.xlu0 %v3119, 104
      %v11144 = vpop.permute.xlu0 %11143
      %v11147 = vsel %vm1092, %v11142, 0
      %11149 = vmatpush.bf16.msra.mxu0 0
      %11150 = vmatpush.bf16.msra.mxu0 0
      %11151 = vmatpush.bf16.msra.mxu0 0
      %11152 = vmatpush.bf16.msra.mxu0 0
      %11153 = vmatpush.bf16.msra.mxu0 0
      %11154 = vmatpush.bf16.msra.mxu0 0
      %11155 = vmatpush.bf16.msra.mxu0 0
      %11156 = vmatpush.bf16.msra.mxu0 %v11144
      %11157 = vmatmul.bf16.gmra.mxu0 %v11147
      %v11158 = vpop.f32.mrf.mxu0
      %v11159 = vadd.f32 0.0, %v11158
      %v11160 = vpop.f32.mrf.mxu0
      %v11161 = vadd.f32 0.0, %v11160
      %11162 = vdwg.mxu0
      %v11165 = vunpack.c.l.b16 %v10754
      %v11166 = vunpack.c.l.b16 %v10755
      %v11167 = vpack.c.b16 %v11166, %v11165
      %11168 = vrot.lane.b32.xlu0 %v3147, 104
      %v11169 = vpop.permute.xlu0 %11168
      %v11172 = vsel %vm1092, %v11167, 0
      %11174 = vmatpush.bf16.msra.mxu0 0
      %11175 = vmatpush.bf16.msra.mxu0 0
      %11176 = vmatpush.bf16.msra.mxu0 0
      %11177 = vmatpush.bf16.msra.mxu0 0
      %11178 = vmatpush.bf16.msra.mxu0 0
      %11179 = vmatpush.bf16.msra.mxu0 0
      %11180 = vmatpush.bf16.msra.mxu0 0
      %11181 = vmatpush.bf16.msra.mxu0 %v11169
      %11182 = vmatmul.bf16.gmra.mxu0 %v11172
      %v11183 = vpop.f32.mrf.mxu0
      %v11184 = vadd.f32 0.0, %v11183
      %v11185 = vpop.f32.mrf.mxu0
      %v11186 = vadd.f32 0.0, %v11185
      %11187 = vdwg.mxu0
      %v11190 = vunpack.c.l.b16 %v10756
      %v11191 = vunpack.c.l.b16 %v10757
      %v11192 = vpack.c.b16 %v11191, %v11190
      %11193 = vrot.lane.b32.xlu0 %v3175, 104
      %v11194 = vpop.permute.xlu0 %11193
      %v11197 = vsel %vm1092, %v11192, 0
      %11199 = vmatpush.bf16.msra.mxu0 0
      %11200 = vmatpush.bf16.msra.mxu0 0
      %11201 = vmatpush.bf16.msra.mxu0 0
      %11202 = vmatpush.bf16.msra.mxu0 0
      %11203 = vmatpush.bf16.msra.mxu0 0
      %11204 = vmatpush.bf16.msra.mxu0 0
      %11205 = vmatpush.bf16.msra.mxu0 0
      %11206 = vmatpush.bf16.msra.mxu0 %v11194
      %11207 = vmatmul.bf16.gmra.mxu0 %v11197
      %v11208 = vpop.f32.mrf.mxu0
      %v11209 = vadd.f32 0.0, %v11208
      %v11210 = vpop.f32.mrf.mxu0
      %v11211 = vadd.f32 0.0, %v11210
      %11212 = vdwg.mxu0
      %v11215 = vunpack.c.l.b16 %v10758
      %v11216 = vunpack.c.l.b16 %v10759
      %v11217 = vpack.c.b16 %v11216, %v11215
      %11218 = vrot.lane.b32.xlu0 %v3203, 104
      %v11219 = vpop.permute.xlu0 %11218
      %v11222 = vsel %vm1092, %v11217, 0
      %11224 = vmatpush.bf16.msra.mxu0 0
      %11225 = vmatpush.bf16.msra.mxu0 0
      %11226 = vmatpush.bf16.msra.mxu0 0
      %11227 = vmatpush.bf16.msra.mxu0 0
      %11228 = vmatpush.bf16.msra.mxu0 0
      %11229 = vmatpush.bf16.msra.mxu0 0
      %11230 = vmatpush.bf16.msra.mxu0 0
      %11231 = vmatpush.bf16.msra.mxu0 %v11219
      %11232 = vmatmul.bf16.gmra.mxu0 %v11222
      %v11233 = vpop.f32.mrf.mxu0
      %v11234 = vadd.f32 0.0, %v11233
      %v11235 = vpop.f32.mrf.mxu0
      %v11236 = vadd.f32 0.0, %v11235
      %11237 = vdwg.mxu0
      %v11240 = vunpack.c.l.b16 %v10760
      %v11241 = vunpack.c.l.b16 %v10761
      %v11242 = vpack.c.b16 %v11241, %v11240
      %11243 = vrot.lane.b32.xlu0 %v3231, 104
      %v11244 = vpop.permute.xlu0 %11243
      %v11247 = vsel %vm1092, %v11242, 0
      %11249 = vmatpush.bf16.msra.mxu0 0
      %11250 = vmatpush.bf16.msra.mxu0 0
      %11251 = vmatpush.bf16.msra.mxu0 0
      %11252 = vmatpush.bf16.msra.mxu0 0
      %11253 = vmatpush.bf16.msra.mxu0 0
      %11254 = vmatpush.bf16.msra.mxu0 0
      %11255 = vmatpush.bf16.msra.mxu0 0
      %11256 = vmatpush.bf16.msra.mxu0 %v11244
      %11257 = vmatmul.bf16.gmra.mxu0 %v11247
      %v11258 = vpop.f32.mrf.mxu0
      %v11259 = vadd.f32 0.0, %v11258
      %v11260 = vpop.f32.mrf.mxu0
      %v11261 = vadd.f32 0.0, %v11260
      %11262 = vdwg.mxu0
      %v11265 = vunpack.c.l.b16 %v10762
      %v11266 = vunpack.c.l.b16 %v10763
      %v11267 = vpack.c.b16 %v11266, %v11265
      %11268 = vrot.lane.b32.xlu0 %v3259, 104
      %v11269 = vpop.permute.xlu0 %11268
      %v11272 = vsel %vm1092, %v11267, 0
      %11274 = vmatpush.bf16.msra.mxu0 0
      %11275 = vmatpush.bf16.msra.mxu0 0
      %11276 = vmatpush.bf16.msra.mxu0 0
      %11277 = vmatpush.bf16.msra.mxu0 0
      %11278 = vmatpush.bf16.msra.mxu0 0
      %11279 = vmatpush.bf16.msra.mxu0 0
      %11280 = vmatpush.bf16.msra.mxu0 0
      %11281 = vmatpush.bf16.msra.mxu0 %v11269
      %11282 = vmatmul.bf16.gmra.mxu0 %v11272
      %v11283 = vpop.f32.mrf.mxu0
      %v11284 = vadd.f32 0.0, %v11283
      %v11285 = vpop.f32.mrf.mxu0
      %v11286 = vadd.f32 0.0, %v11285
      %11287 = vdwg.mxu0
      %v11290 = vunpack.c.l.b16 %v10764
      %v11291 = vunpack.c.l.b16 %v10765
      %v11292 = vpack.c.b16 %v11291, %v11290
      %11293 = vrot.lane.b32.xlu0 %v3287, 104
      %v11294 = vpop.permute.xlu0 %11293
      %v11297 = vsel %vm1092, %v11292, 0
      %11299 = vmatpush.bf16.msra.mxu0 0
      %11300 = vmatpush.bf16.msra.mxu0 0
      %11301 = vmatpush.bf16.msra.mxu0 0
      %11302 = vmatpush.bf16.msra.mxu0 0
      %11303 = vmatpush.bf16.msra.mxu0 0
      %11304 = vmatpush.bf16.msra.mxu0 0
      %11305 = vmatpush.bf16.msra.mxu0 0
      %11306 = vmatpush.bf16.msra.mxu0 %v11294
      %11307 = vmatmul.bf16.gmra.mxu0 %v11297
      %v11308 = vpop.f32.mrf.mxu0
      %v11309 = vadd.f32 0.0, %v11308
      %v11310 = vpop.f32.mrf.mxu0
      %v11311 = vadd.f32 0.0, %v11310
      %11312 = vdwg.mxu0
      %v11315 = vunpack.c.l.b16 %v10766
      %v11316 = vunpack.c.l.b16 %v10767
      %v11317 = vpack.c.b16 %v11316, %v11315
      %11318 = vrot.lane.b32.xlu0 %v3315, 104
      %v11319 = vpop.permute.xlu0 %11318
      %v11322 = vsel %vm1092, %v11317, 0
      %11324 = vmatpush.bf16.msra.mxu0 0
      %11325 = vmatpush.bf16.msra.mxu0 0
      %11326 = vmatpush.bf16.msra.mxu0 0
      %11327 = vmatpush.bf16.msra.mxu0 0
      %11328 = vmatpush.bf16.msra.mxu0 0
      %11329 = vmatpush.bf16.msra.mxu0 0
      %11330 = vmatpush.bf16.msra.mxu0 0
      %11331 = vmatpush.bf16.msra.mxu0 %v11319
      %11332 = vmatmul.bf16.gmra.mxu0 %v11322
      %v11333 = vpop.f32.mrf.mxu0
      %v11334 = vadd.f32 0.0, %v11333
      %v11335 = vpop.f32.mrf.mxu0
      %v11336 = vadd.f32 0.0, %v11335
      %11337 = vdwg.mxu0
      %v11340 = vunpack.c.l.b16 %v10768
      %v11341 = vunpack.c.l.b16 %v10769
      %v11342 = vpack.c.b16 %v11341, %v11340
      %11343 = vrot.lane.b32.xlu0 %v3343, 104
      %v11344 = vpop.permute.xlu0 %11343
      %v11347 = vsel %vm1092, %v11342, 0
      %11349 = vmatpush.bf16.msra.mxu0 0
      %11350 = vmatpush.bf16.msra.mxu0 0
      %11351 = vmatpush.bf16.msra.mxu0 0
      %11352 = vmatpush.bf16.msra.mxu0 0
      %11353 = vmatpush.bf16.msra.mxu0 0
      %11354 = vmatpush.bf16.msra.mxu0 0
      %11355 = vmatpush.bf16.msra.mxu0 0
      %11356 = vmatpush.bf16.msra.mxu0 %v11344
      %11357 = vmatmul.bf16.gmra.mxu0 %v11347
      %v11358 = vpop.f32.mrf.mxu0
      %v11359 = vadd.f32 0.0, %v11358
      %v11360 = vpop.f32.mrf.mxu0
      %v11361 = vadd.f32 0.0, %v11360
      %11362 = vdwg.mxu0
      %v11365 = vunpack.c.l.b16 %v10770
      %v11366 = vunpack.c.l.b16 %v10771
      %v11367 = vpack.c.b16 %v11366, %v11365
      %11368 = vrot.lane.b32.xlu0 %v3371, 104
      %v11369 = vpop.permute.xlu0 %11368
      %v11372 = vsel %vm1092, %v11367, 0
      %11374 = vmatpush.bf16.msra.mxu0 0
      %11375 = vmatpush.bf16.msra.mxu0 0
      %11376 = vmatpush.bf16.msra.mxu0 0
      %11377 = vmatpush.bf16.msra.mxu0 0
      %11378 = vmatpush.bf16.msra.mxu0 0
      %11379 = vmatpush.bf16.msra.mxu0 0
      %11380 = vmatpush.bf16.msra.mxu0 0
      %11381 = vmatpush.bf16.msra.mxu0 %v11369
      %11382 = vmatmul.bf16.gmra.mxu0 %v11372
      %v11383 = vpop.f32.mrf.mxu0
      %v11384 = vadd.f32 0.0, %v11383
      %v11385 = vpop.f32.mrf.mxu0
      %v11386 = vadd.f32 0.0, %v11385
      %11387 = vdwg.mxu0
      %v11390 = vunpack.c.l.b16 %v10772
      %v11391 = vunpack.c.l.b16 %v10773
      %v11392 = vpack.c.b16 %v11391, %v11390
      %11393 = vrot.lane.b32.xlu0 %v3399, 104
      %v11394 = vpop.permute.xlu0 %11393
      %v11397 = vsel %vm1092, %v11392, 0
      %11399 = vmatpush.bf16.msra.mxu0 0
      %11400 = vmatpush.bf16.msra.mxu0 0
      %11401 = vmatpush.bf16.msra.mxu0 0
      %11402 = vmatpush.bf16.msra.mxu0 0
      %11403 = vmatpush.bf16.msra.mxu0 0
      %11404 = vmatpush.bf16.msra.mxu0 0
      %11405 = vmatpush.bf16.msra.mxu0 0
      %11406 = vmatpush.bf16.msra.mxu0 %v11394
      %11407 = vmatmul.bf16.gmra.mxu0 %v11397
      %v11408 = vpop.f32.mrf.mxu0
      %v11409 = vadd.f32 0.0, %v11408
      %v11410 = vpop.f32.mrf.mxu0
      %v11411 = vadd.f32 0.0, %v11410
      %11412 = vdwg.mxu0
      %v11415 = vunpack.c.l.b16 %v10774
      %v11416 = vunpack.c.l.b16 %v10775
      %v11417 = vpack.c.b16 %v11416, %v11415
      %11418 = vrot.lane.b32.xlu0 %v3427, 104
      %v11419 = vpop.permute.xlu0 %11418
      %v11422 = vsel %vm1092, %v11417, 0
      %11424 = vmatpush.bf16.msra.mxu0 0
      %11425 = vmatpush.bf16.msra.mxu0 0
      %11426 = vmatpush.bf16.msra.mxu0 0
      %11427 = vmatpush.bf16.msra.mxu0 0
      %11428 = vmatpush.bf16.msra.mxu0 0
      %11429 = vmatpush.bf16.msra.mxu0 0
      %11430 = vmatpush.bf16.msra.mxu0 0
      %11431 = vmatpush.bf16.msra.mxu0 %v11419
      %11432 = vmatmul.bf16.gmra.mxu0 %v11422
      %v11433 = vpop.f32.mrf.mxu0
      %v11434 = vadd.f32 0.0, %v11433
      %v11435 = vpop.f32.mrf.mxu0
      %v11436 = vadd.f32 0.0, %v11435
      %11437 = vdwg.mxu0
      %v11440 = vunpack.c.l.b16 %v10776
      %v11441 = vunpack.c.l.b16 %v10777
      %v11442 = vpack.c.b16 %v11441, %v11440
      %11443 = vrot.lane.b32.xlu0 %v3455, 104
      %v11444 = vpop.permute.xlu0 %11443
      %v11447 = vsel %vm1092, %v11442, 0
      %11449 = vmatpush.bf16.msra.mxu0 0
      %11450 = vmatpush.bf16.msra.mxu0 0
      %11451 = vmatpush.bf16.msra.mxu0 0
      %11452 = vmatpush.bf16.msra.mxu0 0
      %11453 = vmatpush.bf16.msra.mxu0 0
      %11454 = vmatpush.bf16.msra.mxu0 0
      %11455 = vmatpush.bf16.msra.mxu0 0
      %11456 = vmatpush.bf16.msra.mxu0 %v11444
      %11457 = vmatmul.bf16.gmra.mxu0 %v11447
      %v11458 = vpop.f32.mrf.mxu0
      %v11459 = vadd.f32 0.0, %v11458
      %v11460 = vpop.f32.mrf.mxu0
      %v11461 = vadd.f32 0.0, %v11460
      %11462 = vdwg.mxu0
      %v11465 = vunpack.c.l.b16 %v10778
      %v11466 = vunpack.c.l.b16 %v10779
      %v11467 = vpack.c.b16 %v11466, %v11465
      %11468 = vrot.lane.b32.xlu0 %v3483, 104
      %v11469 = vpop.permute.xlu0 %11468
      %v11472 = vsel %vm1092, %v11467, 0
      %11474 = vmatpush.bf16.msra.mxu0 0
      %11475 = vmatpush.bf16.msra.mxu0 0
      %11476 = vmatpush.bf16.msra.mxu0 0
      %11477 = vmatpush.bf16.msra.mxu0 0
      %11478 = vmatpush.bf16.msra.mxu0 0
      %11479 = vmatpush.bf16.msra.mxu0 0
      %11480 = vmatpush.bf16.msra.mxu0 0
      %11481 = vmatpush.bf16.msra.mxu0 %v11469
      %11482 = vmatmul.bf16.gmra.mxu0 %v11472
      %v11483 = vpop.f32.mrf.mxu0
      %v11484 = vadd.f32 0.0, %v11483
      %v11485 = vpop.f32.mrf.mxu0
      %v11486 = vadd.f32 0.0, %v11485
      %11487 = vdwg.mxu0
      %v11490 = vunpack.c.l.b16 %v10780
      %v11491 = vunpack.c.l.b16 %v10781
      %v11492 = vpack.c.b16 %v11491, %v11490
      %11493 = vrot.lane.b32.xlu0 %v3511, 104
      %v11494 = vpop.permute.xlu0 %11493
      %v11497 = vsel %vm1092, %v11492, 0
      %11499 = vmatpush.bf16.msra.mxu0 0
      %11500 = vmatpush.bf16.msra.mxu0 0
      %11501 = vmatpush.bf16.msra.mxu0 0
      %11502 = vmatpush.bf16.msra.mxu0 0
      %11503 = vmatpush.bf16.msra.mxu0 0
      %11504 = vmatpush.bf16.msra.mxu0 0
      %11505 = vmatpush.bf16.msra.mxu0 0
      %11506 = vmatpush.bf16.msra.mxu0 %v11494
      %11507 = vmatmul.bf16.gmra.mxu0 %v11497
      %v11508 = vpop.f32.mrf.mxu0
      %v11509 = vadd.f32 0.0, %v11508
      %v11510 = vpop.f32.mrf.mxu0
      %v11511 = vadd.f32 0.0, %v11510
      %11512 = vdwg.mxu0
      %v11515 = vunpack.c.l.b16 %v10782
      %v11516 = vunpack.c.l.b16 %v10783
      %v11517 = vpack.c.b16 %v11516, %v11515
      %11518 = vrot.lane.b32.xlu0 %v3539, 104
      %v11519 = vpop.permute.xlu0 %11518
      %v11522 = vsel %vm1092, %v11517, 0
      %11524 = vmatpush.bf16.msra.mxu0 0
      %11525 = vmatpush.bf16.msra.mxu0 0
      %11526 = vmatpush.bf16.msra.mxu0 0
      %11527 = vmatpush.bf16.msra.mxu0 0
      %11528 = vmatpush.bf16.msra.mxu0 0
      %11529 = vmatpush.bf16.msra.mxu0 0
      %11530 = vmatpush.bf16.msra.mxu0 0
      %11531 = vmatpush.bf16.msra.mxu0 %v11519
      %11532 = vmatmul.bf16.gmra.mxu0 %v11522
      %v11533 = vpop.f32.mrf.mxu0
      %v11534 = vadd.f32 0.0, %v11533
      %v11535 = vpop.f32.mrf.mxu0
      %v11536 = vadd.f32 0.0, %v11535
      %11537 = vdwg.mxu0
      %v11540 = vunpack.c.l.b16 %v10784
      %v11541 = vunpack.c.l.b16 %v10785
      %v11542 = vpack.c.b16 %v11541, %v11540
      %11543 = vrot.lane.b32.xlu0 %v3567, 104
      %v11544 = vpop.permute.xlu0 %11543
      %v11547 = vsel %vm1092, %v11542, 0
      %11549 = vmatpush.bf16.msra.mxu0 0
      %11550 = vmatpush.bf16.msra.mxu0 0
      %11551 = vmatpush.bf16.msra.mxu0 0
      %11552 = vmatpush.bf16.msra.mxu0 0
      %11553 = vmatpush.bf16.msra.mxu0 0
      %11554 = vmatpush.bf16.msra.mxu0 0
      %11555 = vmatpush.bf16.msra.mxu0 0
      %11556 = vmatpush.bf16.msra.mxu0 %v11544
      %11557 = vmatmul.bf16.gmra.mxu0 %v11547
      %v11558 = vpop.f32.mrf.mxu0
      %v11559 = vadd.f32 0.0, %v11558
      %v11560 = vpop.f32.mrf.mxu0
      %v11561 = vadd.f32 0.0, %v11560
      %11562 = vdwg.mxu0
      %v11565 = vunpack.c.l.b16 %v10786
      %v11566 = vunpack.c.l.b16 %v10787
      %v11567 = vpack.c.b16 %v11566, %v11565
      %11568 = vrot.lane.b32.xlu0 %v3595, 104
      %v11569 = vpop.permute.xlu0 %11568
      %v11572 = vsel %vm1092, %v11567, 0
      %11574 = vmatpush.bf16.msra.mxu0 0
      %11575 = vmatpush.bf16.msra.mxu0 0
      %11576 = vmatpush.bf16.msra.mxu0 0
      %11577 = vmatpush.bf16.msra.mxu0 0
      %11578 = vmatpush.bf16.msra.mxu0 0
      %11579 = vmatpush.bf16.msra.mxu0 0
      %11580 = vmatpush.bf16.msra.mxu0 0
      %11581 = vmatpush.bf16.msra.mxu0 %v11569
      %11582 = vmatmul.bf16.gmra.mxu0 %v11572
      %v11583 = vpop.f32.mrf.mxu0
      %v11584 = vadd.f32 0.0, %v11583
      %v11585 = vpop.f32.mrf.mxu0
      %v11586 = vadd.f32 0.0, %v11585
      %11587 = vdwg.mxu0
      %v11588 = vpack.c.bf16 %v10811, %v10809
      %v11589 = vpack.c.bf16 %v10836, %v10834
      %v11590 = vpack.c.bf16 %v10861, %v10859
      %v11591 = vpack.c.bf16 %v10886, %v10884
      %v11592 = vpack.c.bf16 %v10911, %v10909
      %v11593 = vpack.c.bf16 %v10936, %v10934
      %v11594 = vpack.c.bf16 %v10961, %v10959
      %v11595 = vpack.c.bf16 %v10986, %v10984
      %v11596 = vpack.c.bf16 %v11011, %v11009
      %v11597 = vpack.c.bf16 %v11036, %v11034
      %v11598 = vpack.c.bf16 %v11061, %v11059
      %v11599 = vpack.c.bf16 %v11086, %v11084
      %v11600 = vpack.c.bf16 %v11111, %v11109
      %v11601 = vpack.c.bf16 %v11136, %v11134
      %v11602 = vpack.c.bf16 %v11161, %v11159
      %v11603 = vpack.c.bf16 %v11186, %v11184
      %v11604 = vpack.c.bf16 %v11211, %v11209
      %v11605 = vpack.c.bf16 %v11236, %v11234
      %v11606 = vpack.c.bf16 %v11261, %v11259
      %v11607 = vpack.c.bf16 %v11286, %v11284
      %v11608 = vpack.c.bf16 %v11311, %v11309
      %v11609 = vpack.c.bf16 %v11336, %v11334
      %v11610 = vpack.c.bf16 %v11361, %v11359
      %v11611 = vpack.c.bf16 %v11386, %v11384
      %v11612 = vpack.c.bf16 %v11411, %v11409
      %v11613 = vpack.c.bf16 %v11436, %v11434
      %v11614 = vpack.c.bf16 %v11461, %v11459
      %v11615 = vpack.c.bf16 %v11486, %v11484
      %v11616 = vpack.c.bf16 %v11511, %v11509
      %v11617 = vpack.c.bf16 %v11536, %v11534
      %v11618 = vpack.c.bf16 %v11561, %v11559
      %v11619 = vpack.c.bf16 %v11586, %v11584
      %v11621 = vsel %vm6014, %v11588, 0
      %v11624 = vsel %vm6014, %v11589, 0
      %v11627 = vsel %vm6014, %v11590, 0
      %v11630 = vsel %vm6014, %v11591, 0
      %v11633 = vsel %vm6014, %v11592, 0
      %v11636 = vsel %vm6014, %v11593, 0
      %v11639 = vsel %vm6014, %v11594, 0
      %v11642 = vsel %vm6014, %v11595, 0
      %v11645 = vsel %vm6014, %v11596, 0
      %v11648 = vsel %vm6014, %v11597, 0
      %v11651 = vsel %vm6014, %v11598, 0
      %v11654 = vsel %vm6014, %v11599, 0
      %v11657 = vsel %vm6014, %v11600, 0
      %v11660 = vsel %vm6014, %v11601, 0
      %v11663 = vsel %vm6014, %v11602, 0
      %v11666 = vsel %vm6014, %v11603, 0
      %v11669 = vsel %vm6014, %v11604, 0
      %v11672 = vsel %vm6014, %v11605, 0
      %v11675 = vsel %vm6014, %v11606, 0
      %v11678 = vsel %vm6014, %v11607, 0
      %v11681 = vsel %vm6014, %v11608, 0
      %v11684 = vsel %vm6014, %v11609, 0
      %v11687 = vsel %vm6014, %v11610, 0
      %v11690 = vsel %vm6014, %v11611, 0
      %v11693 = vsel %vm6014, %v11612, 0
      %v11696 = vsel %vm6014, %v11613, 0
      %v11699 = vsel %vm6014, %v11614, 0
      %v11702 = vsel %vm6014, %v11615, 0
      %v11705 = vsel %vm6014, %v11616, 0
      %v11708 = vsel %vm6014, %v11617, 0
      %v11711 = vsel %vm6014, %v11618, 0
      %v11714 = vsel %vm6014, %v11619, 0
      %v11717 = vsel %vm6111, %v1084, 0
      %11719 = vmatpush.bf16.msra.mxu0 0
      %11720 = vmatpush.bf16.msra.mxu0 0
      %11721 = vmatpush.bf16.msra.mxu0 0
      %11722 = vmatpush.bf16.msra.mxu0 0
      %11723 = vmatpush.bf16.msra.mxu0 0
      %11724 = vmatpush.bf16.msra.mxu0 0
      %11725 = vmatpush.bf16.msra.mxu0 0
      %11726 = vmatpush.bf16.msra.mxu0 %v11717
      %11727 = vmatmul.bf16.gmra.mxu0 %v11621
      %v11728 = vpop.f32.mrf.mxu0
      %v11729 = vadd.f32 0.0, %v11728
      %v11730 = vpop.f32.mrf.mxu0
      %v11731 = vadd.f32 0.0, %v11730
      %11732 = vmatmul.bf16.gmra.mxu0 %v11624
      %v11733 = vpop.f32.mrf.mxu0
      %v11734 = vadd.f32 0.0, %v11733
      %v11735 = vpop.f32.mrf.mxu0
      %v11736 = vadd.f32 0.0, %v11735
      %11737 = vmatmul.bf16.gmra.mxu0 %v11627
      %v11738 = vpop.f32.mrf.mxu0
      %v11739 = vadd.f32 0.0, %v11738
      %v11740 = vpop.f32.mrf.mxu0
      %v11741 = vadd.f32 0.0, %v11740
      %11742 = vmatmul.bf16.gmra.mxu0 %v11630
      %v11743 = vpop.f32.mrf.mxu0
      %v11744 = vadd.f32 0.0, %v11743
      %v11745 = vpop.f32.mrf.mxu0
      %v11746 = vadd.f32 0.0, %v11745
      %11747 = vmatmul.bf16.gmra.mxu0 %v11633
      %v11748 = vpop.f32.mrf.mxu0
      %v11749 = vadd.f32 0.0, %v11748
      %v11750 = vpop.f32.mrf.mxu0
      %v11751 = vadd.f32 0.0, %v11750
      %11752 = vmatmul.bf16.gmra.mxu0 %v11636
      %v11753 = vpop.f32.mrf.mxu0
      %v11754 = vadd.f32 0.0, %v11753
      %v11755 = vpop.f32.mrf.mxu0
      %v11756 = vadd.f32 0.0, %v11755
      %11757 = vmatmul.bf16.gmra.mxu0 %v11639
      %v11758 = vpop.f32.mrf.mxu0
      %v11759 = vadd.f32 0.0, %v11758
      %v11760 = vpop.f32.mrf.mxu0
      %v11761 = vadd.f32 0.0, %v11760
      %11762 = vmatmul.bf16.gmra.mxu0 %v11642
      %v11763 = vpop.f32.mrf.mxu0
      %v11764 = vadd.f32 0.0, %v11763
      %v11765 = vpop.f32.mrf.mxu0
      %v11766 = vadd.f32 0.0, %v11765
      %11767 = vmatmul.bf16.gmra.mxu0 %v11645
      %v11768 = vpop.f32.mrf.mxu0
      %v11769 = vadd.f32 0.0, %v11768
      %v11770 = vpop.f32.mrf.mxu0
      %v11771 = vadd.f32 0.0, %v11770
      %11772 = vmatmul.bf16.gmra.mxu0 %v11648
      %v11773 = vpop.f32.mrf.mxu0
      %v11774 = vadd.f32 0.0, %v11773
      %v11775 = vpop.f32.mrf.mxu0
      %v11776 = vadd.f32 0.0, %v11775
      %11777 = vmatmul.bf16.gmra.mxu0 %v11651
      %v11778 = vpop.f32.mrf.mxu0
      %v11779 = vadd.f32 0.0, %v11778
      %v11780 = vpop.f32.mrf.mxu0
      %v11781 = vadd.f32 0.0, %v11780
      %11782 = vmatmul.bf16.gmra.mxu0 %v11654
      %v11783 = vpop.f32.mrf.mxu0
      %v11784 = vadd.f32 0.0, %v11783
      %v11785 = vpop.f32.mrf.mxu0
      %v11786 = vadd.f32 0.0, %v11785
      %11787 = vmatmul.bf16.gmra.mxu0 %v11657
      %v11788 = vpop.f32.mrf.mxu0
      %v11789 = vadd.f32 0.0, %v11788
      %v11790 = vpop.f32.mrf.mxu0
      %v11791 = vadd.f32 0.0, %v11790
      %11792 = vmatmul.bf16.gmra.mxu0 %v11660
      %v11793 = vpop.f32.mrf.mxu0
      %v11794 = vadd.f32 0.0, %v11793
      %v11795 = vpop.f32.mrf.mxu0
      %v11796 = vadd.f32 0.0, %v11795
      %11797 = vmatmul.bf16.gmra.mxu0 %v11663
      %v11798 = vpop.f32.mrf.mxu0
      %v11799 = vadd.f32 0.0, %v11798
      %v11800 = vpop.f32.mrf.mxu0
      %v11801 = vadd.f32 0.0, %v11800
      %11802 = vmatmul.bf16.gmra.mxu0 %v11666
      %v11803 = vpop.f32.mrf.mxu0
      %v11804 = vadd.f32 0.0, %v11803
      %v11805 = vpop.f32.mrf.mxu0
      %v11806 = vadd.f32 0.0, %v11805
      %11807 = vmatmul.bf16.gmra.mxu0 %v11669
      %v11808 = vpop.f32.mrf.mxu0
      %v11809 = vadd.f32 0.0, %v11808
      %v11810 = vpop.f32.mrf.mxu0
      %v11811 = vadd.f32 0.0, %v11810
      %11812 = vmatmul.bf16.gmra.mxu0 %v11672
      %v11813 = vpop.f32.mrf.mxu0
      %v11814 = vadd.f32 0.0, %v11813
      %v11815 = vpop.f32.mrf.mxu0
      %v11816 = vadd.f32 0.0, %v11815
      %11817 = vmatmul.bf16.gmra.mxu0 %v11675
      %v11818 = vpop.f32.mrf.mxu0
      %v11819 = vadd.f32 0.0, %v11818
      %v11820 = vpop.f32.mrf.mxu0
      %v11821 = vadd.f32 0.0, %v11820
      %11822 = vmatmul.bf16.gmra.mxu0 %v11678
      %v11823 = vpop.f32.mrf.mxu0
      %v11824 = vadd.f32 0.0, %v11823
      %v11825 = vpop.f32.mrf.mxu0
      %v11826 = vadd.f32 0.0, %v11825
      %11827 = vmatmul.bf16.gmra.mxu0 %v11681
      %v11828 = vpop.f32.mrf.mxu0
      %v11829 = vadd.f32 0.0, %v11828
      %v11830 = vpop.f32.mrf.mxu0
      %v11831 = vadd.f32 0.0, %v11830
      %11832 = vmatmul.bf16.gmra.mxu0 %v11684
      %v11833 = vpop.f32.mrf.mxu0
      %v11834 = vadd.f32 0.0, %v11833
      %v11835 = vpop.f32.mrf.mxu0
      %v11836 = vadd.f32 0.0, %v11835
      %11837 = vmatmul.bf16.gmra.mxu0 %v11687
      %v11838 = vpop.f32.mrf.mxu0
      %v11839 = vadd.f32 0.0, %v11838
      %v11840 = vpop.f32.mrf.mxu0
      %v11841 = vadd.f32 0.0, %v11840
      %11842 = vmatmul.bf16.gmra.mxu0 %v11690
      %v11843 = vpop.f32.mrf.mxu0
      %v11844 = vadd.f32 0.0, %v11843
      %v11845 = vpop.f32.mrf.mxu0
      %v11846 = vadd.f32 0.0, %v11845
      %11847 = vmatmul.bf16.gmra.mxu0 %v11693
      %v11848 = vpop.f32.mrf.mxu0
      %v11849 = vadd.f32 0.0, %v11848
      %v11850 = vpop.f32.mrf.mxu0
      %v11851 = vadd.f32 0.0, %v11850
      %11852 = vmatmul.bf16.gmra.mxu0 %v11696
      %v11853 = vpop.f32.mrf.mxu0
      %v11854 = vadd.f32 0.0, %v11853
      %v11855 = vpop.f32.mrf.mxu0
      %v11856 = vadd.f32 0.0, %v11855
      %11857 = vmatmul.bf16.gmra.mxu0 %v11699
      %v11858 = vpop.f32.mrf.mxu0
      %v11859 = vadd.f32 0.0, %v11858
      %v11860 = vpop.f32.mrf.mxu0
      %v11861 = vadd.f32 0.0, %v11860
      %11862 = vmatmul.bf16.gmra.mxu0 %v11702
      %v11863 = vpop.f32.mrf.mxu0
      %v11864 = vadd.f32 0.0, %v11863
      %v11865 = vpop.f32.mrf.mxu0
      %v11866 = vadd.f32 0.0, %v11865
      %11867 = vmatmul.bf16.gmra.mxu0 %v11705
      %v11868 = vpop.f32.mrf.mxu0
      %v11869 = vadd.f32 0.0, %v11868
      %v11870 = vpop.f32.mrf.mxu0
      %v11871 = vadd.f32 0.0, %v11870
      %11872 = vmatmul.bf16.gmra.mxu0 %v11708
      %v11873 = vpop.f32.mrf.mxu0
      %v11874 = vadd.f32 0.0, %v11873
      %v11875 = vpop.f32.mrf.mxu0
      %v11876 = vadd.f32 0.0, %v11875
      %11877 = vmatmul.bf16.gmra.mxu0 %v11711
      %v11878 = vpop.f32.mrf.mxu0
      %v11879 = vadd.f32 0.0, %v11878
      %v11880 = vpop.f32.mrf.mxu0
      %v11881 = vadd.f32 0.0, %v11880
      %11882 = vmatmul.bf16.gmra.mxu0 %v11714
      %v11883 = vpop.f32.mrf.mxu0
      %v11884 = vadd.f32 0.0, %v11883
      %v11885 = vpop.f32.mrf.mxu0
      %v11886 = vadd.f32 0.0, %v11885
      %11887 = vdwg.mxu0
      %v11888 = vadd.f32 %v9188, %v11729
      %v11889 = vadd.f32 %v9189, %v11731
      %v11890 = vadd.f32 %v9190, %v11734
      %v11891 = vadd.f32 %v9191, %v11736
      %v11892 = vadd.f32 %v9192, %v11739
      %v11893 = vadd.f32 %v9193, %v11741
      %v11894 = vadd.f32 %v9194, %v11744
      %v11895 = vadd.f32 %v9195, %v11746
      %v11896 = vadd.f32 %v9196, %v11749
      %v11897 = vadd.f32 %v9197, %v11751
      %v11898 = vadd.f32 %v9198, %v11754
      %v11899 = vadd.f32 %v9199, %v11756
      %v11900 = vadd.f32 %v9200, %v11759
      %v11901 = vadd.f32 %v9201, %v11761
      %v11902 = vadd.f32 %v9202, %v11764
      %v11903 = vadd.f32 %v9203, %v11766
      %v11904 = vadd.f32 %v9204, %v11769
      %v11905 = vadd.f32 %v9205, %v11771
      %v11906 = vadd.f32 %v9206, %v11774
      %v11907 = vadd.f32 %v9207, %v11776
      %v11908 = vadd.f32 %v9208, %v11779
      %v11909 = vadd.f32 %v9209, %v11781
      %v11910 = vadd.f32 %v9210, %v11784
      %v11911 = vadd.f32 %v9211, %v11786
      %v11912 = vadd.f32 %v9212, %v11789
      %v11913 = vadd.f32 %v9213, %v11791
      %v11914 = vadd.f32 %v9214, %v11794
      %v11915 = vadd.f32 %v9215, %v11796
      %v11916 = vadd.f32 %v9216, %v11799
      %v11917 = vadd.f32 %v9217, %v11801
      %v11918 = vadd.f32 %v9218, %v11804
      %v11919 = vadd.f32 %v9219, %v11806
      %v11920 = vadd.f32 %v9220, %v11809
      %v11921 = vadd.f32 %v9221, %v11811
      %v11922 = vadd.f32 %v9222, %v11814
      %v11923 = vadd.f32 %v9223, %v11816
      %v11924 = vadd.f32 %v9224, %v11819
      %v11925 = vadd.f32 %v9225, %v11821
      %v11926 = vadd.f32 %v9226, %v11824
      %v11927 = vadd.f32 %v9227, %v11826
      %v11928 = vadd.f32 %v9228, %v11829
      %v11929 = vadd.f32 %v9229, %v11831
      %v11930 = vadd.f32 %v9230, %v11834
      %v11931 = vadd.f32 %v9231, %v11836
      %v11932 = vadd.f32 %v9232, %v11839
      %v11933 = vadd.f32 %v9233, %v11841
      %v11934 = vadd.f32 %v9234, %v11844
      %v11935 = vadd.f32 %v9235, %v11846
      %v11936 = vadd.f32 %v9236, %v11849
      %v11937 = vadd.f32 %v9237, %v11851
      %v11938 = vadd.f32 %v9238, %v11854
      %v11939 = vadd.f32 %v9239, %v11856
      %v11940 = vadd.f32 %v9240, %v11859
      %v11941 = vadd.f32 %v9241, %v11861
      %v11942 = vadd.f32 %v9242, %v11864
      %v11943 = vadd.f32 %v9243, %v11866
      %v11944 = vadd.f32 %v9244, %v11869
      %v11945 = vadd.f32 %v9245, %v11871
      %v11946 = vadd.f32 %v9246, %v11874
      %v11947 = vadd.f32 %v9247, %v11876
      %v11948 = vadd.f32 %v9248, %v11879
      %v11949 = vadd.f32 %v9249, %v11881
      %v11950 = vadd.f32 %v9250, %v11884
      %v11951 = vadd.f32 %v9251, %v11886
      %v11952 = vld [vmem:[%s5] sm:$0x1]
      %v11954 = vperm.slane %v11952, 0
      %v11956 = vadd.f32 %v11888, %v11954
      %v11957 = vadd.f32 %v11889, %v11954
      %v11958 = vadd.f32 %v11890, %v11954
      %v11959 = vadd.f32 %v11891, %v11954
      %v11960 = vadd.f32 %v11892, %v11954
      %v11961 = vadd.f32 %v11893, %v11954
      %v11962 = vadd.f32 %v11894, %v11954
      %v11963 = vadd.f32 %v11895, %v11954
      %v11964 = vadd.f32 %v11896, %v11954
      %v11965 = vadd.f32 %v11897, %v11954
      %v11966 = vadd.f32 %v11898, %v11954
      %v11967 = vadd.f32 %v11899, %v11954
      %v11968 = vadd.f32 %v11900, %v11954
      %v11969 = vadd.f32 %v11901, %v11954
      %v11970 = vadd.f32 %v11902, %v11954
      %v11971 = vadd.f32 %v11903, %v11954
      %v11972 = vadd.f32 %v11904, %v11954
      %v11973 = vadd.f32 %v11905, %v11954
      %v11974 = vadd.f32 %v11906, %v11954
      %v11975 = vadd.f32 %v11907, %v11954
      %v11976 = vadd.f32 %v11908, %v11954
      %v11977 = vadd.f32 %v11909, %v11954
      %v11978 = vadd.f32 %v11910, %v11954
      %v11979 = vadd.f32 %v11911, %v11954
      %v11980 = vadd.f32 %v11912, %v11954
      %v11981 = vadd.f32 %v11913, %v11954
      %v11982 = vadd.f32 %v11914, %v11954
      %v11983 = vadd.f32 %v11915, %v11954
      %v11984 = vadd.f32 %v11916, %v11954
      %v11985 = vadd.f32 %v11917, %v11954
      %v11986 = vadd.f32 %v11918, %v11954
      %v11987 = vadd.f32 %v11919, %v11954
      %v11988 = vadd.f32 %v11920, %v11954
      %v11989 = vadd.f32 %v11921, %v11954
      %v11990 = vadd.f32 %v11922, %v11954
      %v11991 = vadd.f32 %v11923, %v11954
      %v11992 = vadd.f32 %v11924, %v11954
      %v11993 = vadd.f32 %v11925, %v11954
      %v11994 = vadd.f32 %v11926, %v11954
      %v11995 = vadd.f32 %v11927, %v11954
      %v11996 = vadd.f32 %v11928, %v11954
      %v11997 = vadd.f32 %v11929, %v11954
      %v11998 = vadd.f32 %v11930, %v11954
      %v11999 = vadd.f32 %v11931, %v11954
      %v12000 = vadd.f32 %v11932, %v11954
      %v12001 = vadd.f32 %v11933, %v11954
      %v12002 = vadd.f32 %v11934, %v11954
      %v12003 = vadd.f32 %v11935, %v11954
      %v12004 = vadd.f32 %v11936, %v11954
      %v12005 = vadd.f32 %v11937, %v11954
      %v12006 = vadd.f32 %v11938, %v11954
      %v12007 = vadd.f32 %v11939, %v11954
      %v12008 = vadd.f32 %v11940, %v11954
      %v12009 = vadd.f32 %v11941, %v11954
      %v12010 = vadd.f32 %v11942, %v11954
      %v12011 = vadd.f32 %v11943, %v11954
      %v12012 = vadd.f32 %v11944, %v11954
      %v12013 = vadd.f32 %v11945, %v11954
      %v12014 = vadd.f32 %v11946, %v11954
      %v12015 = vadd.f32 %v11947, %v11954
      %v12016 = vadd.f32 %v11948, %v11954
      %v12017 = vadd.f32 %v11949, %v11954
      %v12018 = vadd.f32 %v11950, %v11954
      %v12019 = vadd.f32 %v11951, %v11954
      %12020 = vst.msk [vmem:[%s253] sm:$0xff] %vm510, %v11956
      %12021 = vst.msk [vmem:[%s253 + $0x8] sm:$0xff] %vm510, %v11957
      %12022 = vst.msk [vmem:[%s253 + $0x10] sm:$0xff] %vm510, %v11958
      %12023 = vst.msk [vmem:[%s253 + $0x18] sm:$0xff] %vm510, %v11959
      %12024 = vst.msk [vmem:[%s253 + $0x20] sm:$0xff] %vm510, %v11960
      %12025 = vst.msk [vmem:[%s253 + $0x28] sm:$0xff] %vm510, %v11961
      %12026 = vst.msk [vmem:[%s253 + $0x30] sm:$0xff] %vm510, %v11962
      %12027 = vst.msk [vmem:[%s253 + $0x38] sm:$0xff] %vm510, %v11963
      %12028 = vst.msk [vmem:[%s253 + $0x40] sm:$0xff] %vm510, %v11964
      %12029 = vst.msk [vmem:[%s253 + $0x48] sm:$0xff] %vm510, %v11965
      %12030 = vst.msk [vmem:[%s253 + $0x50] sm:$0xff] %vm510, %v11966
      %12031 = vst.msk [vmem:[%s253 + $0x58] sm:$0xff] %vm510, %v11967
      %12032 = vst.msk [vmem:[%s253 + $0x60] sm:$0xff] %vm510, %v11968
      %12033 = vst.msk [vmem:[%s253 + $0x68] sm:$0xff] %vm510, %v11969
      %12034 = vst.msk [vmem:[%s253 + $0x70] sm:$0xff] %vm510, %v11970
      %12035 = vst.msk [vmem:[%s253 + $0x78] sm:$0xff] %vm510, %v11971
      %12036 = vst.msk [vmem:[%s253 + $0x80] sm:$0xff] %vm510, %v11972
      %12037 = vst.msk [vmem:[%s253 + $0x88] sm:$0xff] %vm510, %v11973
      %12038 = vst.msk [vmem:[%s253 + $0x90] sm:$0xff] %vm510, %v11974
      %12039 = vst.msk [vmem:[%s253 + $0x98] sm:$0xff] %vm510, %v11975
      %12040 = vst.msk [vmem:[%s253 + $0xa0] sm:$0xff] %vm510, %v11976
      %12041 = vst.msk [vmem:[%s253 + $0xa8] sm:$0xff] %vm510, %v11977
      %12042 = vst.msk [vmem:[%s253 + $0xb0] sm:$0xff] %vm510, %v11978
      %12043 = vst.msk [vmem:[%s253 + $0xb8] sm:$0xff] %vm510, %v11979
      %12044 = vst.msk [vmem:[%s253 + $0xc0] sm:$0xff] %vm510, %v11980
      %12045 = vst.msk [vmem:[%s253 + $0xc8] sm:$0xff] %vm510, %v11981
      %12046 = vst.msk [vmem:[%s253 + $0xd0] sm:$0xff] %vm510, %v11982
      %12047 = vst.msk [vmem:[%s253 + $0xd8] sm:$0xff] %vm510, %v11983
      %12048 = vst.msk [vmem:[%s253 + $0xe0] sm:$0xff] %vm510, %v11984
      %12049 = vst.msk [vmem:[%s253 + $0xe8] sm:$0xff] %vm510, %v11985
      %12050 = vst.msk [vmem:[%s253 + $0xf0] sm:$0xff] %vm510, %v11986
      %12051 = vst.msk [vmem:[%s253 + $0xf8] sm:$0xff] %vm510, %v11987
      %12052 = vst.msk [vmem:[%s253 + $0x100] sm:$0xff] %vm510, %v11988
      %12053 = vst.msk [vmem:[%s253 + $0x108] sm:$0xff] %vm510, %v11989
      %12054 = vst.msk [vmem:[%s253 + $0x110] sm:$0xff] %vm510, %v11990
      %12055 = vst.msk [vmem:[%s253 + $0x118] sm:$0xff] %vm510, %v11991
      %12056 = vst.msk [vmem:[%s253 + $0x120] sm:$0xff] %vm510, %v11992
      %12057 = vst.msk [vmem:[%s253 + $0x128] sm:$0xff] %vm510, %v11993
      %12058 = vst.msk [vmem:[%s253 + $0x130] sm:$0xff] %vm510, %v11994
      %12059 = vst.msk [vmem:[%s253 + $0x138] sm:$0xff] %vm510, %v11995
      %12060 = vst.msk [vmem:[%s253 + $0x140] sm:$0xff] %vm510, %v11996
      %12061 = vst.msk [vmem:[%s253 + $0x148] sm:$0xff] %vm510, %v11997
      %12062 = vst.msk [vmem:[%s253 + $0x150] sm:$0xff] %vm510, %v11998
      %12063 = vst.msk [vmem:[%s253 + $0x158] sm:$0xff] %vm510, %v11999
      %12064 = vst.msk [vmem:[%s253 + $0x160] sm:$0xff] %vm510, %v12000
      %12065 = vst.msk [vmem:[%s253 + $0x168] sm:$0xff] %vm510, %v12001
      %12066 = vst.msk [vmem:[%s253 + $0x170] sm:$0xff] %vm510, %v12002
      %12067 = vst.msk [vmem:[%s253 + $0x178] sm:$0xff] %vm510, %v12003
      %12068 = vst.msk [vmem:[%s253 + $0x180] sm:$0xff] %vm510, %v12004
      %12069 = vst.msk [vmem:[%s253 + $0x188] sm:$0xff] %vm510, %v12005
      %12070 = vst.msk [vmem:[%s253 + $0x190] sm:$0xff] %vm510, %v12006
      %12071 = vst.msk [vmem:[%s253 + $0x198] sm:$0xff] %vm510, %v12007
      %12072 = vst.msk [vmem:[%s253 + $0x1a0] sm:$0xff] %vm510, %v12008
      %12073 = vst.msk [vmem:[%s253 + $0x1a8] sm:$0xff] %vm510, %v12009
      %12074 = vst.msk [vmem:[%s253 + $0x1b0] sm:$0xff] %vm510, %v12010
      %12075 = vst.msk [vmem:[%s253 + $0x1b8] sm:$0xff] %vm510, %v12011
      %12076 = vst.msk [vmem:[%s253 + $0x1c0] sm:$0xff] %vm510, %v12012
      %12077 = vst.msk [vmem:[%s253 + $0x1c8] sm:$0xff] %vm510, %v12013
      %12078 = vst.msk [vmem:[%s253 + $0x1d0] sm:$0xff] %vm510, %v12014
      %12079 = vst.msk [vmem:[%s253 + $0x1d8] sm:$0xff] %vm510, %v12015
      %12080 = vst.msk [vmem:[%s253 + $0x1e0] sm:$0xff] %vm510, %v12016
      %12081 = vst.msk [vmem:[%s253 + $0x1e8] sm:$0xff] %vm510, %v12017
      %12082 = vst.msk [vmem:[%s253 + $0x1f0] sm:$0xff] %vm510, %v12018
      %12083 = vst.msk [vmem:[%s253 + $0x1f8] sm:$0xff] %vm510, %v12019
      %s12084 = smul.u32 64, %s17
      %p12085 = scmp.lt.s32.totalorder %s12084, 127
      %s12086 = scalar_select %p12085, %s12084, 127
      %s12087 = smul.addr %s12086, 8
      %s12088 = scalar_lea.vmem %s6, %s12087
      // Predicated region
      $region45: #{tpu_custom_call.1} parent=43 // pred_check
        %p12089 = pneg %p166
      $region46: #{tpu_custom_call.1} parent=43 // pred_check_branch
        %12091 = sbr.rel (%p12089) target = $region48
      $region47: #{tpu_custom_call.1} parent=43 // pred_region
        %s12092 = smul.u32 64, %s17
      $region48: #{tpu_custom_call.1} parent=43 // pred_fallthru
        _
    $region44: #{tpu_custom_call.1} parent=5 // pred_fallthru
      _
    %p12093 = scmp.le.s32.totalorder 2, %s12
    // Predicated region
    $region49: #{tpu_custom_call.1} parent=5 // pred_check
      %p12094 = pneg %p12093
    $region50: #{tpu_custom_call.1} parent=5 // pred_check_branch
      %12096 = sbr.rel (%p12094) target = $region52
    $region51: #{tpu_custom_call.1} parent=5 // pred_region
      %s12097 = ssub.s32 %s12, 2
      // Predicated region
      $region53: #{tpu_custom_call.1} parent=51 // pred_check
        %p12098 = pneg %p172
      $region54: #{tpu_custom_call.1} parent=51 // pred_check_branch
        %12100 = sbr.rel (%p12098) target = $region56
      $region55: #{tpu_custom_call.1} parent=51 // pred_region
        %s12101 = smul.u32 64, %s18
        %p12102 = scmp.lt.s32.totalorder %s12101, 127
        %s12103 = scalar_select %p12102, %s12101, 127
        %s12104 = smul.addr %s12103, 8
        %s12105 = scalar_lea.vmem %s6, %s12104
      $region56: #{tpu_custom_call.1} parent=51 // pred_fallthru
        _
    $region52: #{tpu_custom_call.1} parent=5 // pred_fallthru
      _
  $region6: #{tpu_custom_call.1} parent=0 // loop_footer
    %s16 = sadd.s32 1, %s12
  $region7: #{tpu_custom_call.1} parent=0 // loop_footer_branch
    %11 = sbr.rel target = $region3
  $region8: #{tpu_custom_call.1} parent=0 // loop_exit
    _

</llo_original>
